<compile_context>
chip_gen: v7x
topology: tpu7x:2x2x1
jax: 0.10.0
libtpu: 0.0.40
codegen_flags: <defaults>
</compile_context>

<pallas_src>
import jax
import jax.numpy as jnp
from jax.experimental import pallas as pl
from jax.experimental.pallas import tpu as pltpu

GN_GROUPS = 8
GN_EPS = 1e-5


# ---------------------------------------------------------------------------
# Fused bottleneck kernel (one grid cell = one sample)
# ---------------------------------------------------------------------------
def _make_bottleneck_kernel(*, H, W, P, Cin, OC, has_down, reflect,
                            groups=GN_GROUPS, eps=GN_EPS):
    HW = H * W
    taps = [(ki, kj) for ki in range(3) for kj in range(3)]

    def gn(acc, gamma, beta):
        """Exact f32 per-sample GroupNorm over (rows, oc); returns affine-normed acc."""
        rows, oc = acc.shape
        cg = oc // groups
        inv_count = 1.0 / float(rows * cg)
        col_sum = jnp.sum(acc, axis=0, keepdims=True)            # (1, oc) f32
        col_sq = jnp.sum(acc * acc, axis=0, keepdims=True)       # (1, oc) f32
        ch = jax.lax.broadcasted_iota(jnp.int32, (1, oc), 1)
        mean_c = jnp.zeros((1, oc), jnp.float32)
        ex2_c = jnp.zeros((1, oc), jnp.float32)
        for g in range(groups):                                   # static, G=8
            lo = g * cg
            m = jnp.sum(col_sum[:, lo:lo + cg], axis=1, keepdims=True) * inv_count
            e = jnp.sum(col_sq[:, lo:lo + cg], axis=1, keepdims=True) * inv_count
            in_g = jnp.logical_and(ch >= lo, ch < lo + cg)
            mean_c = jnp.where(in_g, m, mean_c)
            ex2_c = jnp.where(in_g, e, ex2_c)
        var_c = jnp.maximum(ex2_c - mean_c * mean_c, 0.0)
        scale = jax.lax.rsqrt(var_c + eps) * gamma
        shift = beta - mean_c * scale
        return acc * scale + shift

    def kernel(x_ref, w1_ref, g1_ref, b1_ref, w2_ref, g2_ref, b2_ref,
               w3_ref, g3_ref, b3_ref, *rest):
        if has_down:
            wd_ref, gd_ref, bd_ref, o_ref, pad_ref, col_ref = rest
        else:
            o_ref, pad_ref, col_ref = rest

        xf = x_ref[...]                              # (HW, Cin) f32 (kept for residual)
        xb = xf.astype(jnp.bfloat16)                 # single cast for all MXU uses

        # ---- conv1 (1x1) -> GN -> ReLU ------------------------------------
        a1 = jnp.dot(xb, w1_ref[...], preferred_element_type=jnp.float32)   # (HW, P)
        y1 = jnp.maximum(gn(a1, g1_ref[...], b1_ref[...]), 0.0)
        y1b = y1.astype(jnp.bfloat16).reshape(H, W, P)                      # bf16 once

        # ---- conv2 input padding built in VMEM (no HBM pad pass) ----------
        pad_ref[1:H + 1, 1:W + 1, :] = y1b
        if reflect:
            pad_ref[0:1, 1:W + 1, :] = y1b[1:2]               # top    <- row 1
            pad_ref[H + 1:H + 2, 1:W + 1, :] = y1b[H - 2:H - 1]  # bottom <- row H-2
            pad_ref[:, 0:1, :] = pad_ref[:, 2:3, :]           # left   <- col 1 (+corners)
            pad_ref[:, W + 1:W + 2, :] = pad_ref[:, W - 1:W, :]  # right  <- col W-2
        else:  # zero padding
            zrow = jnp.zeros((1, W + 2, P), jnp.bfloat16)
            zcol = jnp.zeros((H + 2, 1, P), jnp.bfloat16)
            pad_ref[0:1, :, :] = zrow
            pad_ref[H + 1:H + 2, :, :] = zrow
            pad_ref[:, 0:1, :] = zcol
            pad_ref[:, W + 1:W + 2, :] = zcol

        # ---- conv2 (3x3, stride 1): im2col slab in VMEM, one K=9P GEMM ----
        for t, (ki, kj) in enumerate(taps):          # static 9-tap copy, no recasts
            col_ref[:, t * P:(t + 1) * P] = pad_ref[ki:ki + H, kj:kj + W, :].reshape(HW, P)
        a2 = jnp.dot(col_ref[...], w2_ref[...], preferred_element_type=jnp.float32)
        y2 = jnp.maximum(gn(a2, g2_ref[...], b2_ref[...]), 0.0)             # (HW, P)

        # ---- conv3 (1x1) -> GN --------------------------------------------
        a3 = jnp.dot(y2.astype(jnp.bfloat16), w3_ref[...],
                     preferred_element_type=jnp.float32)                    # (HW, 4P)
        y3 = gn(a3, g3_ref[...], b3_ref[...])

        # ---- residual (+ optional fused downsample) -> ReLU ---------------
        if has_down:
            ad = jnp.dot(xb, wd_ref[...], preferred_element_type=jnp.float32)
            res = gn(ad, gd_ref[...], bd_ref[...])
        else:
            res = xf                                   # identity (Cin == 4P)
        o_ref[...] = jnp.maximum(y3 + res, 0.0)

    return kernel


# ---------------------------------------------------------------------------
# Wrapper
# ---------------------------------------------------------------------------
def bottleneck_forward(p, x_nhwc):
    """Fused HRNetV2 Bottleneck forward. x_nhwc: (N, H, W, Cin) f32 -> (N, H, W, 4P)."""
    N, H, W, Cin = x_nhwc.shape
    P = p["planes"]
    OC = 4 * P
    HW = H * W
    has_down = "wd" in p
    if not has_down:
        assert Cin == OC, "identity residual requires inplanes == planes*4"
    reflect = (p["padding_mode"] == "reflect")

    kernel = _make_bottleneck_kernel(H=H, W=W, P=P, Cin=Cin, OC=OC,
                                     has_down=has_down, reflect=reflect)

    x2d = x_nhwc.reshape(N * HW, Cin)                 # free reshape (NHWC contiguous)

    def const_spec(a):
        # Constant across the grid (weights / gamma / beta).
        # TODO(synk): could be pipeline_mode=pl.Buffered(1) to save VMEM once OC grows.
        return pl.BlockSpec(a.shape, lambda n, nd=a.ndim: (0,) * nd)

    inputs = [x2d, p["w1"], p["g1"], p["b1"], p["w2"], p["g2"], p["b2"],
              p["w3"], p["g3"], p["b3"]]
    in_specs = [pl.BlockSpec((HW, Cin), lambda n: (n, 0))]
    in_specs += [const_spec(a) for a in inputs[1:]]
    if has_down:
        for name in ("wd", "gd", "bd"):
            inputs.append(p[name])
            in_specs.append(const_spec(p[name]))

    out2d = pl.pallas_call(
        kernel,
        out_shape=jax.ShapeDtypeStruct((N * HW, OC), jnp.float32),
        grid=(N,),
        in_specs=in_specs,
        out_specs=pl.BlockSpec((HW, OC), lambda n: (n, 0)),
        scratch_shapes=[
            pltpu.VMEM((H + 2, W + 2, P), jnp.bfloat16),   # padded conv2 input
            pltpu.VMEM((HW, 9 * P), jnp.bfloat16),         # im2col slab (K = 9P)
        ],
        compiler_params=pltpu.CompilerParams(
            dimension_semantics=("parallel",),
            vmem_limit_bytes=48 * 1024 * 1024,
        ),
    )(*inputs)
    return out2d.reshape(N, H, W, OC)


# ---------------------------------------------------------------------------
# Parameters
# ---------------------------------------------------------------------------
def init_bottleneck(key, inplanes, planes, downsample=False, padding_mode="reflect"):
    keys = jax.random.split(key, 4)

    def conv_w(k, cin, cout, ks):
        fan_in = cin * ks * ks
        w = jax.random.normal(k, (cout, cin, ks, ks), jnp.float32) * (2.0 / fan_in) ** 0.5
        # Round weights through bf16 once so the kernel and the f32 reference
        # use numerically identical weights.
        return w.astype(jnp.bfloat16).astype(jnp.float32)

    w1 = conv_w(keys[0], inplanes, planes, 1)
    w2 = conv_w(keys[1], planes, planes, 3)
    w3 = conv_w(keys[2], planes, planes * 4, 1)
    oc = planes * 4
    p = {
        "planes": planes, "inplanes": inplanes, "padding_mode": padding_mode,
        # OIHW copies for the pure-JAX reference
        "w1_oihw": w1, "w2_oihw": w2, "w3_oihw": w3,
        # GEMM-ready bf16 layouts for the kernel
        "w1": w1[:, :, 0, 0].T.astype(jnp.bfloat16),                               # (Cin, P)
        "w2": jnp.transpose(w2, (2, 3, 1, 0)).reshape(9 * planes, planes).astype(jnp.bfloat16),  # (9P, P)
        "w3": w3[:, :, 0, 0].T.astype(jnp.bfloat16),                               # (P, 4P)
        "g1": jnp.ones((1, planes), jnp.float32), "b1": jnp.zeros((1, planes), jnp.float32),
        "g2": jnp.ones((1, planes), jnp.float32), "b2": jnp.zeros((1, planes), jnp.float32),
        "g3": jnp.ones((1, oc), jnp.float32), "b3": jnp.zeros((1, oc), jnp.float32),
    }
    if downsample:
        wd = conv_w(keys[3], inplanes, oc, 1)
        p["wd_oihw"] = wd
        p["wd"] = wd[:, :, 0, 0].T.astype(jnp.bfloat16)                            # (Cin, 4P)
        p["gd"] = jnp.ones((1, oc), jnp.float32)
        p["bd"] = jnp.zeros((1, oc), jnp.float32)
    return p


# ---------------------------------------------------------------------------
# Pure-JAX f32 reference (correctness check only)
# ---------------------------------------------------------------------------
def _ref_conv(x, w_oihw, padding, mode):
    if padding > 0:
        pm = "reflect" if mode == "reflect" else "constant"
        x = jnp.pad(x, ((0, 0), (padding, padding), (padding, padding), (0, 0)), mode=pm)
    return jax.lax.conv_general_dilated(
        x, w_oihw, window_strides=(1, 1), padding="VALID",
        dimension_numbers=("NHWC", "OIHW", "NHWC"),
        precision=jax.lax.Precision.HIGHEST)


def _ref_gn(y):
    N, H, W, C = y.shape
    G, Cg = GN_GROUPS, C // GN_GROUPS
    yr = y.reshape(N, H * W, G, Cg)
    mean = yr.mean(axis=(1, 3), keepdims=True)
    var = ((yr - mean) ** 2).mean(axis=(1, 3), keepdims=True)
    return ((yr - mean) * jax.lax.rsqrt(var + GN_EPS)).reshape(N, H, W, C)


def _ref_bottleneck(p, x):
    out = jnp.maximum(_ref_gn(_ref_conv(x, p["w1_oihw"], 0, "zeros")), 0.0)
    out = jnp.maximum(_ref_gn(_ref_conv(out, p["w2_oihw"], 1, p["padding_mode"])), 0.0)
    out = _ref_gn(_ref_conv(out, p["w3_oihw"], 0, "zeros"))
    if "wd_oihw" in p:
        residual = _ref_gn(_ref_conv(x, p["wd_oihw"], 0, "zeros"))
    else:
        residual = x
    return jnp.maximum(out + residual, 0.0)


# ---------------------------------------------------------------------------
if __name__ == "__main__":
    planes = 32
    k_params, k_x = jax.random.split(jax.random.PRNGKey(0))
    kp1, kp2 = jax.random.split(k_params)
    kx1, kx2 = jax.random.split(k_x)

    # Plain bottleneck (identity residual, inplanes == planes*4).
    p_plain = init_bottleneck(kp1, 4 * planes, planes, downsample=False)
    # Bottleneck with 1x1 projection downsample (channel change).
    p_proj = init_bottleneck(kp2, 64, planes, downsample=True)

    x1 = jax.random.normal(kx1, (2, 4 * planes, 16, 16), jnp.float32)   # NCHW like PyTorch
    x2 = jax.random.normal(kx2, (2, 64, 16, 16), jnp.float32)

    def run(params, x_nchw):
        x_nhwc = jnp.transpose(x_nchw, (0, 2, 3, 1))      # layout change once at boundary
        y = bottleneck_forward(params, x_nhwc)
        return jnp.transpose(y, (0, 3, 1, 2))

    fwd_plain = jax.jit(lambda x: run(p_plain, x))
    fwd_proj = jax.jit(lambda x: run(p_proj, x))
    y1 = jax.block_until_ready(fwd_plain(x1))
    y2 = jax.block_until_ready(fwd_proj(x2))

    assert y1.shape == (2, 4 * planes, 16, 16), y1.shape
    assert y2.shape == (2, 4 * planes, 16, 16), y2.shape
    assert bool(jnp.all(jnp.isfinite(y1))) and bool(jnp.all(jnp.isfinite(y2)))

    def ref_run(params, x_nchw):
        x_nhwc = jnp.transpose(x_nchw, (0, 2, 3, 1))
        return jnp.transpose(_ref_bottleneck(params, x_nhwc), (0, 3, 1, 2))

    r1 = ref_run(p_plain, x1)
    r2 = ref_run(p_proj, x2)
    err1 = float(jnp.max(jnp.abs(y1 - r1)))
    err2 = float(jnp.max(jnp.abs(y2 - r2)))
    assert err1 < 0.2, f"plain bottleneck max err {err1}"
    assert err2 < 0.2, f"proj bottleneck max err {err2}"

    print("KERNEL_OK")
</pallas_src>

<mosaic_0001>
module attributes {stable_mosaic.version = 11 : i64} {
  func.func @kernel(%arg0: i32, %arg1: memref<256x128xf32, #tpu.memory_space<vmem>>, %arg2: memref<128x32xbf16, #tpu.memory_space<vmem>>, %arg3: memref<1x32xf32, #tpu.memory_space<vmem>>, %arg4: memref<1x32xf32, #tpu.memory_space<vmem>>, %arg5: memref<288x32xbf16, #tpu.memory_space<vmem>>, %arg6: memref<1x32xf32, #tpu.memory_space<vmem>>, %arg7: memref<1x32xf32, #tpu.memory_space<vmem>>, %arg8: memref<32x128xbf16, #tpu.memory_space<vmem>>, %arg9: memref<1x128xf32, #tpu.memory_space<vmem>>, %arg10: memref<1x128xf32, #tpu.memory_space<vmem>>, %arg11: memref<256x128xf32, #tpu.memory_space<vmem>>, %arg12: memref<18x18x32xbf16, #tpu.memory_space<vmem>>, %arg13: memref<256x288xbf16, #tpu.memory_space<vmem>>) attributes {dimension_semantics = [#tpu.dimension_semantics<parallel>], iteration_bounds = array<i64: 2>, scalar_prefetch = 0 : i64, scratch_operands = 2 : i64, tpu.core_type = #tpu.core_type<tc>, window_params = [{transform_indices = @transform_0, window_bounds = array<i64: 256, 128>}, {pipeline_mode = #tpu.pipeline_mode<synchronous>, transform_indices = @transform_1, window_bounds = array<i64: 128, 32>}, {pipeline_mode = #tpu.pipeline_mode<synchronous>, transform_indices = @transform_2, window_bounds = array<i64: 1, 32>}, {pipeline_mode = #tpu.pipeline_mode<synchronous>, transform_indices = @transform_3, window_bounds = array<i64: 1, 32>}, {pipeline_mode = #tpu.pipeline_mode<synchronous>, transform_indices = @transform_4, window_bounds = array<i64: 288, 32>}, {pipeline_mode = #tpu.pipeline_mode<synchronous>, transform_indices = @transform_5, window_bounds = array<i64: 1, 32>}, {pipeline_mode = #tpu.pipeline_mode<synchronous>, transform_indices = @transform_6, window_bounds = array<i64: 1, 32>}, {pipeline_mode = #tpu.pipeline_mode<synchronous>, transform_indices = @transform_7, window_bounds = array<i64: 32, 128>}, {pipeline_mode = #tpu.pipeline_mode<synchronous>, transform_indices = @transform_8, window_bounds = array<i64: 1, 128>}, {pipeline_mode = #tpu.pipeline_mode<synchronous>, transform_indices = @transform_9, window_bounds = array<i64: 1, 128>}, {transform_indices = @transform_10, window_bounds = array<i64: 256, 128>}]} {
    %c0 = arith.constant 0 : index
    %c0_0 = arith.constant 0 : index
    %0 = vector.load %arg1[%c0, %c0_0] : memref<256x128xf32, #tpu.memory_space<vmem>>, vector<256x128xf32>
    %1 = arith.truncf %0 : vector<256x128xf32> to vector<256x128xbf16>
    %c0_1 = arith.constant 0 : index
    %c0_2 = arith.constant 0 : index
    %2 = vector.load %arg2[%c0_1, %c0_2] : memref<128x32xbf16, #tpu.memory_space<vmem>>, vector<128x32xbf16>
    %cst = arith.constant dense<0.000000e+00> : vector<256x32xf32>
    %3 = tpu.matmul %1, %2, %cst {dimension_numbers = #tpu.dot_dimension_numbers<[1], [0], [0], [1], [0, 0, 1, 1], [], []>} : vector<256x128xbf16>, vector<128x32xbf16>, vector<256x32xf32> -> vector<256x32xf32>
    %c0_3 = arith.constant 0 : index
    %c0_4 = arith.constant 0 : index
    %4 = vector.load %arg3[%c0_3, %c0_4] : memref<1x32xf32, #tpu.memory_space<vmem>>, vector<1x32xf32>
    %c0_5 = arith.constant 0 : index
    %c0_6 = arith.constant 0 : index
    %5 = vector.load %arg4[%c0_5, %c0_6] : memref<1x32xf32, #tpu.memory_space<vmem>>, vector<1x32xf32>
    %cst_7 = arith.constant dense<0.000000e+00> : vector<32xf32>
    %6 = vector.multi_reduction <add>, %3, %cst_7 [0] : vector<256x32xf32> to vector<32xf32>
    %7 = vector.shape_cast %6 : vector<32xf32> to vector<1x32xf32>
    %8 = arith.mulf %3, %3 : vector<256x32xf32>
    %cst_8 = arith.constant dense<0.000000e+00> : vector<32xf32>
    %9 = vector.multi_reduction <add>, %8, %cst_8 [0] : vector<256x32xf32> to vector<32xf32>
    %10 = vector.shape_cast %9 : vector<32xf32> to vector<1x32xf32>
    %11 = tpu.iota {dimensions = array<i32: 1>} : vector<1x32xi32>
    %cst_9 = arith.constant 0.000000e+00 : f32
    %12 = vector.broadcast %cst_9 : f32 to vector<1x32xf32>
    %cst_10 = arith.constant 0.000000e+00 : f32
    %13 = vector.broadcast %cst_10 : f32 to vector<1x32xf32>
    %14 = vector.extract_strided_slice %7 {offsets = [0, 0], sizes = [1, 4], strides = [1, 1]} : vector<1x32xf32> to vector<1x4xf32>
    %cst_11 = arith.constant dense<0.000000e+00> : vector<1xf32>
    %15 = vector.multi_reduction <add>, %14, %cst_11 [1] : vector<1x4xf32> to vector<1xf32>
    %16 = vector.shape_cast %15 : vector<1xf32> to vector<1x1xf32>
    %cst_12 = arith.constant 9.765625E-4 : f32
    %17 = vector.broadcast %cst_12 : f32 to vector<1x1xf32>
    %18 = arith.mulf %16, %17 : vector<1x1xf32>
    %19 = vector.extract_strided_slice %10 {offsets = [0, 0], sizes = [1, 4], strides = [1, 1]} : vector<1x32xf32> to vector<1x4xf32>
    %cst_13 = arith.constant dense<0.000000e+00> : vector<1xf32>
    %20 = vector.multi_reduction <add>, %19, %cst_13 [1] : vector<1x4xf32> to vector<1xf32>
    %21 = vector.shape_cast %20 : vector<1xf32> to vector<1x1xf32>
    %cst_14 = arith.constant 9.765625E-4 : f32
    %22 = vector.broadcast %cst_14 : f32 to vector<1x1xf32>
    %23 = arith.mulf %21, %22 : vector<1x1xf32>
    %c0_i32 = arith.constant 0 : i32
    %24 = vector.broadcast %c0_i32 : i32 to vector<1x32xi32>
    %25 = arith.cmpi sge, %11, %24 : vector<1x32xi32>
    %c4_i32 = arith.constant 4 : i32
    %26 = vector.broadcast %c4_i32 : i32 to vector<1x32xi32>
    %27 = arith.cmpi slt, %11, %26 : vector<1x32xi32>
    %28 = arith.andi %25, %27 : vector<1x32xi1>
    %29 = vector.shape_cast %18 : vector<1x1xf32> to vector<1x1xf32>
    %30 = vector.broadcast %29 : vector<1x1xf32> to vector<1x32xf32>
    %31 = arith.select %28, %30, %12 : vector<1x32xi1>, vector<1x32xf32>
    %32 = vector.shape_cast %23 : vector<1x1xf32> to vector<1x1xf32>
    %33 = vector.broadcast %32 : vector<1x1xf32> to vector<1x32xf32>
    %34 = arith.select %28, %33, %13 : vector<1x32xi1>, vector<1x32xf32>
    %35 = vector.extract_strided_slice %7 {offsets = [0, 4], sizes = [1, 4], strides = [1, 1]} : vector<1x32xf32> to vector<1x4xf32>
    %cst_15 = arith.constant dense<0.000000e+00> : vector<1xf32>
    %36 = vector.multi_reduction <add>, %35, %cst_15 [1] : vector<1x4xf32> to vector<1xf32>
    %37 = vector.shape_cast %36 : vector<1xf32> to vector<1x1xf32>
    %cst_16 = arith.constant 9.765625E-4 : f32
    %38 = vector.broadcast %cst_16 : f32 to vector<1x1xf32>
    %39 = arith.mulf %37, %38 : vector<1x1xf32>
    %40 = vector.extract_strided_slice %10 {offsets = [0, 4], sizes = [1, 4], strides = [1, 1]} : vector<1x32xf32> to vector<1x4xf32>
    %cst_17 = arith.constant dense<0.000000e+00> : vector<1xf32>
    %41 = vector.multi_reduction <add>, %40, %cst_17 [1] : vector<1x4xf32> to vector<1xf32>
    %42 = vector.shape_cast %41 : vector<1xf32> to vector<1x1xf32>
    %cst_18 = arith.constant 9.765625E-4 : f32
    %43 = vector.broadcast %cst_18 : f32 to vector<1x1xf32>
    %44 = arith.mulf %42, %43 : vector<1x1xf32>
    %c4_i32_19 = arith.constant 4 : i32
    %45 = vector.broadcast %c4_i32_19 : i32 to vector<1x32xi32>
    %46 = arith.cmpi sge, %11, %45 : vector<1x32xi32>
    %c8_i32 = arith.constant 8 : i32
    %47 = vector.broadcast %c8_i32 : i32 to vector<1x32xi32>
    %48 = arith.cmpi slt, %11, %47 : vector<1x32xi32>
    %49 = arith.andi %46, %48 : vector<1x32xi1>
    %50 = vector.shape_cast %39 : vector<1x1xf32> to vector<1x1xf32>
    %51 = vector.broadcast %50 : vector<1x1xf32> to vector<1x32xf32>
    %52 = arith.select %49, %51, %31 : vector<1x32xi1>, vector<1x32xf32>
    %53 = vector.shape_cast %44 : vector<1x1xf32> to vector<1x1xf32>
    %54 = vector.broadcast %53 : vector<1x1xf32> to vector<1x32xf32>
    %55 = arith.select %49, %54, %34 : vector<1x32xi1>, vector<1x32xf32>
    %56 = vector.extract_strided_slice %7 {offsets = [0, 8], sizes = [1, 4], strides = [1, 1]} : vector<1x32xf32> to vector<1x4xf32>
    %cst_20 = arith.constant dense<0.000000e+00> : vector<1xf32>
    %57 = vector.multi_reduction <add>, %56, %cst_20 [1] : vector<1x4xf32> to vector<1xf32>
    %58 = vector.shape_cast %57 : vector<1xf32> to vector<1x1xf32>
    %cst_21 = arith.constant 9.765625E-4 : f32
    %59 = vector.broadcast %cst_21 : f32 to vector<1x1xf32>
    %60 = arith.mulf %58, %59 : vector<1x1xf32>
    %61 = vector.extract_strided_slice %10 {offsets = [0, 8], sizes = [1, 4], strides = [1, 1]} : vector<1x32xf32> to vector<1x4xf32>
    %cst_22 = arith.constant dense<0.000000e+00> : vector<1xf32>
    %62 = vector.multi_reduction <add>, %61, %cst_22 [1] : vector<1x4xf32> to vector<1xf32>
    %63 = vector.shape_cast %62 : vector<1xf32> to vector<1x1xf32>
    %cst_23 = arith.constant 9.765625E-4 : f32
    %64 = vector.broadcast %cst_23 : f32 to vector<1x1xf32>
    %65 = arith.mulf %63, %64 : vector<1x1xf32>
    %c8_i32_24 = arith.constant 8 : i32
    %66 = vector.broadcast %c8_i32_24 : i32 to vector<1x32xi32>
    %67 = arith.cmpi sge, %11, %66 : vector<1x32xi32>
    %c12_i32 = arith.constant 12 : i32
    %68 = vector.broadcast %c12_i32 : i32 to vector<1x32xi32>
    %69 = arith.cmpi slt, %11, %68 : vector<1x32xi32>
    %70 = arith.andi %67, %69 : vector<1x32xi1>
    %71 = vector.shape_cast %60 : vector<1x1xf32> to vector<1x1xf32>
    %72 = vector.broadcast %71 : vector<1x1xf32> to vector<1x32xf32>
    %73 = arith.select %70, %72, %52 : vector<1x32xi1>, vector<1x32xf32>
    %74 = vector.shape_cast %65 : vector<1x1xf32> to vector<1x1xf32>
    %75 = vector.broadcast %74 : vector<1x1xf32> to vector<1x32xf32>
    %76 = arith.select %70, %75, %55 : vector<1x32xi1>, vector<1x32xf32>
    %77 = vector.extract_strided_slice %7 {offsets = [0, 12], sizes = [1, 4], strides = [1, 1]} : vector<1x32xf32> to vector<1x4xf32>
    %cst_25 = arith.constant dense<0.000000e+00> : vector<1xf32>
    %78 = vector.multi_reduction <add>, %77, %cst_25 [1] : vector<1x4xf32> to vector<1xf32>
    %79 = vector.shape_cast %78 : vector<1xf32> to vector<1x1xf32>
    %cst_26 = arith.constant 9.765625E-4 : f32
    %80 = vector.broadcast %cst_26 : f32 to vector<1x1xf32>
    %81 = arith.mulf %79, %80 : vector<1x1xf32>
    %82 = vector.extract_strided_slice %10 {offsets = [0, 12], sizes = [1, 4], strides = [1, 1]} : vector<1x32xf32> to vector<1x4xf32>
    %cst_27 = arith.constant dense<0.000000e+00> : vector<1xf32>
    %83 = vector.multi_reduction <add>, %82, %cst_27 [1] : vector<1x4xf32> to vector<1xf32>
    %84 = vector.shape_cast %83 : vector<1xf32> to vector<1x1xf32>
    %cst_28 = arith.constant 9.765625E-4 : f32
    %85 = vector.broadcast %cst_28 : f32 to vector<1x1xf32>
    %86 = arith.mulf %84, %85 : vector<1x1xf32>
    %c12_i32_29 = arith.constant 12 : i32
    %87 = vector.broadcast %c12_i32_29 : i32 to vector<1x32xi32>
    %88 = arith.cmpi sge, %11, %87 : vector<1x32xi32>
    %c16_i32 = arith.constant 16 : i32
    %89 = vector.broadcast %c16_i32 : i32 to vector<1x32xi32>
    %90 = arith.cmpi slt, %11, %89 : vector<1x32xi32>
    %91 = arith.andi %88, %90 : vector<1x32xi1>
    %92 = vector.shape_cast %81 : vector<1x1xf32> to vector<1x1xf32>
    %93 = vector.broadcast %92 : vector<1x1xf32> to vector<1x32xf32>
    %94 = arith.select %91, %93, %73 : vector<1x32xi1>, vector<1x32xf32>
    %95 = vector.shape_cast %86 : vector<1x1xf32> to vector<1x1xf32>
    %96 = vector.broadcast %95 : vector<1x1xf32> to vector<1x32xf32>
    %97 = arith.select %91, %96, %76 : vector<1x32xi1>, vector<1x32xf32>
    %98 = vector.extract_strided_slice %7 {offsets = [0, 16], sizes = [1, 4], strides = [1, 1]} : vector<1x32xf32> to vector<1x4xf32>
    %cst_30 = arith.constant dense<0.000000e+00> : vector<1xf32>
    %99 = vector.multi_reduction <add>, %98, %cst_30 [1] : vector<1x4xf32> to vector<1xf32>
    %100 = vector.shape_cast %99 : vector<1xf32> to vector<1x1xf32>
    %cst_31 = arith.constant 9.765625E-4 : f32
    %101 = vector.broadcast %cst_31 : f32 to vector<1x1xf32>
    %102 = arith.mulf %100, %101 : vector<1x1xf32>
    %103 = vector.extract_strided_slice %10 {offsets = [0, 16], sizes = [1, 4], strides = [1, 1]} : vector<1x32xf32> to vector<1x4xf32>
    %cst_32 = arith.constant dense<0.000000e+00> : vector<1xf32>
    %104 = vector.multi_reduction <add>, %103, %cst_32 [1] : vector<1x4xf32> to vector<1xf32>
    %105 = vector.shape_cast %104 : vector<1xf32> to vector<1x1xf32>
    %cst_33 = arith.constant 9.765625E-4 : f32
    %106 = vector.broadcast %cst_33 : f32 to vector<1x1xf32>
    %107 = arith.mulf %105, %106 : vector<1x1xf32>
    %c16_i32_34 = arith.constant 16 : i32
    %108 = vector.broadcast %c16_i32_34 : i32 to vector<1x32xi32>
    %109 = arith.cmpi sge, %11, %108 : vector<1x32xi32>
    %c20_i32 = arith.constant 20 : i32
    %110 = vector.broadcast %c20_i32 : i32 to vector<1x32xi32>
    %111 = arith.cmpi slt, %11, %110 : vector<1x32xi32>
    %112 = arith.andi %109, %111 : vector<1x32xi1>
    %113 = vector.shape_cast %102 : vector<1x1xf32> to vector<1x1xf32>
    %114 = vector.broadcast %113 : vector<1x1xf32> to vector<1x32xf32>
    %115 = arith.select %112, %114, %94 : vector<1x32xi1>, vector<1x32xf32>
    %116 = vector.shape_cast %107 : vector<1x1xf32> to vector<1x1xf32>
    %117 = vector.broadcast %116 : vector<1x1xf32> to vector<1x32xf32>
    %118 = arith.select %112, %117, %97 : vector<1x32xi1>, vector<1x32xf32>
    %119 = vector.extract_strided_slice %7 {offsets = [0, 20], sizes = [1, 4], strides = [1, 1]} : vector<1x32xf32> to vector<1x4xf32>
    %cst_35 = arith.constant dense<0.000000e+00> : vector<1xf32>
    %120 = vector.multi_reduction <add>, %119, %cst_35 [1] : vector<1x4xf32> to vector<1xf32>
    %121 = vector.shape_cast %120 : vector<1xf32> to vector<1x1xf32>
    %cst_36 = arith.constant 9.765625E-4 : f32
    %122 = vector.broadcast %cst_36 : f32 to vector<1x1xf32>
    %123 = arith.mulf %121, %122 : vector<1x1xf32>
    %124 = vector.extract_strided_slice %10 {offsets = [0, 20], sizes = [1, 4], strides = [1, 1]} : vector<1x32xf32> to vector<1x4xf32>
    %cst_37 = arith.constant dense<0.000000e+00> : vector<1xf32>
    %125 = vector.multi_reduction <add>, %124, %cst_37 [1] : vector<1x4xf32> to vector<1xf32>
    %126 = vector.shape_cast %125 : vector<1xf32> to vector<1x1xf32>
    %cst_38 = arith.constant 9.765625E-4 : f32
    %127 = vector.broadcast %cst_38 : f32 to vector<1x1xf32>
    %128 = arith.mulf %126, %127 : vector<1x1xf32>
    %c20_i32_39 = arith.constant 20 : i32
    %129 = vector.broadcast %c20_i32_39 : i32 to vector<1x32xi32>
    %130 = arith.cmpi sge, %11, %129 : vector<1x32xi32>
    %c24_i32 = arith.constant 24 : i32
    %131 = vector.broadcast %c24_i32 : i32 to vector<1x32xi32>
    %132 = arith.cmpi slt, %11, %131 : vector<1x32xi32>
    %133 = arith.andi %130, %132 : vector<1x32xi1>
    %134 = vector.shape_cast %123 : vector<1x1xf32> to vector<1x1xf32>
    %135 = vector.broadcast %134 : vector<1x1xf32> to vector<1x32xf32>
    %136 = arith.select %133, %135, %115 : vector<1x32xi1>, vector<1x32xf32>
    %137 = vector.shape_cast %128 : vector<1x1xf32> to vector<1x1xf32>
    %138 = vector.broadcast %137 : vector<1x1xf32> to vector<1x32xf32>
    %139 = arith.select %133, %138, %118 : vector<1x32xi1>, vector<1x32xf32>
    %140 = vector.extract_strided_slice %7 {offsets = [0, 24], sizes = [1, 4], strides = [1, 1]} : vector<1x32xf32> to vector<1x4xf32>
    %cst_40 = arith.constant dense<0.000000e+00> : vector<1xf32>
    %141 = vector.multi_reduction <add>, %140, %cst_40 [1] : vector<1x4xf32> to vector<1xf32>
    %142 = vector.shape_cast %141 : vector<1xf32> to vector<1x1xf32>
    %cst_41 = arith.constant 9.765625E-4 : f32
    %143 = vector.broadcast %cst_41 : f32 to vector<1x1xf32>
    %144 = arith.mulf %142, %143 : vector<1x1xf32>
    %145 = vector.extract_strided_slice %10 {offsets = [0, 24], sizes = [1, 4], strides = [1, 1]} : vector<1x32xf32> to vector<1x4xf32>
    %cst_42 = arith.constant dense<0.000000e+00> : vector<1xf32>
    %146 = vector.multi_reduction <add>, %145, %cst_42 [1] : vector<1x4xf32> to vector<1xf32>
    %147 = vector.shape_cast %146 : vector<1xf32> to vector<1x1xf32>
    %cst_43 = arith.constant 9.765625E-4 : f32
    %148 = vector.broadcast %cst_43 : f32 to vector<1x1xf32>
    %149 = arith.mulf %147, %148 : vector<1x1xf32>
    %c24_i32_44 = arith.constant 24 : i32
    %150 = vector.broadcast %c24_i32_44 : i32 to vector<1x32xi32>
    %151 = arith.cmpi sge, %11, %150 : vector<1x32xi32>
    %c28_i32 = arith.constant 28 : i32
    %152 = vector.broadcast %c28_i32 : i32 to vector<1x32xi32>
    %153 = arith.cmpi slt, %11, %152 : vector<1x32xi32>
    %154 = arith.andi %151, %153 : vector<1x32xi1>
    %155 = vector.shape_cast %144 : vector<1x1xf32> to vector<1x1xf32>
    %156 = vector.broadcast %155 : vector<1x1xf32> to vector<1x32xf32>
    %157 = arith.select %154, %156, %136 : vector<1x32xi1>, vector<1x32xf32>
    %158 = vector.shape_cast %149 : vector<1x1xf32> to vector<1x1xf32>
    %159 = vector.broadcast %158 : vector<1x1xf32> to vector<1x32xf32>
    %160 = arith.select %154, %159, %139 : vector<1x32xi1>, vector<1x32xf32>
    %161 = vector.extract_strided_slice %7 {offsets = [0, 28], sizes = [1, 4], strides = [1, 1]} : vector<1x32xf32> to vector<1x4xf32>
    %cst_45 = arith.constant dense<0.000000e+00> : vector<1xf32>
    %162 = vector.multi_reduction <add>, %161, %cst_45 [1] : vector<1x4xf32> to vector<1xf32>
    %163 = vector.shape_cast %162 : vector<1xf32> to vector<1x1xf32>
    %cst_46 = arith.constant 9.765625E-4 : f32
    %164 = vector.broadcast %cst_46 : f32 to vector<1x1xf32>
    %165 = arith.mulf %163, %164 : vector<1x1xf32>
    %166 = vector.extract_strided_slice %10 {offsets = [0, 28], sizes = [1, 4], strides = [1, 1]} : vector<1x32xf32> to vector<1x4xf32>
    %cst_47 = arith.constant dense<0.000000e+00> : vector<1xf32>
    %167 = vector.multi_reduction <add>, %166, %cst_47 [1] : vector<1x4xf32> to vector<1xf32>
    %168 = vector.shape_cast %167 : vector<1xf32> to vector<1x1xf32>
    %cst_48 = arith.constant 9.765625E-4 : f32
    %169 = vector.broadcast %cst_48 : f32 to vector<1x1xf32>
    %170 = arith.mulf %168, %169 : vector<1x1xf32>
    %c28_i32_49 = arith.constant 28 : i32
    %171 = vector.broadcast %c28_i32_49 : i32 to vector<1x32xi32>
    %172 = arith.cmpi sge, %11, %171 : vector<1x32xi32>
    %c32_i32 = arith.constant 32 : i32
    %173 = vector.broadcast %c32_i32 : i32 to vector<1x32xi32>
    %174 = arith.cmpi slt, %11, %173 : vector<1x32xi32>
    %175 = arith.andi %172, %174 : vector<1x32xi1>
    %176 = vector.shape_cast %165 : vector<1x1xf32> to vector<1x1xf32>
    %177 = vector.broadcast %176 : vector<1x1xf32> to vector<1x32xf32>
    %178 = arith.select %175, %177, %157 : vector<1x32xi1>, vector<1x32xf32>
    %179 = vector.shape_cast %170 : vector<1x1xf32> to vector<1x1xf32>
    %180 = vector.broadcast %179 : vector<1x1xf32> to vector<1x32xf32>
    %181 = arith.select %175, %180, %160 : vector<1x32xi1>, vector<1x32xf32>
    %182 = arith.mulf %178, %178 : vector<1x32xf32>
    %183 = arith.subf %181, %182 : vector<1x32xf32>
    %cst_50 = arith.constant 0.000000e+00 : f32
    %184 = vector.broadcast %cst_50 : f32 to vector<1x32xf32>
    %185 = arith.maximumf %183, %184 : vector<1x32xf32>
    %cst_51 = arith.constant 9.99999974E-6 : f32
    %186 = vector.broadcast %cst_51 : f32 to vector<1x32xf32>
    %187 = arith.addf %185, %186 : vector<1x32xf32>
    %188 = math.rsqrt %187 : vector<1x32xf32>
    %189 = arith.mulf %188, %4 : vector<1x32xf32>
    %190 = arith.mulf %178, %189 : vector<1x32xf32>
    %191 = arith.subf %5, %190 : vector<1x32xf32>
    %192 = vector.broadcast %189 : vector<1x32xf32> to vector<256x32xf32>
    %193 = arith.mulf %3, %192 : vector<256x32xf32>
    %194 = vector.broadcast %191 : vector<1x32xf32> to vector<256x32xf32>
    %195 = arith.addf %193, %194 : vector<256x32xf32>
    %cst_52 = arith.constant 0.000000e+00 : f32
    %196 = vector.broadcast %cst_52 : f32 to vector<256x32xf32>
    %197 = arith.maximumf %195, %196 : vector<256x32xf32>
    %198 = arith.truncf %197 : vector<256x32xf32> to vector<256x32xbf16>
    %199 = vector.shape_cast %198 : vector<256x32xbf16> to vector<16x16x32xbf16>
    %c1 = arith.constant 1 : index
    %c1_53 = arith.constant 1 : index
    %c0_54 = arith.constant 0 : index
    %200 = vector.load %arg12[%c1, %c1_53, %c0_54] : memref<18x18x32xbf16, #tpu.memory_space<vmem>>, vector<16x16x32xbf16>
    tpu.vector_store %arg12[%c1, %c1_53, %c0_54], %199 {strides = array<i32>} : memref<18x18x32xbf16, #tpu.memory_space<vmem>>, vector<16x16x32xbf16>,
    %201 = vector.extract_strided_slice %199 {offsets = [1, 0, 0], sizes = [1, 16, 32], strides = [1, 1, 1]} : vector<16x16x32xbf16> to vector<1x16x32xbf16>
    %c0_55 = arith.constant 0 : index
    %c1_56 = arith.constant 1 : index
    %c0_57 = arith.constant 0 : index
    %202 = vector.load %arg12[%c0_55, %c1_56, %c0_57] : memref<18x18x32xbf16, #tpu.memory_space<vmem>>, vector<1x16x32xbf16>
    tpu.vector_store %arg12[%c0_55, %c1_56, %c0_57], %201 {strides = array<i32>} : memref<18x18x32xbf16, #tpu.memory_space<vmem>>, vector<1x16x32xbf16>,
    %203 = vector.extract_strided_slice %199 {offsets = [14, 0, 0], sizes = [1, 16, 32], strides = [1, 1, 1]} : vector<16x16x32xbf16> to vector<1x16x32xbf16>
    %c17 = arith.constant 17 : index
    %c1_58 = arith.constant 1 : index
    %c0_59 = arith.constant 0 : index
    %204 = vector.load %arg12[%c17, %c1_58, %c0_59] : memref<18x18x32xbf16, #tpu.memory_space<vmem>>, vector<1x16x32xbf16>
    tpu.vector_store %arg12[%c17, %c1_58, %c0_59], %203 {strides = array<i32>} : memref<18x18x32xbf16, #tpu.memory_space<vmem>>, vector<1x16x32xbf16>,
    %c0_60 = arith.constant 0 : index
    %c2 = arith.constant 2 : index
    %c0_61 = arith.constant 0 : index
    %205 = vector.load %arg12[%c0_60, %c2, %c0_61] : memref<18x18x32xbf16, #tpu.memory_space<vmem>>, vector<18x1x32xbf16>
    %c0_62 = arith.constant 0 : index
    %c0_63 = arith.constant 0 : index
    %c0_64 = arith.constant 0 : index
    %206 = vector.load %arg12[%c0_62, %c0_63, %c0_64] : memref<18x18x32xbf16, #tpu.memory_space<vmem>>, vector<18x1x32xbf16>
    tpu.vector_store %arg12[%c0_62, %c0_63, %c0_64], %205 {strides = array<i32>} : memref<18x18x32xbf16, #tpu.memory_space<vmem>>, vector<18x1x32xbf16>,
    %c0_65 = arith.constant 0 : index
    %c15 = arith.constant 15 : index
    %c0_66 = arith.constant 0 : index
    %207 = vector.load %arg12[%c0_65, %c15, %c0_66] : memref<18x18x32xbf16, #tpu.memory_space<vmem>>, vector<18x1x32xbf16>
    %c0_67 = arith.constant 0 : index
    %c17_68 = arith.constant 17 : index
    %c0_69 = arith.constant 0 : index
    %208 = vector.load %arg12[%c0_67, %c17_68, %c0_69] : memref<18x18x32xbf16, #tpu.memory_space<vmem>>, vector<18x1x32xbf16>
    tpu.vector_store %arg12[%c0_67, %c17_68, %c0_69], %207 {strides = array<i32>} : memref<18x18x32xbf16, #tpu.memory_space<vmem>>, vector<18x1x32xbf16>,
    %c0_70 = arith.constant 0 : index
    %c0_71 = arith.constant 0 : index
    %c0_72 = arith.constant 0 : index
    %209 = vector.load %arg12[%c0_70, %c0_71, %c0_72] : memref<18x18x32xbf16, #tpu.memory_space<vmem>>, vector<16x16x32xbf16>
    %210 = vector.shape_cast %209 : vector<16x16x32xbf16> to vector<256x32xbf16>
    %c0_73 = arith.constant 0 : index
    %c0_74 = arith.constant 0 : index
    %211 = vector.load %arg13[%c0_73, %c0_74] : memref<256x288xbf16, #tpu.memory_space<vmem>>, vector<256x32xbf16>
    tpu.vector_store %arg13[%c0_73, %c0_74], %210 {strides = array<i32>} : memref<256x288xbf16, #tpu.memory_space<vmem>>, vector<256x32xbf16>,
    %c0_75 = arith.constant 0 : index
    %c1_76 = arith.constant 1 : index
    %c0_77 = arith.constant 0 : index
    %212 = vector.load %arg12[%c0_75, %c1_76, %c0_77] : memref<18x18x32xbf16, #tpu.memory_space<vmem>>, vector<16x16x32xbf16>
    %213 = vector.shape_cast %212 : vector<16x16x32xbf16> to vector<256x32xbf16>
    %c0_78 = arith.constant 0 : index
    %c32 = arith.constant 32 : index
    %214 = vector.load %arg13[%c0_78, %c32] : memref<256x288xbf16, #tpu.memory_space<vmem>>, vector<256x32xbf16>
    tpu.vector_store %arg13[%c0_78, %c32], %213 {strides = array<i32>} : memref<256x288xbf16, #tpu.memory_space<vmem>>, vector<256x32xbf16>,
    %c0_79 = arith.constant 0 : index
    %c2_80 = arith.constant 2 : index
    %c0_81 = arith.constant 0 : index
    %215 = vector.load %arg12[%c0_79, %c2_80, %c0_81] : memref<18x18x32xbf16, #tpu.memory_space<vmem>>, vector<16x16x32xbf16>
    %216 = vector.shape_cast %215 : vector<16x16x32xbf16> to vector<256x32xbf16>
    %c0_82 = arith.constant 0 : index
    %c64 = arith.constant 64 : index
    %217 = vector.load %arg13[%c0_82, %c64] : memref<256x288xbf16, #tpu.memory_space<vmem>>, vector<256x32xbf16>
    tpu.vector_store %arg13[%c0_82, %c64], %216 {strides = array<i32>} : memref<256x288xbf16, #tpu.memory_space<vmem>>, vector<256x32xbf16>,
    %c1_83 = arith.constant 1 : index
    %c0_84 = arith.constant 0 : index
    %c0_85 = arith.constant 0 : index
    %218 = vector.load %arg12[%c1_83, %c0_84, %c0_85] : memref<18x18x32xbf16, #tpu.memory_space<vmem>>, vector<16x16x32xbf16>
    %219 = vector.shape_cast %218 : vector<16x16x32xbf16> to vector<256x32xbf16>
    %c0_86 = arith.constant 0 : index
    %c96 = arith.constant 96 : index
    %220 = vector.load %arg13[%c0_86, %c96] : memref<256x288xbf16, #tpu.memory_space<vmem>>, vector<256x32xbf16>
    tpu.vector_store %arg13[%c0_86, %c96], %219 {strides = array<i32>} : memref<256x288xbf16, #tpu.memory_space<vmem>>, vector<256x32xbf16>,
    %c1_87 = arith.constant 1 : index
    %c1_88 = arith.constant 1 : index
    %c0_89 = arith.constant 0 : index
    %221 = vector.load %arg12[%c1_87, %c1_88, %c0_89] : memref<18x18x32xbf16, #tpu.memory_space<vmem>>, vector<16x16x32xbf16>
    %222 = vector.shape_cast %221 : vector<16x16x32xbf16> to vector<256x32xbf16>
    %c0_90 = arith.constant 0 : index
    %c128 = arith.constant 128 : index
    %223 = vector.load %arg13[%c0_90, %c128] : memref<256x288xbf16, #tpu.memory_space<vmem>>, vector<256x32xbf16>
    tpu.vector_store %arg13[%c0_90, %c128], %222 {strides = array<i32>} : memref<256x288xbf16, #tpu.memory_space<vmem>>, vector<256x32xbf16>,
    %c1_91 = arith.constant 1 : index
    %c2_92 = arith.constant 2 : index
    %c0_93 = arith.constant 0 : index
    %224 = vector.load %arg12[%c1_91, %c2_92, %c0_93] : memref<18x18x32xbf16, #tpu.memory_space<vmem>>, vector<16x16x32xbf16>
    %225 = vector.shape_cast %224 : vector<16x16x32xbf16> to vector<256x32xbf16>
    %c0_94 = arith.constant 0 : index
    %c160 = arith.constant 160 : index
    %226 = vector.load %arg13[%c0_94, %c160] : memref<256x288xbf16, #tpu.memory_space<vmem>>, vector<256x32xbf16>
    tpu.vector_store %arg13[%c0_94, %c160], %225 {strides = array<i32>} : memref<256x288xbf16, #tpu.memory_space<vmem>>, vector<256x32xbf16>,
    %c2_95 = arith.constant 2 : index
    %c0_96 = arith.constant 0 : index
    %c0_97 = arith.constant 0 : index
    %227 = vector.load %arg12[%c2_95, %c0_96, %c0_97] : memref<18x18x32xbf16, #tpu.memory_space<vmem>>, vector<16x16x32xbf16>
    %228 = vector.shape_cast %227 : vector<16x16x32xbf16> to vector<256x32xbf16>
    %c0_98 = arith.constant 0 : index
    %c192 = arith.constant 192 : index
    %229 = vector.load %arg13[%c0_98, %c192] : memref<256x288xbf16, #tpu.memory_space<vmem>>, vector<256x32xbf16>
    tpu.vector_store %arg13[%c0_98, %c192], %228 {strides = array<i32>} : memref<256x288xbf16, #tpu.memory_space<vmem>>, vector<256x32xbf16>,
    %c2_99 = arith.constant 2 : index
    %c1_100 = arith.constant 1 : index
    %c0_101 = arith.constant 0 : index
    %230 = vector.load %arg12[%c2_99, %c1_100, %c0_101] : memref<18x18x32xbf16, #tpu.memory_space<vmem>>, vector<16x16x32xbf16>
    %231 = vector.shape_cast %230 : vector<16x16x32xbf16> to vector<256x32xbf16>
    %c0_102 = arith.constant 0 : index
    %c224 = arith.constant 224 : index
    %232 = vector.load %arg13[%c0_102, %c224] : memref<256x288xbf16, #tpu.memory_space<vmem>>, vector<256x32xbf16>
    tpu.vector_store %arg13[%c0_102, %c224], %231 {strides = array<i32>} : memref<256x288xbf16, #tpu.memory_space<vmem>>, vector<256x32xbf16>,
    %c2_103 = arith.constant 2 : index
    %c2_104 = arith.constant 2 : index
    %c0_105 = arith.constant 0 : index
    %233 = vector.load %arg12[%c2_103, %c2_104, %c0_105] : memref<18x18x32xbf16, #tpu.memory_space<vmem>>, vector<16x16x32xbf16>
    %234 = vector.shape_cast %233 : vector<16x16x32xbf16> to vector<256x32xbf16>
    %c0_106 = arith.constant 0 : index
    %c256 = arith.constant 256 : index
    %235 = vector.load %arg13[%c0_106, %c256] : memref<256x288xbf16, #tpu.memory_space<vmem>>, vector<256x32xbf16>
    tpu.vector_store %arg13[%c0_106, %c256], %234 {strides = array<i32>} : memref<256x288xbf16, #tpu.memory_space<vmem>>, vector<256x32xbf16>,
    %c0_107 = arith.constant 0 : index
    %c0_108 = arith.constant 0 : index
    %236 = vector.load %arg13[%c0_107, %c0_108] : memref<256x288xbf16, #tpu.memory_space<vmem>>, vector<256x288xbf16>
    %c0_109 = arith.constant 0 : index
    %c0_110 = arith.constant 0 : index
    %237 = vector.load %arg5[%c0_109, %c0_110] : memref<288x32xbf16, #tpu.memory_space<vmem>>, vector<288x32xbf16>
    %cst_111 = arith.constant dense<0.000000e+00> : vector<256x32xf32>
    %238 = tpu.matmul %236, %237, %cst_111 {dimension_numbers = #tpu.dot_dimension_numbers<[1], [0], [0], [1], [0, 0, 1, 1], [], []>} : vector<256x288xbf16>, vector<288x32xbf16>, vector<256x32xf32> -> vector<256x32xf32>
    %c0_112 = arith.constant 0 : index
    %c0_113 = arith.constant 0 : index
    %239 = vector.load %arg6[%c0_112, %c0_113] : memref<1x32xf32, #tpu.memory_space<vmem>>, vector<1x32xf32>
    %c0_114 = arith.constant 0 : index
    %c0_115 = arith.constant 0 : index
    %240 = vector.load %arg7[%c0_114, %c0_115] : memref<1x32xf32, #tpu.memory_space<vmem>>, vector<1x32xf32>
    %cst_116 = arith.constant dense<0.000000e+00> : vector<32xf32>
    %241 = vector.multi_reduction <add>, %238, %cst_116 [0] : vector<256x32xf32> to vector<32xf32>
    %242 = vector.shape_cast %241 : vector<32xf32> to vector<1x32xf32>
    %243 = arith.mulf %238, %238 : vector<256x32xf32>
    %cst_117 = arith.constant dense<0.000000e+00> : vector<32xf32>
    %244 = vector.multi_reduction <add>, %243, %cst_117 [0] : vector<256x32xf32> to vector<32xf32>
    %245 = vector.shape_cast %244 : vector<32xf32> to vector<1x32xf32>
    %246 = tpu.iota {dimensions = array<i32: 1>} : vector<1x32xi32>
    %cst_118 = arith.constant 0.000000e+00 : f32
    %247 = vector.broadcast %cst_118 : f32 to vector<1x32xf32>
    %cst_119 = arith.constant 0.000000e+00 : f32
    %248 = vector.broadcast %cst_119 : f32 to vector<1x32xf32>
    %249 = vector.extract_strided_slice %242 {offsets = [0, 0], sizes = [1, 4], strides = [1, 1]} : vector<1x32xf32> to vector<1x4xf32>
    %cst_120 = arith.constant dense<0.000000e+00> : vector<1xf32>
    %250 = vector.multi_reduction <add>, %249, %cst_120 [1] : vector<1x4xf32> to vector<1xf32>
    %251 = vector.shape_cast %250 : vector<1xf32> to vector<1x1xf32>
    %cst_121 = arith.constant 9.765625E-4 : f32
    %252 = vector.broadcast %cst_121 : f32 to vector<1x1xf32>
    %253 = arith.mulf %251, %252 : vector<1x1xf32>
    %254 = vector.extract_strided_slice %245 {offsets = [0, 0], sizes = [1, 4], strides = [1, 1]} : vector<1x32xf32> to vector<1x4xf32>
    %cst_122 = arith.constant dense<0.000000e+00> : vector<1xf32>
    %255 = vector.multi_reduction <add>, %254, %cst_122 [1] : vector<1x4xf32> to vector<1xf32>
    %256 = vector.shape_cast %255 : vector<1xf32> to vector<1x1xf32>
    %cst_123 = arith.constant 9.765625E-4 : f32
    %257 = vector.broadcast %cst_123 : f32 to vector<1x1xf32>
    %258 = arith.mulf %256, %257 : vector<1x1xf32>
    %c0_i32_124 = arith.constant 0 : i32
    %259 = vector.broadcast %c0_i32_124 : i32 to vector<1x32xi32>
    %260 = arith.cmpi sge, %246, %259 : vector<1x32xi32>
    %c4_i32_125 = arith.constant 4 : i32
    %261 = vector.broadcast %c4_i32_125 : i32 to vector<1x32xi32>
    %262 = arith.cmpi slt, %246, %261 : vector<1x32xi32>
    %263 = arith.andi %260, %262 : vector<1x32xi1>
    %264 = vector.shape_cast %253 : vector<1x1xf32> to vector<1x1xf32>
    %265 = vector.broadcast %264 : vector<1x1xf32> to vector<1x32xf32>
    %266 = arith.select %263, %265, %247 : vector<1x32xi1>, vector<1x32xf32>
    %267 = vector.shape_cast %258 : vector<1x1xf32> to vector<1x1xf32>
    %268 = vector.broadcast %267 : vector<1x1xf32> to vector<1x32xf32>
    %269 = arith.select %263, %268, %248 : vector<1x32xi1>, vector<1x32xf32>
    %270 = vector.extract_strided_slice %242 {offsets = [0, 4], sizes = [1, 4], strides = [1, 1]} : vector<1x32xf32> to vector<1x4xf32>
    %cst_126 = arith.constant dense<0.000000e+00> : vector<1xf32>
    %271 = vector.multi_reduction <add>, %270, %cst_126 [1] : vector<1x4xf32> to vector<1xf32>
    %272 = vector.shape_cast %271 : vector<1xf32> to vector<1x1xf32>
    %cst_127 = arith.constant 9.765625E-4 : f32
    %273 = vector.broadcast %cst_127 : f32 to vector<1x1xf32>
    %274 = arith.mulf %272, %273 : vector<1x1xf32>
    %275 = vector.extract_strided_slice %245 {offsets = [0, 4], sizes = [1, 4], strides = [1, 1]} : vector<1x32xf32> to vector<1x4xf32>
    %cst_128 = arith.constant dense<0.000000e+00> : vector<1xf32>
    %276 = vector.multi_reduction <add>, %275, %cst_128 [1] : vector<1x4xf32> to vector<1xf32>
    %277 = vector.shape_cast %276 : vector<1xf32> to vector<1x1xf32>
    %cst_129 = arith.constant 9.765625E-4 : f32
    %278 = vector.broadcast %cst_129 : f32 to vector<1x1xf32>
    %279 = arith.mulf %277, %278 : vector<1x1xf32>
    %c4_i32_130 = arith.constant 4 : i32
    %280 = vector.broadcast %c4_i32_130 : i32 to vector<1x32xi32>
    %281 = arith.cmpi sge, %246, %280 : vector<1x32xi32>
    %c8_i32_131 = arith.constant 8 : i32
    %282 = vector.broadcast %c8_i32_131 : i32 to vector<1x32xi32>
    %283 = arith.cmpi slt, %246, %282 : vector<1x32xi32>
    %284 = arith.andi %281, %283 : vector<1x32xi1>
    %285 = vector.shape_cast %274 : vector<1x1xf32> to vector<1x1xf32>
    %286 = vector.broadcast %285 : vector<1x1xf32> to vector<1x32xf32>
    %287 = arith.select %284, %286, %266 : vector<1x32xi1>, vector<1x32xf32>
    %288 = vector.shape_cast %279 : vector<1x1xf32> to vector<1x1xf32>
    %289 = vector.broadcast %288 : vector<1x1xf32> to vector<1x32xf32>
    %290 = arith.select %284, %289, %269 : vector<1x32xi1>, vector<1x32xf32>
    %291 = vector.extract_strided_slice %242 {offsets = [0, 8], sizes = [1, 4], strides = [1, 1]} : vector<1x32xf32> to vector<1x4xf32>
    %cst_132 = arith.constant dense<0.000000e+00> : vector<1xf32>
    %292 = vector.multi_reduction <add>, %291, %cst_132 [1] : vector<1x4xf32> to vector<1xf32>
    %293 = vector.shape_cast %292 : vector<1xf32> to vector<1x1xf32>
    %cst_133 = arith.constant 9.765625E-4 : f32
    %294 = vector.broadcast %cst_133 : f32 to vector<1x1xf32>
    %295 = arith.mulf %293, %294 : vector<1x1xf32>
    %296 = vector.extract_strided_slice %245 {offsets = [0, 8], sizes = [1, 4], strides = [1, 1]} : vector<1x32xf32> to vector<1x4xf32>
    %cst_134 = arith.constant dense<0.000000e+00> : vector<1xf32>
    %297 = vector.multi_reduction <add>, %296, %cst_134 [1] : vector<1x4xf32> to vector<1xf32>
    %298 = vector.shape_cast %297 : vector<1xf32> to vector<1x1xf32>
    %cst_135 = arith.constant 9.765625E-4 : f32
    %299 = vector.broadcast %cst_135 : f32 to vector<1x1xf32>
    %300 = arith.mulf %298, %299 : vector<1x1xf32>
    %c8_i32_136 = arith.constant 8 : i32
    %301 = vector.broadcast %c8_i32_136 : i32 to vector<1x32xi32>
    %302 = arith.cmpi sge, %246, %301 : vector<1x32xi32>
    %c12_i32_137 = arith.constant 12 : i32
    %303 = vector.broadcast %c12_i32_137 : i32 to vector<1x32xi32>
    %304 = arith.cmpi slt, %246, %303 : vector<1x32xi32>
    %305 = arith.andi %302, %304 : vector<1x32xi1>
    %306 = vector.shape_cast %295 : vector<1x1xf32> to vector<1x1xf32>
    %307 = vector.broadcast %306 : vector<1x1xf32> to vector<1x32xf32>
    %308 = arith.select %305, %307, %287 : vector<1x32xi1>, vector<1x32xf32>
    %309 = vector.shape_cast %300 : vector<1x1xf32> to vector<1x1xf32>
    %310 = vector.broadcast %309 : vector<1x1xf32> to vector<1x32xf32>
    %311 = arith.select %305, %310, %290 : vector<1x32xi1>, vector<1x32xf32>
    %312 = vector.extract_strided_slice %242 {offsets = [0, 12], sizes = [1, 4], strides = [1, 1]} : vector<1x32xf32> to vector<1x4xf32>
    %cst_138 = arith.constant dense<0.000000e+00> : vector<1xf32>
    %313 = vector.multi_reduction <add>, %312, %cst_138 [1] : vector<1x4xf32> to vector<1xf32>
    %314 = vector.shape_cast %313 : vector<1xf32> to vector<1x1xf32>
    %cst_139 = arith.constant 9.765625E-4 : f32
    %315 = vector.broadcast %cst_139 : f32 to vector<1x1xf32>
    %316 = arith.mulf %314, %315 : vector<1x1xf32>
    %317 = vector.extract_strided_slice %245 {offsets = [0, 12], sizes = [1, 4], strides = [1, 1]} : vector<1x32xf32> to vector<1x4xf32>
    %cst_140 = arith.constant dense<0.000000e+00> : vector<1xf32>
    %318 = vector.multi_reduction <add>, %317, %cst_140 [1] : vector<1x4xf32> to vector<1xf32>
    %319 = vector.shape_cast %318 : vector<1xf32> to vector<1x1xf32>
    %cst_141 = arith.constant 9.765625E-4 : f32
    %320 = vector.broadcast %cst_141 : f32 to vector<1x1xf32>
    %321 = arith.mulf %319, %320 : vector<1x1xf32>
    %c12_i32_142 = arith.constant 12 : i32
    %322 = vector.broadcast %c12_i32_142 : i32 to vector<1x32xi32>
    %323 = arith.cmpi sge, %246, %322 : vector<1x32xi32>
    %c16_i32_143 = arith.constant 16 : i32
    %324 = vector.broadcast %c16_i32_143 : i32 to vector<1x32xi32>
    %325 = arith.cmpi slt, %246, %324 : vector<1x32xi32>
    %326 = arith.andi %323, %325 : vector<1x32xi1>
    %327 = vector.shape_cast %316 : vector<1x1xf32> to vector<1x1xf32>
    %328 = vector.broadcast %327 : vector<1x1xf32> to vector<1x32xf32>
    %329 = arith.select %326, %328, %308 : vector<1x32xi1>, vector<1x32xf32>
    %330 = vector.shape_cast %321 : vector<1x1xf32> to vector<1x1xf32>
    %331 = vector.broadcast %330 : vector<1x1xf32> to vector<1x32xf32>
    %332 = arith.select %326, %331, %311 : vector<1x32xi1>, vector<1x32xf32>
    %333 = vector.extract_strided_slice %242 {offsets = [0, 16], sizes = [1, 4], strides = [1, 1]} : vector<1x32xf32> to vector<1x4xf32>
    %cst_144 = arith.constant dense<0.000000e+00> : vector<1xf32>
    %334 = vector.multi_reduction <add>, %333, %cst_144 [1] : vector<1x4xf32> to vector<1xf32>
    %335 = vector.shape_cast %334 : vector<1xf32> to vector<1x1xf32>
    %cst_145 = arith.constant 9.765625E-4 : f32
    %336 = vector.broadcast %cst_145 : f32 to vector<1x1xf32>
    %337 = arith.mulf %335, %336 : vector<1x1xf32>
    %338 = vector.extract_strided_slice %245 {offsets = [0, 16], sizes = [1, 4], strides = [1, 1]} : vector<1x32xf32> to vector<1x4xf32>
    %cst_146 = arith.constant dense<0.000000e+00> : vector<1xf32>
    %339 = vector.multi_reduction <add>, %338, %cst_146 [1] : vector<1x4xf32> to vector<1xf32>
    %340 = vector.shape_cast %339 : vector<1xf32> to vector<1x1xf32>
    %cst_147 = arith.constant 9.765625E-4 : f32
    %341 = vector.broadcast %cst_147 : f32 to vector<1x1xf32>
    %342 = arith.mulf %340, %341 : vector<1x1xf32>
    %c16_i32_148 = arith.constant 16 : i32
    %343 = vector.broadcast %c16_i32_148 : i32 to vector<1x32xi32>
    %344 = arith.cmpi sge, %246, %343 : vector<1x32xi32>
    %c20_i32_149 = arith.constant 20 : i32
    %345 = vector.broadcast %c20_i32_149 : i32 to vector<1x32xi32>
    %346 = arith.cmpi slt, %246, %345 : vector<1x32xi32>
    %347 = arith.andi %344, %346 : vector<1x32xi1>
    %348 = vector.shape_cast %337 : vector<1x1xf32> to vector<1x1xf32>
    %349 = vector.broadcast %348 : vector<1x1xf32> to vector<1x32xf32>
    %350 = arith.select %347, %349, %329 : vector<1x32xi1>, vector<1x32xf32>
    %351 = vector.shape_cast %342 : vector<1x1xf32> to vector<1x1xf32>
    %352 = vector.broadcast %351 : vector<1x1xf32> to vector<1x32xf32>
    %353 = arith.select %347, %352, %332 : vector<1x32xi1>, vector<1x32xf32>
    %354 = vector.extract_strided_slice %242 {offsets = [0, 20], sizes = [1, 4], strides = [1, 1]} : vector<1x32xf32> to vector<1x4xf32>
    %cst_150 = arith.constant dense<0.000000e+00> : vector<1xf32>
    %355 = vector.multi_reduction <add>, %354, %cst_150 [1] : vector<1x4xf32> to vector<1xf32>
    %356 = vector.shape_cast %355 : vector<1xf32> to vector<1x1xf32>
    %cst_151 = arith.constant 9.765625E-4 : f32
    %357 = vector.broadcast %cst_151 : f32 to vector<1x1xf32>
    %358 = arith.mulf %356, %357 : vector<1x1xf32>
    %359 = vector.extract_strided_slice %245 {offsets = [0, 20], sizes = [1, 4], strides = [1, 1]} : vector<1x32xf32> to vector<1x4xf32>
    %cst_152 = arith.constant dense<0.000000e+00> : vector<1xf32>
    %360 = vector.multi_reduction <add>, %359, %cst_152 [1] : vector<1x4xf32> to vector<1xf32>
    %361 = vector.shape_cast %360 : vector<1xf32> to vector<1x1xf32>
    %cst_153 = arith.constant 9.765625E-4 : f32
    %362 = vector.broadcast %cst_153 : f32 to vector<1x1xf32>
    %363 = arith.mulf %361, %362 : vector<1x1xf32>
    %c20_i32_154 = arith.constant 20 : i32
    %364 = vector.broadcast %c20_i32_154 : i32 to vector<1x32xi32>
    %365 = arith.cmpi sge, %246, %364 : vector<1x32xi32>
    %c24_i32_155 = arith.constant 24 : i32
    %366 = vector.broadcast %c24_i32_155 : i32 to vector<1x32xi32>
    %367 = arith.cmpi slt, %246, %366 : vector<1x32xi32>
    %368 = arith.andi %365, %367 : vector<1x32xi1>
    %369 = vector.shape_cast %358 : vector<1x1xf32> to vector<1x1xf32>
    %370 = vector.broadcast %369 : vector<1x1xf32> to vector<1x32xf32>
    %371 = arith.select %368, %370, %350 : vector<1x32xi1>, vector<1x32xf32>
    %372 = vector.shape_cast %363 : vector<1x1xf32> to vector<1x1xf32>
    %373 = vector.broadcast %372 : vector<1x1xf32> to vector<1x32xf32>
    %374 = arith.select %368, %373, %353 : vector<1x32xi1>, vector<1x32xf32>
    %375 = vector.extract_strided_slice %242 {offsets = [0, 24], sizes = [1, 4], strides = [1, 1]} : vector<1x32xf32> to vector<1x4xf32>
    %cst_156 = arith.constant dense<0.000000e+00> : vector<1xf32>
    %376 = vector.multi_reduction <add>, %375, %cst_156 [1] : vector<1x4xf32> to vector<1xf32>
    %377 = vector.shape_cast %376 : vector<1xf32> to vector<1x1xf32>
    %cst_157 = arith.constant 9.765625E-4 : f32
    %378 = vector.broadcast %cst_157 : f32 to vector<1x1xf32>
    %379 = arith.mulf %377, %378 : vector<1x1xf32>
    %380 = vector.extract_strided_slice %245 {offsets = [0, 24], sizes = [1, 4], strides = [1, 1]} : vector<1x32xf32> to vector<1x4xf32>
    %cst_158 = arith.constant dense<0.000000e+00> : vector<1xf32>
    %381 = vector.multi_reduction <add>, %380, %cst_158 [1] : vector<1x4xf32> to vector<1xf32>
    %382 = vector.shape_cast %381 : vector<1xf32> to vector<1x1xf32>
    %cst_159 = arith.constant 9.765625E-4 : f32
    %383 = vector.broadcast %cst_159 : f32 to vector<1x1xf32>
    %384 = arith.mulf %382, %383 : vector<1x1xf32>
    %c24_i32_160 = arith.constant 24 : i32
    %385 = vector.broadcast %c24_i32_160 : i32 to vector<1x32xi32>
    %386 = arith.cmpi sge, %246, %385 : vector<1x32xi32>
    %c28_i32_161 = arith.constant 28 : i32
    %387 = vector.broadcast %c28_i32_161 : i32 to vector<1x32xi32>
    %388 = arith.cmpi slt, %246, %387 : vector<1x32xi32>
    %389 = arith.andi %386, %388 : vector<1x32xi1>
    %390 = vector.shape_cast %379 : vector<1x1xf32> to vector<1x1xf32>
    %391 = vector.broadcast %390 : vector<1x1xf32> to vector<1x32xf32>
    %392 = arith.select %389, %391, %371 : vector<1x32xi1>, vector<1x32xf32>
    %393 = vector.shape_cast %384 : vector<1x1xf32> to vector<1x1xf32>
    %394 = vector.broadcast %393 : vector<1x1xf32> to vector<1x32xf32>
    %395 = arith.select %389, %394, %374 : vector<1x32xi1>, vector<1x32xf32>
    %396 = vector.extract_strided_slice %242 {offsets = [0, 28], sizes = [1, 4], strides = [1, 1]} : vector<1x32xf32> to vector<1x4xf32>
    %cst_162 = arith.constant dense<0.000000e+00> : vector<1xf32>
    %397 = vector.multi_reduction <add>, %396, %cst_162 [1] : vector<1x4xf32> to vector<1xf32>
    %398 = vector.shape_cast %397 : vector<1xf32> to vector<1x1xf32>
    %cst_163 = arith.constant 9.765625E-4 : f32
    %399 = vector.broadcast %cst_163 : f32 to vector<1x1xf32>
    %400 = arith.mulf %398, %399 : vector<1x1xf32>
    %401 = vector.extract_strided_slice %245 {offsets = [0, 28], sizes = [1, 4], strides = [1, 1]} : vector<1x32xf32> to vector<1x4xf32>
    %cst_164 = arith.constant dense<0.000000e+00> : vector<1xf32>
    %402 = vector.multi_reduction <add>, %401, %cst_164 [1] : vector<1x4xf32> to vector<1xf32>
    %403 = vector.shape_cast %402 : vector<1xf32> to vector<1x1xf32>
    %cst_165 = arith.constant 9.765625E-4 : f32
    %404 = vector.broadcast %cst_165 : f32 to vector<1x1xf32>
    %405 = arith.mulf %403, %404 : vector<1x1xf32>
    %c28_i32_166 = arith.constant 28 : i32
    %406 = vector.broadcast %c28_i32_166 : i32 to vector<1x32xi32>
    %407 = arith.cmpi sge, %246, %406 : vector<1x32xi32>
    %c32_i32_167 = arith.constant 32 : i32
    %408 = vector.broadcast %c32_i32_167 : i32 to vector<1x32xi32>
    %409 = arith.cmpi slt, %246, %408 : vector<1x32xi32>
    %410 = arith.andi %407, %409 : vector<1x32xi1>
    %411 = vector.shape_cast %400 : vector<1x1xf32> to vector<1x1xf32>
    %412 = vector.broadcast %411 : vector<1x1xf32> to vector<1x32xf32>
    %413 = arith.select %410, %412, %392 : vector<1x32xi1>, vector<1x32xf32>
    %414 = vector.shape_cast %405 : vector<1x1xf32> to vector<1x1xf32>
    %415 = vector.broadcast %414 : vector<1x1xf32> to vector<1x32xf32>
    %416 = arith.select %410, %415, %395 : vector<1x32xi1>, vector<1x32xf32>
    %417 = arith.mulf %413, %413 : vector<1x32xf32>
    %418 = arith.subf %416, %417 : vector<1x32xf32>
    %cst_168 = arith.constant 0.000000e+00 : f32
    %419 = vector.broadcast %cst_168 : f32 to vector<1x32xf32>
    %420 = arith.maximumf %418, %419 : vector<1x32xf32>
    %cst_169 = arith.constant 9.99999974E-6 : f32
    %421 = vector.broadcast %cst_169 : f32 to vector<1x32xf32>
    %422 = arith.addf %420, %421 : vector<1x32xf32>
    %423 = math.rsqrt %422 : vector<1x32xf32>
    %424 = arith.mulf %423, %239 : vector<1x32xf32>
    %425 = arith.mulf %413, %424 : vector<1x32xf32>
    %426 = arith.subf %240, %425 : vector<1x32xf32>
    %427 = vector.broadcast %424 : vector<1x32xf32> to vector<256x32xf32>
    %428 = arith.mulf %238, %427 : vector<256x32xf32>
    %429 = vector.broadcast %426 : vector<1x32xf32> to vector<256x32xf32>
    %430 = arith.addf %428, %429 : vector<256x32xf32>
    %cst_170 = arith.constant 0.000000e+00 : f32
    %431 = vector.broadcast %cst_170 : f32 to vector<256x32xf32>
    %432 = arith.maximumf %430, %431 : vector<256x32xf32>
    %433 = arith.truncf %432 : vector<256x32xf32> to vector<256x32xbf16>
    %c0_171 = arith.constant 0 : index
    %c0_172 = arith.constant 0 : index
    %434 = vector.load %arg8[%c0_171, %c0_172] : memref<32x128xbf16, #tpu.memory_space<vmem>>, vector<32x128xbf16>
    %cst_173 = arith.constant dense<0.000000e+00> : vector<256x128xf32>
    %435 = tpu.matmul %433, %434, %cst_173 {dimension_numbers = #tpu.dot_dimension_numbers<[1], [0], [0], [1], [0, 0, 1, 1], [], []>} : vector<256x32xbf16>, vector<32x128xbf16>, vector<256x128xf32> -> vector<256x128xf32>
    %c0_174 = arith.constant 0 : index
    %c0_175 = arith.constant 0 : index
    %436 = vector.load %arg9[%c0_174, %c0_175] : memref<1x128xf32, #tpu.memory_space<vmem>>, vector<1x128xf32>
    %c0_176 = arith.constant 0 : index
    %c0_177 = arith.constant 0 : index
    %437 = vector.load %arg10[%c0_176, %c0_177] : memref<1x128xf32, #tpu.memory_space<vmem>>, vector<1x128xf32>
    %cst_178 = arith.constant dense<0.000000e+00> : vector<128xf32>
    %438 = vector.multi_reduction <add>, %435, %cst_178 [0] : vector<256x128xf32> to vector<128xf32>
    %439 = vector.shape_cast %438 : vector<128xf32> to vector<1x128xf32>
    %440 = arith.mulf %435, %435 : vector<256x128xf32>
    %cst_179 = arith.constant dense<0.000000e+00> : vector<128xf32>
    %441 = vector.multi_reduction <add>, %440, %cst_179 [0] : vector<256x128xf32> to vector<128xf32>
    %442 = vector.shape_cast %441 : vector<128xf32> to vector<1x128xf32>
    %443 = tpu.iota {dimensions = array<i32: 1>} : vector<1x128xi32>
    %cst_180 = arith.constant 0.000000e+00 : f32
    %444 = vector.broadcast %cst_180 : f32 to vector<1x128xf32>
    %cst_181 = arith.constant 0.000000e+00 : f32
    %445 = vector.broadcast %cst_181 : f32 to vector<1x128xf32>
    %446 = vector.extract_strided_slice %439 {offsets = [0, 0], sizes = [1, 16], strides = [1, 1]} : vector<1x128xf32> to vector<1x16xf32>
    %cst_182 = arith.constant dense<0.000000e+00> : vector<1xf32>
    %447 = vector.multi_reduction <add>, %446, %cst_182 [1] : vector<1x16xf32> to vector<1xf32>
    %448 = vector.shape_cast %447 : vector<1xf32> to vector<1x1xf32>
    %cst_183 = arith.constant 2.44140625E-4 : f32
    %449 = vector.broadcast %cst_183 : f32 to vector<1x1xf32>
    %450 = arith.mulf %448, %449 : vector<1x1xf32>
    %451 = vector.extract_strided_slice %442 {offsets = [0, 0], sizes = [1, 16], strides = [1, 1]} : vector<1x128xf32> to vector<1x16xf32>
    %cst_184 = arith.constant dense<0.000000e+00> : vector<1xf32>
    %452 = vector.multi_reduction <add>, %451, %cst_184 [1] : vector<1x16xf32> to vector<1xf32>
    %453 = vector.shape_cast %452 : vector<1xf32> to vector<1x1xf32>
    %cst_185 = arith.constant 2.44140625E-4 : f32
    %454 = vector.broadcast %cst_185 : f32 to vector<1x1xf32>
    %455 = arith.mulf %453, %454 : vector<1x1xf32>
    %c0_i32_186 = arith.constant 0 : i32
    %456 = vector.broadcast %c0_i32_186 : i32 to vector<1x128xi32>
    %457 = arith.cmpi sge, %443, %456 : vector<1x128xi32>
    %c16_i32_187 = arith.constant 16 : i32
    %458 = vector.broadcast %c16_i32_187 : i32 to vector<1x128xi32>
    %459 = arith.cmpi slt, %443, %458 : vector<1x128xi32>
    %460 = arith.andi %457, %459 : vector<1x128xi1>
    %461 = vector.shape_cast %450 : vector<1x1xf32> to vector<1x1xf32>
    %462 = vector.broadcast %461 : vector<1x1xf32> to vector<1x128xf32>
    %463 = arith.select %460, %462, %444 : vector<1x128xi1>, vector<1x128xf32>
    %464 = vector.shape_cast %455 : vector<1x1xf32> to vector<1x1xf32>
    %465 = vector.broadcast %464 : vector<1x1xf32> to vector<1x128xf32>
    %466 = arith.select %460, %465, %445 : vector<1x128xi1>, vector<1x128xf32>
    %467 = vector.extract_strided_slice %439 {offsets = [0, 16], sizes = [1, 16], strides = [1, 1]} : vector<1x128xf32> to vector<1x16xf32>
    %cst_188 = arith.constant dense<0.000000e+00> : vector<1xf32>
    %468 = vector.multi_reduction <add>, %467, %cst_188 [1] : vector<1x16xf32> to vector<1xf32>
    %469 = vector.shape_cast %468 : vector<1xf32> to vector<1x1xf32>
    %cst_189 = arith.constant 2.44140625E-4 : f32
    %470 = vector.broadcast %cst_189 : f32 to vector<1x1xf32>
    %471 = arith.mulf %469, %470 : vector<1x1xf32>
    %472 = vector.extract_strided_slice %442 {offsets = [0, 16], sizes = [1, 16], strides = [1, 1]} : vector<1x128xf32> to vector<1x16xf32>
    %cst_190 = arith.constant dense<0.000000e+00> : vector<1xf32>
    %473 = vector.multi_reduction <add>, %472, %cst_190 [1] : vector<1x16xf32> to vector<1xf32>
    %474 = vector.shape_cast %473 : vector<1xf32> to vector<1x1xf32>
    %cst_191 = arith.constant 2.44140625E-4 : f32
    %475 = vector.broadcast %cst_191 : f32 to vector<1x1xf32>
    %476 = arith.mulf %474, %475 : vector<1x1xf32>
    %c16_i32_192 = arith.constant 16 : i32
    %477 = vector.broadcast %c16_i32_192 : i32 to vector<1x128xi32>
    %478 = arith.cmpi sge, %443, %477 : vector<1x128xi32>
    %c32_i32_193 = arith.constant 32 : i32
    %479 = vector.broadcast %c32_i32_193 : i32 to vector<1x128xi32>
    %480 = arith.cmpi slt, %443, %479 : vector<1x128xi32>
    %481 = arith.andi %478, %480 : vector<1x128xi1>
    %482 = vector.shape_cast %471 : vector<1x1xf32> to vector<1x1xf32>
    %483 = vector.broadcast %482 : vector<1x1xf32> to vector<1x128xf32>
    %484 = arith.select %481, %483, %463 : vector<1x128xi1>, vector<1x128xf32>
    %485 = vector.shape_cast %476 : vector<1x1xf32> to vector<1x1xf32>
    %486 = vector.broadcast %485 : vector<1x1xf32> to vector<1x128xf32>
    %487 = arith.select %481, %486, %466 : vector<1x128xi1>, vector<1x128xf32>
    %488 = vector.extract_strided_slice %439 {offsets = [0, 32], sizes = [1, 16], strides = [1, 1]} : vector<1x128xf32> to vector<1x16xf32>
    %cst_194 = arith.constant dense<0.000000e+00> : vector<1xf32>
    %489 = vector.multi_reduction <add>, %488, %cst_194 [1] : vector<1x16xf32> to vector<1xf32>
    %490 = vector.shape_cast %489 : vector<1xf32> to vector<1x1xf32>
    %cst_195 = arith.constant 2.44140625E-4 : f32
    %491 = vector.broadcast %cst_195 : f32 to vector<1x1xf32>
    %492 = arith.mulf %490, %491 : vector<1x1xf32>
    %493 = vector.extract_strided_slice %442 {offsets = [0, 32], sizes = [1, 16], strides = [1, 1]} : vector<1x128xf32> to vector<1x16xf32>
    %cst_196 = arith.constant dense<0.000000e+00> : vector<1xf32>
    %494 = vector.multi_reduction <add>, %493, %cst_196 [1] : vector<1x16xf32> to vector<1xf32>
    %495 = vector.shape_cast %494 : vector<1xf32> to vector<1x1xf32>
    %cst_197 = arith.constant 2.44140625E-4 : f32
    %496 = vector.broadcast %cst_197 : f32 to vector<1x1xf32>
    %497 = arith.mulf %495, %496 : vector<1x1xf32>
    %c32_i32_198 = arith.constant 32 : i32
    %498 = vector.broadcast %c32_i32_198 : i32 to vector<1x128xi32>
    %499 = arith.cmpi sge, %443, %498 : vector<1x128xi32>
    %c48_i32 = arith.constant 48 : i32
    %500 = vector.broadcast %c48_i32 : i32 to vector<1x128xi32>
    %501 = arith.cmpi slt, %443, %500 : vector<1x128xi32>
    %502 = arith.andi %499, %501 : vector<1x128xi1>
    %503 = vector.shape_cast %492 : vector<1x1xf32> to vector<1x1xf32>
    %504 = vector.broadcast %503 : vector<1x1xf32> to vector<1x128xf32>
    %505 = arith.select %502, %504, %484 : vector<1x128xi1>, vector<1x128xf32>
    %506 = vector.shape_cast %497 : vector<1x1xf32> to vector<1x1xf32>
    %507 = vector.broadcast %506 : vector<1x1xf32> to vector<1x128xf32>
    %508 = arith.select %502, %507, %487 : vector<1x128xi1>, vector<1x128xf32>
    %509 = vector.extract_strided_slice %439 {offsets = [0, 48], sizes = [1, 16], strides = [1, 1]} : vector<1x128xf32> to vector<1x16xf32>
    %cst_199 = arith.constant dense<0.000000e+00> : vector<1xf32>
    %510 = vector.multi_reduction <add>, %509, %cst_199 [1] : vector<1x16xf32> to vector<1xf32>
    %511 = vector.shape_cast %510 : vector<1xf32> to vector<1x1xf32>
    %cst_200 = arith.constant 2.44140625E-4 : f32
    %512 = vector.broadcast %cst_200 : f32 to vector<1x1xf32>
    %513 = arith.mulf %511, %512 : vector<1x1xf32>
    %514 = vector.extract_strided_slice %442 {offsets = [0, 48], sizes = [1, 16], strides = [1, 1]} : vector<1x128xf32> to vector<1x16xf32>
    %cst_201 = arith.constant dense<0.000000e+00> : vector<1xf32>
    %515 = vector.multi_reduction <add>, %514, %cst_201 [1] : vector<1x16xf32> to vector<1xf32>
    %516 = vector.shape_cast %515 : vector<1xf32> to vector<1x1xf32>
    %cst_202 = arith.constant 2.44140625E-4 : f32
    %517 = vector.broadcast %cst_202 : f32 to vector<1x1xf32>
    %518 = arith.mulf %516, %517 : vector<1x1xf32>
    %c48_i32_203 = arith.constant 48 : i32
    %519 = vector.broadcast %c48_i32_203 : i32 to vector<1x128xi32>
    %520 = arith.cmpi sge, %443, %519 : vector<1x128xi32>
    %c64_i32 = arith.constant 64 : i32
    %521 = vector.broadcast %c64_i32 : i32 to vector<1x128xi32>
    %522 = arith.cmpi slt, %443, %521 : vector<1x128xi32>
    %523 = arith.andi %520, %522 : vector<1x128xi1>
    %524 = vector.shape_cast %513 : vector<1x1xf32> to vector<1x1xf32>
    %525 = vector.broadcast %524 : vector<1x1xf32> to vector<1x128xf32>
    %526 = arith.select %523, %525, %505 : vector<1x128xi1>, vector<1x128xf32>
    %527 = vector.shape_cast %518 : vector<1x1xf32> to vector<1x1xf32>
    %528 = vector.broadcast %527 : vector<1x1xf32> to vector<1x128xf32>
    %529 = arith.select %523, %528, %508 : vector<1x128xi1>, vector<1x128xf32>
    %530 = vector.extract_strided_slice %439 {offsets = [0, 64], sizes = [1, 16], strides = [1, 1]} : vector<1x128xf32> to vector<1x16xf32>
    %cst_204 = arith.constant dense<0.000000e+00> : vector<1xf32>
    %531 = vector.multi_reduction <add>, %530, %cst_204 [1] : vector<1x16xf32> to vector<1xf32>
    %532 = vector.shape_cast %531 : vector<1xf32> to vector<1x1xf32>
    %cst_205 = arith.constant 2.44140625E-4 : f32
    %533 = vector.broadcast %cst_205 : f32 to vector<1x1xf32>
    %534 = arith.mulf %532, %533 : vector<1x1xf32>
    %535 = vector.extract_strided_slice %442 {offsets = [0, 64], sizes = [1, 16], strides = [1, 1]} : vector<1x128xf32> to vector<1x16xf32>
    %cst_206 = arith.constant dense<0.000000e+00> : vector<1xf32>
    %536 = vector.multi_reduction <add>, %535, %cst_206 [1] : vector<1x16xf32> to vector<1xf32>
    %537 = vector.shape_cast %536 : vector<1xf32> to vector<1x1xf32>
    %cst_207 = arith.constant 2.44140625E-4 : f32
    %538 = vector.broadcast %cst_207 : f32 to vector<1x1xf32>
    %539 = arith.mulf %537, %538 : vector<1x1xf32>
    %c64_i32_208 = arith.constant 64 : i32
    %540 = vector.broadcast %c64_i32_208 : i32 to vector<1x128xi32>
    %541 = arith.cmpi sge, %443, %540 : vector<1x128xi32>
    %c80_i32 = arith.constant 80 : i32
    %542 = vector.broadcast %c80_i32 : i32 to vector<1x128xi32>
    %543 = arith.cmpi slt, %443, %542 : vector<1x128xi32>
    %544 = arith.andi %541, %543 : vector<1x128xi1>
    %545 = vector.shape_cast %534 : vector<1x1xf32> to vector<1x1xf32>
    %546 = vector.broadcast %545 : vector<1x1xf32> to vector<1x128xf32>
    %547 = arith.select %544, %546, %526 : vector<1x128xi1>, vector<1x128xf32>
    %548 = vector.shape_cast %539 : vector<1x1xf32> to vector<1x1xf32>
    %549 = vector.broadcast %548 : vector<1x1xf32> to vector<1x128xf32>
    %550 = arith.select %544, %549, %529 : vector<1x128xi1>, vector<1x128xf32>
    %551 = vector.extract_strided_slice %439 {offsets = [0, 80], sizes = [1, 16], strides = [1, 1]} : vector<1x128xf32> to vector<1x16xf32>
    %cst_209 = arith.constant dense<0.000000e+00> : vector<1xf32>
    %552 = vector.multi_reduction <add>, %551, %cst_209 [1] : vector<1x16xf32> to vector<1xf32>
    %553 = vector.shape_cast %552 : vector<1xf32> to vector<1x1xf32>
    %cst_210 = arith.constant 2.44140625E-4 : f32
    %554 = vector.broadcast %cst_210 : f32 to vector<1x1xf32>
    %555 = arith.mulf %553, %554 : vector<1x1xf32>
    %556 = vector.extract_strided_slice %442 {offsets = [0, 80], sizes = [1, 16], strides = [1, 1]} : vector<1x128xf32> to vector<1x16xf32>
    %cst_211 = arith.constant dense<0.000000e+00> : vector<1xf32>
    %557 = vector.multi_reduction <add>, %556, %cst_211 [1] : vector<1x16xf32> to vector<1xf32>
    %558 = vector.shape_cast %557 : vector<1xf32> to vector<1x1xf32>
    %cst_212 = arith.constant 2.44140625E-4 : f32
    %559 = vector.broadcast %cst_212 : f32 to vector<1x1xf32>
    %560 = arith.mulf %558, %559 : vector<1x1xf32>
    %c80_i32_213 = arith.constant 80 : i32
    %561 = vector.broadcast %c80_i32_213 : i32 to vector<1x128xi32>
    %562 = arith.cmpi sge, %443, %561 : vector<1x128xi32>
    %c96_i32 = arith.constant 96 : i32
    %563 = vector.broadcast %c96_i32 : i32 to vector<1x128xi32>
    %564 = arith.cmpi slt, %443, %563 : vector<1x128xi32>
    %565 = arith.andi %562, %564 : vector<1x128xi1>
    %566 = vector.shape_cast %555 : vector<1x1xf32> to vector<1x1xf32>
    %567 = vector.broadcast %566 : vector<1x1xf32> to vector<1x128xf32>
    %568 = arith.select %565, %567, %547 : vector<1x128xi1>, vector<1x128xf32>
    %569 = vector.shape_cast %560 : vector<1x1xf32> to vector<1x1xf32>
    %570 = vector.broadcast %569 : vector<1x1xf32> to vector<1x128xf32>
    %571 = arith.select %565, %570, %550 : vector<1x128xi1>, vector<1x128xf32>
    %572 = vector.extract_strided_slice %439 {offsets = [0, 96], sizes = [1, 16], strides = [1, 1]} : vector<1x128xf32> to vector<1x16xf32>
    %cst_214 = arith.constant dense<0.000000e+00> : vector<1xf32>
    %573 = vector.multi_reduction <add>, %572, %cst_214 [1] : vector<1x16xf32> to vector<1xf32>
    %574 = vector.shape_cast %573 : vector<1xf32> to vector<1x1xf32>
    %cst_215 = arith.constant 2.44140625E-4 : f32
    %575 = vector.broadcast %cst_215 : f32 to vector<1x1xf32>
    %576 = arith.mulf %574, %575 : vector<1x1xf32>
    %577 = vector.extract_strided_slice %442 {offsets = [0, 96], sizes = [1, 16], strides = [1, 1]} : vector<1x128xf32> to vector<1x16xf32>
    %cst_216 = arith.constant dense<0.000000e+00> : vector<1xf32>
    %578 = vector.multi_reduction <add>, %577, %cst_216 [1] : vector<1x16xf32> to vector<1xf32>
    %579 = vector.shape_cast %578 : vector<1xf32> to vector<1x1xf32>
    %cst_217 = arith.constant 2.44140625E-4 : f32
    %580 = vector.broadcast %cst_217 : f32 to vector<1x1xf32>
    %581 = arith.mulf %579, %580 : vector<1x1xf32>
    %c96_i32_218 = arith.constant 96 : i32
    %582 = vector.broadcast %c96_i32_218 : i32 to vector<1x128xi32>
    %583 = arith.cmpi sge, %443, %582 : vector<1x128xi32>
    %c112_i32 = arith.constant 112 : i32
    %584 = vector.broadcast %c112_i32 : i32 to vector<1x128xi32>
    %585 = arith.cmpi slt, %443, %584 : vector<1x128xi32>
    %586 = arith.andi %583, %585 : vector<1x128xi1>
    %587 = vector.shape_cast %576 : vector<1x1xf32> to vector<1x1xf32>
    %588 = vector.broadcast %587 : vector<1x1xf32> to vector<1x128xf32>
    %589 = arith.select %586, %588, %568 : vector<1x128xi1>, vector<1x128xf32>
    %590 = vector.shape_cast %581 : vector<1x1xf32> to vector<1x1xf32>
    %591 = vector.broadcast %590 : vector<1x1xf32> to vector<1x128xf32>
    %592 = arith.select %586, %591, %571 : vector<1x128xi1>, vector<1x128xf32>
    %593 = vector.extract_strided_slice %439 {offsets = [0, 112], sizes = [1, 16], strides = [1, 1]} : vector<1x128xf32> to vector<1x16xf32>
    %cst_219 = arith.constant dense<0.000000e+00> : vector<1xf32>
    %594 = vector.multi_reduction <add>, %593, %cst_219 [1] : vector<1x16xf32> to vector<1xf32>
    %595 = vector.shape_cast %594 : vector<1xf32> to vector<1x1xf32>
    %cst_220 = arith.constant 2.44140625E-4 : f32
    %596 = vector.broadcast %cst_220 : f32 to vector<1x1xf32>
    %597 = arith.mulf %595, %596 : vector<1x1xf32>
    %598 = vector.extract_strided_slice %442 {offsets = [0, 112], sizes = [1, 16], strides = [1, 1]} : vector<1x128xf32> to vector<1x16xf32>
    %cst_221 = arith.constant dense<0.000000e+00> : vector<1xf32>
    %599 = vector.multi_reduction <add>, %598, %cst_221 [1] : vector<1x16xf32> to vector<1xf32>
    %600 = vector.shape_cast %599 : vector<1xf32> to vector<1x1xf32>
    %cst_222 = arith.constant 2.44140625E-4 : f32
    %601 = vector.broadcast %cst_222 : f32 to vector<1x1xf32>
    %602 = arith.mulf %600, %601 : vector<1x1xf32>
    %c112_i32_223 = arith.constant 112 : i32
    %603 = vector.broadcast %c112_i32_223 : i32 to vector<1x128xi32>
    %604 = arith.cmpi sge, %443, %603 : vector<1x128xi32>
    %c128_i32 = arith.constant 128 : i32
    %605 = vector.broadcast %c128_i32 : i32 to vector<1x128xi32>
    %606 = arith.cmpi slt, %443, %605 : vector<1x128xi32>
    %607 = arith.andi %604, %606 : vector<1x128xi1>
    %608 = vector.shape_cast %597 : vector<1x1xf32> to vector<1x1xf32>
    %609 = vector.broadcast %608 : vector<1x1xf32> to vector<1x128xf32>
    %610 = arith.select %607, %609, %589 : vector<1x128xi1>, vector<1x128xf32>
    %611 = vector.shape_cast %602 : vector<1x1xf32> to vector<1x1xf32>
    %612 = vector.broadcast %611 : vector<1x1xf32> to vector<1x128xf32>
    %613 = arith.select %607, %612, %592 : vector<1x128xi1>, vector<1x128xf32>
    %614 = arith.mulf %610, %610 : vector<1x128xf32>
    %615 = arith.subf %613, %614 : vector<1x128xf32>
    %cst_224 = arith.constant 0.000000e+00 : f32
    %616 = vector.broadcast %cst_224 : f32 to vector<1x128xf32>
    %617 = arith.maximumf %615, %616 : vector<1x128xf32>
    %cst_225 = arith.constant 9.99999974E-6 : f32
    %618 = vector.broadcast %cst_225 : f32 to vector<1x128xf32>
    %619 = arith.addf %617, %618 : vector<1x128xf32>
    %620 = math.rsqrt %619 : vector<1x128xf32>
    %621 = arith.mulf %620, %436 : vector<1x128xf32>
    %622 = arith.mulf %610, %621 : vector<1x128xf32>
    %623 = arith.subf %437, %622 : vector<1x128xf32>
    %624 = vector.broadcast %621 : vector<1x128xf32> to vector<256x128xf32>
    %625 = arith.mulf %435, %624 : vector<256x128xf32>
    %626 = vector.broadcast %623 : vector<1x128xf32> to vector<256x128xf32>
    %627 = arith.addf %625, %626 : vector<256x128xf32>
    %628 = arith.addf %627, %0 : vector<256x128xf32>
    %cst_226 = arith.constant 0.000000e+00 : f32
    %629 = vector.broadcast %cst_226 : f32 to vector<256x128xf32>
    %630 = arith.maximumf %628, %629 : vector<256x128xf32>
    %c0_227 = arith.constant 0 : index
    %c0_228 = arith.constant 0 : index
    %631 = vector.load %arg11[%c0_227, %c0_228] : memref<256x128xf32, #tpu.memory_space<vmem>>, vector<256x128xf32>
    tpu.vector_store %arg11[%c0_227, %c0_228], %630 {strides = array<i32>} : memref<256x128xf32, #tpu.memory_space<vmem>>, vector<256x128xf32>,
    return
  }
  func.func @transform_0(%arg0: i32) -> (i32, i32) {
    %c0_i32 = arith.constant 0 : i32
    %c0_i32_0 = arith.constant 0 : i32
    return %arg0, %c0_i32 : i32, i32
  }
  func.func @transform_1(%arg0: i32) -> (i32, i32) {
    %c0_i32 = arith.constant 0 : i32
    %c0_i32_0 = arith.constant 0 : i32
    %c0_i32_1 = arith.constant 0 : i32
    return %c0_i32, %c0_i32_0 : i32, i32
  }
  func.func @transform_2(%arg0: i32) -> (i32, i32) {
    %c0_i32 = arith.constant 0 : i32
    %c0_i32_0 = arith.constant 0 : i32
    %c0_i32_1 = arith.constant 0 : i32
    return %c0_i32, %c0_i32_0 : i32, i32
  }
  func.func @transform_3(%arg0: i32) -> (i32, i32) {
    %c0_i32 = arith.constant 0 : i32
    %c0_i32_0 = arith.constant 0 : i32
    %c0_i32_1 = arith.constant 0 : i32
    return %c0_i32, %c0_i32_0 : i32, i32
  }
  func.func @transform_4(%arg0: i32) -> (i32, i32) {
    %c0_i32 = arith.constant 0 : i32
    %c0_i32_0 = arith.constant 0 : i32
    %c0_i32_1 = arith.constant 0 : i32
    return %c0_i32, %c0_i32_0 : i32, i32
  }
  func.func @transform_5(%arg0: i32) -> (i32, i32) {
    %c0_i32 = arith.constant 0 : i32
    %c0_i32_0 = arith.constant 0 : i32
    %c0_i32_1 = arith.constant 0 : i32
    return %c0_i32, %c0_i32_0 : i32, i32
  }
  func.func @transform_6(%arg0: i32) -> (i32, i32) {
    %c0_i32 = arith.constant 0 : i32
    %c0_i32_0 = arith.constant 0 : i32
    %c0_i32_1 = arith.constant 0 : i32
    return %c0_i32, %c0_i32_0 : i32, i32
  }
  func.func @transform_7(%arg0: i32) -> (i32, i32) {
    %c0_i32 = arith.constant 0 : i32
    %c0_i32_0 = arith.constant 0 : i32
    %c0_i32_1 = arith.constant 0 : i32
    return %c0_i32, %c0_i32_0 : i32, i32
  }
  func.func @transform_8(%arg0: i32) -> (i32, i32) {
    %c0_i32 = arith.constant 0 : i32
    %c0_i32_0 = arith.constant 0 : i32
    %c0_i32_1 = arith.constant 0 : i32
    return %c0_i32, %c0_i32_0 : i32, i32
  }
  func.func @transform_9(%arg0: i32) -> (i32, i32) {
    %c0_i32 = arith.constant 0 : i32
    %c0_i32_0 = arith.constant 0 : i32
    %c0_i32_1 = arith.constant 0 : i32
    return %c0_i32, %c0_i32_0 : i32, i32
  }
  func.func @transform_10(%arg0: i32) -> (i32, i32) {
    %c0_i32 = arith.constant 0 : i32
    %c0_i32_0 = arith.constant 0 : i32
    return %arg0, %c0_i32 : i32, i32
  }
}

</mosaic_0001>

<llo_original>
// kernel: _lambda_.1
$region0: #{_lambda_.1}
  #allocation0 [shape = 'u32[]', space=smem, size = 0x4, offset = 0x4, fixed_abs, tag = 'smem constant byte address 0x4 - core index']
  #allocation1 [shape = 'u32[144,128]{1,0:T(1,128)}', space=vmem, size = 0x12000, scoped, tag = 'internal scratch']
  #allocation2 [shape = 'bf16[18,18,32]{2,1,0:T(8,128)(2,1)}', space=vmem, size = 0x1b000, scoped, tag = 'scratch operand']
  #allocation3 [shape = 'bf16[256,288]{1,0:T(16,128)(2,1)}', space=vmem, size = 0x30000, scoped, tag = 'scratch operand']
  %s0 = inlined_call_operand.hbm [shape: f32[512,128], index: 0, kind: input, shape index: {}]
  %s1 = inlined_call_operand.hbm [shape: bf16[128,32], index: 1, kind: input, shape index: {}]
  %s2 = inlined_call_operand.vmem [shape: f32[1,32], index: 2, kind: input, shape index: {}, may-alias: {2,5}]
  %s3 = inlined_call_operand.vmem [shape: f32[1,32], index: 3, kind: input, shape index: {}, may-alias: {3,6}]
  %s4 = inlined_call_operand.hbm [shape: bf16[288,32], index: 4, kind: input, shape index: {}]
  %s5 = inlined_call_operand.vmem [shape: f32[1,32], index: 5, kind: input, shape index: {}, may-alias: {2,5}]
  %s6 = inlined_call_operand.vmem [shape: f32[1,32], index: 6, kind: input, shape index: {}, may-alias: {3,6}]
  %s7 = inlined_call_operand.vmem [shape: bf16[32,128], index: 7, kind: input, shape index: {}]
  %s8 = inlined_call_operand.vmem [shape: f32[1,128], index: 8, kind: input, shape index: {}]
  %s9 = inlined_call_operand.vmem [shape: f32[1,128], index: 9, kind: input, shape index: {}]
  %s10 = inlined_call_operand.hbm [shape: f32[512,128], index: 10, kind: output, shape index: {}]
  %s11 = sld [smem:[#allocation0]]
  $region85: #{_lambda_.1} parent=0
    _
  %s13 = ssub.s32 1, %s11
  %s14 = scalar_select 0, %s13, %s11
  $region1: #{_lambda_.1} parent=0
    #allocation4 [shape = 'u8[262144]{0}', space=vmem, size = 0x40000, scoped, tag = 'input window, operand 0']
    #allocation5 [shape = 's32[2]{0}', space=sflag, size = 0x8, scoped, tag = 'scoped memory for _lambda_.1']
    #allocation6 [shape = 's32[2]{0}', space=sflag, size = 0x8, scoped, tag = 'scoped memory for _lambda_.1']
    #allocation7 [shape = 'u8[32768]{0}', space=vmem, size = 0x8000, scoped, tag = 'input window, operand 1, single buffered']
    #allocation8 [shape = 's32[1]{0}', space=sflag, size = 0x4, scoped, tag = 'scoped memory for _lambda_.1']
    #allocation9 [shape = 'u8[73728]{0}', space=vmem, size = 0x12000, scoped, tag = 'input window, operand 4, single buffered']
    #allocation10 [shape = 'u8[262144]{0}', space=vmem, size = 0x40000, scoped, tag = 'output window, operand 0']
    %15 = vsyncpa [#allocation5], 0
    %s16 = scalar_lea.sflag [#allocation5], 1
    %17 = vsyncpa %s16, 0
    %18 = vsyncpa [#allocation8], 0
    %19 = vsyncpa [#allocation6], 0
    %s20 = scalar_lea.sflag [#allocation6], 1
    %21 = vsyncpa %s20, 0
    loop: start=0, step=1, limit=4
    $region2: #{_lambda_.1} parent=1 // loop_pre_header
      _
    $region3: #{_lambda_.1} parent=1 // loop_header
      %s23 = sphi 0, %s27
      %p24 = scmp.ge.s32.totalorder %s23, 4
      %s33 = sphi 0, %s35
      %s36 = sphi 0, %s33
      %s37 = sphi 0, %s36
      %s53 = sphi 0, %s37
      %s57 = sphi 0, %s57
      %s59 = sphi 0, %s57
      %s60 = sphi 0, %s59
      %s74 = sphi 0, %s60
      %s78 = sphi 0, %s78
      %s80 = sphi 0, %s78
      %s81 = sphi 0, %s80
      %s95 = sphi 0, %s81
      %s99 = sphi 0, %s99
      %s101 = sphi 0, %s99
      %s102 = sphi 0, %s101
      %s116 = sphi 0, %s102
      %s120 = sphi 0, %s120
      %s122 = sphi 0, %s120
      %s123 = sphi 0, %s122
      %s137 = sphi 0, %s123
      %s141 = sphi 0, %s141
      %s143 = sphi 0, %s141
      %s144 = sphi 0, %s143
      %s158 = sphi 0, %s144
      %s162 = sphi 0, %s162
      %s164 = sphi 0, %s162
      %s165 = sphi 0, %s164
      %s179 = sphi 0, %s165
      %s183 = sphi 0, %s183
      %s185 = sphi 0, %s183
      %s186 = sphi 0, %s185
      %s200 = sphi 0, %s186
      %s204 = sphi 0, %s204
      %s206 = sphi 0, %s204
      %s207 = sphi 0, %s206
      %s221 = sphi 0, %s207
      %s225 = sphi 0, %s225
      %s227 = sphi 0, %s225
      %s228 = sphi 0, %s227
      %s242 = sphi 0, %s228
      %s248 = sphi 0, %s250
      %s251 = sphi 0, %s248
      %s252 = sphi 0, %s251
      %s268 = sphi 0, %s252
    $region4: #{_lambda_.1} parent=1 // loop_header_branch
      %26 = sbr.rel (%p24) target = $region8
    $region5: #{_lambda_.1} parent=1 // loop_body
      %s28 = ssub.s32 %s23, 1
      %s29 = ssub.s32 %s23, 2
      %s30 = sadd.s32 %s23, 1
      %s31 = ssub.s32 %s23, %s30
      %p32 = scmp.eq.s32.totalorder %s31, 0
      %s34 = sadd.s32 %s33, 1
      %s35 = scalar_select %p32, %s33, %s34
      %p38 = pneg %p32
      %p39 = scmp.eq.s32.totalorder %s23, 1
      %p40 = por %p38, %p39
      %p41 = scmp.ne.s32.totalorder %s33, %s36
      %p42 = scmp.eq.s32.totalorder %s23, 0
      %p43 = por %p41, %p42
      %p44 = scmp.ne.s32.totalorder %s33, %s36
      %p45 = scmp.eq.s32.totalorder %s28, 1
      %p46 = por %p44, %p45
      %p47 = scmp.ne.s32.totalorder %s36, %s37
      %p48 = scmp.eq.s32.totalorder %s28, 0
      %p49 = por %p47, %p48
      %p50 = scmp.ne.s32.totalorder %s36, %s37
      %p51 = scmp.eq.s32.totalorder %s29, 1
      %p52 = por %p50, %p51
      %p54 = scmp.ne.s32.totalorder %s37, %s53
      %p55 = scmp.eq.s32.totalorder %s29, 0
      %p56 = por %p54, %p55
      %s58 = sadd.s32 %s57, 1
      %p61 = scmp.eq.s32.totalorder %s23, 1
      %p62 = scmp.ne.s32.totalorder %s57, %s59
      %p63 = scmp.eq.s32.totalorder %s23, 0
      %p64 = por %p62, %p63
      %p65 = scmp.ne.s32.totalorder %s57, %s59
      %p66 = scmp.eq.s32.totalorder %s28, 1
      %p67 = por %p65, %p66
      %p68 = scmp.ne.s32.totalorder %s59, %s60
      %p69 = scmp.eq.s32.totalorder %s28, 0
      %p70 = por %p68, %p69
      %p71 = scmp.ne.s32.totalorder %s59, %s60
      %p72 = scmp.eq.s32.totalorder %s29, 1
      %p73 = por %p71, %p72
      %p75 = scmp.ne.s32.totalorder %s60, %s74
      %p76 = scmp.eq.s32.totalorder %s29, 0
      %p77 = por %p75, %p76
      %s79 = sadd.s32 %s78, 1
      %p82 = scmp.eq.s32.totalorder %s23, 1
      %p83 = scmp.ne.s32.totalorder %s78, %s80
      %p84 = scmp.eq.s32.totalorder %s23, 0
      %p85 = por %p83, %p84
      %p86 = scmp.ne.s32.totalorder %s78, %s80
      %p87 = scmp.eq.s32.totalorder %s28, 1
      %p88 = por %p86, %p87
      %p89 = scmp.ne.s32.totalorder %s80, %s81
      %p90 = scmp.eq.s32.totalorder %s28, 0
      %p91 = por %p89, %p90
      %p92 = scmp.ne.s32.totalorder %s80, %s81
      %p93 = scmp.eq.s32.totalorder %s29, 1
      %p94 = por %p92, %p93
      %p96 = scmp.ne.s32.totalorder %s81, %s95
      %p97 = scmp.eq.s32.totalorder %s29, 0
      %p98 = por %p96, %p97
      %s100 = sadd.s32 %s99, 1
      %p103 = scmp.eq.s32.totalorder %s23, 1
      %p104 = scmp.ne.s32.totalorder %s99, %s101
      %p105 = scmp.eq.s32.totalorder %s23, 0
      %p106 = por %p104, %p105
      %p107 = scmp.ne.s32.totalorder %s99, %s101
      %p108 = scmp.eq.s32.totalorder %s28, 1
      %p109 = por %p107, %p108
      %p110 = scmp.ne.s32.totalorder %s101, %s102
      %p111 = scmp.eq.s32.totalorder %s28, 0
      %p112 = por %p110, %p111
      %p113 = scmp.ne.s32.totalorder %s101, %s102
      %p114 = scmp.eq.s32.totalorder %s29, 1
      %p115 = por %p113, %p114
      %p117 = scmp.ne.s32.totalorder %s102, %s116
      %p118 = scmp.eq.s32.totalorder %s29, 0
      %p119 = por %p117, %p118
      %s121 = sadd.s32 %s120, 1
      %p124 = scmp.eq.s32.totalorder %s23, 1
      %p125 = scmp.ne.s32.totalorder %s120, %s122
      %p126 = scmp.eq.s32.totalorder %s23, 0
      %p127 = por %p125, %p126
      %p128 = scmp.ne.s32.totalorder %s120, %s122
      %p129 = scmp.eq.s32.totalorder %s28, 1
      %p130 = por %p128, %p129
      %p131 = scmp.ne.s32.totalorder %s122, %s123
      %p132 = scmp.eq.s32.totalorder %s28, 0
      %p133 = por %p131, %p132
      %p134 = scmp.ne.s32.totalorder %s122, %s123
      %p135 = scmp.eq.s32.totalorder %s29, 1
      %p136 = por %p134, %p135
      %p138 = scmp.ne.s32.totalorder %s123, %s137
      %p139 = scmp.eq.s32.totalorder %s29, 0
      %p140 = por %p138, %p139
      %s142 = sadd.s32 %s141, 1
      %p145 = scmp.eq.s32.totalorder %s23, 1
      %p146 = scmp.ne.s32.totalorder %s141, %s143
      %p147 = scmp.eq.s32.totalorder %s23, 0
      %p148 = por %p146, %p147
      %p149 = scmp.ne.s32.totalorder %s141, %s143
      %p150 = scmp.eq.s32.totalorder %s28, 1
      %p151 = por %p149, %p150
      %p152 = scmp.ne.s32.totalorder %s143, %s144
      %p153 = scmp.eq.s32.totalorder %s28, 0
      %p154 = por %p152, %p153
      %p155 = scmp.ne.s32.totalorder %s143, %s144
      %p156 = scmp.eq.s32.totalorder %s29, 1
      %p157 = por %p155, %p156
      %p159 = scmp.ne.s32.totalorder %s144, %s158
      %p160 = scmp.eq.s32.totalorder %s29, 0
      %p161 = por %p159, %p160
      %s163 = sadd.s32 %s162, 1
      %p166 = scmp.eq.s32.totalorder %s23, 1
      %p167 = scmp.ne.s32.totalorder %s162, %s164
      %p168 = scmp.eq.s32.totalorder %s23, 0
      %p169 = por %p167, %p168
      %p170 = scmp.ne.s32.totalorder %s162, %s164
      %p171 = scmp.eq.s32.totalorder %s28, 1
      %p172 = por %p170, %p171
      %p173 = scmp.ne.s32.totalorder %s164, %s165
      %p174 = scmp.eq.s32.totalorder %s28, 0
      %p175 = por %p173, %p174
      %p176 = scmp.ne.s32.totalorder %s164, %s165
      %p177 = scmp.eq.s32.totalorder %s29, 1
      %p178 = por %p176, %p177
      %p180 = scmp.ne.s32.totalorder %s165, %s179
      %p181 = scmp.eq.s32.totalorder %s29, 0
      %p182 = por %p180, %p181
      %s184 = sadd.s32 %s183, 1
      %p187 = scmp.eq.s32.totalorder %s23, 1
      %p188 = scmp.ne.s32.totalorder %s183, %s185
      %p189 = scmp.eq.s32.totalorder %s23, 0
      %p190 = por %p188, %p189
      %p191 = scmp.ne.s32.totalorder %s183, %s185
      %p192 = scmp.eq.s32.totalorder %s28, 1
      %p193 = por %p191, %p192
      %p194 = scmp.ne.s32.totalorder %s185, %s186
      %p195 = scmp.eq.s32.totalorder %s28, 0
      %p196 = por %p194, %p195
      %p197 = scmp.ne.s32.totalorder %s185, %s186
      %p198 = scmp.eq.s32.totalorder %s29, 1
      %p199 = por %p197, %p198
      %p201 = scmp.ne.s32.totalorder %s186, %s200
      %p202 = scmp.eq.s32.totalorder %s29, 0
      %p203 = por %p201, %p202
      %s205 = sadd.s32 %s204, 1
      %p208 = scmp.eq.s32.totalorder %s23, 1
      %p209 = scmp.ne.s32.totalorder %s204, %s206
      %p210 = scmp.eq.s32.totalorder %s23, 0
      %p211 = por %p209, %p210
      %p212 = scmp.ne.s32.totalorder %s204, %s206
      %p213 = scmp.eq.s32.totalorder %s28, 1
      %p214 = por %p212, %p213
      %p215 = scmp.ne.s32.totalorder %s206, %s207
      %p216 = scmp.eq.s32.totalorder %s28, 0
      %p217 = por %p215, %p216
      %p218 = scmp.ne.s32.totalorder %s206, %s207
      %p219 = scmp.eq.s32.totalorder %s29, 1
      %p220 = por %p218, %p219
      %p222 = scmp.ne.s32.totalorder %s207, %s221
      %p223 = scmp.eq.s32.totalorder %s29, 0
      %p224 = por %p222, %p223
      %s226 = sadd.s32 %s225, 1
      %p229 = scmp.eq.s32.totalorder %s23, 1
      %p230 = scmp.ne.s32.totalorder %s225, %s227
      %p231 = scmp.eq.s32.totalorder %s23, 0
      %p232 = por %p230, %p231
      %p233 = scmp.ne.s32.totalorder %s225, %s227
      %p234 = scmp.eq.s32.totalorder %s28, 1
      %p235 = por %p233, %p234
      %p236 = scmp.ne.s32.totalorder %s227, %s228
      %p237 = scmp.eq.s32.totalorder %s28, 0
      %p238 = por %p236, %p237
      %p239 = scmp.ne.s32.totalorder %s227, %s228
      %p240 = scmp.eq.s32.totalorder %s29, 1
      %p241 = por %p239, %p240
      %p243 = scmp.ne.s32.totalorder %s228, %s242
      %p244 = scmp.eq.s32.totalorder %s29, 0
      %p245 = por %p243, %p244
      %s246 = ssub.s32 %s23, %s30
      %p247 = scmp.eq.s32.totalorder %s246, 0
      %s249 = sadd.s32 %s248, 1
      %s250 = scalar_select %p247, %s248, %s249
      %p253 = pneg %p247
      %p254 = scmp.eq.s32.totalorder %s23, 1
      %p255 = por %p253, %p254
      %p256 = scmp.ne.s32.totalorder %s248, %s251
      %p257 = scmp.eq.s32.totalorder %s23, 0
      %p258 = por %p256, %p257
      %p259 = scmp.ne.s32.totalorder %s248, %s251
      %p260 = scmp.eq.s32.totalorder %s28, 1
      %p261 = por %p259, %p260
      %p262 = scmp.ne.s32.totalorder %s251, %s252
      %p263 = scmp.eq.s32.totalorder %s28, 0
      %p264 = por %p262, %p263
      %p265 = scmp.ne.s32.totalorder %s251, %s252
      %p266 = scmp.eq.s32.totalorder %s29, 1
      %p267 = por %p265, %p266
      %p269 = scmp.ne.s32.totalorder %s252, %s268
      %p270 = scmp.eq.s32.totalorder %s29, 0
      %p271 = por %p269, %p270
      %p272 = scmp.le.s32.totalorder 1, %s23
      %p273 = scmp.lt.s32.totalorder %s23, 3
      %p274 = pnand %p272, %p273
      %p275 = pneg %p274
      // Predicated region
      $region9: #{_lambda_.1} parent=5 // pred_check
        _
      $region10: #{_lambda_.1} parent=5 // pred_check_branch
        %277 = sbr.rel (%p274) target = $region12
      $region11: #{_lambda_.1} parent=5 // pred_region
        %s278 = ssub.s32 %s23, 1
        // Predicated region
        $region13: #{_lambda_.1} parent=11 // pred_check
          %p279 = pneg %p70
        $region14: #{_lambda_.1} parent=11 // pred_check_branch
          %281 = sbr.rel (%p279) target = $region16
        $region15: #{_lambda_.1} parent=11 // pred_region
          %s283 = ssub.s32 1024, 1024
          %284 = vsyncadd [#allocation8], %s283
          %s285 = sshll.u32 [#allocation7], 4
          %s286 = int_to_ptr.vmem [resolvable:$true] %s285
          %291 = dma.hbm_to_vmem [thread:$0]  %s1, 1024, %s286, [#allocation8], 64, 64, 4
        $region16: #{_lambda_.1} parent=11 // pred_fallthru
          _
        // Predicated region
        $region17: #{_lambda_.1} parent=11 // pred_check
          %p292 = pneg %p91
        $region18: #{_lambda_.1} parent=11 // pred_check_branch
          %294 = sbr.rel (%p292) target = $region20
        $region19: #{_lambda_.1} parent=11 // pred_region
          _
        $region20: #{_lambda_.1} parent=11 // pred_fallthru
          _
        // Predicated region
        $region21: #{_lambda_.1} parent=11 // pred_check
          %p295 = pneg %p112
        $region22: #{_lambda_.1} parent=11 // pred_check_branch
          %297 = sbr.rel (%p295) target = $region24
        $region23: #{_lambda_.1} parent=11 // pred_region
          _
        $region24: #{_lambda_.1} parent=11 // pred_fallthru
          _
        // Predicated region
        $region25: #{_lambda_.1} parent=11 // pred_check
          %p298 = pneg %p133
        $region26: #{_lambda_.1} parent=11 // pred_check_branch
          %300 = sbr.rel (%p298) target = $region28
        $region27: #{_lambda_.1} parent=11 // pred_region
          %s302 = ssub.s32 2304, 2304
          %303 = vsyncadd [#allocation8], %s302
          %s304 = sshll.u32 [#allocation9], 4
          %s305 = int_to_ptr.vmem [resolvable:$true] %s304
          %310 = dma.hbm_to_vmem [thread:$0]  %s4, 2304, %s305, [#allocation8], 64, 64, 4
        $region28: #{_lambda_.1} parent=11 // pred_fallthru
          _
        // Predicated region
        $region29: #{_lambda_.1} parent=11 // pred_check
          %p311 = pneg %p154
        $region30: #{_lambda_.1} parent=11 // pred_check_branch
          %313 = sbr.rel (%p311) target = $region32
        $region31: #{_lambda_.1} parent=11 // pred_region
          _
        $region32: #{_lambda_.1} parent=11 // pred_fallthru
          _
        // Predicated region
        $region33: #{_lambda_.1} parent=11 // pred_check
          %p314 = pneg %p175
        $region34: #{_lambda_.1} parent=11 // pred_check_branch
          %316 = sbr.rel (%p314) target = $region36
        $region35: #{_lambda_.1} parent=11 // pred_region
          _
        $region36: #{_lambda_.1} parent=11 // pred_fallthru
          _
        // Predicated region
        $region37: #{_lambda_.1} parent=11 // pred_check
          %p317 = pneg %p196
        $region38: #{_lambda_.1} parent=11 // pred_check_branch
          %319 = sbr.rel (%p317) target = $region40
        $region39: #{_lambda_.1} parent=11 // pred_region
          _
        $region40: #{_lambda_.1} parent=11 // pred_fallthru
          _
        // Predicated region
        $region41: #{_lambda_.1} parent=11 // pred_check
          %p320 = pneg %p217
        $region42: #{_lambda_.1} parent=11 // pred_check_branch
          %322 = sbr.rel (%p320) target = $region44
        $region43: #{_lambda_.1} parent=11 // pred_region
          _
        $region44: #{_lambda_.1} parent=11 // pred_fallthru
          _
        // Predicated region
        $region45: #{_lambda_.1} parent=11 // pred_check
          %p323 = pneg %p238
        $region46: #{_lambda_.1} parent=11 // pred_check_branch
          %325 = sbr.rel (%p323) target = $region48
        $region47: #{_lambda_.1} parent=11 // pred_region
          _
        $region48: #{_lambda_.1} parent=11 // pred_fallthru
          _
      $region12: #{_lambda_.1} parent=5 // pred_fallthru
        _
      %p326 = scmp.lt.s32.totalorder %s23, 2
      // Predicated region
      $region49: #{_lambda_.1} parent=5 // pred_check
        %p327 = pneg %p326
      $region50: #{_lambda_.1} parent=5 // pred_check_branch
        %329 = sbr.rel (%p327) target = $region52
      $region51: #{_lambda_.1} parent=5 // pred_region
        // Predicated region
        $region53: #{_lambda_.1} parent=51 // pred_check
          %p330 = pneg %p43
        $region54: #{_lambda_.1} parent=51 // pred_check_branch
          %332 = sbr.rel (%p330) target = $region56
        $region55: #{_lambda_.1} parent=51 // pred_region
          %s333 = sand.u32 %s33, 1
          %s334 = scalar_lea.sflag [#allocation5], %s333
          %s335 = sand.u32 %s33, 1
          %s336 = smul.addr %s335, 256
          %s337 = scalar_lea.vmem [#allocation4], %s336
          %s338 = smul.u32 32, %s23
          %s340 = ssub.s32 4096, 4096
          %341 = vsyncadd %s334, %s340
          %s342 = smul.addr %s338, 128
          %s343 = scalar_lea.hbm %s0, %s342
          %s344 = sshll.u32 %s337, 4
          %s345 = int_to_ptr.vmem [resolvable:$true] %s344
          %350 = dma.hbm_to_vmem [thread:$0]  %s343, 4096, %s345, %s334, 128, 128, 8
        $region56: #{_lambda_.1} parent=51 // pred_fallthru
          _
      $region52: #{_lambda_.1} parent=5 // pred_fallthru
        _
      %p351 = scmp.le.s32.totalorder 1, %s23
      %p352 = scmp.lt.s32.totalorder %s23, 3
      %p353 = pnand %p351, %p352
      %p354 = pneg %p353
      // Predicated region
      $region57: #{_lambda_.1} parent=5 // pred_check
        _
      $region58: #{_lambda_.1} parent=5 // pred_check_branch
        %356 = sbr.rel (%p353) target = $region60
      $region59: #{_lambda_.1} parent=5 // pred_region
        %s357 = ssub.s32 %s23, 1
        %s358 = sand.u32 %s36, 1
        %s359 = scalar_lea.sflag [#allocation5], %s358
        %s360 = sand.u32 %s36, 1
        %s361 = smul.addr %s360, 256
        %s362 = scalar_lea.vmem [#allocation4], %s361
        // Predicated region
        $region61: #{_lambda_.1} parent=59 // pred_check
          %p363 = pneg %p49
        $region62: #{_lambda_.1} parent=59 // pred_check_branch
          %365 = sbr.rel (%p363) target = $region64
        $region63: #{_lambda_.1} parent=59 // pred_region
          %366 = dma.done %s359, 4096
        $region64: #{_lambda_.1} parent=59 // pred_fallthru
          _
        // Predicated region
        $region65: #{_lambda_.1} parent=59 // pred_check
          %p367 = pneg %p70
        $region66: #{_lambda_.1} parent=59 // pred_check_branch
          %369 = sbr.rel (%p367) target = $region68
        $region67: #{_lambda_.1} parent=59 // pred_region
          %370 = dma.done [#allocation8], 1024
        $region68: #{_lambda_.1} parent=59 // pred_fallthru
          _
        // Predicated region
        $region69: #{_lambda_.1} parent=59 // pred_check
          %p371 = pneg %p133
        $region70: #{_lambda_.1} parent=59 // pred_check_branch
          %373 = sbr.rel (%p371) target = $region72
        $region71: #{_lambda_.1} parent=59 // pred_region
          %374 = dma.done [#allocation8], 2304
        $region72: #{_lambda_.1} parent=59 // pred_fallthru
          _
        %s375 = sand.u32 %s36, 1
        %s376 = scalar_lea.sflag [#allocation5], %s375
        %s377 = sand.u32 %s36, 1
        %s378 = smul.addr %s377, 256
        %s379 = scalar_lea.vmem [#allocation4], %s378
        %p380 = pneg %p49
        %p381 = pneg %p46
        %p382 = pneg %p70
        %p383 = pneg %p67
        %p384 = pneg %p91
        %p385 = pneg %p88
        %p386 = pneg %p112
        %p387 = pneg %p109
        %p388 = pneg %p133
        %p389 = pneg %p130
        %p390 = pneg %p154
        %p391 = pneg %p151
        %p392 = pneg %p175
        %p393 = pneg %p172
        %p394 = pneg %p196
        %p395 = pneg %p193
        %p396 = pneg %p217
        %p397 = pneg %p214
        %p398 = pneg %p238
        %p399 = pneg %p235
        %p400 = pneg %p264
        %p401 = pneg %p261
        %s402 = sand.u32 %s251, 1
        %s403 = scalar_lea.sflag [#allocation6], %s402
        %s404 = sand.u32 %s251, 1
        %s405 = smul.addr %s404, 256
        %s406 = scalar_lea.vmem [#allocation10], %s405
        %s407 = smul.u32 32, %s28
        %s408 = smul.u32 32, %s28
        %v410 = vld [vmem:[%s362] sm:$0xff]
        %v411 = vld [vmem:[%s362 + $0x8] sm:$0xff]
        %v412 = vld [vmem:[%s362 + $0x10] sm:$0xff]
        %v413 = vld [vmem:[%s362 + $0x18] sm:$0xff]
        %v414 = vld [vmem:[%s362 + $0x20] sm:$0xff]
        %v415 = vld [vmem:[%s362 + $0x28] sm:$0xff]
        %v416 = vld [vmem:[%s362 + $0x30] sm:$0xff]
        %v417 = vld [vmem:[%s362 + $0x38] sm:$0xff]
        %v418 = vld [vmem:[%s362 + $0x40] sm:$0xff]
        %v419 = vld [vmem:[%s362 + $0x48] sm:$0xff]
        %v420 = vld [vmem:[%s362 + $0x50] sm:$0xff]
        %v421 = vld [vmem:[%s362 + $0x58] sm:$0xff]
        %v422 = vld [vmem:[%s362 + $0x60] sm:$0xff]
        %v423 = vld [vmem:[%s362 + $0x68] sm:$0xff]
        %v424 = vld [vmem:[%s362 + $0x70] sm:$0xff]
        %v425 = vld [vmem:[%s362 + $0x78] sm:$0xff]
        %v426 = vld [vmem:[%s362 + $0x80] sm:$0xff]
        %v427 = vld [vmem:[%s362 + $0x88] sm:$0xff]
        %v428 = vld [vmem:[%s362 + $0x90] sm:$0xff]
        %v429 = vld [vmem:[%s362 + $0x98] sm:$0xff]
        %v430 = vld [vmem:[%s362 + $0xa0] sm:$0xff]
        %v431 = vld [vmem:[%s362 + $0xa8] sm:$0xff]
        %v432 = vld [vmem:[%s362 + $0xb0] sm:$0xff]
        %v433 = vld [vmem:[%s362 + $0xb8] sm:$0xff]
        %v434 = vld [vmem:[%s362 + $0xc0] sm:$0xff]
        %v435 = vld [vmem:[%s362 + $0xc8] sm:$0xff]
        %v436 = vld [vmem:[%s362 + $0xd0] sm:$0xff]
        %v437 = vld [vmem:[%s362 + $0xd8] sm:$0xff]
        %v438 = vld [vmem:[%s362 + $0xe0] sm:$0xff]
        %v439 = vld [vmem:[%s362 + $0xe8] sm:$0xff]
        %v440 = vld [vmem:[%s362 + $0xf0] sm:$0xff]
        %v441 = vld [vmem:[%s362 + $0xf8] sm:$0xff]
        %v442 = vpack.c.bf16 %v411, %v410
        %v443 = vpack.c.bf16 %v413, %v412
        %v444 = vpack.c.bf16 %v415, %v414
        %v445 = vpack.c.bf16 %v417, %v416
        %v446 = vpack.c.bf16 %v419, %v418
        %v447 = vpack.c.bf16 %v421, %v420
        %v448 = vpack.c.bf16 %v423, %v422
        %v449 = vpack.c.bf16 %v425, %v424
        %v450 = vpack.c.bf16 %v427, %v426
        %v451 = vpack.c.bf16 %v429, %v428
        %v452 = vpack.c.bf16 %v431, %v430
        %v453 = vpack.c.bf16 %v433, %v432
        %v454 = vpack.c.bf16 %v435, %v434
        %v455 = vpack.c.bf16 %v437, %v436
        %v456 = vpack.c.bf16 %v439, %v438
        %v457 = vpack.c.bf16 %v441, %v440
        %v458 = vld [vmem:[#allocation7] sm:$0xf]
        %v459 = vld [vmem:[#allocation7 + $0x4] sm:$0xf]
        %v460 = vld [vmem:[#allocation7 + $0x8] sm:$0xf]
        %v461 = vld [vmem:[#allocation7 + $0xc] sm:$0xf]
        %v462 = vld [vmem:[#allocation7 + $0x10] sm:$0xf]
        %v463 = vld [vmem:[#allocation7 + $0x14] sm:$0xf]
        %v464 = vld [vmem:[#allocation7 + $0x18] sm:$0xf]
        %v465 = vld [vmem:[#allocation7 + $0x1c] sm:$0xf]
        %v466 = vld [vmem:[#allocation7 + $0x20] sm:$0xf]
        %v467 = vld [vmem:[#allocation7 + $0x24] sm:$0xf]
        %v468 = vld [vmem:[#allocation7 + $0x28] sm:$0xf]
        %v469 = vld [vmem:[#allocation7 + $0x2c] sm:$0xf]
        %v470 = vld [vmem:[#allocation7 + $0x30] sm:$0xf]
        %v471 = vld [vmem:[#allocation7 + $0x34] sm:$0xf]
        %v472 = vld [vmem:[#allocation7 + $0x38] sm:$0xf]
        %v473 = vld [vmem:[#allocation7 + $0x3c] sm:$0xf]
        %v490 = vunpack.c.l.b16 %v458
        %v491 = vunpack.c.l.b16 %v459
        %v492 = vunpack.c.l.b16 %v460
        %v493 = vunpack.c.l.b16 %v461
        %v494 = vunpack.c.l.b16 %v462
        %v495 = vunpack.c.l.b16 %v463
        %v496 = vunpack.c.l.b16 %v464
        %v497 = vunpack.c.l.b16 %v465
        %v498 = vunpack.c.l.b16 %v466
        %v499 = vunpack.c.l.b16 %v467
        %v500 = vunpack.c.l.b16 %v468
        %v501 = vunpack.c.l.b16 %v469
        %v502 = vunpack.c.l.b16 %v470
        %v503 = vunpack.c.l.b16 %v471
        %v504 = vunpack.c.l.b16 %v472
        %v505 = vunpack.c.l.b16 %v473
        %v506 = vpack.c.b16 %v491, %v490
        %v507 = vpack.c.b16 %v493, %v492
        %v508 = vpack.c.b16 %v495, %v494
        %v509 = vpack.c.b16 %v497, %v496
        %v510 = vpack.c.b16 %v499, %v498
        %v511 = vpack.c.b16 %v501, %v500
        %v512 = vpack.c.b16 %v503, %v502
        %v513 = vpack.c.b16 %v505, %v504
        %522 = vmatprep.subr.bf16.mxu0 0
        %523 = vmatpush1.bf16.msra.mxu0 %v506
        %524 = vmatprep.subr.bf16.mxu0 0
        %525 = vmatpush1.bf16.msra.mxu0 %v507
        %526 = vmatprep.subr.bf16.mxu0 0
        %527 = vmatpush1.bf16.msra.mxu0 %v508
        %528 = vmatprep.subr.bf16.mxu0 0
        %529 = vmatpush1.bf16.msra.mxu0 %v509
        %530 = vmatprep.subr.bf16.mxu0 0
        %531 = vmatpush1.bf16.msra.mxu0 %v510
        %532 = vmatprep.subr.bf16.mxu0 0
        %533 = vmatpush1.bf16.msra.mxu0 %v511
        %534 = vmatprep.subr.bf16.mxu0 0
        %535 = vmatpush1.bf16.msra.mxu0 %v512
        %536 = vmatprep.subr.bf16.mxu0 0
        %537 = vmatpush1.bf16.msra.mxu0 %v513
        %538 = vmatprep.subr.bf16.mxu0 0
        %539 = vmatpush1.bf16.msra.mxu0 0
        %540 = vmatprep.subr.bf16.mxu0 0
        %541 = vmatpush1.bf16.msra.mxu0 0
        %542 = vmatprep.subr.bf16.mxu0 0
        %543 = vmatpush1.bf16.msra.mxu0 0
        %544 = vmatprep.subr.bf16.mxu0 0
        %545 = vmatpush1.bf16.msra.mxu0 0
        %546 = vmatprep.subr.bf16.mxu0 0
        %547 = vmatpush1.bf16.msra.mxu0 0
        %548 = vmatprep.subr.bf16.mxu0 0
        %549 = vmatpush1.bf16.msra.mxu0 0
        %550 = vmatprep.subr.bf16.mxu0 0
        %551 = vmatpush1.bf16.msra.mxu0 0
        %552 = vmatprep.subr.bf16.mxu0 0
        %553 = vmatpush1.bf16.msra.mxu0 0
        %554 = vmatprep.mubr.bf16.mxu0 0
        %555 = vmatmul.mubr.bf16.gmra.mrb[0].mxu0 %v442
        %v556 = vpop.f32.mrb[0].mxu0
        %v557 = vadd.f32 0.0, %v556
        %v558 = vpop.f32.mrb[0].mxu0
        %v559 = vpop.f32.mrb[0].mxu0
        %v560 = vadd.f32 0.0, %v559
        %v561 = vpop.f32.mrb[0].mxu0
        %562 = vmatprep.mubr.bf16.mxu0 0
        %563 = vmatmul.mubr.bf16.gmra.mrb[0].mxu0 %v443
        %v564 = vpop.f32.mrb[0].mxu0
        %v565 = vadd.f32 0.0, %v564
        %v566 = vpop.f32.mrb[0].mxu0
        %v567 = vpop.f32.mrb[0].mxu0
        %v568 = vadd.f32 0.0, %v567
        %v569 = vpop.f32.mrb[0].mxu0
        %570 = vmatprep.mubr.bf16.mxu0 0
        %571 = vmatmul.mubr.bf16.gmra.mrb[0].mxu0 %v444
        %v572 = vpop.f32.mrb[0].mxu0
        %v573 = vadd.f32 0.0, %v572
        %v574 = vpop.f32.mrb[0].mxu0
        %v575 = vpop.f32.mrb[0].mxu0
        %v576 = vadd.f32 0.0, %v575
        %v577 = vpop.f32.mrb[0].mxu0
        %578 = vmatprep.mubr.bf16.mxu0 0
        %579 = vmatmul.mubr.bf16.gmra.mrb[0].mxu0 %v445
        %v580 = vpop.f32.mrb[0].mxu0
        %v581 = vadd.f32 0.0, %v580
        %v582 = vpop.f32.mrb[0].mxu0
        %v583 = vpop.f32.mrb[0].mxu0
        %v584 = vadd.f32 0.0, %v583
        %v585 = vpop.f32.mrb[0].mxu0
        %586 = vmatprep.mubr.bf16.mxu0 0
        %587 = vmatmul.mubr.bf16.gmra.mrb[0].mxu0 %v446
        %v588 = vpop.f32.mrb[0].mxu0
        %v589 = vadd.f32 0.0, %v588
        %v590 = vpop.f32.mrb[0].mxu0
        %v591 = vpop.f32.mrb[0].mxu0
        %v592 = vadd.f32 0.0, %v591
        %v593 = vpop.f32.mrb[0].mxu0
        %594 = vmatprep.mubr.bf16.mxu0 0
        %595 = vmatmul.mubr.bf16.gmra.mrb[0].mxu0 %v447
        %v596 = vpop.f32.mrb[0].mxu0
        %v597 = vadd.f32 0.0, %v596
        %v598 = vpop.f32.mrb[0].mxu0
        %v599 = vpop.f32.mrb[0].mxu0
        %v600 = vadd.f32 0.0, %v599
        %v601 = vpop.f32.mrb[0].mxu0
        %602 = vmatprep.mubr.bf16.mxu0 0
        %603 = vmatmul.mubr.bf16.gmra.mrb[0].mxu0 %v448
        %v604 = vpop.f32.mrb[0].mxu0
        %v605 = vadd.f32 0.0, %v604
        %v606 = vpop.f32.mrb[0].mxu0
        %v607 = vpop.f32.mrb[0].mxu0
        %v608 = vadd.f32 0.0, %v607
        %v609 = vpop.f32.mrb[0].mxu0
        %610 = vmatprep.mubr.bf16.mxu0 0
        %611 = vmatmul.mubr.bf16.gmra.mrb[0].mxu0 %v449
        %v612 = vpop.f32.mrb[0].mxu0
        %v613 = vadd.f32 0.0, %v612
        %v614 = vpop.f32.mrb[0].mxu0
        %v615 = vpop.f32.mrb[0].mxu0
        %v616 = vadd.f32 0.0, %v615
        %v617 = vpop.f32.mrb[0].mxu0
        %618 = vmatprep.mubr.bf16.mxu0 0
        %619 = vmatmul.mubr.bf16.gmra.mrb[0].mxu0 %v450
        %v620 = vpop.f32.mrb[0].mxu0
        %v621 = vadd.f32 0.0, %v620
        %v622 = vpop.f32.mrb[0].mxu0
        %v623 = vpop.f32.mrb[0].mxu0
        %v624 = vadd.f32 0.0, %v623
        %v625 = vpop.f32.mrb[0].mxu0
        %626 = vmatprep.mubr.bf16.mxu0 0
        %627 = vmatmul.mubr.bf16.gmra.mrb[0].mxu0 %v451
        %v628 = vpop.f32.mrb[0].mxu0
        %v629 = vadd.f32 0.0, %v628
        %v630 = vpop.f32.mrb[0].mxu0
        %v631 = vpop.f32.mrb[0].mxu0
        %v632 = vadd.f32 0.0, %v631
        %v633 = vpop.f32.mrb[0].mxu0
        %634 = vmatprep.mubr.bf16.mxu0 0
        %635 = vmatmul.mubr.bf16.gmra.mrb[0].mxu0 %v452
        %v636 = vpop.f32.mrb[0].mxu0
        %v637 = vadd.f32 0.0, %v636
        %v638 = vpop.f32.mrb[0].mxu0
        %v639 = vpop.f32.mrb[0].mxu0
        %v640 = vadd.f32 0.0, %v639
        %v641 = vpop.f32.mrb[0].mxu0
        %642 = vmatprep.mubr.bf16.mxu0 0
        %643 = vmatmul.mubr.bf16.gmra.mrb[0].mxu0 %v453
        %v644 = vpop.f32.mrb[0].mxu0
        %v645 = vadd.f32 0.0, %v644
        %v646 = vpop.f32.mrb[0].mxu0
        %v647 = vpop.f32.mrb[0].mxu0
        %v648 = vadd.f32 0.0, %v647
        %v649 = vpop.f32.mrb[0].mxu0
        %650 = vmatprep.mubr.bf16.mxu0 0
        %651 = vmatmul.mubr.bf16.gmra.mrb[0].mxu0 %v454
        %v652 = vpop.f32.mrb[0].mxu0
        %v653 = vadd.f32 0.0, %v652
        %v654 = vpop.f32.mrb[0].mxu0
        %v655 = vpop.f32.mrb[0].mxu0
        %v656 = vadd.f32 0.0, %v655
        %v657 = vpop.f32.mrb[0].mxu0
        %658 = vmatprep.mubr.bf16.mxu0 0
        %659 = vmatmul.mubr.bf16.gmra.mrb[0].mxu0 %v455
        %v660 = vpop.f32.mrb[0].mxu0
        %v661 = vadd.f32 0.0, %v660
        %v662 = vpop.f32.mrb[0].mxu0
        %v663 = vpop.f32.mrb[0].mxu0
        %v664 = vadd.f32 0.0, %v663
        %v665 = vpop.f32.mrb[0].mxu0
        %666 = vmatprep.mubr.bf16.mxu0 0
        %667 = vmatmul.mubr.bf16.gmra.mrb[0].mxu0 %v456
        %v668 = vpop.f32.mrb[0].mxu0
        %v669 = vadd.f32 0.0, %v668
        %v670 = vpop.f32.mrb[0].mxu0
        %v671 = vpop.f32.mrb[0].mxu0
        %v672 = vadd.f32 0.0, %v671
        %v673 = vpop.f32.mrb[0].mxu0
        %674 = vmatprep.mubr.bf16.mxu0 0
        %675 = vmatmul.mubr.bf16.gmra.mrb[0].mxu0 %v457
        %v676 = vpop.f32.mrb[0].mxu0
        %v677 = vadd.f32 0.0, %v676
        %v678 = vpop.f32.mrb[0].mxu0
        %v679 = vpop.f32.mrb[0].mxu0
        %v680 = vadd.f32 0.0, %v679
        %v681 = vpop.f32.mrb[0].mxu0
        %682 = vdwg.mxu0
        %v683 = vld [vmem:[%s2] sm:$0x1]
        %v684 = vld [vmem:[%s3] sm:$0x1]
        %vm685 = vcmask 261120
        %v686 = vsel %vm685, %v557, 0.0
        %v687 = vsel %vm685, %v560, 0.0
        %v688 = vadd.f32 %v686, %v687
        %v689 = vsel %vm685, %v565, 0.0
        %v690 = vadd.f32 %v688, %v689
        %v691 = vsel %vm685, %v568, 0.0
        %v692 = vadd.f32 %v690, %v691
        %v693 = vsel %vm685, %v573, 0.0
        %v694 = vadd.f32 %v692, %v693
        %v695 = vsel %vm685, %v576, 0.0
        %v696 = vadd.f32 %v694, %v695
        %v697 = vsel %vm685, %v581, 0.0
        %v698 = vadd.f32 %v696, %v697
        %v699 = vsel %vm685, %v584, 0.0
        %v700 = vadd.f32 %v698, %v699
        %v701 = vsel %vm685, %v589, 0.0
        %v702 = vadd.f32 %v700, %v701
        %v703 = vsel %vm685, %v592, 0.0
        %v704 = vadd.f32 %v702, %v703
        %v705 = vsel %vm685, %v597, 0.0
        %v706 = vadd.f32 %v704, %v705
        %v707 = vsel %vm685, %v600, 0.0
        %v708 = vadd.f32 %v706, %v707
        %v709 = vsel %vm685, %v605, 0.0
        %v710 = vadd.f32 %v708, %v709
        %v711 = vsel %vm685, %v608, 0.0
        %v712 = vadd.f32 %v710, %v711
        %v713 = vsel %vm685, %v613, 0.0
        %v714 = vadd.f32 %v712, %v713
        %v715 = vsel %vm685, %v616, 0.0
        %v716 = vadd.f32 %v714, %v715
        %v717 = vsel %vm685, %v621, 0.0
        %v718 = vadd.f32 %v716, %v717
        %v719 = vsel %vm685, %v624, 0.0
        %v720 = vadd.f32 %v718, %v719
        %v721 = vsel %vm685, %v629, 0.0
        %v722 = vadd.f32 %v720, %v721
        %v723 = vsel %vm685, %v632, 0.0
        %v724 = vadd.f32 %v722, %v723
        %v725 = vsel %vm685, %v637, 0.0
        %v726 = vadd.f32 %v724, %v725
        %v727 = vsel %vm685, %v640, 0.0
        %v728 = vadd.f32 %v726, %v727
        %v729 = vsel %vm685, %v645, 0.0
        %v730 = vadd.f32 %v728, %v729
        %v731 = vsel %vm685, %v648, 0.0
        %v732 = vadd.f32 %v730, %v731
        %v733 = vsel %vm685, %v653, 0.0
        %v734 = vadd.f32 %v732, %v733
        %v735 = vsel %vm685, %v656, 0.0
        %v736 = vadd.f32 %v734, %v735
        %v737 = vsel %vm685, %v661, 0.0
        %v738 = vadd.f32 %v736, %v737
        %v739 = vsel %vm685, %v664, 0.0
        %v740 = vadd.f32 %v738, %v739
        %v741 = vsel %vm685, %v669, 0.0
        %v742 = vadd.f32 %v740, %v741
        %v743 = vsel %vm685, %v672, 0.0
        %v744 = vadd.f32 %v742, %v743
        %v745 = vsel %vm685, %v677, 0.0
        %v746 = vadd.f32 %v744, %v745
        %v747 = vsel %vm685, %v680, 0.0
        %v748 = vadd.f32 %v746, %v747
        %v749 = vrot.slane %v748, 4
        %v750 = vadd.f32 %v748, %v749
        %v751 = vrot.slane %v750, 2
        %v752 = vadd.f32 %v750, %v751
        %v753 = vrot.slane %v752, 1
        %v754 = vadd.f32 %v752, %v753
        %v755 = vmul.f32 %v557, %v557
        %v756 = vmul.f32 %v560, %v560
        %v757 = vmul.f32 %v565, %v565
        %v758 = vmul.f32 %v568, %v568
        %v759 = vmul.f32 %v573, %v573
        %v760 = vmul.f32 %v576, %v576
        %v761 = vmul.f32 %v581, %v581
        %v762 = vmul.f32 %v584, %v584
        %v763 = vmul.f32 %v589, %v589
        %v764 = vmul.f32 %v592, %v592
        %v765 = vmul.f32 %v597, %v597
        %v766 = vmul.f32 %v600, %v600
        %v767 = vmul.f32 %v605, %v605
        %v768 = vmul.f32 %v608, %v608
        %v769 = vmul.f32 %v613, %v613
        %v770 = vmul.f32 %v616, %v616
        %v771 = vmul.f32 %v621, %v621
        %v772 = vmul.f32 %v624, %v624
        %v773 = vmul.f32 %v629, %v629
        %v774 = vmul.f32 %v632, %v632
        %v775 = vmul.f32 %v637, %v637
        %v776 = vmul.f32 %v640, %v640
        %v777 = vmul.f32 %v645, %v645
        %v778 = vmul.f32 %v648, %v648
        %v779 = vmul.f32 %v653, %v653
        %v780 = vmul.f32 %v656, %v656
        %v781 = vmul.f32 %v661, %v661
        %v782 = vmul.f32 %v664, %v664
        %v783 = vmul.f32 %v669, %v669
        %v784 = vmul.f32 %v672, %v672
        %v785 = vmul.f32 %v677, %v677
        %v786 = vmul.f32 %v680, %v680
        %v787 = vsel %vm685, %v755, 0.0
        %v788 = vsel %vm685, %v756, 0.0
        %v789 = vadd.f32 %v787, %v788
        %v790 = vsel %vm685, %v757, 0.0
        %v791 = vadd.f32 %v789, %v790
        %v792 = vsel %vm685, %v758, 0.0
        %v793 = vadd.f32 %v791, %v792
        %v794 = vsel %vm685, %v759, 0.0
        %v795 = vadd.f32 %v793, %v794
        %v796 = vsel %vm685, %v760, 0.0
        %v797 = vadd.f32 %v795, %v796
        %v798 = vsel %vm685, %v761, 0.0
        %v799 = vadd.f32 %v797, %v798
        %v800 = vsel %vm685, %v762, 0.0
        %v801 = vadd.f32 %v799, %v800
        %v802 = vsel %vm685, %v763, 0.0
        %v803 = vadd.f32 %v801, %v802
        %v804 = vsel %vm685, %v764, 0.0
        %v805 = vadd.f32 %v803, %v804
        %v806 = vsel %vm685, %v765, 0.0
        %v807 = vadd.f32 %v805, %v806
        %v808 = vsel %vm685, %v766, 0.0
        %v809 = vadd.f32 %v807, %v808
        %v810 = vsel %vm685, %v767, 0.0
        %v811 = vadd.f32 %v809, %v810
        %v812 = vsel %vm685, %v768, 0.0
        %v813 = vadd.f32 %v811, %v812
        %v814 = vsel %vm685, %v769, 0.0
        %v815 = vadd.f32 %v813, %v814
        %v816 = vsel %vm685, %v770, 0.0
        %v817 = vadd.f32 %v815, %v816
        %v818 = vsel %vm685, %v771, 0.0
        %v819 = vadd.f32 %v817, %v818
        %v820 = vsel %vm685, %v772, 0.0
        %v821 = vadd.f32 %v819, %v820
        %v822 = vsel %vm685, %v773, 0.0
        %v823 = vadd.f32 %v821, %v822
        %v824 = vsel %vm685, %v774, 0.0
        %v825 = vadd.f32 %v823, %v824
        %v826 = vsel %vm685, %v775, 0.0
        %v827 = vadd.f32 %v825, %v826
        %v828 = vsel %vm685, %v776, 0.0
        %v829 = vadd.f32 %v827, %v828
        %v830 = vsel %vm685, %v777, 0.0
        %v831 = vadd.f32 %v829, %v830
        %v832 = vsel %vm685, %v778, 0.0
        %v833 = vadd.f32 %v831, %v832
        %v834 = vsel %vm685, %v779, 0.0
        %v835 = vadd.f32 %v833, %v834
        %v836 = vsel %vm685, %v780, 0.0
        %v837 = vadd.f32 %v835, %v836
        %v838 = vsel %vm685, %v781, 0.0
        %v839 = vadd.f32 %v837, %v838
        %v840 = vsel %vm685, %v782, 0.0
        %v841 = vadd.f32 %v839, %v840
        %v842 = vsel %vm685, %v783, 0.0
        %v843 = vadd.f32 %v841, %v842
        %v844 = vsel %vm685, %v784, 0.0
        %v845 = vadd.f32 %v843, %v844
        %v846 = vsel %vm685, %v785, 0.0
        %v847 = vadd.f32 %v845, %v846
        %v848 = vsel %vm685, %v786, 0.0
        %v849 = vadd.f32 %v847, %v848
        %v850 = vrot.slane %v849, 4
        %v851 = vadd.f32 %v849, %v850
        %v852 = vrot.slane %v851, 2
        %v853 = vadd.f32 %v851, %v852
        %v854 = vrot.slane %v853, 1
        %v855 = vadd.f32 %v853, %v854
        %v856 = vlaneseq
        %v857 = vand.u32 %v856, 127
        %vm858 = vcmask 31744
        %v859 = vsel %vm858, %v754, 0.0
        %860 = vadd.xlane.f32.xlu0 %v859
        %v861 = vpop.xlane.xlu0 %860
        %v862 = vmul.f32 %v861, 0.0009765625
        %v863 = vsel %vm858, %v855, 0.0
        %864 = vadd.xlane.f32.xlu0 %v863
        %v865 = vpop.xlane.xlu0 %864
        %v866 = vmul.f32 %v865, 0.0009765625
        %vm867 = vcmp.ge.s32.totalorder %v857, 0
        %vm868 = vcmp.lt.s32.totalorder %v857, 4
        %vm869 = vmand %vm867, %vm868
        %v870 = vsel %vm869, %v862, 0.0
        %v871 = vsel %vm869, %v866, 0.0
        %873 = vrot.lane.b32.xlu0 %v754, 124
        %v874 = vpop.permute.xlu0 %873
        %v876 = vsel %vm858, %v874, 0.0
        %877 = vadd.xlane.f32.xlu0 %v876
        %v878 = vpop.xlane.xlu0 %877
        %v879 = vmul.f32 %v878, 0.0009765625
        %881 = vrot.lane.b32.xlu0 %v855, 124
        %v882 = vpop.permute.xlu0 %881
        %v884 = vsel %vm858, %v882, 0.0
        %885 = vadd.xlane.f32.xlu0 %v884
        %v886 = vpop.xlane.xlu0 %885
        %v887 = vmul.f32 %v886, 0.0009765625
        %vm888 = vcmp.ge.s32.totalorder %v857, 4
        %vm889 = vcmp.lt.s32.totalorder %v857, 8
        %vm890 = vmand %vm888, %vm889
        %v891 = vsel %vm890, %v879, %v870
        %v892 = vsel %vm890, %v887, %v871
        %893 = vrot.lane.b32.xlu0 %v754, 120
        %v894 = vpop.permute.xlu0 %893
        %v896 = vsel %vm858, %v894, 0.0
        %897 = vadd.xlane.f32.xlu0 %v896
        %v898 = vpop.xlane.xlu0 %897
        %v899 = vmul.f32 %v898, 0.0009765625
        %900 = vrot.lane.b32.xlu0 %v855, 120
        %v901 = vpop.permute.xlu0 %900
        %v903 = vsel %vm858, %v901, 0.0
        %904 = vadd.xlane.f32.xlu0 %v903
        %v905 = vpop.xlane.xlu0 %904
        %v906 = vmul.f32 %v905, 0.0009765625
        %vm907 = vcmp.ge.s32.totalorder %v857, 8
        %vm908 = vcmp.lt.s32.totalorder %v857, 12
        %vm909 = vmand %vm907, %vm908
        %v910 = vsel %vm909, %v899, %v891
        %v911 = vsel %vm909, %v906, %v892
        %912 = vrot.lane.b32.xlu0 %v754, 116
        %v913 = vpop.permute.xlu0 %912
        %v915 = vsel %vm858, %v913, 0.0
        %916 = vadd.xlane.f32.xlu0 %v915
        %v917 = vpop.xlane.xlu0 %916
        %v918 = vmul.f32 %v917, 0.0009765625
        %919 = vrot.lane.b32.xlu0 %v855, 116
        %v920 = vpop.permute.xlu0 %919
        %v922 = vsel %vm858, %v920, 0.0
        %923 = vadd.xlane.f32.xlu0 %v922
        %v924 = vpop.xlane.xlu0 %923
        %v925 = vmul.f32 %v924, 0.0009765625
        %vm926 = vcmp.ge.s32.totalorder %v857, 12
        %vm927 = vcmp.lt.s32.totalorder %v857, 16
        %vm928 = vmand %vm926, %vm927
        %v929 = vsel %vm928, %v918, %v910
        %v930 = vsel %vm928, %v925, %v911
        %931 = vrot.lane.b32.xlu0 %v754, 112
        %v932 = vpop.permute.xlu0 %931
        %v934 = vsel %vm858, %v932, 0.0
        %935 = vadd.xlane.f32.xlu0 %v934
        %v936 = vpop.xlane.xlu0 %935
        %v937 = vmul.f32 %v936, 0.0009765625
        %938 = vrot.lane.b32.xlu0 %v855, 112
        %v939 = vpop.permute.xlu0 %938
        %v941 = vsel %vm858, %v939, 0.0
        %942 = vadd.xlane.f32.xlu0 %v941
        %v943 = vpop.xlane.xlu0 %942
        %v944 = vmul.f32 %v943, 0.0009765625
        %vm945 = vcmp.ge.s32.totalorder %v857, 16
        %vm946 = vcmp.lt.s32.totalorder %v857, 20
        %vm947 = vmand %vm945, %vm946
        %v948 = vsel %vm947, %v937, %v929
        %v949 = vsel %vm947, %v944, %v930
        %950 = vrot.lane.b32.xlu0 %v754, 108
        %v951 = vpop.permute.xlu0 %950
        %v953 = vsel %vm858, %v951, 0.0
        %954 = vadd.xlane.f32.xlu0 %v953
        %v955 = vpop.xlane.xlu0 %954
        %v956 = vmul.f32 %v955, 0.0009765625
        %957 = vrot.lane.b32.xlu0 %v855, 108
        %v958 = vpop.permute.xlu0 %957
        %v960 = vsel %vm858, %v958, 0.0
        %961 = vadd.xlane.f32.xlu0 %v960
        %v962 = vpop.xlane.xlu0 %961
        %v963 = vmul.f32 %v962, 0.0009765625
        %vm964 = vcmp.ge.s32.totalorder %v857, 20
        %vm965 = vcmp.lt.s32.totalorder %v857, 24
        %vm966 = vmand %vm964, %vm965
        %v967 = vsel %vm966, %v956, %v948
        %v968 = vsel %vm966, %v963, %v949
        %969 = vrot.lane.b32.xlu0 %v754, 104
        %v970 = vpop.permute.xlu0 %969
        %v972 = vsel %vm858, %v970, 0.0
        %973 = vadd.xlane.f32.xlu0 %v972
        %v974 = vpop.xlane.xlu0 %973
        %v975 = vmul.f32 %v974, 0.0009765625
        %976 = vrot.lane.b32.xlu0 %v855, 104
        %v977 = vpop.permute.xlu0 %976
        %v979 = vsel %vm858, %v977, 0.0
        %980 = vadd.xlane.f32.xlu0 %v979
        %v981 = vpop.xlane.xlu0 %980
        %v982 = vmul.f32 %v981, 0.0009765625
        %vm983 = vcmp.ge.s32.totalorder %v857, 24
        %vm984 = vcmp.lt.s32.totalorder %v857, 28
        %vm985 = vmand %vm983, %vm984
        %v986 = vsel %vm985, %v975, %v967
        %v987 = vsel %vm985, %v982, %v968
        %988 = vrot.lane.b32.xlu0 %v754, 100
        %v989 = vpop.permute.xlu0 %988
        %v991 = vsel %vm858, %v989, 0.0
        %992 = vadd.xlane.f32.xlu0 %v991
        %v993 = vpop.xlane.xlu0 %992
        %v994 = vmul.f32 %v993, 0.0009765625
        %995 = vrot.lane.b32.xlu0 %v855, 100
        %v996 = vpop.permute.xlu0 %995
        %v998 = vsel %vm858, %v996, 0.0
        %999 = vadd.xlane.f32.xlu0 %v998
        %v1000 = vpop.xlane.xlu0 %999
        %v1001 = vmul.f32 %v1000, 0.0009765625
        %vm1002 = vcmp.ge.s32.totalorder %v857, 28
        %vm1003 = vcmp.lt.s32.totalorder %v857, 32
        %vm1004 = vmand %vm1002, %vm1003
        %v1005 = vsel %vm1004, %v994, %v986
        %v1006 = vsel %vm1004, %v1001, %v987
        %v1007 = vmul.f32 %v1005, %v1005
        %v1008 = vsub.f32 %v1006, %v1007
        %v1009 = vmax.f32 %v1008, 0.0
        %v1010 = vadd.f32 %v1009, 1e-05
        %v1011 = vrsqrt.pop %v1010
        %v1012 = vmul.f32 %v1011, %v683
        %v1013 = vmul.f32 %v1005, %v1012
        %v1014 = vsub.f32 %v684, %v1013
        %v1015 = vlaneseq
        %v1016 = vshrl.u32 %v1015, 7
        %v1017 = vsub.s32 0, %v1016
        %v1018 = vrot.slane %v1012, %v1017
        %v1019 = vmul.f32 %v557, %v1018
        %v1020 = vmul.f32 %v560, %v1018
        %v1021 = vmul.f32 %v565, %v1018
        %v1022 = vmul.f32 %v568, %v1018
        %v1023 = vmul.f32 %v573, %v1018
        %v1024 = vmul.f32 %v576, %v1018
        %v1025 = vmul.f32 %v581, %v1018
        %v1026 = vmul.f32 %v584, %v1018
        %v1027 = vmul.f32 %v589, %v1018
        %v1028 = vmul.f32 %v592, %v1018
        %v1029 = vmul.f32 %v597, %v1018
        %v1030 = vmul.f32 %v600, %v1018
        %v1031 = vmul.f32 %v605, %v1018
        %v1032 = vmul.f32 %v608, %v1018
        %v1033 = vmul.f32 %v613, %v1018
        %v1034 = vmul.f32 %v616, %v1018
        %v1035 = vmul.f32 %v621, %v1018
        %v1036 = vmul.f32 %v624, %v1018
        %v1037 = vmul.f32 %v629, %v1018
        %v1038 = vmul.f32 %v632, %v1018
        %v1039 = vmul.f32 %v637, %v1018
        %v1040 = vmul.f32 %v640, %v1018
        %v1041 = vmul.f32 %v645, %v1018
        %v1042 = vmul.f32 %v648, %v1018
        %v1043 = vmul.f32 %v653, %v1018
        %v1044 = vmul.f32 %v656, %v1018
        %v1045 = vmul.f32 %v661, %v1018
        %v1046 = vmul.f32 %v664, %v1018
        %v1047 = vmul.f32 %v669, %v1018
        %v1048 = vmul.f32 %v672, %v1018
        %v1049 = vmul.f32 %v677, %v1018
        %v1050 = vmul.f32 %v680, %v1018
        %v1052 = vlaneseq
        %v1053 = vshrl.u32 %v1052, 7
        %v1054 = vsub.s32 0, %v1053
        %v1055 = vrot.slane %v1014, %v1054
        %v1057 = vadd.f32 %v1019, %v1055
        %v1058 = vadd.f32 %v1020, %v1055
        %v1059 = vadd.f32 %v1021, %v1055
        %v1060 = vadd.f32 %v1022, %v1055
        %v1061 = vadd.f32 %v1023, %v1055
        %v1062 = vadd.f32 %v1024, %v1055
        %v1063 = vadd.f32 %v1025, %v1055
        %v1064 = vadd.f32 %v1026, %v1055
        %v1065 = vadd.f32 %v1027, %v1055
        %v1066 = vadd.f32 %v1028, %v1055
        %v1067 = vadd.f32 %v1029, %v1055
        %v1068 = vadd.f32 %v1030, %v1055
        %v1069 = vadd.f32 %v1031, %v1055
        %v1070 = vadd.f32 %v1032, %v1055
        %v1071 = vadd.f32 %v1033, %v1055
        %v1072 = vadd.f32 %v1034, %v1055
        %v1073 = vadd.f32 %v1035, %v1055
        %v1074 = vadd.f32 %v1036, %v1055
        %v1075 = vadd.f32 %v1037, %v1055
        %v1076 = vadd.f32 %v1038, %v1055
        %v1077 = vadd.f32 %v1039, %v1055
        %v1078 = vadd.f32 %v1040, %v1055
        %v1079 = vadd.f32 %v1041, %v1055
        %v1080 = vadd.f32 %v1042, %v1055
        %v1081 = vadd.f32 %v1043, %v1055
        %v1082 = vadd.f32 %v1044, %v1055
        %v1083 = vadd.f32 %v1045, %v1055
        %v1084 = vadd.f32 %v1046, %v1055
        %v1085 = vadd.f32 %v1047, %v1055
        %v1086 = vadd.f32 %v1048, %v1055
        %v1087 = vadd.f32 %v1049, %v1055
        %v1088 = vadd.f32 %v1050, %v1055
        %v1089 = vmax.f32 %v1057, 0.0
        %v1090 = vmax.f32 %v1058, 0.0
        %v1091 = vmax.f32 %v1059, 0.0
        %v1092 = vmax.f32 %v1060, 0.0
        %v1093 = vmax.f32 %v1061, 0.0
        %v1094 = vmax.f32 %v1062, 0.0
        %v1095 = vmax.f32 %v1063, 0.0
        %v1096 = vmax.f32 %v1064, 0.0
        %v1097 = vmax.f32 %v1065, 0.0
        %v1098 = vmax.f32 %v1066, 0.0
        %v1099 = vmax.f32 %v1067, 0.0
        %v1100 = vmax.f32 %v1068, 0.0
        %v1101 = vmax.f32 %v1069, 0.0
        %v1102 = vmax.f32 %v1070, 0.0
        %v1103 = vmax.f32 %v1071, 0.0
        %v1104 = vmax.f32 %v1072, 0.0
        %v1105 = vmax.f32 %v1073, 0.0
        %v1106 = vmax.f32 %v1074, 0.0
        %v1107 = vmax.f32 %v1075, 0.0
        %v1108 = vmax.f32 %v1076, 0.0
        %v1109 = vmax.f32 %v1077, 0.0
        %v1110 = vmax.f32 %v1078, 0.0
        %v1111 = vmax.f32 %v1079, 0.0
        %v1112 = vmax.f32 %v1080, 0.0
        %v1113 = vmax.f32 %v1081, 0.0
        %v1114 = vmax.f32 %v1082, 0.0
        %v1115 = vmax.f32 %v1083, 0.0
        %v1116 = vmax.f32 %v1084, 0.0
        %v1117 = vmax.f32 %v1085, 0.0
        %v1118 = vmax.f32 %v1086, 0.0
        %v1119 = vmax.f32 %v1087, 0.0
        %v1120 = vmax.f32 %v1088, 0.0
        %v1121 = vpack.c.bf16 %v1090, %v1089
        %v1122 = vpack.c.bf16 %v1092, %v1091
        %v1123 = vpack.c.bf16 %v1094, %v1093
        %v1124 = vpack.c.bf16 %v1096, %v1095
        %v1125 = vpack.c.bf16 %v1098, %v1097
        %v1126 = vpack.c.bf16 %v1100, %v1099
        %v1127 = vpack.c.bf16 %v1102, %v1101
        %v1128 = vpack.c.bf16 %v1104, %v1103
        %v1129 = vpack.c.bf16 %v1106, %v1105
        %v1130 = vpack.c.bf16 %v1108, %v1107
        %v1131 = vpack.c.bf16 %v1110, %v1109
        %v1132 = vpack.c.bf16 %v1112, %v1111
        %v1133 = vpack.c.bf16 %v1114, %v1113
        %v1134 = vpack.c.bf16 %v1116, %v1115
        %v1135 = vpack.c.bf16 %v1118, %v1117
        %v1136 = vpack.c.bf16 %v1120, %v1119
        %v1153 = vunpack.c.l.b16 %v1121
        %v1154 = vunpack.c.h.b16 %v1121
        %v1155 = vunpack.c.l.b16 %v1122
        %v1156 = vunpack.c.h.b16 %v1122
        %v1157 = vunpack.c.l.b16 %v1123
        %v1158 = vunpack.c.h.b16 %v1123
        %v1159 = vunpack.c.l.b16 %v1124
        %v1160 = vunpack.c.h.b16 %v1124
        %v1161 = vunpack.c.l.b16 %v1125
        %v1162 = vunpack.c.h.b16 %v1125
        %v1163 = vunpack.c.l.b16 %v1126
        %v1164 = vunpack.c.h.b16 %v1126
        %v1165 = vunpack.c.l.b16 %v1127
        %v1166 = vunpack.c.h.b16 %v1127
        %v1167 = vunpack.c.l.b16 %v1128
        %v1168 = vunpack.c.h.b16 %v1128
        %v1169 = vunpack.c.l.b16 %v1129
        %v1170 = vunpack.c.h.b16 %v1129
        %v1171 = vunpack.c.l.b16 %v1130
        %v1172 = vunpack.c.h.b16 %v1130
        %v1173 = vunpack.c.l.b16 %v1131
        %v1174 = vunpack.c.h.b16 %v1131
        %v1175 = vunpack.c.l.b16 %v1132
        %v1176 = vunpack.c.h.b16 %v1132
        %v1177 = vunpack.c.l.b16 %v1133
        %v1178 = vunpack.c.h.b16 %v1133
        %v1179 = vunpack.c.l.b16 %v1134
        %v1180 = vunpack.c.h.b16 %v1134
        %v1181 = vunpack.c.l.b16 %v1135
        %v1182 = vunpack.c.h.b16 %v1135
        %v1183 = vunpack.c.l.b16 %v1136
        %v1184 = vunpack.c.h.b16 %v1136
        %v1185 = vpack.c.b16 %v1153, %v1153
        %v1186 = vpack.c.b16 %v1154, %v1154
        %v1187 = vpack.c.b16 %v1155, %v1155
        %v1188 = vpack.c.b16 %v1156, %v1156
        %v1189 = vpack.c.b16 %v1157, %v1157
        %v1190 = vpack.c.b16 %v1158, %v1158
        %v1191 = vpack.c.b16 %v1159, %v1159
        %v1192 = vpack.c.b16 %v1160, %v1160
        %v1193 = vpack.c.b16 %v1161, %v1161
        %v1194 = vpack.c.b16 %v1162, %v1162
        %v1195 = vpack.c.b16 %v1163, %v1163
        %v1196 = vpack.c.b16 %v1164, %v1164
        %v1197 = vpack.c.b16 %v1165, %v1165
        %v1198 = vpack.c.b16 %v1166, %v1166
        %v1199 = vpack.c.b16 %v1167, %v1167
        %v1200 = vpack.c.b16 %v1168, %v1168
        %v1201 = vpack.c.b16 %v1169, %v1169
        %v1202 = vpack.c.b16 %v1170, %v1170
        %v1203 = vpack.c.b16 %v1171, %v1171
        %v1204 = vpack.c.b16 %v1172, %v1172
        %v1205 = vpack.c.b16 %v1173, %v1173
        %v1206 = vpack.c.b16 %v1174, %v1174
        %v1207 = vpack.c.b16 %v1175, %v1175
        %v1208 = vpack.c.b16 %v1176, %v1176
        %v1209 = vpack.c.b16 %v1177, %v1177
        %v1210 = vpack.c.b16 %v1178, %v1178
        %v1211 = vpack.c.b16 %v1179, %v1179
        %v1212 = vpack.c.b16 %v1180, %v1180
        %v1213 = vpack.c.b16 %v1181, %v1181
        %v1214 = vpack.c.b16 %v1182, %v1182
        %v1215 = vpack.c.b16 %v1183, %v1183
        %v1216 = vpack.c.b16 %v1184, %v1184
        %vm1217 = vsmask.f32 256
        %vm1218 = vsmask.f32 4368
        %vm1219 = vmor %vm1217, %vm1218
        %v1221 = vshrl.u32 %v1185, 16
        %v1223 = vrot.slane %v1221, 7
        %v1224 = vshll.u32 %v1185, 16
        %v1226 = vor.u32 %v1223, %v1224
        %v1227 = vrot.slane %v1223, 4
        %v1229 = vshrl.u32 %v1186, 16
        %v1231 = vrot.slane %v1229, 7
        %v1232 = vshll.u32 %v1186, 16
        %v1234 = vor.u32 %v1231, %v1232
        %v1235 = vsel %vm1219, %v1227, %v1234
        %v1236 = vrot.slane %v1231, 4
        %v1238 = vshrl.u32 %v1187, 16
        %v1240 = vrot.slane %v1238, 7
        %v1241 = vshll.u32 %v1187, 16
        %v1243 = vor.u32 %v1240, %v1241
        %v1244 = vrot.slane %v1240, 4
        %v1246 = vshrl.u32 %v1188, 16
        %v1248 = vrot.slane %v1246, 7
        %v1249 = vshll.u32 %v1188, 16
        %v1251 = vor.u32 %v1248, %v1249
        %v1252 = vsel %vm1219, %v1244, %v1251
        %v1253 = vrot.slane %v1248, 4
        %v1255 = vshrl.u32 %v1189, 16
        %v1257 = vrot.slane %v1255, 7
        %v1258 = vshll.u32 %v1189, 16
        %v1260 = vor.u32 %v1257, %v1258
        %v1261 = vrot.slane %v1257, 4
        %v1263 = vshrl.u32 %v1190, 16
        %v1265 = vrot.slane %v1263, 7
        %v1266 = vshll.u32 %v1190, 16
        %v1268 = vor.u32 %v1265, %v1266
        %v1269 = vsel %vm1219, %v1261, %v1268
        %v1270 = vrot.slane %v1265, 4
        %v1272 = vshrl.u32 %v1191, 16
        %v1274 = vrot.slane %v1272, 7
        %v1275 = vshll.u32 %v1191, 16
        %v1277 = vor.u32 %v1274, %v1275
        %v1278 = vrot.slane %v1274, 4
        %v1280 = vshrl.u32 %v1192, 16
        %v1282 = vrot.slane %v1280, 7
        %v1283 = vshll.u32 %v1192, 16
        %v1285 = vor.u32 %v1282, %v1283
        %v1286 = vsel %vm1219, %v1278, %v1285
        %v1287 = vrot.slane %v1282, 4
        %v1289 = vshrl.u32 %v1193, 16
        %v1291 = vrot.slane %v1289, 7
        %v1292 = vshll.u32 %v1193, 16
        %v1294 = vor.u32 %v1291, %v1292
        %v1295 = vrot.slane %v1291, 4
        %v1297 = vshrl.u32 %v1194, 16
        %v1299 = vrot.slane %v1297, 7
        %v1300 = vshll.u32 %v1194, 16
        %v1302 = vor.u32 %v1299, %v1300
        %v1303 = vsel %vm1219, %v1295, %v1302
        %v1304 = vrot.slane %v1299, 4
        %v1306 = vshrl.u32 %v1195, 16
        %v1308 = vrot.slane %v1306, 7
        %v1309 = vshll.u32 %v1195, 16
        %v1311 = vor.u32 %v1308, %v1309
        %v1312 = vrot.slane %v1308, 4
        %v1314 = vshrl.u32 %v1196, 16
        %v1316 = vrot.slane %v1314, 7
        %v1317 = vshll.u32 %v1196, 16
        %v1319 = vor.u32 %v1316, %v1317
        %v1320 = vsel %vm1219, %v1312, %v1319
        %v1321 = vrot.slane %v1316, 4
        %v1323 = vshrl.u32 %v1197, 16
        %v1325 = vrot.slane %v1323, 7
        %v1326 = vshll.u32 %v1197, 16
        %v1328 = vor.u32 %v1325, %v1326
        %v1329 = vrot.slane %v1325, 4
        %v1331 = vshrl.u32 %v1198, 16
        %v1333 = vrot.slane %v1331, 7
        %v1334 = vshll.u32 %v1198, 16
        %v1336 = vor.u32 %v1333, %v1334
        %v1337 = vsel %vm1219, %v1329, %v1336
        %v1338 = vrot.slane %v1333, 4
        %v1340 = vshrl.u32 %v1199, 16
        %v1342 = vrot.slane %v1340, 7
        %v1343 = vshll.u32 %v1199, 16
        %v1345 = vor.u32 %v1342, %v1343
        %v1346 = vrot.slane %v1342, 4
        %v1348 = vshrl.u32 %v1200, 16
        %v1350 = vrot.slane %v1348, 7
        %v1351 = vshll.u32 %v1200, 16
        %v1353 = vor.u32 %v1350, %v1351
        %v1354 = vsel %vm1219, %v1346, %v1353
        %v1355 = vrot.slane %v1350, 4
        %v1357 = vshrl.u32 %v1201, 16
        %v1359 = vrot.slane %v1357, 7
        %v1360 = vshll.u32 %v1201, 16
        %v1362 = vor.u32 %v1359, %v1360
        %v1363 = vrot.slane %v1359, 4
        %v1365 = vshrl.u32 %v1202, 16
        %v1367 = vrot.slane %v1365, 7
        %v1368 = vshll.u32 %v1202, 16
        %v1370 = vor.u32 %v1367, %v1368
        %v1371 = vsel %vm1219, %v1363, %v1370
        %v1372 = vrot.slane %v1367, 4
        %v1374 = vshrl.u32 %v1203, 16
        %v1376 = vrot.slane %v1374, 7
        %v1377 = vshll.u32 %v1203, 16
        %v1379 = vor.u32 %v1376, %v1377
        %v1380 = vrot.slane %v1376, 4
        %v1382 = vshrl.u32 %v1204, 16
        %v1384 = vrot.slane %v1382, 7
        %v1385 = vshll.u32 %v1204, 16
        %v1387 = vor.u32 %v1384, %v1385
        %v1388 = vsel %vm1219, %v1380, %v1387
        %v1389 = vrot.slane %v1384, 4
        %v1391 = vshrl.u32 %v1205, 16
        %v1393 = vrot.slane %v1391, 7
        %v1394 = vshll.u32 %v1205, 16
        %v1396 = vor.u32 %v1393, %v1394
        %v1397 = vrot.slane %v1393, 4
        %v1399 = vshrl.u32 %v1206, 16
        %v1401 = vrot.slane %v1399, 7
        %v1402 = vshll.u32 %v1206, 16
        %v1404 = vor.u32 %v1401, %v1402
        %v1405 = vsel %vm1219, %v1397, %v1404
        %v1406 = vrot.slane %v1401, 4
        %v1408 = vshrl.u32 %v1207, 16
        %v1410 = vrot.slane %v1408, 7
        %v1411 = vshll.u32 %v1207, 16
        %v1413 = vor.u32 %v1410, %v1411
        %v1414 = vrot.slane %v1410, 4
        %v1416 = vshrl.u32 %v1208, 16
        %v1418 = vrot.slane %v1416, 7
        %v1419 = vshll.u32 %v1208, 16
        %v1421 = vor.u32 %v1418, %v1419
        %v1422 = vsel %vm1219, %v1414, %v1421
        %v1423 = vrot.slane %v1418, 4
        %v1425 = vshrl.u32 %v1209, 16
        %v1427 = vrot.slane %v1425, 7
        %v1428 = vshll.u32 %v1209, 16
        %v1430 = vor.u32 %v1427, %v1428
        %v1431 = vrot.slane %v1427, 4
        %v1433 = vshrl.u32 %v1210, 16
        %v1435 = vrot.slane %v1433, 7
        %v1436 = vshll.u32 %v1210, 16
        %v1438 = vor.u32 %v1435, %v1436
        %v1439 = vsel %vm1219, %v1431, %v1438
        %v1440 = vrot.slane %v1435, 4
        %v1442 = vshrl.u32 %v1211, 16
        %v1444 = vrot.slane %v1442, 7
        %v1445 = vshll.u32 %v1211, 16
        %v1447 = vor.u32 %v1444, %v1445
        %v1448 = vrot.slane %v1444, 4
        %v1450 = vshrl.u32 %v1212, 16
        %v1452 = vrot.slane %v1450, 7
        %v1453 = vshll.u32 %v1212, 16
        %v1455 = vor.u32 %v1452, %v1453
        %v1456 = vsel %vm1219, %v1448, %v1455
        %v1457 = vrot.slane %v1452, 4
        %v1459 = vshrl.u32 %v1213, 16
        %v1461 = vrot.slane %v1459, 7
        %v1462 = vshll.u32 %v1213, 16
        %v1464 = vor.u32 %v1461, %v1462
        %v1465 = vrot.slane %v1461, 4
        %v1467 = vshrl.u32 %v1214, 16
        %v1469 = vrot.slane %v1467, 7
        %v1470 = vshll.u32 %v1214, 16
        %v1472 = vor.u32 %v1469, %v1470
        %v1473 = vsel %vm1219, %v1465, %v1472
        %v1474 = vrot.slane %v1469, 4
        %v1476 = vshrl.u32 %v1215, 16
        %v1478 = vrot.slane %v1476, 7
        %v1479 = vshll.u32 %v1215, 16
        %v1481 = vor.u32 %v1478, %v1479
        %v1482 = vrot.slane %v1478, 4
        %v1484 = vshrl.u32 %v1216, 16
        %v1486 = vrot.slane %v1484, 7
        %v1487 = vshll.u32 %v1216, 16
        %v1489 = vor.u32 %v1486, %v1487
        %v1490 = vsel %vm1219, %v1482, %v1489
        %v1491 = vrot.slane %v1486, 4
        %s1540 = scalar_lea.vmem [#allocation2], 12
        %vm1541 = vcmask 257024
        %vm1542 = vsmask.f32 7938
        %vm1543 = vmand %vm1541, %vm1542
        %v1544 = vld [vmem:[%s1540] sm:$0xf]
        %v1545 = vsel %vm1543, %v1226, %v1544
        %1546 = vst [vmem:[%s1540] sm:$0xf] %v1545
        %vm1547 = vcmask 257024
        %1548 = vst.msk [vmem:[%s1540 + $0x4] sm:$0xf] %vm1547, %v1235
        %vm1549 = vcmask 253952
        %vm1550 = vmand %vm1549, %vm1217
        %v1551 = vld [vmem:[%s1540 + $0x8] sm:$0x1]
        %v1552 = vsel %vm1550, %v1236, %v1551
        %1553 = vst [vmem:[%s1540 + $0x8] sm:$0x1] %v1552
        %v1554 = vld [vmem:[%s1540 + $0xc] sm:$0xf]
        %v1555 = vsel %vm1543, %v1243, %v1554
        %1556 = vst [vmem:[%s1540 + $0xc] sm:$0xf] %v1555
        %1557 = vst.msk [vmem:[%s1540 + $0x10] sm:$0xf] %vm1547, %v1252
        %v1558 = vld [vmem:[%s1540 + $0x14] sm:$0x1]
        %v1559 = vsel %vm1550, %v1253, %v1558
        %1560 = vst [vmem:[%s1540 + $0x14] sm:$0x1] %v1559
        %v1561 = vld [vmem:[%s1540 + $0x18] sm:$0xf]
        %v1562 = vsel %vm1543, %v1260, %v1561
        %1563 = vst [vmem:[%s1540 + $0x18] sm:$0xf] %v1562
        %1564 = vst.msk [vmem:[%s1540 + $0x1c] sm:$0xf] %vm1547, %v1269
        %v1565 = vld [vmem:[%s1540 + $0x20] sm:$0x1]
        %v1566 = vsel %vm1550, %v1270, %v1565
        %1567 = vst [vmem:[%s1540 + $0x20] sm:$0x1] %v1566
        %v1568 = vld [vmem:[%s1540 + $0x24] sm:$0xf]
        %v1569 = vsel %vm1543, %v1277, %v1568
        %1570 = vst [vmem:[%s1540 + $0x24] sm:$0xf] %v1569
        %1571 = vst.msk [vmem:[%s1540 + $0x28] sm:$0xf] %vm1547, %v1286
        %v1572 = vld [vmem:[%s1540 + $0x2c] sm:$0x1]
        %v1573 = vsel %vm1550, %v1287, %v1572
        %1574 = vst [vmem:[%s1540 + $0x2c] sm:$0x1] %v1573
        %v1575 = vld [vmem:[%s1540 + $0x30] sm:$0xf]
        %v1576 = vsel %vm1543, %v1294, %v1575
        %1577 = vst [vmem:[%s1540 + $0x30] sm:$0xf] %v1576
        %1578 = vst.msk [vmem:[%s1540 + $0x34] sm:$0xf] %vm1547, %v1303
        %v1579 = vld [vmem:[%s1540 + $0x38] sm:$0x1]
        %v1580 = vsel %vm1550, %v1304, %v1579
        %1581 = vst [vmem:[%s1540 + $0x38] sm:$0x1] %v1580
        %v1582 = vld [vmem:[%s1540 + $0x3c] sm:$0xf]
        %v1583 = vsel %vm1543, %v1311, %v1582
        %1584 = vst [vmem:[%s1540 + $0x3c] sm:$0xf] %v1583
        %1585 = vst.msk [vmem:[%s1540 + $0x40] sm:$0xf] %vm1547, %v1320
        %v1586 = vld [vmem:[%s1540 + $0x44] sm:$0x1]
        %v1587 = vsel %vm1550, %v1321, %v1586
        %1588 = vst [vmem:[%s1540 + $0x44] sm:$0x1] %v1587
        %v1589 = vld [vmem:[%s1540 + $0x48] sm:$0xf]
        %v1590 = vsel %vm1543, %v1328, %v1589
        %1591 = vst [vmem:[%s1540 + $0x48] sm:$0xf] %v1590
        %1592 = vst.msk [vmem:[%s1540 + $0x4c] sm:$0xf] %vm1547, %v1337
        %v1593 = vld [vmem:[%s1540 + $0x50] sm:$0x1]
        %v1594 = vsel %vm1550, %v1338, %v1593
        %1595 = vst [vmem:[%s1540 + $0x50] sm:$0x1] %v1594
        %v1596 = vld [vmem:[%s1540 + $0x54] sm:$0xf]
        %v1597 = vsel %vm1543, %v1345, %v1596
        %1598 = vst [vmem:[%s1540 + $0x54] sm:$0xf] %v1597
        %1599 = vst.msk [vmem:[%s1540 + $0x58] sm:$0xf] %vm1547, %v1354
        %v1600 = vld [vmem:[%s1540 + $0x5c] sm:$0x1]
        %v1601 = vsel %vm1550, %v1355, %v1600
        %1602 = vst [vmem:[%s1540 + $0x5c] sm:$0x1] %v1601
        %v1603 = vld [vmem:[%s1540 + $0x60] sm:$0xf]
        %v1604 = vsel %vm1543, %v1362, %v1603
        %1605 = vst [vmem:[%s1540 + $0x60] sm:$0xf] %v1604
        %1606 = vst.msk [vmem:[%s1540 + $0x64] sm:$0xf] %vm1547, %v1371
        %v1607 = vld [vmem:[%s1540 + $0x68] sm:$0x1]
        %v1608 = vsel %vm1550, %v1372, %v1607
        %1609 = vst [vmem:[%s1540 + $0x68] sm:$0x1] %v1608
        %v1610 = vld [vmem:[%s1540 + $0x6c] sm:$0xf]
        %v1611 = vsel %vm1543, %v1379, %v1610
        %1612 = vst [vmem:[%s1540 + $0x6c] sm:$0xf] %v1611
        %1613 = vst.msk [vmem:[%s1540 + $0x70] sm:$0xf] %vm1547, %v1388
        %v1614 = vld [vmem:[%s1540 + $0x74] sm:$0x1]
        %v1615 = vsel %vm1550, %v1389, %v1614
        %1616 = vst [vmem:[%s1540 + $0x74] sm:$0x1] %v1615
        %v1617 = vld [vmem:[%s1540 + $0x78] sm:$0xf]
        %v1618 = vsel %vm1543, %v1396, %v1617
        %1619 = vst [vmem:[%s1540 + $0x78] sm:$0xf] %v1618
        %1620 = vst.msk [vmem:[%s1540 + $0x7c] sm:$0xf] %vm1547, %v1405
        %v1621 = vld [vmem:[%s1540 + $0x80] sm:$0x1]
        %v1622 = vsel %vm1550, %v1406, %v1621
        %1623 = vst [vmem:[%s1540 + $0x80] sm:$0x1] %v1622
        %v1624 = vld [vmem:[%s1540 + $0x84] sm:$0xf]
        %v1625 = vsel %vm1543, %v1413, %v1624
        %1626 = vst [vmem:[%s1540 + $0x84] sm:$0xf] %v1625
        %1627 = vst.msk [vmem:[%s1540 + $0x88] sm:$0xf] %vm1547, %v1422
        %v1628 = vld [vmem:[%s1540 + $0x8c] sm:$0x1]
        %v1629 = vsel %vm1550, %v1423, %v1628
        %1630 = vst [vmem:[%s1540 + $0x8c] sm:$0x1] %v1629
        %v1631 = vld [vmem:[%s1540 + $0x90] sm:$0xf]
        %v1632 = vsel %vm1543, %v1430, %v1631
        %1633 = vst [vmem:[%s1540 + $0x90] sm:$0xf] %v1632
        %1634 = vst.msk [vmem:[%s1540 + $0x94] sm:$0xf] %vm1547, %v1439
        %v1635 = vld [vmem:[%s1540 + $0x98] sm:$0x1]
        %v1636 = vsel %vm1550, %v1440, %v1635
        %1637 = vst [vmem:[%s1540 + $0x98] sm:$0x1] %v1636
        %v1638 = vld [vmem:[%s1540 + $0x9c] sm:$0xf]
        %v1639 = vsel %vm1543, %v1447, %v1638
        %1640 = vst [vmem:[%s1540 + $0x9c] sm:$0xf] %v1639
        %1641 = vst.msk [vmem:[%s1540 + $0xa0] sm:$0xf] %vm1547, %v1456
        %v1642 = vld [vmem:[%s1540 + $0xa4] sm:$0x1]
        %v1643 = vsel %vm1550, %v1457, %v1642
        %1644 = vst [vmem:[%s1540 + $0xa4] sm:$0x1] %v1643
        %v1645 = vld [vmem:[%s1540 + $0xa8] sm:$0xf]
        %v1646 = vsel %vm1543, %v1464, %v1645
        %1647 = vst [vmem:[%s1540 + $0xa8] sm:$0xf] %v1646
        %1648 = vst.msk [vmem:[%s1540 + $0xac] sm:$0xf] %vm1547, %v1473
        %v1649 = vld [vmem:[%s1540 + $0xb0] sm:$0x1]
        %v1650 = vsel %vm1550, %v1474, %v1649
        %1651 = vst [vmem:[%s1540 + $0xb0] sm:$0x1] %v1650
        %v1652 = vld [vmem:[%s1540 + $0xb4] sm:$0xf]
        %v1653 = vsel %vm1543, %v1481, %v1652
        %1654 = vst [vmem:[%s1540 + $0xb4] sm:$0xf] %v1653
        %1655 = vst.msk [vmem:[%s1540 + $0xb8] sm:$0xf] %vm1547, %v1490
        %v1656 = vld [vmem:[%s1540 + $0xbc] sm:$0x1]
        %v1657 = vsel %vm1550, %v1491, %v1656
        %1658 = vst [vmem:[%s1540 + $0xbc] sm:$0x1] %v1657
        %v1659 = vld [vmem:[#allocation2] sm:$0xf]
        %v1660 = vsel %vm1543, %v1243, %v1659
        %1661 = vst [vmem:[#allocation2] sm:$0xf] %v1660
        %1662 = vst.msk [vmem:[#allocation2 + $0x4] sm:$0xf] %vm1547, %v1252
        %v1663 = vld [vmem:[#allocation2 + $0x8] sm:$0x1]
        %v1664 = vsel %vm1550, %v1253, %v1663
        %1665 = vst [vmem:[#allocation2 + $0x8] sm:$0x1] %v1664
        %s1666 = scalar_lea.vmem [#allocation2], 204
        %v1667 = vld [vmem:[%s1666] sm:$0xf]
        %v1668 = vsel %vm1543, %v1464, %v1667
        %1669 = vst [vmem:[%s1666] sm:$0xf] %v1668
        %1670 = vst.msk [vmem:[%s1666 + $0x4] sm:$0xf] %vm1547, %v1473
        %v1671 = vld [vmem:[%s1666 + $0x8] sm:$0x1]
        %v1672 = vsel %vm1550, %v1474, %v1671
        %1673 = vst [vmem:[%s1666 + $0x8] sm:$0x1] %v1672
        %v1674 = vld [vmem:[#allocation2] sm:$0x2]
        %v1675 = vld [vmem:[#allocation2 + $0xc] sm:$0x2]
        %v1676 = vld [vmem:[#allocation2 + $0x18] sm:$0x2]
        %v1677 = vld [vmem:[#allocation2 + $0x24] sm:$0x2]
        %v1678 = vld [vmem:[#allocation2 + $0x30] sm:$0x2]
        %v1679 = vld [vmem:[#allocation2 + $0x3c] sm:$0x2]
        %v1680 = vld [vmem:[#allocation2 + $0x48] sm:$0x2]
        %v1681 = vld [vmem:[#allocation2 + $0x54] sm:$0x2]
        %v1682 = vld [vmem:[#allocation2 + $0x60] sm:$0x2]
        %v1683 = vld [vmem:[#allocation2 + $0x6c] sm:$0x2]
        %v1684 = vld [vmem:[#allocation2 + $0x78] sm:$0x2]
        %v1685 = vld [vmem:[#allocation2 + $0x84] sm:$0x2]
        %v1686 = vld [vmem:[#allocation2 + $0x90] sm:$0x2]
        %v1687 = vld [vmem:[#allocation2 + $0x9c] sm:$0x2]
        %v1688 = vld [vmem:[#allocation2 + $0xa8] sm:$0x2]
        %v1689 = vld [vmem:[#allocation2 + $0xb4] sm:$0x2]
        %v1690 = vld [vmem:[#allocation2 + $0xc0] sm:$0x2]
        %v1691 = vld [vmem:[#allocation2 + $0xcc] sm:$0x2]
        %v1710 = vrot.slane %v1674, 5
        %v1711 = vrot.slane %v1710, 4
        %v1712 = vrot.slane %v1675, 5
        %v1713 = vrot.slane %v1712, 4
        %v1714 = vrot.slane %v1676, 5
        %v1715 = vrot.slane %v1714, 4
        %v1716 = vrot.slane %v1677, 5
        %v1717 = vrot.slane %v1716, 4
        %v1718 = vrot.slane %v1678, 5
        %v1719 = vrot.slane %v1718, 4
        %v1720 = vrot.slane %v1679, 5
        %v1721 = vrot.slane %v1720, 4
        %v1722 = vrot.slane %v1680, 5
        %v1723 = vrot.slane %v1722, 4
        %v1724 = vrot.slane %v1681, 5
        %v1725 = vrot.slane %v1724, 4
        %v1726 = vrot.slane %v1682, 5
        %v1727 = vrot.slane %v1726, 4
        %v1728 = vrot.slane %v1683, 5
        %v1729 = vrot.slane %v1728, 4
        %v1730 = vrot.slane %v1684, 5
        %v1731 = vrot.slane %v1730, 4
        %v1732 = vrot.slane %v1685, 5
        %v1733 = vrot.slane %v1732, 4
        %v1734 = vrot.slane %v1686, 5
        %v1735 = vrot.slane %v1734, 4
        %v1736 = vrot.slane %v1687, 5
        %v1737 = vrot.slane %v1736, 4
        %v1738 = vrot.slane %v1688, 5
        %v1739 = vrot.slane %v1738, 4
        %v1740 = vrot.slane %v1689, 5
        %v1741 = vrot.slane %v1740, 4
        %v1742 = vrot.slane %v1690, 5
        %v1743 = vrot.slane %v1742, 4
        %v1744 = vrot.slane %v1691, 5
        %v1745 = vrot.slane %v1744, 4
        %v1764 = vld [vmem:[#allocation2] sm:$0x1]
        %v1765 = vsel %vm1550, %v1711, %v1764
        %1766 = vst [vmem:[#allocation2] sm:$0x1] %v1765
        %v1767 = vld [vmem:[#allocation2 + $0xc] sm:$0x1]
        %v1768 = vsel %vm1550, %v1713, %v1767
        %1769 = vst [vmem:[#allocation2 + $0xc] sm:$0x1] %v1768
        %v1770 = vld [vmem:[#allocation2 + $0x18] sm:$0x1]
        %v1771 = vsel %vm1550, %v1715, %v1770
        %1772 = vst [vmem:[#allocation2 + $0x18] sm:$0x1] %v1771
        %v1773 = vld [vmem:[#allocation2 + $0x24] sm:$0x1]
        %v1774 = vsel %vm1550, %v1717, %v1773
        %1775 = vst [vmem:[#allocation2 + $0x24] sm:$0x1] %v1774
        %v1776 = vld [vmem:[#allocation2 + $0x30] sm:$0x1]
        %v1777 = vsel %vm1550, %v1719, %v1776
        %1778 = vst [vmem:[#allocation2 + $0x30] sm:$0x1] %v1777
        %v1779 = vld [vmem:[#allocation2 + $0x3c] sm:$0x1]
        %v1780 = vsel %vm1550, %v1721, %v1779
        %1781 = vst [vmem:[#allocation2 + $0x3c] sm:$0x1] %v1780
        %v1782 = vld [vmem:[#allocation2 + $0x48] sm:$0x1]
        %v1783 = vsel %vm1550, %v1723, %v1782
        %1784 = vst [vmem:[#allocation2 + $0x48] sm:$0x1] %v1783
        %v1785 = vld [vmem:[#allocation2 + $0x54] sm:$0x1]
        %v1786 = vsel %vm1550, %v1725, %v1785
        %1787 = vst [vmem:[#allocation2 + $0x54] sm:$0x1] %v1786
        %v1788 = vld [vmem:[#allocation2 + $0x60] sm:$0x1]
        %v1789 = vsel %vm1550, %v1727, %v1788
        %1790 = vst [vmem:[#allocation2 + $0x60] sm:$0x1] %v1789
        %v1791 = vld [vmem:[#allocation2 + $0x6c] sm:$0x1]
        %v1792 = vsel %vm1550, %v1729, %v1791
        %1793 = vst [vmem:[#allocation2 + $0x6c] sm:$0x1] %v1792
        %v1794 = vld [vmem:[#allocation2 + $0x78] sm:$0x1]
        %v1795 = vsel %vm1550, %v1731, %v1794
        %1796 = vst [vmem:[#allocation2 + $0x78] sm:$0x1] %v1795
        %v1797 = vld [vmem:[#allocation2 + $0x84] sm:$0x1]
        %v1798 = vsel %vm1550, %v1733, %v1797
        %1799 = vst [vmem:[#allocation2 + $0x84] sm:$0x1] %v1798
        %v1800 = vld [vmem:[#allocation2 + $0x90] sm:$0x1]
        %v1801 = vsel %vm1550, %v1735, %v1800
        %1802 = vst [vmem:[#allocation2 + $0x90] sm:$0x1] %v1801
        %v1803 = vld [vmem:[#allocation2 + $0x9c] sm:$0x1]
        %v1804 = vsel %vm1550, %v1737, %v1803
        %1805 = vst [vmem:[#allocation2 + $0x9c] sm:$0x1] %v1804
        %v1806 = vld [vmem:[#allocation2 + $0xa8] sm:$0x1]
        %v1807 = vsel %vm1550, %v1739, %v1806
        %1808 = vst [vmem:[#allocation2 + $0xa8] sm:$0x1] %v1807
        %v1809 = vld [vmem:[#allocation2 + $0xb4] sm:$0x1]
        %v1810 = vsel %vm1550, %v1741, %v1809
        %1811 = vst [vmem:[#allocation2 + $0xb4] sm:$0x1] %v1810
        %v1812 = vld [vmem:[#allocation2 + $0xc0] sm:$0x1]
        %v1813 = vsel %vm1550, %v1743, %v1812
        %1814 = vst [vmem:[#allocation2 + $0xc0] sm:$0x1] %v1813
        %v1815 = vld [vmem:[#allocation2 + $0xcc] sm:$0x1]
        %v1816 = vsel %vm1550, %v1745, %v1815
        %1817 = vst [vmem:[#allocation2 + $0xcc] sm:$0x1] %v1816
        %v1818 = vld [vmem:[#allocation2 + $0x4] sm:$0x8]
        %v1819 = vld [vmem:[#allocation2 + $0x10] sm:$0x8]
        %v1820 = vld [vmem:[#allocation2 + $0x1c] sm:$0x8]
        %v1821 = vld [vmem:[#allocation2 + $0x28] sm:$0x8]
        %v1822 = vld [vmem:[#allocation2 + $0x34] sm:$0x8]
        %v1823 = vld [vmem:[#allocation2 + $0x40] sm:$0x8]
        %v1824 = vld [vmem:[#allocation2 + $0x4c] sm:$0x8]
        %v1825 = vld [vmem:[#allocation2 + $0x58] sm:$0x8]
        %v1826 = vld [vmem:[#allocation2 + $0x64] sm:$0x8]
        %v1827 = vld [vmem:[#allocation2 + $0x70] sm:$0x8]
        %v1828 = vld [vmem:[#allocation2 + $0x7c] sm:$0x8]
        %v1829 = vld [vmem:[#allocation2 + $0x88] sm:$0x8]
        %v1830 = vld [vmem:[#allocation2 + $0x94] sm:$0x8]
        %v1831 = vld [vmem:[#allocation2 + $0xa0] sm:$0x8]
        %v1832 = vld [vmem:[#allocation2 + $0xac] sm:$0x8]
        %v1833 = vld [vmem:[#allocation2 + $0xb8] sm:$0x8]
        %v1834 = vld [vmem:[#allocation2 + $0xc4] sm:$0x8]
        %v1835 = vld [vmem:[#allocation2 + $0xd0] sm:$0x8]
        %v1854 = vrot.slane %v1818, 7
        %v1855 = vrot.slane %v1854, 4
        %v1856 = vrot.slane %v1819, 7
        %v1857 = vrot.slane %v1856, 4
        %v1858 = vrot.slane %v1820, 7
        %v1859 = vrot.slane %v1858, 4
        %v1860 = vrot.slane %v1821, 7
        %v1861 = vrot.slane %v1860, 4
        %v1862 = vrot.slane %v1822, 7
        %v1863 = vrot.slane %v1862, 4
        %v1864 = vrot.slane %v1823, 7
        %v1865 = vrot.slane %v1864, 4
        %v1866 = vrot.slane %v1824, 7
        %v1867 = vrot.slane %v1866, 4
        %v1868 = vrot.slane %v1825, 7
        %v1869 = vrot.slane %v1868, 4
        %v1870 = vrot.slane %v1826, 7
        %v1871 = vrot.slane %v1870, 4
        %v1872 = vrot.slane %v1827, 7
        %v1873 = vrot.slane %v1872, 4
        %v1874 = vrot.slane %v1828, 7
        %v1875 = vrot.slane %v1874, 4
        %v1876 = vrot.slane %v1829, 7
        %v1877 = vrot.slane %v1876, 4
        %v1878 = vrot.slane %v1830, 7
        %v1879 = vrot.slane %v1878, 4
        %v1880 = vrot.slane %v1831, 7
        %v1881 = vrot.slane %v1880, 4
        %v1882 = vrot.slane %v1832, 7
        %v1883 = vrot.slane %v1882, 4
        %v1884 = vrot.slane %v1833, 7
        %v1885 = vrot.slane %v1884, 4
        %v1886 = vrot.slane %v1834, 7
        %v1887 = vrot.slane %v1886, 4
        %v1888 = vrot.slane %v1835, 7
        %v1889 = vrot.slane %v1888, 4
        %vm1908 = vmand %vm1549, %vm1542
        %v1909 = vld [vmem:[#allocation2 + $0x8] sm:$0x1]
        %v1910 = vsel %vm1908, %v1855, %v1909
        %1911 = vst [vmem:[#allocation2 + $0x8] sm:$0x1] %v1910
        %v1912 = vld [vmem:[#allocation2 + $0x14] sm:$0x1]
        %v1913 = vsel %vm1908, %v1857, %v1912
        %1914 = vst [vmem:[#allocation2 + $0x14] sm:$0x1] %v1913
        %v1915 = vld [vmem:[#allocation2 + $0x20] sm:$0x1]
        %v1916 = vsel %vm1908, %v1859, %v1915
        %1917 = vst [vmem:[#allocation2 + $0x20] sm:$0x1] %v1916
        %v1918 = vld [vmem:[#allocation2 + $0x2c] sm:$0x1]
        %v1919 = vsel %vm1908, %v1861, %v1918
        %1920 = vst [vmem:[#allocation2 + $0x2c] sm:$0x1] %v1919
        %v1921 = vld [vmem:[#allocation2 + $0x38] sm:$0x1]
        %v1922 = vsel %vm1908, %v1863, %v1921
        %1923 = vst [vmem:[#allocation2 + $0x38] sm:$0x1] %v1922
        %v1924 = vld [vmem:[#allocation2 + $0x44] sm:$0x1]
        %v1925 = vsel %vm1908, %v1865, %v1924
        %1926 = vst [vmem:[#allocation2 + $0x44] sm:$0x1] %v1925
        %v1927 = vld [vmem:[#allocation2 + $0x50] sm:$0x1]
        %v1928 = vsel %vm1908, %v1867, %v1927
        %1929 = vst [vmem:[#allocation2 + $0x50] sm:$0x1] %v1928
        %v1930 = vld [vmem:[#allocation2 + $0x5c] sm:$0x1]
        %v1931 = vsel %vm1908, %v1869, %v1930
        %1932 = vst [vmem:[#allocation2 + $0x5c] sm:$0x1] %v1931
        %v1933 = vld [vmem:[#allocation2 + $0x68] sm:$0x1]
        %v1934 = vsel %vm1908, %v1871, %v1933
        %1935 = vst [vmem:[#allocation2 + $0x68] sm:$0x1] %v1934
        %v1936 = vld [vmem:[#allocation2 + $0x74] sm:$0x1]
        %v1937 = vsel %vm1908, %v1873, %v1936
        %1938 = vst [vmem:[#allocation2 + $0x74] sm:$0x1] %v1937
        %v1939 = vld [vmem:[#allocation2 + $0x80] sm:$0x1]
        %v1940 = vsel %vm1908, %v1875, %v1939
        %1941 = vst [vmem:[#allocation2 + $0x80] sm:$0x1] %v1940
        %v1942 = vld [vmem:[#allocation2 + $0x8c] sm:$0x1]
        %v1943 = vsel %vm1908, %v1877, %v1942
        %1944 = vst [vmem:[#allocation2 + $0x8c] sm:$0x1] %v1943
        %v1945 = vld [vmem:[#allocation2 + $0x98] sm:$0x1]
        %v1946 = vsel %vm1908, %v1879, %v1945
        %1947 = vst [vmem:[#allocation2 + $0x98] sm:$0x1] %v1946
        %v1948 = vld [vmem:[#allocation2 + $0xa4] sm:$0x1]
        %v1949 = vsel %vm1908, %v1881, %v1948
        %1950 = vst [vmem:[#allocation2 + $0xa4] sm:$0x1] %v1949
        %v1951 = vld [vmem:[#allocation2 + $0xb0] sm:$0x1]
        %v1952 = vsel %vm1908, %v1883, %v1951
        %1953 = vst [vmem:[#allocation2 + $0xb0] sm:$0x1] %v1952
        %v1954 = vld [vmem:[#allocation2 + $0xbc] sm:$0x1]
        %v1955 = vsel %vm1908, %v1885, %v1954
        %1956 = vst [vmem:[#allocation2 + $0xbc] sm:$0x1] %v1955
        %v1957 = vld [vmem:[#allocation2 + $0xc8] sm:$0x1]
        %v1958 = vsel %vm1908, %v1887, %v1957
        %1959 = vst [vmem:[#allocation2 + $0xc8] sm:$0x1] %v1958
        %v1960 = vld [vmem:[#allocation2 + $0xd4] sm:$0x1]
        %v1961 = vsel %vm1908, %v1889, %v1960
        %1962 = vst [vmem:[#allocation2 + $0xd4] sm:$0x1] %v1961
        %v1963 = vld [vmem:[#allocation2] sm:$0xf]
        %v1964 = vld [vmem:[#allocation2 + $0x4] sm:$0xf]
        %v1965 = vld [vmem:[#allocation2 + $0xc] sm:$0xf]
        %v1966 = vld [vmem:[#allocation2 + $0x10] sm:$0xf]
        %v1967 = vld [vmem:[#allocation2 + $0x18] sm:$0xf]
        %v1968 = vld [vmem:[#allocation2 + $0x1c] sm:$0xf]
        %v1969 = vld [vmem:[#allocation2 + $0x24] sm:$0xf]
        %v1970 = vld [vmem:[#allocation2 + $0x28] sm:$0xf]
        %v1971 = vld [vmem:[#allocation2 + $0x30] sm:$0xf]
        %v1972 = vld [vmem:[#allocation2 + $0x34] sm:$0xf]
        %v1973 = vld [vmem:[#allocation2 + $0x3c] sm:$0xf]
        %v1974 = vld [vmem:[#allocation2 + $0x40] sm:$0xf]
        %v1975 = vld [vmem:[#allocation2 + $0x48] sm:$0xf]
        %v1976 = vld [vmem:[#allocation2 + $0x4c] sm:$0xf]
        %v1977 = vld [vmem:[#allocation2 + $0x54] sm:$0xf]
        %v1978 = vld [vmem:[#allocation2 + $0x58] sm:$0xf]
        %v1979 = vld [vmem:[#allocation2 + $0x60] sm:$0xf]
        %v1980 = vld [vmem:[#allocation2 + $0x64] sm:$0xf]
        %v1981 = vld [vmem:[#allocation2 + $0x6c] sm:$0xf]
        %v1982 = vld [vmem:[#allocation2 + $0x70] sm:$0xf]
        %v1983 = vld [vmem:[#allocation2 + $0x78] sm:$0xf]
        %v1984 = vld [vmem:[#allocation2 + $0x7c] sm:$0xf]
        %v1985 = vld [vmem:[#allocation2 + $0x84] sm:$0xf]
        %v1986 = vld [vmem:[#allocation2 + $0x88] sm:$0xf]
        %v1987 = vld [vmem:[#allocation2 + $0x90] sm:$0xf]
        %v1988 = vld [vmem:[#allocation2 + $0x94] sm:$0xf]
        %v1989 = vld [vmem:[#allocation2 + $0x9c] sm:$0xf]
        %v1990 = vld [vmem:[#allocation2 + $0xa0] sm:$0xf]
        %v1991 = vld [vmem:[#allocation2 + $0xa8] sm:$0xf]
        %v1992 = vld [vmem:[#allocation2 + $0xac] sm:$0xf]
        %v1993 = vld [vmem:[#allocation2 + $0xb4] sm:$0xf]
        %v1994 = vld [vmem:[#allocation2 + $0xb8] sm:$0xf]
        %v2027 = vunpack.c.l.b16 %v1963
        %v2028 = vunpack.c.l.b16 %v1964
        %v2029 = vunpack.c.l.b16 %v1965
        %v2030 = vunpack.c.l.b16 %v1966
        %v2031 = vunpack.c.l.b16 %v1967
        %v2032 = vunpack.c.l.b16 %v1968
        %v2033 = vunpack.c.l.b16 %v1969
        %v2034 = vunpack.c.l.b16 %v1970
        %v2035 = vunpack.c.l.b16 %v1971
        %v2036 = vunpack.c.l.b16 %v1972
        %v2037 = vunpack.c.l.b16 %v1973
        %v2038 = vunpack.c.l.b16 %v1974
        %v2039 = vunpack.c.l.b16 %v1975
        %v2040 = vunpack.c.l.b16 %v1976
        %v2041 = vunpack.c.l.b16 %v1977
        %v2042 = vunpack.c.l.b16 %v1978
        %v2043 = vunpack.c.l.b16 %v1979
        %v2044 = vunpack.c.l.b16 %v1980
        %v2045 = vunpack.c.l.b16 %v1981
        %v2046 = vunpack.c.l.b16 %v1982
        %v2047 = vunpack.c.l.b16 %v1983
        %v2048 = vunpack.c.l.b16 %v1984
        %v2049 = vunpack.c.l.b16 %v1985
        %v2050 = vunpack.c.l.b16 %v1986
        %v2051 = vunpack.c.l.b16 %v1987
        %v2052 = vunpack.c.l.b16 %v1988
        %v2053 = vunpack.c.l.b16 %v1989
        %v2054 = vunpack.c.l.b16 %v1990
        %v2055 = vunpack.c.l.b16 %v1991
        %v2056 = vunpack.c.l.b16 %v1992
        %v2057 = vunpack.c.l.b16 %v1993
        %v2058 = vunpack.c.l.b16 %v1994
        %v2059 = vpack.c.b16 %v2028, %v2027
        %v2060 = vpack.c.b16 %v2030, %v2029
        %v2061 = vpack.c.b16 %v2032, %v2031
        %v2062 = vpack.c.b16 %v2034, %v2033
        %v2063 = vpack.c.b16 %v2036, %v2035
        %v2064 = vpack.c.b16 %v2038, %v2037
        %v2065 = vpack.c.b16 %v2040, %v2039
        %v2066 = vpack.c.b16 %v2042, %v2041
        %v2067 = vpack.c.b16 %v2044, %v2043
        %v2068 = vpack.c.b16 %v2046, %v2045
        %v2069 = vpack.c.b16 %v2048, %v2047
        %v2070 = vpack.c.b16 %v2050, %v2049
        %v2071 = vpack.c.b16 %v2052, %v2051
        %v2072 = vpack.c.b16 %v2054, %v2053
        %v2073 = vpack.c.b16 %v2056, %v2055
        %v2074 = vpack.c.b16 %v2058, %v2057
        %2091 = vst.msk [vmem:[#allocation3] sm:$0xff] %vm685, %v2059
        %2092 = vst.msk [vmem:[#allocation3 + $0x18] sm:$0xff] %vm685, %v2060
        %2093 = vst.msk [vmem:[#allocation3 + $0x30] sm:$0xff] %vm685, %v2061
        %2094 = vst.msk [vmem:[#allocation3 + $0x48] sm:$0xff] %vm685, %v2062
        %2095 = vst.msk [vmem:[#allocation3 + $0x60] sm:$0xff] %vm685, %v2063
        %2096 = vst.msk [vmem:[#allocation3 + $0x78] sm:$0xff] %vm685, %v2064
        %2097 = vst.msk [vmem:[#allocation3 + $0x90] sm:$0xff] %vm685, %v2065
        %2098 = vst.msk [vmem:[#allocation3 + $0xa8] sm:$0xff] %vm685, %v2066
        %2099 = vst.msk [vmem:[#allocation3 + $0xc0] sm:$0xff] %vm685, %v2067
        %2100 = vst.msk [vmem:[#allocation3 + $0xd8] sm:$0xff] %vm685, %v2068
        %2101 = vst.msk [vmem:[#allocation3 + $0xf0] sm:$0xff] %vm685, %v2069
        %2102 = vst.msk [vmem:[#allocation3 + $0x108] sm:$0xff] %vm685, %v2070
        %2103 = vst.msk [vmem:[#allocation3 + $0x120] sm:$0xff] %vm685, %v2071
        %2104 = vst.msk [vmem:[#allocation3 + $0x138] sm:$0xff] %vm685, %v2072
        %2105 = vst.msk [vmem:[#allocation3 + $0x150] sm:$0xff] %vm685, %v2073
        %2106 = vst.msk [vmem:[#allocation3 + $0x168] sm:$0xff] %vm685, %v2074
        %v2107 = vld [vmem:[#allocation2] sm:$0xf]
        %v2108 = vld [vmem:[#allocation2 + $0x4] sm:$0xf]
        %v2109 = vld [vmem:[#allocation2 + $0x8] sm:$0x1]
        %v2110 = vld [vmem:[#allocation2 + $0xc] sm:$0xf]
        %v2111 = vld [vmem:[#allocation2 + $0x10] sm:$0xf]
        %v2112 = vld [vmem:[#allocation2 + $0x14] sm:$0x1]
        %v2113 = vld [vmem:[#allocation2 + $0x18] sm:$0xf]
        %v2114 = vld [vmem:[#allocation2 + $0x1c] sm:$0xf]
        %v2115 = vld [vmem:[#allocation2 + $0x20] sm:$0x1]
        %v2116 = vld [vmem:[#allocation2 + $0x24] sm:$0xf]
        %v2117 = vld [vmem:[#allocation2 + $0x28] sm:$0xf]
        %v2118 = vld [vmem:[#allocation2 + $0x2c] sm:$0x1]
        %v2119 = vld [vmem:[#allocation2 + $0x30] sm:$0xf]
        %v2120 = vld [vmem:[#allocation2 + $0x34] sm:$0xf]
        %v2121 = vld [vmem:[#allocation2 + $0x38] sm:$0x1]
        %v2122 = vld [vmem:[#allocation2 + $0x3c] sm:$0xf]
        %v2123 = vld [vmem:[#allocation2 + $0x40] sm:$0xf]
        %v2124 = vld [vmem:[#allocation2 + $0x44] sm:$0x1]
        %v2125 = vld [vmem:[#allocation2 + $0x48] sm:$0xf]
        %v2126 = vld [vmem:[#allocation2 + $0x4c] sm:$0xf]
        %v2127 = vld [vmem:[#allocation2 + $0x50] sm:$0x1]
        %v2128 = vld [vmem:[#allocation2 + $0x54] sm:$0xf]
        %v2129 = vld [vmem:[#allocation2 + $0x58] sm:$0xf]
        %v2130 = vld [vmem:[#allocation2 + $0x5c] sm:$0x1]
        %v2131 = vld [vmem:[#allocation2 + $0x60] sm:$0xf]
        %v2132 = vld [vmem:[#allocation2 + $0x64] sm:$0xf]
        %v2133 = vld [vmem:[#allocation2 + $0x68] sm:$0x1]
        %v2134 = vld [vmem:[#allocation2 + $0x6c] sm:$0xf]
        %v2135 = vld [vmem:[#allocation2 + $0x70] sm:$0xf]
        %v2136 = vld [vmem:[#allocation2 + $0x74] sm:$0x1]
        %v2137 = vld [vmem:[#allocation2 + $0x78] sm:$0xf]
        %v2138 = vld [vmem:[#allocation2 + $0x7c] sm:$0xf]
        %v2139 = vld [vmem:[#allocation2 + $0x80] sm:$0x1]
        %v2140 = vld [vmem:[#allocation2 + $0x84] sm:$0xf]
        %v2141 = vld [vmem:[#allocation2 + $0x88] sm:$0xf]
        %v2142 = vld [vmem:[#allocation2 + $0x8c] sm:$0x1]
        %v2143 = vld [vmem:[#allocation2 + $0x90] sm:$0xf]
        %v2144 = vld [vmem:[#allocation2 + $0x94] sm:$0xf]
        %v2145 = vld [vmem:[#allocation2 + $0x98] sm:$0x1]
        %v2146 = vld [vmem:[#allocation2 + $0x9c] sm:$0xf]
        %v2147 = vld [vmem:[#allocation2 + $0xa0] sm:$0xf]
        %v2148 = vld [vmem:[#allocation2 + $0xa4] sm:$0x1]
        %v2149 = vld [vmem:[#allocation2 + $0xa8] sm:$0xf]
        %v2150 = vld [vmem:[#allocation2 + $0xac] sm:$0xf]
        %v2151 = vld [vmem:[#allocation2 + $0xb0] sm:$0x1]
        %v2152 = vld [vmem:[#allocation2 + $0xb4] sm:$0xf]
        %v2153 = vld [vmem:[#allocation2 + $0xb8] sm:$0xf]
        %v2154 = vld [vmem:[#allocation2 + $0xbc] sm:$0x1]
        %vm2155 = vsmask.f32 3328
        %vm2156 = vsmask.f32 7440
        %vm2157 = vmor %vm2155, %vm2156
        %v2159 = vshrl.u32 %v2107, 16
        %v2161 = vrot.slane %v2159, 4
        %v2162 = vshll.u32 %v2107, 16
        %v2164 = vrot.slane %v2162, 5
        %v2165 = vor.u32 %v2161, %v2164
        %v2166 = vrot.slane %v2165, 4
        %v2168 = vshll.u32 %v2108, 16
        %v2170 = vrot.slane %v2168, 5
        %v2171 = vsel %vm2157, %v2166, %v2170
        %v2172 = vshrl.u32 %v2108, 16
        %v2174 = vrot.slane %v2172, 4
        %v2175 = vor.u32 %v2174, %v2170
        %v2176 = vrot.slane %v2175, 4
        %v2178 = vshll.u32 %v2109, 16
        %v2180 = vrot.slane %v2178, 5
        %v2181 = vsel %vm2157, %v2176, %v2180
        %v2183 = vshrl.u32 %v2110, 16
        %v2185 = vrot.slane %v2183, 4
        %v2186 = vshll.u32 %v2110, 16
        %v2188 = vrot.slane %v2186, 5
        %v2189 = vor.u32 %v2185, %v2188
        %v2190 = vrot.slane %v2189, 4
        %v2192 = vshll.u32 %v2111, 16
        %v2194 = vrot.slane %v2192, 5
        %v2195 = vsel %vm2157, %v2190, %v2194
        %v2196 = vshrl.u32 %v2111, 16
        %v2198 = vrot.slane %v2196, 4
        %v2199 = vor.u32 %v2198, %v2194
        %v2200 = vrot.slane %v2199, 4
        %v2202 = vshll.u32 %v2112, 16
        %v2204 = vrot.slane %v2202, 5
        %v2205 = vsel %vm2157, %v2200, %v2204
        %v2207 = vshrl.u32 %v2113, 16
        %v2209 = vrot.slane %v2207, 4
        %v2210 = vshll.u32 %v2113, 16
        %v2212 = vrot.slane %v2210, 5
        %v2213 = vor.u32 %v2209, %v2212
        %v2214 = vrot.slane %v2213, 4
        %v2216 = vshll.u32 %v2114, 16
        %v2218 = vrot.slane %v2216, 5
        %v2219 = vsel %vm2157, %v2214, %v2218
        %v2220 = vshrl.u32 %v2114, 16
        %v2222 = vrot.slane %v2220, 4
        %v2223 = vor.u32 %v2222, %v2218
        %v2224 = vrot.slane %v2223, 4
        %v2226 = vshll.u32 %v2115, 16
        %v2228 = vrot.slane %v2226, 5
        %v2229 = vsel %vm2157, %v2224, %v2228
        %v2231 = vshrl.u32 %v2116, 16
        %v2233 = vrot.slane %v2231, 4
        %v2234 = vshll.u32 %v2116, 16
        %v2236 = vrot.slane %v2234, 5
        %v2237 = vor.u32 %v2233, %v2236
        %v2238 = vrot.slane %v2237, 4
        %v2240 = vshll.u32 %v2117, 16
        %v2242 = vrot.slane %v2240, 5
        %v2243 = vsel %vm2157, %v2238, %v2242
        %v2244 = vshrl.u32 %v2117, 16
        %v2246 = vrot.slane %v2244, 4
        %v2247 = vor.u32 %v2246, %v2242
        %v2248 = vrot.slane %v2247, 4
        %v2250 = vshll.u32 %v2118, 16
        %v2252 = vrot.slane %v2250, 5
        %v2253 = vsel %vm2157, %v2248, %v2252
        %v2255 = vshrl.u32 %v2119, 16
        %v2257 = vrot.slane %v2255, 4
        %v2258 = vshll.u32 %v2119, 16
        %v2260 = vrot.slane %v2258, 5
        %v2261 = vor.u32 %v2257, %v2260
        %v2262 = vrot.slane %v2261, 4
        %v2264 = vshll.u32 %v2120, 16
        %v2266 = vrot.slane %v2264, 5
        %v2267 = vsel %vm2157, %v2262, %v2266
        %v2268 = vshrl.u32 %v2120, 16
        %v2270 = vrot.slane %v2268, 4
        %v2271 = vor.u32 %v2270, %v2266
        %v2272 = vrot.slane %v2271, 4
        %v2274 = vshll.u32 %v2121, 16
        %v2276 = vrot.slane %v2274, 5
        %v2277 = vsel %vm2157, %v2272, %v2276
        %v2279 = vshrl.u32 %v2122, 16
        %v2281 = vrot.slane %v2279, 4
        %v2282 = vshll.u32 %v2122, 16
        %v2284 = vrot.slane %v2282, 5
        %v2285 = vor.u32 %v2281, %v2284
        %v2286 = vrot.slane %v2285, 4
        %v2288 = vshll.u32 %v2123, 16
        %v2290 = vrot.slane %v2288, 5
        %v2291 = vsel %vm2157, %v2286, %v2290
        %v2292 = vshrl.u32 %v2123, 16
        %v2294 = vrot.slane %v2292, 4
        %v2295 = vor.u32 %v2294, %v2290
        %v2296 = vrot.slane %v2295, 4
        %v2298 = vshll.u32 %v2124, 16
        %v2300 = vrot.slane %v2298, 5
        %v2301 = vsel %vm2157, %v2296, %v2300
        %v2303 = vshrl.u32 %v2125, 16
        %v2305 = vrot.slane %v2303, 4
        %v2306 = vshll.u32 %v2125, 16
        %v2308 = vrot.slane %v2306, 5
        %v2309 = vor.u32 %v2305, %v2308
        %v2310 = vrot.slane %v2309, 4
        %v2312 = vshll.u32 %v2126, 16
        %v2314 = vrot.slane %v2312, 5
        %v2315 = vsel %vm2157, %v2310, %v2314
        %v2316 = vshrl.u32 %v2126, 16
        %v2318 = vrot.slane %v2316, 4
        %v2319 = vor.u32 %v2318, %v2314
        %v2320 = vrot.slane %v2319, 4
        %v2322 = vshll.u32 %v2127, 16
        %v2324 = vrot.slane %v2322, 5
        %v2325 = vsel %vm2157, %v2320, %v2324
        %v2327 = vshrl.u32 %v2128, 16
        %v2329 = vrot.slane %v2327, 4
        %v2330 = vshll.u32 %v2128, 16
        %v2332 = vrot.slane %v2330, 5
        %v2333 = vor.u32 %v2329, %v2332
        %v2334 = vrot.slane %v2333, 4
        %v2336 = vshll.u32 %v2129, 16
        %v2338 = vrot.slane %v2336, 5
        %v2339 = vsel %vm2157, %v2334, %v2338
        %v2340 = vshrl.u32 %v2129, 16
        %v2342 = vrot.slane %v2340, 4
        %v2343 = vor.u32 %v2342, %v2338
        %v2344 = vrot.slane %v2343, 4
        %v2346 = vshll.u32 %v2130, 16
        %v2348 = vrot.slane %v2346, 5
        %v2349 = vsel %vm2157, %v2344, %v2348
        %v2351 = vshrl.u32 %v2131, 16
        %v2353 = vrot.slane %v2351, 4
        %v2354 = vshll.u32 %v2131, 16
        %v2356 = vrot.slane %v2354, 5
        %v2357 = vor.u32 %v2353, %v2356
        %v2358 = vrot.slane %v2357, 4
        %v2360 = vshll.u32 %v2132, 16
        %v2362 = vrot.slane %v2360, 5
        %v2363 = vsel %vm2157, %v2358, %v2362
        %v2364 = vshrl.u32 %v2132, 16
        %v2366 = vrot.slane %v2364, 4
        %v2367 = vor.u32 %v2366, %v2362
        %v2368 = vrot.slane %v2367, 4
        %v2370 = vshll.u32 %v2133, 16
        %v2372 = vrot.slane %v2370, 5
        %v2373 = vsel %vm2157, %v2368, %v2372
        %v2375 = vshrl.u32 %v2134, 16
        %v2377 = vrot.slane %v2375, 4
        %v2378 = vshll.u32 %v2134, 16
        %v2380 = vrot.slane %v2378, 5
        %v2381 = vor.u32 %v2377, %v2380
        %v2382 = vrot.slane %v2381, 4
        %v2384 = vshll.u32 %v2135, 16
        %v2386 = vrot.slane %v2384, 5
        %v2387 = vsel %vm2157, %v2382, %v2386
        %v2388 = vshrl.u32 %v2135, 16
        %v2390 = vrot.slane %v2388, 4
        %v2391 = vor.u32 %v2390, %v2386
        %v2392 = vrot.slane %v2391, 4
        %v2394 = vshll.u32 %v2136, 16
        %v2396 = vrot.slane %v2394, 5
        %v2397 = vsel %vm2157, %v2392, %v2396
        %v2399 = vshrl.u32 %v2137, 16
        %v2401 = vrot.slane %v2399, 4
        %v2402 = vshll.u32 %v2137, 16
        %v2404 = vrot.slane %v2402, 5
        %v2405 = vor.u32 %v2401, %v2404
        %v2406 = vrot.slane %v2405, 4
        %v2408 = vshll.u32 %v2138, 16
        %v2410 = vrot.slane %v2408, 5
        %v2411 = vsel %vm2157, %v2406, %v2410
        %v2412 = vshrl.u32 %v2138, 16
        %v2414 = vrot.slane %v2412, 4
        %v2415 = vor.u32 %v2414, %v2410
        %v2416 = vrot.slane %v2415, 4
        %v2418 = vshll.u32 %v2139, 16
        %v2420 = vrot.slane %v2418, 5
        %v2421 = vsel %vm2157, %v2416, %v2420
        %v2423 = vshrl.u32 %v2140, 16
        %v2425 = vrot.slane %v2423, 4
        %v2426 = vshll.u32 %v2140, 16
        %v2428 = vrot.slane %v2426, 5
        %v2429 = vor.u32 %v2425, %v2428
        %v2430 = vrot.slane %v2429, 4
        %v2432 = vshll.u32 %v2141, 16
        %v2434 = vrot.slane %v2432, 5
        %v2435 = vsel %vm2157, %v2430, %v2434
        %v2436 = vshrl.u32 %v2141, 16
        %v2438 = vrot.slane %v2436, 4
        %v2439 = vor.u32 %v2438, %v2434
        %v2440 = vrot.slane %v2439, 4
        %v2442 = vshll.u32 %v2142, 16
        %v2444 = vrot.slane %v2442, 5
        %v2445 = vsel %vm2157, %v2440, %v2444
        %v2447 = vshrl.u32 %v2143, 16
        %v2449 = vrot.slane %v2447, 4
        %v2450 = vshll.u32 %v2143, 16
        %v2452 = vrot.slane %v2450, 5
        %v2453 = vor.u32 %v2449, %v2452
        %v2454 = vrot.slane %v2453, 4
        %v2456 = vshll.u32 %v2144, 16
        %v2458 = vrot.slane %v2456, 5
        %v2459 = vsel %vm2157, %v2454, %v2458
        %v2460 = vshrl.u32 %v2144, 16
        %v2462 = vrot.slane %v2460, 4
        %v2463 = vor.u32 %v2462, %v2458
        %v2464 = vrot.slane %v2463, 4
        %v2466 = vshll.u32 %v2145, 16
        %v2468 = vrot.slane %v2466, 5
        %v2469 = vsel %vm2157, %v2464, %v2468
        %v2471 = vshrl.u32 %v2146, 16
        %v2473 = vrot.slane %v2471, 4
        %v2474 = vshll.u32 %v2146, 16
        %v2476 = vrot.slane %v2474, 5
        %v2477 = vor.u32 %v2473, %v2476
        %v2478 = vrot.slane %v2477, 4
        %v2480 = vshll.u32 %v2147, 16
        %v2482 = vrot.slane %v2480, 5
        %v2483 = vsel %vm2157, %v2478, %v2482
        %v2484 = vshrl.u32 %v2147, 16
        %v2486 = vrot.slane %v2484, 4
        %v2487 = vor.u32 %v2486, %v2482
        %v2488 = vrot.slane %v2487, 4
        %v2490 = vshll.u32 %v2148, 16
        %v2492 = vrot.slane %v2490, 5
        %v2493 = vsel %vm2157, %v2488, %v2492
        %v2495 = vshrl.u32 %v2149, 16
        %v2497 = vrot.slane %v2495, 4
        %v2498 = vshll.u32 %v2149, 16
        %v2500 = vrot.slane %v2498, 5
        %v2501 = vor.u32 %v2497, %v2500
        %v2502 = vrot.slane %v2501, 4
        %v2504 = vshll.u32 %v2150, 16
        %v2506 = vrot.slane %v2504, 5
        %v2507 = vsel %vm2157, %v2502, %v2506
        %v2508 = vshrl.u32 %v2150, 16
        %v2510 = vrot.slane %v2508, 4
        %v2511 = vor.u32 %v2510, %v2506
        %v2512 = vrot.slane %v2511, 4
        %v2514 = vshll.u32 %v2151, 16
        %v2516 = vrot.slane %v2514, 5
        %v2517 = vsel %vm2157, %v2512, %v2516
        %v2519 = vshrl.u32 %v2152, 16
        %v2521 = vrot.slane %v2519, 4
        %v2522 = vshll.u32 %v2152, 16
        %v2524 = vrot.slane %v2522, 5
        %v2525 = vor.u32 %v2521, %v2524
        %v2526 = vrot.slane %v2525, 4
        %v2528 = vshll.u32 %v2153, 16
        %v2530 = vrot.slane %v2528, 5
        %v2531 = vsel %vm2157, %v2526, %v2530
        %v2532 = vshrl.u32 %v2153, 16
        %v2534 = vrot.slane %v2532, 4
        %v2535 = vor.u32 %v2534, %v2530
        %v2536 = vrot.slane %v2535, 4
        %v2538 = vshll.u32 %v2154, 16
        %v2540 = vrot.slane %v2538, 5
        %v2541 = vsel %vm2157, %v2536, %v2540
        %v2542 = vunpack.c.l.b16 %v2171
        %v2543 = vunpack.c.l.b16 %v2181
        %v2544 = vunpack.c.l.b16 %v2195
        %v2545 = vunpack.c.l.b16 %v2205
        %v2546 = vunpack.c.l.b16 %v2219
        %v2547 = vunpack.c.l.b16 %v2229
        %v2548 = vunpack.c.l.b16 %v2243
        %v2549 = vunpack.c.l.b16 %v2253
        %v2550 = vunpack.c.l.b16 %v2267
        %v2551 = vunpack.c.l.b16 %v2277
        %v2552 = vunpack.c.l.b16 %v2291
        %v2553 = vunpack.c.l.b16 %v2301
        %v2554 = vunpack.c.l.b16 %v2315
        %v2555 = vunpack.c.l.b16 %v2325
        %v2556 = vunpack.c.l.b16 %v2339
        %v2557 = vunpack.c.l.b16 %v2349
        %v2558 = vunpack.c.l.b16 %v2363
        %v2559 = vunpack.c.l.b16 %v2373
        %v2560 = vunpack.c.l.b16 %v2387
        %v2561 = vunpack.c.l.b16 %v2397
        %v2562 = vunpack.c.l.b16 %v2411
        %v2563 = vunpack.c.l.b16 %v2421
        %v2564 = vunpack.c.l.b16 %v2435
        %v2565 = vunpack.c.l.b16 %v2445
        %v2566 = vunpack.c.l.b16 %v2459
        %v2567 = vunpack.c.l.b16 %v2469
        %v2568 = vunpack.c.l.b16 %v2483
        %v2569 = vunpack.c.l.b16 %v2493
        %v2570 = vunpack.c.l.b16 %v2507
        %v2571 = vunpack.c.l.b16 %v2517
        %v2572 = vunpack.c.l.b16 %v2531
        %v2573 = vunpack.c.l.b16 %v2541
        %v2574 = vpack.c.b16 %v2543, %v2542
        %v2575 = vpack.c.b16 %v2545, %v2544
        %v2576 = vpack.c.b16 %v2547, %v2546
        %v2577 = vpack.c.b16 %v2549, %v2548
        %v2578 = vpack.c.b16 %v2551, %v2550
        %v2579 = vpack.c.b16 %v2553, %v2552
        %v2580 = vpack.c.b16 %v2555, %v2554
        %v2581 = vpack.c.b16 %v2557, %v2556
        %v2582 = vpack.c.b16 %v2559, %v2558
        %v2583 = vpack.c.b16 %v2561, %v2560
        %v2584 = vpack.c.b16 %v2563, %v2562
        %v2585 = vpack.c.b16 %v2565, %v2564
        %v2586 = vpack.c.b16 %v2567, %v2566
        %v2587 = vpack.c.b16 %v2569, %v2568
        %v2588 = vpack.c.b16 %v2571, %v2570
        %v2589 = vpack.c.b16 %v2573, %v2572
        %2590 = vrot.lane.b32.xlu0 %v2574, 32
        %v2591 = vpop.permute.xlu0 %2590
        %2592 = vrot.lane.b32.xlu0 %v2575, 32
        %v2593 = vpop.permute.xlu0 %2592
        %2594 = vrot.lane.b32.xlu0 %v2576, 32
        %v2595 = vpop.permute.xlu0 %2594
        %2596 = vrot.lane.b32.xlu0 %v2577, 32
        %v2597 = vpop.permute.xlu0 %2596
        %2598 = vrot.lane.b32.xlu0 %v2578, 32
        %v2599 = vpop.permute.xlu0 %2598
        %2600 = vrot.lane.b32.xlu0 %v2579, 32
        %v2601 = vpop.permute.xlu0 %2600
        %2602 = vrot.lane.b32.xlu0 %v2580, 32
        %v2603 = vpop.permute.xlu0 %2602
        %2604 = vrot.lane.b32.xlu0 %v2581, 32
        %v2605 = vpop.permute.xlu0 %2604
        %2606 = vrot.lane.b32.xlu0 %v2582, 32
        %v2607 = vpop.permute.xlu0 %2606
        %2608 = vrot.lane.b32.xlu0 %v2583, 32
        %v2609 = vpop.permute.xlu0 %2608
        %2610 = vrot.lane.b32.xlu0 %v2584, 32
        %v2611 = vpop.permute.xlu0 %2610
        %2612 = vrot.lane.b32.xlu0 %v2585, 32
        %v2613 = vpop.permute.xlu0 %2612
        %2614 = vrot.lane.b32.xlu0 %v2586, 32
        %v2615 = vpop.permute.xlu0 %2614
        %2616 = vrot.lane.b32.xlu0 %v2587, 32
        %v2617 = vpop.permute.xlu0 %2616
        %2618 = vrot.lane.b32.xlu0 %v2588, 32
        %v2619 = vpop.permute.xlu0 %2618
        %2620 = vrot.lane.b32.xlu0 %v2589, 32
        %v2621 = vpop.permute.xlu0 %2620
        %vm2638 = vcmask 523520
        %2639 = vst.msk [vmem:[#allocation3] sm:$0xff] %vm2638, %v2591
        %2640 = vst.msk [vmem:[#allocation3 + $0x18] sm:$0xff] %vm2638, %v2593
        %2641 = vst.msk [vmem:[#allocation3 + $0x30] sm:$0xff] %vm2638, %v2595
        %2642 = vst.msk [vmem:[#allocation3 + $0x48] sm:$0xff] %vm2638, %v2597
        %2643 = vst.msk [vmem:[#allocation3 + $0x60] sm:$0xff] %vm2638, %v2599
        %2644 = vst.msk [vmem:[#allocation3 + $0x78] sm:$0xff] %vm2638, %v2601
        %2645 = vst.msk [vmem:[#allocation3 + $0x90] sm:$0xff] %vm2638, %v2603
        %2646 = vst.msk [vmem:[#allocation3 + $0xa8] sm:$0xff] %vm2638, %v2605
        %2647 = vst.msk [vmem:[#allocation3 + $0xc0] sm:$0xff] %vm2638, %v2607
        %2648 = vst.msk [vmem:[#allocation3 + $0xd8] sm:$0xff] %vm2638, %v2609
        %2649 = vst.msk [vmem:[#allocation3 + $0xf0] sm:$0xff] %vm2638, %v2611
        %2650 = vst.msk [vmem:[#allocation3 + $0x108] sm:$0xff] %vm2638, %v2613
        %2651 = vst.msk [vmem:[#allocation3 + $0x120] sm:$0xff] %vm2638, %v2615
        %2652 = vst.msk [vmem:[#allocation3 + $0x138] sm:$0xff] %vm2638, %v2617
        %2653 = vst.msk [vmem:[#allocation3 + $0x150] sm:$0xff] %vm2638, %v2619
        %2654 = vst.msk [vmem:[#allocation3 + $0x168] sm:$0xff] %vm2638, %v2621
        %v2655 = vld [vmem:[#allocation2] sm:$0xe]
        %v2656 = vld [vmem:[#allocation2 + $0x4] sm:$0xf]
        %v2657 = vld [vmem:[#allocation2 + $0x8] sm:$0x1]
        %v2658 = vld [vmem:[#allocation2 + $0xc] sm:$0xe]
        %v2659 = vld [vmem:[#allocation2 + $0x10] sm:$0xf]
        %v2660 = vld [vmem:[#allocation2 + $0x14] sm:$0x1]
        %v2661 = vld [vmem:[#allocation2 + $0x18] sm:$0xe]
        %v2662 = vld [vmem:[#allocation2 + $0x1c] sm:$0xf]
        %v2663 = vld [vmem:[#allocation2 + $0x20] sm:$0x1]
        %v2664 = vld [vmem:[#allocation2 + $0x24] sm:$0xe]
        %v2665 = vld [vmem:[#allocation2 + $0x28] sm:$0xf]
        %v2666 = vld [vmem:[#allocation2 + $0x2c] sm:$0x1]
        %v2667 = vld [vmem:[#allocation2 + $0x30] sm:$0xe]
        %v2668 = vld [vmem:[#allocation2 + $0x34] sm:$0xf]
        %v2669 = vld [vmem:[#allocation2 + $0x38] sm:$0x1]
        %v2670 = vld [vmem:[#allocation2 + $0x3c] sm:$0xe]
        %v2671 = vld [vmem:[#allocation2 + $0x40] sm:$0xf]
        %v2672 = vld [vmem:[#allocation2 + $0x44] sm:$0x1]
        %v2673 = vld [vmem:[#allocation2 + $0x48] sm:$0xe]
        %v2674 = vld [vmem:[#allocation2 + $0x4c] sm:$0xf]
        %v2675 = vld [vmem:[#allocation2 + $0x50] sm:$0x1]
        %v2676 = vld [vmem:[#allocation2 + $0x54] sm:$0xe]
        %v2677 = vld [vmem:[#allocation2 + $0x58] sm:$0xf]
        %v2678 = vld [vmem:[#allocation2 + $0x5c] sm:$0x1]
        %v2679 = vld [vmem:[#allocation2 + $0x60] sm:$0xe]
        %v2680 = vld [vmem:[#allocation2 + $0x64] sm:$0xf]
        %v2681 = vld [vmem:[#allocation2 + $0x68] sm:$0x1]
        %v2682 = vld [vmem:[#allocation2 + $0x6c] sm:$0xe]
        %v2683 = vld [vmem:[#allocation2 + $0x70] sm:$0xf]
        %v2684 = vld [vmem:[#allocation2 + $0x74] sm:$0x1]
        %v2685 = vld [vmem:[#allocation2 + $0x78] sm:$0xe]
        %v2686 = vld [vmem:[#allocation2 + $0x7c] sm:$0xf]
        %v2687 = vld [vmem:[#allocation2 + $0x80] sm:$0x1]
        %v2688 = vld [vmem:[#allocation2 + $0x84] sm:$0xe]
        %v2689 = vld [vmem:[#allocation2 + $0x88] sm:$0xf]
        %v2690 = vld [vmem:[#allocation2 + $0x8c] sm:$0x1]
        %v2691 = vld [vmem:[#allocation2 + $0x90] sm:$0xe]
        %v2692 = vld [vmem:[#allocation2 + $0x94] sm:$0xf]
        %v2693 = vld [vmem:[#allocation2 + $0x98] sm:$0x1]
        %v2694 = vld [vmem:[#allocation2 + $0x9c] sm:$0xe]
        %v2695 = vld [vmem:[#allocation2 + $0xa0] sm:$0xf]
        %v2696 = vld [vmem:[#allocation2 + $0xa4] sm:$0x1]
        %v2697 = vld [vmem:[#allocation2 + $0xa8] sm:$0xe]
        %v2698 = vld [vmem:[#allocation2 + $0xac] sm:$0xf]
        %v2699 = vld [vmem:[#allocation2 + $0xb0] sm:$0x1]
        %v2700 = vld [vmem:[#allocation2 + $0xb4] sm:$0xe]
        %v2701 = vld [vmem:[#allocation2 + $0xb8] sm:$0xf]
        %v2702 = vld [vmem:[#allocation2 + $0xbc] sm:$0x1]
        %vm2751 = vcmask 1042432
        %vm2752 = vcmask 1046532
        %vm2753 = vmor %vm2751, %vm2752
        %v2754 = vrot.slane %v2655, 5
        %v2755 = vrot.slane %v2754, 4
        %v2756 = vrot.slane %v2656, 5
        %v2757 = vsel %vm2753, %v2755, %v2756
        %v2758 = vrot.slane %v2756, 4
        %v2759 = vrot.slane %v2657, 5
        %v2760 = vsel %vm2753, %v2758, %v2759
        %v2761 = vrot.slane %v2658, 5
        %v2762 = vrot.slane %v2761, 4
        %v2763 = vrot.slane %v2659, 5
        %v2764 = vsel %vm2753, %v2762, %v2763
        %v2765 = vrot.slane %v2763, 4
        %v2766 = vrot.slane %v2660, 5
        %v2767 = vsel %vm2753, %v2765, %v2766
        %v2768 = vrot.slane %v2661, 5
        %v2769 = vrot.slane %v2768, 4
        %v2770 = vrot.slane %v2662, 5
        %v2771 = vsel %vm2753, %v2769, %v2770
        %v2772 = vrot.slane %v2770, 4
        %v2773 = vrot.slane %v2663, 5
        %v2774 = vsel %vm2753, %v2772, %v2773
        %v2775 = vrot.slane %v2664, 5
        %v2776 = vrot.slane %v2775, 4
        %v2777 = vrot.slane %v2665, 5
        %v2778 = vsel %vm2753, %v2776, %v2777
        %v2779 = vrot.slane %v2777, 4
        %v2780 = vrot.slane %v2666, 5
        %v2781 = vsel %vm2753, %v2779, %v2780
        %v2782 = vrot.slane %v2667, 5
        %v2783 = vrot.slane %v2782, 4
        %v2784 = vrot.slane %v2668, 5
        %v2785 = vsel %vm2753, %v2783, %v2784
        %v2786 = vrot.slane %v2784, 4
        %v2787 = vrot.slane %v2669, 5
        %v2788 = vsel %vm2753, %v2786, %v2787
        %v2789 = vrot.slane %v2670, 5
        %v2790 = vrot.slane %v2789, 4
        %v2791 = vrot.slane %v2671, 5
        %v2792 = vsel %vm2753, %v2790, %v2791
        %v2793 = vrot.slane %v2791, 4
        %v2794 = vrot.slane %v2672, 5
        %v2795 = vsel %vm2753, %v2793, %v2794
        %v2796 = vrot.slane %v2673, 5
        %v2797 = vrot.slane %v2796, 4
        %v2798 = vrot.slane %v2674, 5
        %v2799 = vsel %vm2753, %v2797, %v2798
        %v2800 = vrot.slane %v2798, 4
        %v2801 = vrot.slane %v2675, 5
        %v2802 = vsel %vm2753, %v2800, %v2801
        %v2803 = vrot.slane %v2676, 5
        %v2804 = vrot.slane %v2803, 4
        %v2805 = vrot.slane %v2677, 5
        %v2806 = vsel %vm2753, %v2804, %v2805
        %v2807 = vrot.slane %v2805, 4
        %v2808 = vrot.slane %v2678, 5
        %v2809 = vsel %vm2753, %v2807, %v2808
        %v2810 = vrot.slane %v2679, 5
        %v2811 = vrot.slane %v2810, 4
        %v2812 = vrot.slane %v2680, 5
        %v2813 = vsel %vm2753, %v2811, %v2812
        %v2814 = vrot.slane %v2812, 4
        %v2815 = vrot.slane %v2681, 5
        %v2816 = vsel %vm2753, %v2814, %v2815
        %v2817 = vrot.slane %v2682, 5
        %v2818 = vrot.slane %v2817, 4
        %v2819 = vrot.slane %v2683, 5
        %v2820 = vsel %vm2753, %v2818, %v2819
        %v2821 = vrot.slane %v2819, 4
        %v2822 = vrot.slane %v2684, 5
        %v2823 = vsel %vm2753, %v2821, %v2822
        %v2824 = vrot.slane %v2685, 5
        %v2825 = vrot.slane %v2824, 4
        %v2826 = vrot.slane %v2686, 5
        %v2827 = vsel %vm2753, %v2825, %v2826
        %v2828 = vrot.slane %v2826, 4
        %v2829 = vrot.slane %v2687, 5
        %v2830 = vsel %vm2753, %v2828, %v2829
        %v2831 = vrot.slane %v2688, 5
        %v2832 = vrot.slane %v2831, 4
        %v2833 = vrot.slane %v2689, 5
        %v2834 = vsel %vm2753, %v2832, %v2833
        %v2835 = vrot.slane %v2833, 4
        %v2836 = vrot.slane %v2690, 5
        %v2837 = vsel %vm2753, %v2835, %v2836
        %v2838 = vrot.slane %v2691, 5
        %v2839 = vrot.slane %v2838, 4
        %v2840 = vrot.slane %v2692, 5
        %v2841 = vsel %vm2753, %v2839, %v2840
        %v2842 = vrot.slane %v2840, 4
        %v2843 = vrot.slane %v2693, 5
        %v2844 = vsel %vm2753, %v2842, %v2843
        %v2845 = vrot.slane %v2694, 5
        %v2846 = vrot.slane %v2845, 4
        %v2847 = vrot.slane %v2695, 5
        %v2848 = vsel %vm2753, %v2846, %v2847
        %v2849 = vrot.slane %v2847, 4
        %v2850 = vrot.slane %v2696, 5
        %v2851 = vsel %vm2753, %v2849, %v2850
        %v2852 = vrot.slane %v2697, 5
        %v2853 = vrot.slane %v2852, 4
        %v2854 = vrot.slane %v2698, 5
        %v2855 = vsel %vm2753, %v2853, %v2854
        %v2856 = vrot.slane %v2854, 4
        %v2857 = vrot.slane %v2699, 5
        %v2858 = vsel %vm2753, %v2856, %v2857
        %v2859 = vrot.slane %v2700, 5
        %v2860 = vrot.slane %v2859, 4
        %v2861 = vrot.slane %v2701, 5
        %v2862 = vsel %vm2753, %v2860, %v2861
        %v2863 = vrot.slane %v2861, 4
        %v2864 = vrot.slane %v2702, 5
        %v2865 = vsel %vm2753, %v2863, %v2864
        %v2866 = vunpack.c.l.b16 %v2757
        %v2867 = vunpack.c.l.b16 %v2760
        %v2868 = vunpack.c.l.b16 %v2764
        %v2869 = vunpack.c.l.b16 %v2767
        %v2870 = vunpack.c.l.b16 %v2771
        %v2871 = vunpack.c.l.b16 %v2774
        %v2872 = vunpack.c.l.b16 %v2778
        %v2873 = vunpack.c.l.b16 %v2781
        %v2874 = vunpack.c.l.b16 %v2785
        %v2875 = vunpack.c.l.b16 %v2788
        %v2876 = vunpack.c.l.b16 %v2792
        %v2877 = vunpack.c.l.b16 %v2795
        %v2878 = vunpack.c.l.b16 %v2799
        %v2879 = vunpack.c.l.b16 %v2802
        %v2880 = vunpack.c.l.b16 %v2806
        %v2881 = vunpack.c.l.b16 %v2809
        %v2882 = vunpack.c.l.b16 %v2813
        %v2883 = vunpack.c.l.b16 %v2816
        %v2884 = vunpack.c.l.b16 %v2820
        %v2885 = vunpack.c.l.b16 %v2823
        %v2886 = vunpack.c.l.b16 %v2827
        %v2887 = vunpack.c.l.b16 %v2830
        %v2888 = vunpack.c.l.b16 %v2834
        %v2889 = vunpack.c.l.b16 %v2837
        %v2890 = vunpack.c.l.b16 %v2841
        %v2891 = vunpack.c.l.b16 %v2844
        %v2892 = vunpack.c.l.b16 %v2848
        %v2893 = vunpack.c.l.b16 %v2851
        %v2894 = vunpack.c.l.b16 %v2855
        %v2895 = vunpack.c.l.b16 %v2858
        %v2896 = vunpack.c.l.b16 %v2862
        %v2897 = vunpack.c.l.b16 %v2865
        %v2898 = vpack.c.b16 %v2867, %v2866
        %v2899 = vpack.c.b16 %v2869, %v2868
        %v2900 = vpack.c.b16 %v2871, %v2870
        %v2901 = vpack.c.b16 %v2873, %v2872
        %v2902 = vpack.c.b16 %v2875, %v2874
        %v2903 = vpack.c.b16 %v2877, %v2876
        %v2904 = vpack.c.b16 %v2879, %v2878
        %v2905 = vpack.c.b16 %v2881, %v2880
        %v2906 = vpack.c.b16 %v2883, %v2882
        %v2907 = vpack.c.b16 %v2885, %v2884
        %v2908 = vpack.c.b16 %v2887, %v2886
        %v2909 = vpack.c.b16 %v2889, %v2888
        %v2910 = vpack.c.b16 %v2891, %v2890
        %v2911 = vpack.c.b16 %v2893, %v2892
        %v2912 = vpack.c.b16 %v2895, %v2894
        %v2913 = vpack.c.b16 %v2897, %v2896
        %2914 = vrot.lane.b32.xlu0 %v2898, 64
        %v2915 = vpop.permute.xlu0 %2914
        %2916 = vrot.lane.b32.xlu0 %v2899, 64
        %v2917 = vpop.permute.xlu0 %2916
        %2918 = vrot.lane.b32.xlu0 %v2900, 64
        %v2919 = vpop.permute.xlu0 %2918
        %2920 = vrot.lane.b32.xlu0 %v2901, 64
        %v2921 = vpop.permute.xlu0 %2920
        %2922 = vrot.lane.b32.xlu0 %v2902, 64
        %v2923 = vpop.permute.xlu0 %2922
        %2924 = vrot.lane.b32.xlu0 %v2903, 64
        %v2925 = vpop.permute.xlu0 %2924
        %2926 = vrot.lane.b32.xlu0 %v2904, 64
        %v2927 = vpop.permute.xlu0 %2926
        %2928 = vrot.lane.b32.xlu0 %v2905, 64
        %v2929 = vpop.permute.xlu0 %2928
        %2930 = vrot.lane.b32.xlu0 %v2906, 64
        %v2931 = vpop.permute.xlu0 %2930
        %2932 = vrot.lane.b32.xlu0 %v2907, 64
        %v2933 = vpop.permute.xlu0 %2932
        %2934 = vrot.lane.b32.xlu0 %v2908, 64
        %v2935 = vpop.permute.xlu0 %2934
        %2936 = vrot.lane.b32.xlu0 %v2909, 64
        %v2937 = vpop.permute.xlu0 %2936
        %2938 = vrot.lane.b32.xlu0 %v2910, 64
        %v2939 = vpop.permute.xlu0 %2938
        %2940 = vrot.lane.b32.xlu0 %v2911, 64
        %v2941 = vpop.permute.xlu0 %2940
        %2942 = vrot.lane.b32.xlu0 %v2912, 64
        %v2943 = vpop.permute.xlu0 %2942
        %2944 = vrot.lane.b32.xlu0 %v2913, 64
        %v2945 = vpop.permute.xlu0 %2944
        %vm2962 = vcmask 785920
        %2963 = vst.msk [vmem:[#allocation3] sm:$0xff] %vm2962, %v2915
        %2964 = vst.msk [vmem:[#allocation3 + $0x18] sm:$0xff] %vm2962, %v2917
        %2965 = vst.msk [vmem:[#allocation3 + $0x30] sm:$0xff] %vm2962, %v2919
        %2966 = vst.msk [vmem:[#allocation3 + $0x48] sm:$0xff] %vm2962, %v2921
        %2967 = vst.msk [vmem:[#allocation3 + $0x60] sm:$0xff] %vm2962, %v2923
        %2968 = vst.msk [vmem:[#allocation3 + $0x78] sm:$0xff] %vm2962, %v2925
        %2969 = vst.msk [vmem:[#allocation3 + $0x90] sm:$0xff] %vm2962, %v2927
        %2970 = vst.msk [vmem:[#allocation3 + $0xa8] sm:$0xff] %vm2962, %v2929
        %2971 = vst.msk [vmem:[#allocation3 + $0xc0] sm:$0xff] %vm2962, %v2931
        %2972 = vst.msk [vmem:[#allocation3 + $0xd8] sm:$0xff] %vm2962, %v2933
        %2973 = vst.msk [vmem:[#allocation3 + $0xf0] sm:$0xff] %vm2962, %v2935
        %2974 = vst.msk [vmem:[#allocation3 + $0x108] sm:$0xff] %vm2962, %v2937
        %2975 = vst.msk [vmem:[#allocation3 + $0x120] sm:$0xff] %vm2962, %v2939
        %2976 = vst.msk [vmem:[#allocation3 + $0x138] sm:$0xff] %vm2962, %v2941
        %2977 = vst.msk [vmem:[#allocation3 + $0x150] sm:$0xff] %vm2962, %v2943
        %2978 = vst.msk [vmem:[#allocation3 + $0x168] sm:$0xff] %vm2962, %v2945
        %v2979 = vld [vmem:[%s1540] sm:$0xf]
        %v2980 = vld [vmem:[%s1540 + $0x4] sm:$0xf]
        %v2981 = vld [vmem:[%s1540 + $0xc] sm:$0xf]
        %v2982 = vld [vmem:[%s1540 + $0x10] sm:$0xf]
        %v2983 = vld [vmem:[%s1540 + $0x18] sm:$0xf]
        %v2984 = vld [vmem:[%s1540 + $0x1c] sm:$0xf]
        %v2985 = vld [vmem:[%s1540 + $0x24] sm:$0xf]
        %v2986 = vld [vmem:[%s1540 + $0x28] sm:$0xf]
        %v2987 = vld [vmem:[%s1540 + $0x30] sm:$0xf]
        %v2988 = vld [vmem:[%s1540 + $0x34] sm:$0xf]
        %v2989 = vld [vmem:[%s1540 + $0x3c] sm:$0xf]
        %v2990 = vld [vmem:[%s1540 + $0x40] sm:$0xf]
        %v2991 = vld [vmem:[%s1540 + $0x48] sm:$0xf]
        %v2992 = vld [vmem:[%s1540 + $0x4c] sm:$0xf]
        %v2993 = vld [vmem:[%s1540 + $0x54] sm:$0xf]
        %v2994 = vld [vmem:[%s1540 + $0x58] sm:$0xf]
        %v2995 = vld [vmem:[%s1540 + $0x60] sm:$0xf]
        %v2996 = vld [vmem:[%s1540 + $0x64] sm:$0xf]
        %v2997 = vld [vmem:[%s1540 + $0x6c] sm:$0xf]
        %v2998 = vld [vmem:[%s1540 + $0x70] sm:$0xf]
        %v2999 = vld [vmem:[%s1540 + $0x78] sm:$0xf]
        %v3000 = vld [vmem:[%s1540 + $0x7c] sm:$0xf]
        %v3001 = vld [vmem:[%s1540 + $0x84] sm:$0xf]
        %v3002 = vld [vmem:[%s1540 + $0x88] sm:$0xf]
        %v3003 = vld [vmem:[%s1540 + $0x90] sm:$0xf]
        %v3004 = vld [vmem:[%s1540 + $0x94] sm:$0xf]
        %v3005 = vld [vmem:[%s1540 + $0x9c] sm:$0xf]
        %v3006 = vld [vmem:[%s1540 + $0xa0] sm:$0xf]
        %v3007 = vld [vmem:[%s1540 + $0xa8] sm:$0xf]
        %v3008 = vld [vmem:[%s1540 + $0xac] sm:$0xf]
        %v3009 = vld [vmem:[%s1540 + $0xb4] sm:$0xf]
        %v3010 = vld [vmem:[%s1540 + $0xb8] sm:$0xf]
        %v3043 = vunpack.c.l.b16 %v2979
        %v3044 = vunpack.c.l.b16 %v2980
        %v3045 = vunpack.c.l.b16 %v2981
        %v3046 = vunpack.c.l.b16 %v2982
        %v3047 = vunpack.c.l.b16 %v2983
        %v3048 = vunpack.c.l.b16 %v2984
        %v3049 = vunpack.c.l.b16 %v2985
        %v3050 = vunpack.c.l.b16 %v2986
        %v3051 = vunpack.c.l.b16 %v2987
        %v3052 = vunpack.c.l.b16 %v2988
        %v3053 = vunpack.c.l.b16 %v2989
        %v3054 = vunpack.c.l.b16 %v2990
        %v3055 = vunpack.c.l.b16 %v2991
        %v3056 = vunpack.c.l.b16 %v2992
        %v3057 = vunpack.c.l.b16 %v2993
        %v3058 = vunpack.c.l.b16 %v2994
        %v3059 = vunpack.c.l.b16 %v2995
        %v3060 = vunpack.c.l.b16 %v2996
        %v3061 = vunpack.c.l.b16 %v2997
        %v3062 = vunpack.c.l.b16 %v2998
        %v3063 = vunpack.c.l.b16 %v2999
        %v3064 = vunpack.c.l.b16 %v3000
        %v3065 = vunpack.c.l.b16 %v3001
        %v3066 = vunpack.c.l.b16 %v3002
        %v3067 = vunpack.c.l.b16 %v3003
        %v3068 = vunpack.c.l.b16 %v3004
        %v3069 = vunpack.c.l.b16 %v3005
        %v3070 = vunpack.c.l.b16 %v3006
        %v3071 = vunpack.c.l.b16 %v3007
        %v3072 = vunpack.c.l.b16 %v3008
        %v3073 = vunpack.c.l.b16 %v3009
        %v3074 = vunpack.c.l.b16 %v3010
        %v3075 = vpack.c.b16 %v3044, %v3043
        %v3076 = vpack.c.b16 %v3046, %v3045
        %v3077 = vpack.c.b16 %v3048, %v3047
        %v3078 = vpack.c.b16 %v3050, %v3049
        %v3079 = vpack.c.b16 %v3052, %v3051
        %v3080 = vpack.c.b16 %v3054, %v3053
        %v3081 = vpack.c.b16 %v3056, %v3055
        %v3082 = vpack.c.b16 %v3058, %v3057
        %v3083 = vpack.c.b16 %v3060, %v3059
        %v3084 = vpack.c.b16 %v3062, %v3061
        %v3085 = vpack.c.b16 %v3064, %v3063
        %v3086 = vpack.c.b16 %v3066, %v3065
        %v3087 = vpack.c.b16 %v3068, %v3067
        %v3088 = vpack.c.b16 %v3070, %v3069
        %v3089 = vpack.c.b16 %v3072, %v3071
        %v3090 = vpack.c.b16 %v3074, %v3073
        %3091 = vrot.lane.b32.xlu0 %v3075, 96
        %v3092 = vpop.permute.xlu0 %3091
        %3093 = vrot.lane.b32.xlu0 %v3076, 96
        %v3094 = vpop.permute.xlu0 %3093
        %3095 = vrot.lane.b32.xlu0 %v3077, 96
        %v3096 = vpop.permute.xlu0 %3095
        %3097 = vrot.lane.b32.xlu0 %v3078, 96
        %v3098 = vpop.permute.xlu0 %3097
        %3099 = vrot.lane.b32.xlu0 %v3079, 96
        %v3100 = vpop.permute.xlu0 %3099
        %3101 = vrot.lane.b32.xlu0 %v3080, 96
        %v3102 = vpop.permute.xlu0 %3101
        %3103 = vrot.lane.b32.xlu0 %v3081, 96
        %v3104 = vpop.permute.xlu0 %3103
        %3105 = vrot.lane.b32.xlu0 %v3082, 96
        %v3106 = vpop.permute.xlu0 %3105
        %3107 = vrot.lane.b32.xlu0 %v3083, 96
        %v3108 = vpop.permute.xlu0 %3107
        %3109 = vrot.lane.b32.xlu0 %v3084, 96
        %v3110 = vpop.permute.xlu0 %3109
        %3111 = vrot.lane.b32.xlu0 %v3085, 96
        %v3112 = vpop.permute.xlu0 %3111
        %3113 = vrot.lane.b32.xlu0 %v3086, 96
        %v3114 = vpop.permute.xlu0 %3113
        %3115 = vrot.lane.b32.xlu0 %v3087, 96
        %v3116 = vpop.permute.xlu0 %3115
        %3117 = vrot.lane.b32.xlu0 %v3088, 96
        %v3118 = vpop.permute.xlu0 %3117
        %3119 = vrot.lane.b32.xlu0 %v3089, 96
        %v3120 = vpop.permute.xlu0 %3119
        %3121 = vrot.lane.b32.xlu0 %v3090, 96
        %v3122 = vpop.permute.xlu0 %3121
        %vm3139 = vcmask 1048320
        %3140 = vst.msk [vmem:[#allocation3] sm:$0xff] %vm3139, %v3092
        %3141 = vst.msk [vmem:[#allocation3 + $0x18] sm:$0xff] %vm3139, %v3094
        %3142 = vst.msk [vmem:[#allocation3 + $0x30] sm:$0xff] %vm3139, %v3096
        %3143 = vst.msk [vmem:[#allocation3 + $0x48] sm:$0xff] %vm3139, %v3098
        %3144 = vst.msk [vmem:[#allocation3 + $0x60] sm:$0xff] %vm3139, %v3100
        %3145 = vst.msk [vmem:[#allocation3 + $0x78] sm:$0xff] %vm3139, %v3102
        %3146 = vst.msk [vmem:[#allocation3 + $0x90] sm:$0xff] %vm3139, %v3104
        %3147 = vst.msk [vmem:[#allocation3 + $0xa8] sm:$0xff] %vm3139, %v3106
        %3148 = vst.msk [vmem:[#allocation3 + $0xc0] sm:$0xff] %vm3139, %v3108
        %3149 = vst.msk [vmem:[#allocation3 + $0xd8] sm:$0xff] %vm3139, %v3110
        %3150 = vst.msk [vmem:[#allocation3 + $0xf0] sm:$0xff] %vm3139, %v3112
        %3151 = vst.msk [vmem:[#allocation3 + $0x108] sm:$0xff] %vm3139, %v3114
        %3152 = vst.msk [vmem:[#allocation3 + $0x120] sm:$0xff] %vm3139, %v3116
        %3153 = vst.msk [vmem:[#allocation3 + $0x138] sm:$0xff] %vm3139, %v3118
        %3154 = vst.msk [vmem:[#allocation3 + $0x150] sm:$0xff] %vm3139, %v3120
        %3155 = vst.msk [vmem:[#allocation3 + $0x168] sm:$0xff] %vm3139, %v3122
        %v3156 = vld [vmem:[%s1540] sm:$0xf]
        %v3157 = vld [vmem:[%s1540 + $0x4] sm:$0xf]
        %v3158 = vld [vmem:[%s1540 + $0x8] sm:$0x1]
        %v3159 = vld [vmem:[%s1540 + $0xc] sm:$0xf]
        %v3160 = vld [vmem:[%s1540 + $0x10] sm:$0xf]
        %v3161 = vld [vmem:[%s1540 + $0x14] sm:$0x1]
        %v3162 = vld [vmem:[%s1540 + $0x18] sm:$0xf]
        %v3163 = vld [vmem:[%s1540 + $0x1c] sm:$0xf]
        %v3164 = vld [vmem:[%s1540 + $0x20] sm:$0x1]
        %v3165 = vld [vmem:[%s1540 + $0x24] sm:$0xf]
        %v3166 = vld [vmem:[%s1540 + $0x28] sm:$0xf]
        %v3167 = vld [vmem:[%s1540 + $0x2c] sm:$0x1]
        %v3168 = vld [vmem:[%s1540 + $0x30] sm:$0xf]
        %v3169 = vld [vmem:[%s1540 + $0x34] sm:$0xf]
        %v3170 = vld [vmem:[%s1540 + $0x38] sm:$0x1]
        %v3171 = vld [vmem:[%s1540 + $0x3c] sm:$0xf]
        %v3172 = vld [vmem:[%s1540 + $0x40] sm:$0xf]
        %v3173 = vld [vmem:[%s1540 + $0x44] sm:$0x1]
        %v3174 = vld [vmem:[%s1540 + $0x48] sm:$0xf]
        %v3175 = vld [vmem:[%s1540 + $0x4c] sm:$0xf]
        %v3176 = vld [vmem:[%s1540 + $0x50] sm:$0x1]
        %v3177 = vld [vmem:[%s1540 + $0x54] sm:$0xf]
        %v3178 = vld [vmem:[%s1540 + $0x58] sm:$0xf]
        %v3179 = vld [vmem:[%s1540 + $0x5c] sm:$0x1]
        %v3180 = vld [vmem:[%s1540 + $0x60] sm:$0xf]
        %v3181 = vld [vmem:[%s1540 + $0x64] sm:$0xf]
        %v3182 = vld [vmem:[%s1540 + $0x68] sm:$0x1]
        %v3183 = vld [vmem:[%s1540 + $0x6c] sm:$0xf]
        %v3184 = vld [vmem:[%s1540 + $0x70] sm:$0xf]
        %v3185 = vld [vmem:[%s1540 + $0x74] sm:$0x1]
        %v3186 = vld [vmem:[%s1540 + $0x78] sm:$0xf]
        %v3187 = vld [vmem:[%s1540 + $0x7c] sm:$0xf]
        %v3188 = vld [vmem:[%s1540 + $0x80] sm:$0x1]
        %v3189 = vld [vmem:[%s1540 + $0x84] sm:$0xf]
        %v3190 = vld [vmem:[%s1540 + $0x88] sm:$0xf]
        %v3191 = vld [vmem:[%s1540 + $0x8c] sm:$0x1]
        %v3192 = vld [vmem:[%s1540 + $0x90] sm:$0xf]
        %v3193 = vld [vmem:[%s1540 + $0x94] sm:$0xf]
        %v3194 = vld [vmem:[%s1540 + $0x98] sm:$0x1]
        %v3195 = vld [vmem:[%s1540 + $0x9c] sm:$0xf]
        %v3196 = vld [vmem:[%s1540 + $0xa0] sm:$0xf]
        %v3197 = vld [vmem:[%s1540 + $0xa4] sm:$0x1]
        %v3198 = vld [vmem:[%s1540 + $0xa8] sm:$0xf]
        %v3199 = vld [vmem:[%s1540 + $0xac] sm:$0xf]
        %v3200 = vld [vmem:[%s1540 + $0xb0] sm:$0x1]
        %v3201 = vld [vmem:[%s1540 + $0xb4] sm:$0xf]
        %v3202 = vld [vmem:[%s1540 + $0xb8] sm:$0xf]
        %v3203 = vld [vmem:[%s1540 + $0xbc] sm:$0x1]
        %v3205 = vshrl.u32 %v3156, 16
        %v3207 = vrot.slane %v3205, 4
        %v3208 = vshll.u32 %v3156, 16
        %v3210 = vrot.slane %v3208, 5
        %v3211 = vor.u32 %v3207, %v3210
        %v3212 = vrot.slane %v3211, 4
        %v3214 = vshll.u32 %v3157, 16
        %v3216 = vrot.slane %v3214, 5
        %v3217 = vsel %vm2157, %v3212, %v3216
        %v3218 = vshrl.u32 %v3157, 16
        %v3220 = vrot.slane %v3218, 4
        %v3221 = vor.u32 %v3220, %v3216
        %v3222 = vrot.slane %v3221, 4
        %v3224 = vshll.u32 %v3158, 16
        %v3226 = vrot.slane %v3224, 5
        %v3227 = vsel %vm2157, %v3222, %v3226
        %v3229 = vshrl.u32 %v3159, 16
        %v3231 = vrot.slane %v3229, 4
        %v3232 = vshll.u32 %v3159, 16
        %v3234 = vrot.slane %v3232, 5
        %v3235 = vor.u32 %v3231, %v3234
        %v3236 = vrot.slane %v3235, 4
        %v3238 = vshll.u32 %v3160, 16
        %v3240 = vrot.slane %v3238, 5
        %v3241 = vsel %vm2157, %v3236, %v3240
        %v3242 = vshrl.u32 %v3160, 16
        %v3244 = vrot.slane %v3242, 4
        %v3245 = vor.u32 %v3244, %v3240
        %v3246 = vrot.slane %v3245, 4
        %v3248 = vshll.u32 %v3161, 16
        %v3250 = vrot.slane %v3248, 5
        %v3251 = vsel %vm2157, %v3246, %v3250
        %v3253 = vshrl.u32 %v3162, 16
        %v3255 = vrot.slane %v3253, 4
        %v3256 = vshll.u32 %v3162, 16
        %v3258 = vrot.slane %v3256, 5
        %v3259 = vor.u32 %v3255, %v3258
        %v3260 = vrot.slane %v3259, 4
        %v3262 = vshll.u32 %v3163, 16
        %v3264 = vrot.slane %v3262, 5
        %v3265 = vsel %vm2157, %v3260, %v3264
        %v3266 = vshrl.u32 %v3163, 16
        %v3268 = vrot.slane %v3266, 4
        %v3269 = vor.u32 %v3268, %v3264
        %v3270 = vrot.slane %v3269, 4
        %v3272 = vshll.u32 %v3164, 16
        %v3274 = vrot.slane %v3272, 5
        %v3275 = vsel %vm2157, %v3270, %v3274
        %v3277 = vshrl.u32 %v3165, 16
        %v3279 = vrot.slane %v3277, 4
        %v3280 = vshll.u32 %v3165, 16
        %v3282 = vrot.slane %v3280, 5
        %v3283 = vor.u32 %v3279, %v3282
        %v3284 = vrot.slane %v3283, 4
        %v3286 = vshll.u32 %v3166, 16
        %v3288 = vrot.slane %v3286, 5
        %v3289 = vsel %vm2157, %v3284, %v3288
        %v3290 = vshrl.u32 %v3166, 16
        %v3292 = vrot.slane %v3290, 4
        %v3293 = vor.u32 %v3292, %v3288
        %v3294 = vrot.slane %v3293, 4
        %v3296 = vshll.u32 %v3167, 16
        %v3298 = vrot.slane %v3296, 5
        %v3299 = vsel %vm2157, %v3294, %v3298
        %v3301 = vshrl.u32 %v3168, 16
        %v3303 = vrot.slane %v3301, 4
        %v3304 = vshll.u32 %v3168, 16
        %v3306 = vrot.slane %v3304, 5
        %v3307 = vor.u32 %v3303, %v3306
        %v3308 = vrot.slane %v3307, 4
        %v3310 = vshll.u32 %v3169, 16
        %v3312 = vrot.slane %v3310, 5
        %v3313 = vsel %vm2157, %v3308, %v3312
        %v3314 = vshrl.u32 %v3169, 16
        %v3316 = vrot.slane %v3314, 4
        %v3317 = vor.u32 %v3316, %v3312
        %v3318 = vrot.slane %v3317, 4
        %v3320 = vshll.u32 %v3170, 16
        %v3322 = vrot.slane %v3320, 5
        %v3323 = vsel %vm2157, %v3318, %v3322
        %v3325 = vshrl.u32 %v3171, 16
        %v3327 = vrot.slane %v3325, 4
        %v3328 = vshll.u32 %v3171, 16
        %v3330 = vrot.slane %v3328, 5
        %v3331 = vor.u32 %v3327, %v3330
        %v3332 = vrot.slane %v3331, 4
        %v3334 = vshll.u32 %v3172, 16
        %v3336 = vrot.slane %v3334, 5
        %v3337 = vsel %vm2157, %v3332, %v3336
        %v3338 = vshrl.u32 %v3172, 16
        %v3340 = vrot.slane %v3338, 4
        %v3341 = vor.u32 %v3340, %v3336
        %v3342 = vrot.slane %v3341, 4
        %v3344 = vshll.u32 %v3173, 16
        %v3346 = vrot.slane %v3344, 5
        %v3347 = vsel %vm2157, %v3342, %v3346
        %v3349 = vshrl.u32 %v3174, 16
        %v3351 = vrot.slane %v3349, 4
        %v3352 = vshll.u32 %v3174, 16
        %v3354 = vrot.slane %v3352, 5
        %v3355 = vor.u32 %v3351, %v3354
        %v3356 = vrot.slane %v3355, 4
        %v3358 = vshll.u32 %v3175, 16
        %v3360 = vrot.slane %v3358, 5
        %v3361 = vsel %vm2157, %v3356, %v3360
        %v3362 = vshrl.u32 %v3175, 16
        %v3364 = vrot.slane %v3362, 4
        %v3365 = vor.u32 %v3364, %v3360
        %v3366 = vrot.slane %v3365, 4
        %v3368 = vshll.u32 %v3176, 16
        %v3370 = vrot.slane %v3368, 5
        %v3371 = vsel %vm2157, %v3366, %v3370
        %v3373 = vshrl.u32 %v3177, 16
        %v3375 = vrot.slane %v3373, 4
        %v3376 = vshll.u32 %v3177, 16
        %v3378 = vrot.slane %v3376, 5
        %v3379 = vor.u32 %v3375, %v3378
        %v3380 = vrot.slane %v3379, 4
        %v3382 = vshll.u32 %v3178, 16
        %v3384 = vrot.slane %v3382, 5
        %v3385 = vsel %vm2157, %v3380, %v3384
        %v3386 = vshrl.u32 %v3178, 16
        %v3388 = vrot.slane %v3386, 4
        %v3389 = vor.u32 %v3388, %v3384
        %v3390 = vrot.slane %v3389, 4
        %v3392 = vshll.u32 %v3179, 16
        %v3394 = vrot.slane %v3392, 5
        %v3395 = vsel %vm2157, %v3390, %v3394
        %v3397 = vshrl.u32 %v3180, 16
        %v3399 = vrot.slane %v3397, 4
        %v3400 = vshll.u32 %v3180, 16
        %v3402 = vrot.slane %v3400, 5
        %v3403 = vor.u32 %v3399, %v3402
        %v3404 = vrot.slane %v3403, 4
        %v3406 = vshll.u32 %v3181, 16
        %v3408 = vrot.slane %v3406, 5
        %v3409 = vsel %vm2157, %v3404, %v3408
        %v3410 = vshrl.u32 %v3181, 16
        %v3412 = vrot.slane %v3410, 4
        %v3413 = vor.u32 %v3412, %v3408
        %v3414 = vrot.slane %v3413, 4
        %v3416 = vshll.u32 %v3182, 16
        %v3418 = vrot.slane %v3416, 5
        %v3419 = vsel %vm2157, %v3414, %v3418
        %v3421 = vshrl.u32 %v3183, 16
        %v3423 = vrot.slane %v3421, 4
        %v3424 = vshll.u32 %v3183, 16
        %v3426 = vrot.slane %v3424, 5
        %v3427 = vor.u32 %v3423, %v3426
        %v3428 = vrot.slane %v3427, 4
        %v3430 = vshll.u32 %v3184, 16
        %v3432 = vrot.slane %v3430, 5
        %v3433 = vsel %vm2157, %v3428, %v3432
        %v3434 = vshrl.u32 %v3184, 16
        %v3436 = vrot.slane %v3434, 4
        %v3437 = vor.u32 %v3436, %v3432
        %v3438 = vrot.slane %v3437, 4
        %v3440 = vshll.u32 %v3185, 16
        %v3442 = vrot.slane %v3440, 5
        %v3443 = vsel %vm2157, %v3438, %v3442
        %v3445 = vshrl.u32 %v3186, 16
        %v3447 = vrot.slane %v3445, 4
        %v3448 = vshll.u32 %v3186, 16
        %v3450 = vrot.slane %v3448, 5
        %v3451 = vor.u32 %v3447, %v3450
        %v3452 = vrot.slane %v3451, 4
        %v3454 = vshll.u32 %v3187, 16
        %v3456 = vrot.slane %v3454, 5
        %v3457 = vsel %vm2157, %v3452, %v3456
        %v3458 = vshrl.u32 %v3187, 16
        %v3460 = vrot.slane %v3458, 4
        %v3461 = vor.u32 %v3460, %v3456
        %v3462 = vrot.slane %v3461, 4
        %v3464 = vshll.u32 %v3188, 16
        %v3466 = vrot.slane %v3464, 5
        %v3467 = vsel %vm2157, %v3462, %v3466
        %v3469 = vshrl.u32 %v3189, 16
        %v3471 = vrot.slane %v3469, 4
        %v3472 = vshll.u32 %v3189, 16
        %v3474 = vrot.slane %v3472, 5
        %v3475 = vor.u32 %v3471, %v3474
        %v3476 = vrot.slane %v3475, 4
        %v3478 = vshll.u32 %v3190, 16
        %v3480 = vrot.slane %v3478, 5
        %v3481 = vsel %vm2157, %v3476, %v3480
        %v3482 = vshrl.u32 %v3190, 16
        %v3484 = vrot.slane %v3482, 4
        %v3485 = vor.u32 %v3484, %v3480
        %v3486 = vrot.slane %v3485, 4
        %v3488 = vshll.u32 %v3191, 16
        %v3490 = vrot.slane %v3488, 5
        %v3491 = vsel %vm2157, %v3486, %v3490
        %v3493 = vshrl.u32 %v3192, 16
        %v3495 = vrot.slane %v3493, 4
        %v3496 = vshll.u32 %v3192, 16
        %v3498 = vrot.slane %v3496, 5
        %v3499 = vor.u32 %v3495, %v3498
        %v3500 = vrot.slane %v3499, 4
        %v3502 = vshll.u32 %v3193, 16
        %v3504 = vrot.slane %v3502, 5
        %v3505 = vsel %vm2157, %v3500, %v3504
        %v3506 = vshrl.u32 %v3193, 16
        %v3508 = vrot.slane %v3506, 4
        %v3509 = vor.u32 %v3508, %v3504
        %v3510 = vrot.slane %v3509, 4
        %v3512 = vshll.u32 %v3194, 16
        %v3514 = vrot.slane %v3512, 5
        %v3515 = vsel %vm2157, %v3510, %v3514
        %v3517 = vshrl.u32 %v3195, 16
        %v3519 = vrot.slane %v3517, 4
        %v3520 = vshll.u32 %v3195, 16
        %v3522 = vrot.slane %v3520, 5
        %v3523 = vor.u32 %v3519, %v3522
        %v3524 = vrot.slane %v3523, 4
        %v3526 = vshll.u32 %v3196, 16
        %v3528 = vrot.slane %v3526, 5
        %v3529 = vsel %vm2157, %v3524, %v3528
        %v3530 = vshrl.u32 %v3196, 16
        %v3532 = vrot.slane %v3530, 4
        %v3533 = vor.u32 %v3532, %v3528
        %v3534 = vrot.slane %v3533, 4
        %v3536 = vshll.u32 %v3197, 16
        %v3538 = vrot.slane %v3536, 5
        %v3539 = vsel %vm2157, %v3534, %v3538
        %v3541 = vshrl.u32 %v3198, 16
        %v3543 = vrot.slane %v3541, 4
        %v3544 = vshll.u32 %v3198, 16
        %v3546 = vrot.slane %v3544, 5
        %v3547 = vor.u32 %v3543, %v3546
        %v3548 = vrot.slane %v3547, 4
        %v3550 = vshll.u32 %v3199, 16
        %v3552 = vrot.slane %v3550, 5
        %v3553 = vsel %vm2157, %v3548, %v3552
        %v3554 = vshrl.u32 %v3199, 16
        %v3556 = vrot.slane %v3554, 4
        %v3557 = vor.u32 %v3556, %v3552
        %v3558 = vrot.slane %v3557, 4
        %v3560 = vshll.u32 %v3200, 16
        %v3562 = vrot.slane %v3560, 5
        %v3563 = vsel %vm2157, %v3558, %v3562
        %v3565 = vshrl.u32 %v3201, 16
        %v3567 = vrot.slane %v3565, 4
        %v3568 = vshll.u32 %v3201, 16
        %v3570 = vrot.slane %v3568, 5
        %v3571 = vor.u32 %v3567, %v3570
        %v3572 = vrot.slane %v3571, 4
        %v3574 = vshll.u32 %v3202, 16
        %v3576 = vrot.slane %v3574, 5
        %v3577 = vsel %vm2157, %v3572, %v3576
        %v3578 = vshrl.u32 %v3202, 16
        %v3580 = vrot.slane %v3578, 4
        %v3581 = vor.u32 %v3580, %v3576
        %v3582 = vrot.slane %v3581, 4
        %v3584 = vshll.u32 %v3203, 16
        %v3586 = vrot.slane %v3584, 5
        %v3587 = vsel %vm2157, %v3582, %v3586
        %v3588 = vunpack.c.l.b16 %v3217
        %v3589 = vunpack.c.l.b16 %v3227
        %v3590 = vunpack.c.l.b16 %v3241
        %v3591 = vunpack.c.l.b16 %v3251
        %v3592 = vunpack.c.l.b16 %v3265
        %v3593 = vunpack.c.l.b16 %v3275
        %v3594 = vunpack.c.l.b16 %v3289
        %v3595 = vunpack.c.l.b16 %v3299
        %v3596 = vunpack.c.l.b16 %v3313
        %v3597 = vunpack.c.l.b16 %v3323
        %v3598 = vunpack.c.l.b16 %v3337
        %v3599 = vunpack.c.l.b16 %v3347
        %v3600 = vunpack.c.l.b16 %v3361
        %v3601 = vunpack.c.l.b16 %v3371
        %v3602 = vunpack.c.l.b16 %v3385
        %v3603 = vunpack.c.l.b16 %v3395
        %v3604 = vunpack.c.l.b16 %v3409
        %v3605 = vunpack.c.l.b16 %v3419
        %v3606 = vunpack.c.l.b16 %v3433
        %v3607 = vunpack.c.l.b16 %v3443
        %v3608 = vunpack.c.l.b16 %v3457
        %v3609 = vunpack.c.l.b16 %v3467
        %v3610 = vunpack.c.l.b16 %v3481
        %v3611 = vunpack.c.l.b16 %v3491
        %v3612 = vunpack.c.l.b16 %v3505
        %v3613 = vunpack.c.l.b16 %v3515
        %v3614 = vunpack.c.l.b16 %v3529
        %v3615 = vunpack.c.l.b16 %v3539
        %v3616 = vunpack.c.l.b16 %v3553
        %v3617 = vunpack.c.l.b16 %v3563
        %v3618 = vunpack.c.l.b16 %v3577
        %v3619 = vunpack.c.l.b16 %v3587
        %v3620 = vpack.c.b16 %v3589, %v3588
        %v3621 = vpack.c.b16 %v3591, %v3590
        %v3622 = vpack.c.b16 %v3593, %v3592
        %v3623 = vpack.c.b16 %v3595, %v3594
        %v3624 = vpack.c.b16 %v3597, %v3596
        %v3625 = vpack.c.b16 %v3599, %v3598
        %v3626 = vpack.c.b16 %v3601, %v3600
        %v3627 = vpack.c.b16 %v3603, %v3602
        %v3628 = vpack.c.b16 %v3605, %v3604
        %v3629 = vpack.c.b16 %v3607, %v3606
        %v3630 = vpack.c.b16 %v3609, %v3608
        %v3631 = vpack.c.b16 %v3611, %v3610
        %v3632 = vpack.c.b16 %v3613, %v3612
        %v3633 = vpack.c.b16 %v3615, %v3614
        %v3634 = vpack.c.b16 %v3617, %v3616
        %v3635 = vpack.c.b16 %v3619, %v3618
        %3652 = vst.msk [vmem:[#allocation3 + $0x8] sm:$0xff] %vm685, %v3620
        %3653 = vst.msk [vmem:[#allocation3 + $0x20] sm:$0xff] %vm685, %v3621
        %3654 = vst.msk [vmem:[#allocation3 + $0x38] sm:$0xff] %vm685, %v3622
        %3655 = vst.msk [vmem:[#allocation3 + $0x50] sm:$0xff] %vm685, %v3623
        %3656 = vst.msk [vmem:[#allocation3 + $0x68] sm:$0xff] %vm685, %v3624
        %3657 = vst.msk [vmem:[#allocation3 + $0x80] sm:$0xff] %vm685, %v3625
        %3658 = vst.msk [vmem:[#allocation3 + $0x98] sm:$0xff] %vm685, %v3626
        %3659 = vst.msk [vmem:[#allocation3 + $0xb0] sm:$0xff] %vm685, %v3627
        %3660 = vst.msk [vmem:[#allocation3 + $0xc8] sm:$0xff] %vm685, %v3628
        %3661 = vst.msk [vmem:[#allocation3 + $0xe0] sm:$0xff] %vm685, %v3629
        %3662 = vst.msk [vmem:[#allocation3 + $0xf8] sm:$0xff] %vm685, %v3630
        %3663 = vst.msk [vmem:[#allocation3 + $0x110] sm:$0xff] %vm685, %v3631
        %3664 = vst.msk [vmem:[#allocation3 + $0x128] sm:$0xff] %vm685, %v3632
        %3665 = vst.msk [vmem:[#allocation3 + $0x140] sm:$0xff] %vm685, %v3633
        %3666 = vst.msk [vmem:[#allocation3 + $0x158] sm:$0xff] %vm685, %v3634
        %3667 = vst.msk [vmem:[#allocation3 + $0x170] sm:$0xff] %vm685, %v3635
        %v3668 = vld [vmem:[%s1540] sm:$0xe]
        %v3669 = vld [vmem:[%s1540 + $0x4] sm:$0xf]
        %v3670 = vld [vmem:[%s1540 + $0x8] sm:$0x1]
        %v3671 = vld [vmem:[%s1540 + $0xc] sm:$0xe]
        %v3672 = vld [vmem:[%s1540 + $0x10] sm:$0xf]
        %v3673 = vld [vmem:[%s1540 + $0x14] sm:$0x1]
        %v3674 = vld [vmem:[%s1540 + $0x18] sm:$0xe]
        %v3675 = vld [vmem:[%s1540 + $0x1c] sm:$0xf]
        %v3676 = vld [vmem:[%s1540 + $0x20] sm:$0x1]
        %v3677 = vld [vmem:[%s1540 + $0x24] sm:$0xe]
        %v3678 = vld [vmem:[%s1540 + $0x28] sm:$0xf]
        %v3679 = vld [vmem:[%s1540 + $0x2c] sm:$0x1]
        %v3680 = vld [vmem:[%s1540 + $0x30] sm:$0xe]
        %v3681 = vld [vmem:[%s1540 + $0x34] sm:$0xf]
        %v3682 = vld [vmem:[%s1540 + $0x38] sm:$0x1]
        %v3683 = vld [vmem:[%s1540 + $0x3c] sm:$0xe]
        %v3684 = vld [vmem:[%s1540 + $0x40] sm:$0xf]
        %v3685 = vld [vmem:[%s1540 + $0x44] sm:$0x1]
        %v3686 = vld [vmem:[%s1540 + $0x48] sm:$0xe]
        %v3687 = vld [vmem:[%s1540 + $0x4c] sm:$0xf]
        %v3688 = vld [vmem:[%s1540 + $0x50] sm:$0x1]
        %v3689 = vld [vmem:[%s1540 + $0x54] sm:$0xe]
        %v3690 = vld [vmem:[%s1540 + $0x58] sm:$0xf]
        %v3691 = vld [vmem:[%s1540 + $0x5c] sm:$0x1]
        %v3692 = vld [vmem:[%s1540 + $0x60] sm:$0xe]
        %v3693 = vld [vmem:[%s1540 + $0x64] sm:$0xf]
        %v3694 = vld [vmem:[%s1540 + $0x68] sm:$0x1]
        %v3695 = vld [vmem:[%s1540 + $0x6c] sm:$0xe]
        %v3696 = vld [vmem:[%s1540 + $0x70] sm:$0xf]
        %v3697 = vld [vmem:[%s1540 + $0x74] sm:$0x1]
        %v3698 = vld [vmem:[%s1540 + $0x78] sm:$0xe]
        %v3699 = vld [vmem:[%s1540 + $0x7c] sm:$0xf]
        %v3700 = vld [vmem:[%s1540 + $0x80] sm:$0x1]
        %v3701 = vld [vmem:[%s1540 + $0x84] sm:$0xe]
        %v3702 = vld [vmem:[%s1540 + $0x88] sm:$0xf]
        %v3703 = vld [vmem:[%s1540 + $0x8c] sm:$0x1]
        %v3704 = vld [vmem:[%s1540 + $0x90] sm:$0xe]
        %v3705 = vld [vmem:[%s1540 + $0x94] sm:$0xf]
        %v3706 = vld [vmem:[%s1540 + $0x98] sm:$0x1]
        %v3707 = vld [vmem:[%s1540 + $0x9c] sm:$0xe]
        %v3708 = vld [vmem:[%s1540 + $0xa0] sm:$0xf]
        %v3709 = vld [vmem:[%s1540 + $0xa4] sm:$0x1]
        %v3710 = vld [vmem:[%s1540 + $0xa8] sm:$0xe]
        %v3711 = vld [vmem:[%s1540 + $0xac] sm:$0xf]
        %v3712 = vld [vmem:[%s1540 + $0xb0] sm:$0x1]
        %v3713 = vld [vmem:[%s1540 + $0xb4] sm:$0xe]
        %v3714 = vld [vmem:[%s1540 + $0xb8] sm:$0xf]
        %v3715 = vld [vmem:[%s1540 + $0xbc] sm:$0x1]
        %v3764 = vrot.slane %v3668, 5
        %v3765 = vrot.slane %v3764, 4
        %v3766 = vrot.slane %v3669, 5
        %v3767 = vsel %vm2753, %v3765, %v3766
        %v3768 = vrot.slane %v3766, 4
        %v3769 = vrot.slane %v3670, 5
        %v3770 = vsel %vm2753, %v3768, %v3769
        %v3771 = vrot.slane %v3671, 5
        %v3772 = vrot.slane %v3771, 4
        %v3773 = vrot.slane %v3672, 5
        %v3774 = vsel %vm2753, %v3772, %v3773
        %v3775 = vrot.slane %v3773, 4
        %v3776 = vrot.slane %v3673, 5
        %v3777 = vsel %vm2753, %v3775, %v3776
        %v3778 = vrot.slane %v3674, 5
        %v3779 = vrot.slane %v3778, 4
        %v3780 = vrot.slane %v3675, 5
        %v3781 = vsel %vm2753, %v3779, %v3780
        %v3782 = vrot.slane %v3780, 4
        %v3783 = vrot.slane %v3676, 5
        %v3784 = vsel %vm2753, %v3782, %v3783
        %v3785 = vrot.slane %v3677, 5
        %v3786 = vrot.slane %v3785, 4
        %v3787 = vrot.slane %v3678, 5
        %v3788 = vsel %vm2753, %v3786, %v3787
        %v3789 = vrot.slane %v3787, 4
        %v3790 = vrot.slane %v3679, 5
        %v3791 = vsel %vm2753, %v3789, %v3790
        %v3792 = vrot.slane %v3680, 5
        %v3793 = vrot.slane %v3792, 4
        %v3794 = vrot.slane %v3681, 5
        %v3795 = vsel %vm2753, %v3793, %v3794
        %v3796 = vrot.slane %v3794, 4
        %v3797 = vrot.slane %v3682, 5
        %v3798 = vsel %vm2753, %v3796, %v3797
        %v3799 = vrot.slane %v3683, 5
        %v3800 = vrot.slane %v3799, 4
        %v3801 = vrot.slane %v3684, 5
        %v3802 = vsel %vm2753, %v3800, %v3801
        %v3803 = vrot.slane %v3801, 4
        %v3804 = vrot.slane %v3685, 5
        %v3805 = vsel %vm2753, %v3803, %v3804
        %v3806 = vrot.slane %v3686, 5
        %v3807 = vrot.slane %v3806, 4
        %v3808 = vrot.slane %v3687, 5
        %v3809 = vsel %vm2753, %v3807, %v3808
        %v3810 = vrot.slane %v3808, 4
        %v3811 = vrot.slane %v3688, 5
        %v3812 = vsel %vm2753, %v3810, %v3811
        %v3813 = vrot.slane %v3689, 5
        %v3814 = vrot.slane %v3813, 4
        %v3815 = vrot.slane %v3690, 5
        %v3816 = vsel %vm2753, %v3814, %v3815
        %v3817 = vrot.slane %v3815, 4
        %v3818 = vrot.slane %v3691, 5
        %v3819 = vsel %vm2753, %v3817, %v3818
        %v3820 = vrot.slane %v3692, 5
        %v3821 = vrot.slane %v3820, 4
        %v3822 = vrot.slane %v3693, 5
        %v3823 = vsel %vm2753, %v3821, %v3822
        %v3824 = vrot.slane %v3822, 4
        %v3825 = vrot.slane %v3694, 5
        %v3826 = vsel %vm2753, %v3824, %v3825
        %v3827 = vrot.slane %v3695, 5
        %v3828 = vrot.slane %v3827, 4
        %v3829 = vrot.slane %v3696, 5
        %v3830 = vsel %vm2753, %v3828, %v3829
        %v3831 = vrot.slane %v3829, 4
        %v3832 = vrot.slane %v3697, 5
        %v3833 = vsel %vm2753, %v3831, %v3832
        %v3834 = vrot.slane %v3698, 5
        %v3835 = vrot.slane %v3834, 4
        %v3836 = vrot.slane %v3699, 5
        %v3837 = vsel %vm2753, %v3835, %v3836
        %v3838 = vrot.slane %v3836, 4
        %v3839 = vrot.slane %v3700, 5
        %v3840 = vsel %vm2753, %v3838, %v3839
        %v3841 = vrot.slane %v3701, 5
        %v3842 = vrot.slane %v3841, 4
        %v3843 = vrot.slane %v3702, 5
        %v3844 = vsel %vm2753, %v3842, %v3843
        %v3845 = vrot.slane %v3843, 4
        %v3846 = vrot.slane %v3703, 5
        %v3847 = vsel %vm2753, %v3845, %v3846
        %v3848 = vrot.slane %v3704, 5
        %v3849 = vrot.slane %v3848, 4
        %v3850 = vrot.slane %v3705, 5
        %v3851 = vsel %vm2753, %v3849, %v3850
        %v3852 = vrot.slane %v3850, 4
        %v3853 = vrot.slane %v3706, 5
        %v3854 = vsel %vm2753, %v3852, %v3853
        %v3855 = vrot.slane %v3707, 5
        %v3856 = vrot.slane %v3855, 4
        %v3857 = vrot.slane %v3708, 5
        %v3858 = vsel %vm2753, %v3856, %v3857
        %v3859 = vrot.slane %v3857, 4
        %v3860 = vrot.slane %v3709, 5
        %v3861 = vsel %vm2753, %v3859, %v3860
        %v3862 = vrot.slane %v3710, 5
        %v3863 = vrot.slane %v3862, 4
        %v3864 = vrot.slane %v3711, 5
        %v3865 = vsel %vm2753, %v3863, %v3864
        %v3866 = vrot.slane %v3864, 4
        %v3867 = vrot.slane %v3712, 5
        %v3868 = vsel %vm2753, %v3866, %v3867
        %v3869 = vrot.slane %v3713, 5
        %v3870 = vrot.slane %v3869, 4
        %v3871 = vrot.slane %v3714, 5
        %v3872 = vsel %vm2753, %v3870, %v3871
        %v3873 = vrot.slane %v3871, 4
        %v3874 = vrot.slane %v3715, 5
        %v3875 = vsel %vm2753, %v3873, %v3874
        %v3876 = vunpack.c.l.b16 %v3767
        %v3877 = vunpack.c.l.b16 %v3770
        %v3878 = vunpack.c.l.b16 %v3774
        %v3879 = vunpack.c.l.b16 %v3777
        %v3880 = vunpack.c.l.b16 %v3781
        %v3881 = vunpack.c.l.b16 %v3784
        %v3882 = vunpack.c.l.b16 %v3788
        %v3883 = vunpack.c.l.b16 %v3791
        %v3884 = vunpack.c.l.b16 %v3795
        %v3885 = vunpack.c.l.b16 %v3798
        %v3886 = vunpack.c.l.b16 %v3802
        %v3887 = vunpack.c.l.b16 %v3805
        %v3888 = vunpack.c.l.b16 %v3809
        %v3889 = vunpack.c.l.b16 %v3812
        %v3890 = vunpack.c.l.b16 %v3816
        %v3891 = vunpack.c.l.b16 %v3819
        %v3892 = vunpack.c.l.b16 %v3823
        %v3893 = vunpack.c.l.b16 %v3826
        %v3894 = vunpack.c.l.b16 %v3830
        %v3895 = vunpack.c.l.b16 %v3833
        %v3896 = vunpack.c.l.b16 %v3837
        %v3897 = vunpack.c.l.b16 %v3840
        %v3898 = vunpack.c.l.b16 %v3844
        %v3899 = vunpack.c.l.b16 %v3847
        %v3900 = vunpack.c.l.b16 %v3851
        %v3901 = vunpack.c.l.b16 %v3854
        %v3902 = vunpack.c.l.b16 %v3858
        %v3903 = vunpack.c.l.b16 %v3861
        %v3904 = vunpack.c.l.b16 %v3865
        %v3905 = vunpack.c.l.b16 %v3868
        %v3906 = vunpack.c.l.b16 %v3872
        %v3907 = vunpack.c.l.b16 %v3875
        %v3908 = vpack.c.b16 %v3877, %v3876
        %v3909 = vpack.c.b16 %v3879, %v3878
        %v3910 = vpack.c.b16 %v3881, %v3880
        %v3911 = vpack.c.b16 %v3883, %v3882
        %v3912 = vpack.c.b16 %v3885, %v3884
        %v3913 = vpack.c.b16 %v3887, %v3886
        %v3914 = vpack.c.b16 %v3889, %v3888
        %v3915 = vpack.c.b16 %v3891, %v3890
        %v3916 = vpack.c.b16 %v3893, %v3892
        %v3917 = vpack.c.b16 %v3895, %v3894
        %v3918 = vpack.c.b16 %v3897, %v3896
        %v3919 = vpack.c.b16 %v3899, %v3898
        %v3920 = vpack.c.b16 %v3901, %v3900
        %v3921 = vpack.c.b16 %v3903, %v3902
        %v3922 = vpack.c.b16 %v3905, %v3904
        %v3923 = vpack.c.b16 %v3907, %v3906
        %3924 = vrot.lane.b32.xlu0 %v3908, 32
        %v3925 = vpop.permute.xlu0 %3924
        %3926 = vrot.lane.b32.xlu0 %v3909, 32
        %v3927 = vpop.permute.xlu0 %3926
        %3928 = vrot.lane.b32.xlu0 %v3910, 32
        %v3929 = vpop.permute.xlu0 %3928
        %3930 = vrot.lane.b32.xlu0 %v3911, 32
        %v3931 = vpop.permute.xlu0 %3930
        %3932 = vrot.lane.b32.xlu0 %v3912, 32
        %v3933 = vpop.permute.xlu0 %3932
        %3934 = vrot.lane.b32.xlu0 %v3913, 32
        %v3935 = vpop.permute.xlu0 %3934
        %3936 = vrot.lane.b32.xlu0 %v3914, 32
        %v3937 = vpop.permute.xlu0 %3936
        %3938 = vrot.lane.b32.xlu0 %v3915, 32
        %v3939 = vpop.permute.xlu0 %3938
        %3940 = vrot.lane.b32.xlu0 %v3916, 32
        %v3941 = vpop.permute.xlu0 %3940
        %3942 = vrot.lane.b32.xlu0 %v3917, 32
        %v3943 = vpop.permute.xlu0 %3942
        %3944 = vrot.lane.b32.xlu0 %v3918, 32
        %v3945 = vpop.permute.xlu0 %3944
        %3946 = vrot.lane.b32.xlu0 %v3919, 32
        %v3947 = vpop.permute.xlu0 %3946
        %3948 = vrot.lane.b32.xlu0 %v3920, 32
        %v3949 = vpop.permute.xlu0 %3948
        %3950 = vrot.lane.b32.xlu0 %v3921, 32
        %v3951 = vpop.permute.xlu0 %3950
        %3952 = vrot.lane.b32.xlu0 %v3922, 32
        %v3953 = vpop.permute.xlu0 %3952
        %3954 = vrot.lane.b32.xlu0 %v3923, 32
        %v3955 = vpop.permute.xlu0 %3954
        %3972 = vst.msk [vmem:[#allocation3 + $0x8] sm:$0xff] %vm2638, %v3925
        %3973 = vst.msk [vmem:[#allocation3 + $0x20] sm:$0xff] %vm2638, %v3927
        %3974 = vst.msk [vmem:[#allocation3 + $0x38] sm:$0xff] %vm2638, %v3929
        %3975 = vst.msk [vmem:[#allocation3 + $0x50] sm:$0xff] %vm2638, %v3931
        %3976 = vst.msk [vmem:[#allocation3 + $0x68] sm:$0xff] %vm2638, %v3933
        %3977 = vst.msk [vmem:[#allocation3 + $0x80] sm:$0xff] %vm2638, %v3935
        %3978 = vst.msk [vmem:[#allocation3 + $0x98] sm:$0xff] %vm2638, %v3937
        %3979 = vst.msk [vmem:[#allocation3 + $0xb0] sm:$0xff] %vm2638, %v3939
        %3980 = vst.msk [vmem:[#allocation3 + $0xc8] sm:$0xff] %vm2638, %v3941
        %3981 = vst.msk [vmem:[#allocation3 + $0xe0] sm:$0xff] %vm2638, %v3943
        %3982 = vst.msk [vmem:[#allocation3 + $0xf8] sm:$0xff] %vm2638, %v3945
        %3983 = vst.msk [vmem:[#allocation3 + $0x110] sm:$0xff] %vm2638, %v3947
        %3984 = vst.msk [vmem:[#allocation3 + $0x128] sm:$0xff] %vm2638, %v3949
        %3985 = vst.msk [vmem:[#allocation3 + $0x140] sm:$0xff] %vm2638, %v3951
        %3986 = vst.msk [vmem:[#allocation3 + $0x158] sm:$0xff] %vm2638, %v3953
        %3987 = vst.msk [vmem:[#allocation3 + $0x170] sm:$0xff] %vm2638, %v3955
        %s3988 = scalar_lea.vmem [#allocation2], 24
        %v3989 = vld [vmem:[%s3988] sm:$0xf]
        %v3990 = vld [vmem:[%s3988 + $0x4] sm:$0xf]
        %v3991 = vld [vmem:[%s3988 + $0xc] sm:$0xf]
        %v3992 = vld [vmem:[%s3988 + $0x10] sm:$0xf]
        %v3993 = vld [vmem:[%s3988 + $0x18] sm:$0xf]
        %v3994 = vld [vmem:[%s3988 + $0x1c] sm:$0xf]
        %v3995 = vld [vmem:[%s3988 + $0x24] sm:$0xf]
        %v3996 = vld [vmem:[%s3988 + $0x28] sm:$0xf]
        %v3997 = vld [vmem:[%s3988 + $0x30] sm:$0xf]
        %v3998 = vld [vmem:[%s3988 + $0x34] sm:$0xf]
        %v3999 = vld [vmem:[%s3988 + $0x3c] sm:$0xf]
        %v4000 = vld [vmem:[%s3988 + $0x40] sm:$0xf]
        %v4001 = vld [vmem:[%s3988 + $0x48] sm:$0xf]
        %v4002 = vld [vmem:[%s3988 + $0x4c] sm:$0xf]
        %v4003 = vld [vmem:[%s3988 + $0x54] sm:$0xf]
        %v4004 = vld [vmem:[%s3988 + $0x58] sm:$0xf]
        %v4005 = vld [vmem:[%s3988 + $0x60] sm:$0xf]
        %v4006 = vld [vmem:[%s3988 + $0x64] sm:$0xf]
        %v4007 = vld [vmem:[%s3988 + $0x6c] sm:$0xf]
        %v4008 = vld [vmem:[%s3988 + $0x70] sm:$0xf]
        %v4009 = vld [vmem:[%s3988 + $0x78] sm:$0xf]
        %v4010 = vld [vmem:[%s3988 + $0x7c] sm:$0xf]
        %v4011 = vld [vmem:[%s3988 + $0x84] sm:$0xf]
        %v4012 = vld [vmem:[%s3988 + $0x88] sm:$0xf]
        %v4013 = vld [vmem:[%s3988 + $0x90] sm:$0xf]
        %v4014 = vld [vmem:[%s3988 + $0x94] sm:$0xf]
        %v4015 = vld [vmem:[%s3988 + $0x9c] sm:$0xf]
        %v4016 = vld [vmem:[%s3988 + $0xa0] sm:$0xf]
        %v4017 = vld [vmem:[%s3988 + $0xa8] sm:$0xf]
        %v4018 = vld [vmem:[%s3988 + $0xac] sm:$0xf]
        %v4019 = vld [vmem:[%s3988 + $0xb4] sm:$0xf]
        %v4020 = vld [vmem:[%s3988 + $0xb8] sm:$0xf]
        %v4053 = vunpack.c.l.b16 %v3989
        %v4054 = vunpack.c.l.b16 %v3990
        %v4055 = vunpack.c.l.b16 %v3991
        %v4056 = vunpack.c.l.b16 %v3992
        %v4057 = vunpack.c.l.b16 %v3993
        %v4058 = vunpack.c.l.b16 %v3994
        %v4059 = vunpack.c.l.b16 %v3995
        %v4060 = vunpack.c.l.b16 %v3996
        %v4061 = vunpack.c.l.b16 %v3997
        %v4062 = vunpack.c.l.b16 %v3998
        %v4063 = vunpack.c.l.b16 %v3999
        %v4064 = vunpack.c.l.b16 %v4000
        %v4065 = vunpack.c.l.b16 %v4001
        %v4066 = vunpack.c.l.b16 %v4002
        %v4067 = vunpack.c.l.b16 %v4003
        %v4068 = vunpack.c.l.b16 %v4004
        %v4069 = vunpack.c.l.b16 %v4005
        %v4070 = vunpack.c.l.b16 %v4006
        %v4071 = vunpack.c.l.b16 %v4007
        %v4072 = vunpack.c.l.b16 %v4008
        %v4073 = vunpack.c.l.b16 %v4009
        %v4074 = vunpack.c.l.b16 %v4010
        %v4075 = vunpack.c.l.b16 %v4011
        %v4076 = vunpack.c.l.b16 %v4012
        %v4077 = vunpack.c.l.b16 %v4013
        %v4078 = vunpack.c.l.b16 %v4014
        %v4079 = vunpack.c.l.b16 %v4015
        %v4080 = vunpack.c.l.b16 %v4016
        %v4081 = vunpack.c.l.b16 %v4017
        %v4082 = vunpack.c.l.b16 %v4018
        %v4083 = vunpack.c.l.b16 %v4019
        %v4084 = vunpack.c.l.b16 %v4020
        %v4085 = vpack.c.b16 %v4054, %v4053
        %v4086 = vpack.c.b16 %v4056, %v4055
        %v4087 = vpack.c.b16 %v4058, %v4057
        %v4088 = vpack.c.b16 %v4060, %v4059
        %v4089 = vpack.c.b16 %v4062, %v4061
        %v4090 = vpack.c.b16 %v4064, %v4063
        %v4091 = vpack.c.b16 %v4066, %v4065
        %v4092 = vpack.c.b16 %v4068, %v4067
        %v4093 = vpack.c.b16 %v4070, %v4069
        %v4094 = vpack.c.b16 %v4072, %v4071
        %v4095 = vpack.c.b16 %v4074, %v4073
        %v4096 = vpack.c.b16 %v4076, %v4075
        %v4097 = vpack.c.b16 %v4078, %v4077
        %v4098 = vpack.c.b16 %v4080, %v4079
        %v4099 = vpack.c.b16 %v4082, %v4081
        %v4100 = vpack.c.b16 %v4084, %v4083
        %4101 = vrot.lane.b32.xlu0 %v4085, 64
        %v4102 = vpop.permute.xlu0 %4101
        %4103 = vrot.lane.b32.xlu0 %v4086, 64
        %v4104 = vpop.permute.xlu0 %4103
        %4105 = vrot.lane.b32.xlu0 %v4087, 64
        %v4106 = vpop.permute.xlu0 %4105
        %4107 = vrot.lane.b32.xlu0 %v4088, 64
        %v4108 = vpop.permute.xlu0 %4107
        %4109 = vrot.lane.b32.xlu0 %v4089, 64
        %v4110 = vpop.permute.xlu0 %4109
        %4111 = vrot.lane.b32.xlu0 %v4090, 64
        %v4112 = vpop.permute.xlu0 %4111
        %4113 = vrot.lane.b32.xlu0 %v4091, 64
        %v4114 = vpop.permute.xlu0 %4113
        %4115 = vrot.lane.b32.xlu0 %v4092, 64
        %v4116 = vpop.permute.xlu0 %4115
        %4117 = vrot.lane.b32.xlu0 %v4093, 64
        %v4118 = vpop.permute.xlu0 %4117
        %4119 = vrot.lane.b32.xlu0 %v4094, 64
        %v4120 = vpop.permute.xlu0 %4119
        %4121 = vrot.lane.b32.xlu0 %v4095, 64
        %v4122 = vpop.permute.xlu0 %4121
        %4123 = vrot.lane.b32.xlu0 %v4096, 64
        %v4124 = vpop.permute.xlu0 %4123
        %4125 = vrot.lane.b32.xlu0 %v4097, 64
        %v4126 = vpop.permute.xlu0 %4125
        %4127 = vrot.lane.b32.xlu0 %v4098, 64
        %v4128 = vpop.permute.xlu0 %4127
        %4129 = vrot.lane.b32.xlu0 %v4099, 64
        %v4130 = vpop.permute.xlu0 %4129
        %4131 = vrot.lane.b32.xlu0 %v4100, 64
        %v4132 = vpop.permute.xlu0 %4131
        %4149 = vst.msk [vmem:[#allocation3 + $0x8] sm:$0xff] %vm2962, %v4102
        %4150 = vst.msk [vmem:[#allocation3 + $0x20] sm:$0xff] %vm2962, %v4104
        %4151 = vst.msk [vmem:[#allocation3 + $0x38] sm:$0xff] %vm2962, %v4106
        %4152 = vst.msk [vmem:[#allocation3 + $0x50] sm:$0xff] %vm2962, %v4108
        %4153 = vst.msk [vmem:[#allocation3 + $0x68] sm:$0xff] %vm2962, %v4110
        %4154 = vst.msk [vmem:[#allocation3 + $0x80] sm:$0xff] %vm2962, %v4112
        %4155 = vst.msk [vmem:[#allocation3 + $0x98] sm:$0xff] %vm2962, %v4114
        %4156 = vst.msk [vmem:[#allocation3 + $0xb0] sm:$0xff] %vm2962, %v4116
        %4157 = vst.msk [vmem:[#allocation3 + $0xc8] sm:$0xff] %vm2962, %v4118
        %4158 = vst.msk [vmem:[#allocation3 + $0xe0] sm:$0xff] %vm2962, %v4120
        %4159 = vst.msk [vmem:[#allocation3 + $0xf8] sm:$0xff] %vm2962, %v4122
        %4160 = vst.msk [vmem:[#allocation3 + $0x110] sm:$0xff] %vm2962, %v4124
        %4161 = vst.msk [vmem:[#allocation3 + $0x128] sm:$0xff] %vm2962, %v4126
        %4162 = vst.msk [vmem:[#allocation3 + $0x140] sm:$0xff] %vm2962, %v4128
        %4163 = vst.msk [vmem:[#allocation3 + $0x158] sm:$0xff] %vm2962, %v4130
        %4164 = vst.msk [vmem:[#allocation3 + $0x170] sm:$0xff] %vm2962, %v4132
        %v4165 = vld [vmem:[%s3988] sm:$0xf]
        %v4166 = vld [vmem:[%s3988 + $0x4] sm:$0xf]
        %v4167 = vld [vmem:[%s3988 + $0x8] sm:$0x1]
        %v4168 = vld [vmem:[%s3988 + $0xc] sm:$0xf]
        %v4169 = vld [vmem:[%s3988 + $0x10] sm:$0xf]
        %v4170 = vld [vmem:[%s3988 + $0x14] sm:$0x1]
        %v4171 = vld [vmem:[%s3988 + $0x18] sm:$0xf]
        %v4172 = vld [vmem:[%s3988 + $0x1c] sm:$0xf]
        %v4173 = vld [vmem:[%s3988 + $0x20] sm:$0x1]
        %v4174 = vld [vmem:[%s3988 + $0x24] sm:$0xf]
        %v4175 = vld [vmem:[%s3988 + $0x28] sm:$0xf]
        %v4176 = vld [vmem:[%s3988 + $0x2c] sm:$0x1]
        %v4177 = vld [vmem:[%s3988 + $0x30] sm:$0xf]
        %v4178 = vld [vmem:[%s3988 + $0x34] sm:$0xf]
        %v4179 = vld [vmem:[%s3988 + $0x38] sm:$0x1]
        %v4180 = vld [vmem:[%s3988 + $0x3c] sm:$0xf]
        %v4181 = vld [vmem:[%s3988 + $0x40] sm:$0xf]
        %v4182 = vld [vmem:[%s3988 + $0x44] sm:$0x1]
        %v4183 = vld [vmem:[%s3988 + $0x48] sm:$0xf]
        %v4184 = vld [vmem:[%s3988 + $0x4c] sm:$0xf]
        %v4185 = vld [vmem:[%s3988 + $0x50] sm:$0x1]
        %v4186 = vld [vmem:[%s3988 + $0x54] sm:$0xf]
        %v4187 = vld [vmem:[%s3988 + $0x58] sm:$0xf]
        %v4188 = vld [vmem:[%s3988 + $0x5c] sm:$0x1]
        %v4189 = vld [vmem:[%s3988 + $0x60] sm:$0xf]
        %v4190 = vld [vmem:[%s3988 + $0x64] sm:$0xf]
        %v4191 = vld [vmem:[%s3988 + $0x68] sm:$0x1]
        %v4192 = vld [vmem:[%s3988 + $0x6c] sm:$0xf]
        %v4193 = vld [vmem:[%s3988 + $0x70] sm:$0xf]
        %v4194 = vld [vmem:[%s3988 + $0x74] sm:$0x1]
        %v4195 = vld [vmem:[%s3988 + $0x78] sm:$0xf]
        %v4196 = vld [vmem:[%s3988 + $0x7c] sm:$0xf]
        %v4197 = vld [vmem:[%s3988 + $0x80] sm:$0x1]
        %v4198 = vld [vmem:[%s3988 + $0x84] sm:$0xf]
        %v4199 = vld [vmem:[%s3988 + $0x88] sm:$0xf]
        %v4200 = vld [vmem:[%s3988 + $0x8c] sm:$0x1]
        %v4201 = vld [vmem:[%s3988 + $0x90] sm:$0xf]
        %v4202 = vld [vmem:[%s3988 + $0x94] sm:$0xf]
        %v4203 = vld [vmem:[%s3988 + $0x98] sm:$0x1]
        %v4204 = vld [vmem:[%s3988 + $0x9c] sm:$0xf]
        %v4205 = vld [vmem:[%s3988 + $0xa0] sm:$0xf]
        %v4206 = vld [vmem:[%s3988 + $0xa4] sm:$0x1]
        %v4207 = vld [vmem:[%s3988 + $0xa8] sm:$0xf]
        %v4208 = vld [vmem:[%s3988 + $0xac] sm:$0xf]
        %v4209 = vld [vmem:[%s3988 + $0xb0] sm:$0x1]
        %v4210 = vld [vmem:[%s3988 + $0xb4] sm:$0xf]
        %v4211 = vld [vmem:[%s3988 + $0xb8] sm:$0xf]
        %v4212 = vld [vmem:[%s3988 + $0xbc] sm:$0x1]
        %v4214 = vshrl.u32 %v4165, 16
        %v4216 = vrot.slane %v4214, 4
        %v4217 = vshll.u32 %v4165, 16
        %v4219 = vrot.slane %v4217, 5
        %v4220 = vor.u32 %v4216, %v4219
        %v4221 = vrot.slane %v4220, 4
        %v4223 = vshll.u32 %v4166, 16
        %v4225 = vrot.slane %v4223, 5
        %v4226 = vsel %vm2157, %v4221, %v4225
        %v4227 = vshrl.u32 %v4166, 16
        %v4229 = vrot.slane %v4227, 4
        %v4230 = vor.u32 %v4229, %v4225
        %v4231 = vrot.slane %v4230, 4
        %v4233 = vshll.u32 %v4167, 16
        %v4235 = vrot.slane %v4233, 5
        %v4236 = vsel %vm2157, %v4231, %v4235
        %v4238 = vshrl.u32 %v4168, 16
        %v4240 = vrot.slane %v4238, 4
        %v4241 = vshll.u32 %v4168, 16
        %v4243 = vrot.slane %v4241, 5
        %v4244 = vor.u32 %v4240, %v4243
        %v4245 = vrot.slane %v4244, 4
        %v4247 = vshll.u32 %v4169, 16
        %v4249 = vrot.slane %v4247, 5
        %v4250 = vsel %vm2157, %v4245, %v4249
        %v4251 = vshrl.u32 %v4169, 16
        %v4253 = vrot.slane %v4251, 4
        %v4254 = vor.u32 %v4253, %v4249
        %v4255 = vrot.slane %v4254, 4
        %v4257 = vshll.u32 %v4170, 16
        %v4259 = vrot.slane %v4257, 5
        %v4260 = vsel %vm2157, %v4255, %v4259
        %v4262 = vshrl.u32 %v4171, 16
        %v4264 = vrot.slane %v4262, 4
        %v4265 = vshll.u32 %v4171, 16
        %v4267 = vrot.slane %v4265, 5
        %v4268 = vor.u32 %v4264, %v4267
        %v4269 = vrot.slane %v4268, 4
        %v4271 = vshll.u32 %v4172, 16
        %v4273 = vrot.slane %v4271, 5
        %v4274 = vsel %vm2157, %v4269, %v4273
        %v4275 = vshrl.u32 %v4172, 16
        %v4277 = vrot.slane %v4275, 4
        %v4278 = vor.u32 %v4277, %v4273
        %v4279 = vrot.slane %v4278, 4
        %v4281 = vshll.u32 %v4173, 16
        %v4283 = vrot.slane %v4281, 5
        %v4284 = vsel %vm2157, %v4279, %v4283
        %v4286 = vshrl.u32 %v4174, 16
        %v4288 = vrot.slane %v4286, 4
        %v4289 = vshll.u32 %v4174, 16
        %v4291 = vrot.slane %v4289, 5
        %v4292 = vor.u32 %v4288, %v4291
        %v4293 = vrot.slane %v4292, 4
        %v4295 = vshll.u32 %v4175, 16
        %v4297 = vrot.slane %v4295, 5
        %v4298 = vsel %vm2157, %v4293, %v4297
        %v4299 = vshrl.u32 %v4175, 16
        %v4301 = vrot.slane %v4299, 4
        %v4302 = vor.u32 %v4301, %v4297
        %v4303 = vrot.slane %v4302, 4
        %v4305 = vshll.u32 %v4176, 16
        %v4307 = vrot.slane %v4305, 5
        %v4308 = vsel %vm2157, %v4303, %v4307
        %v4310 = vshrl.u32 %v4177, 16
        %v4312 = vrot.slane %v4310, 4
        %v4313 = vshll.u32 %v4177, 16
        %v4315 = vrot.slane %v4313, 5
        %v4316 = vor.u32 %v4312, %v4315
        %v4317 = vrot.slane %v4316, 4
        %v4319 = vshll.u32 %v4178, 16
        %v4321 = vrot.slane %v4319, 5
        %v4322 = vsel %vm2157, %v4317, %v4321
        %v4323 = vshrl.u32 %v4178, 16
        %v4325 = vrot.slane %v4323, 4
        %v4326 = vor.u32 %v4325, %v4321
        %v4327 = vrot.slane %v4326, 4
        %v4329 = vshll.u32 %v4179, 16
        %v4331 = vrot.slane %v4329, 5
        %v4332 = vsel %vm2157, %v4327, %v4331
        %v4334 = vshrl.u32 %v4180, 16
        %v4336 = vrot.slane %v4334, 4
        %v4337 = vshll.u32 %v4180, 16
        %v4339 = vrot.slane %v4337, 5
        %v4340 = vor.u32 %v4336, %v4339
        %v4341 = vrot.slane %v4340, 4
        %v4343 = vshll.u32 %v4181, 16
        %v4345 = vrot.slane %v4343, 5
        %v4346 = vsel %vm2157, %v4341, %v4345
        %v4347 = vshrl.u32 %v4181, 16
        %v4349 = vrot.slane %v4347, 4
        %v4350 = vor.u32 %v4349, %v4345
        %v4351 = vrot.slane %v4350, 4
        %v4353 = vshll.u32 %v4182, 16
        %v4355 = vrot.slane %v4353, 5
        %v4356 = vsel %vm2157, %v4351, %v4355
        %v4358 = vshrl.u32 %v4183, 16
        %v4360 = vrot.slane %v4358, 4
        %v4361 = vshll.u32 %v4183, 16
        %v4363 = vrot.slane %v4361, 5
        %v4364 = vor.u32 %v4360, %v4363
        %v4365 = vrot.slane %v4364, 4
        %v4367 = vshll.u32 %v4184, 16
        %v4369 = vrot.slane %v4367, 5
        %v4370 = vsel %vm2157, %v4365, %v4369
        %v4371 = vshrl.u32 %v4184, 16
        %v4373 = vrot.slane %v4371, 4
        %v4374 = vor.u32 %v4373, %v4369
        %v4375 = vrot.slane %v4374, 4
        %v4377 = vshll.u32 %v4185, 16
        %v4379 = vrot.slane %v4377, 5
        %v4380 = vsel %vm2157, %v4375, %v4379
        %v4382 = vshrl.u32 %v4186, 16
        %v4384 = vrot.slane %v4382, 4
        %v4385 = vshll.u32 %v4186, 16
        %v4387 = vrot.slane %v4385, 5
        %v4388 = vor.u32 %v4384, %v4387
        %v4389 = vrot.slane %v4388, 4
        %v4391 = vshll.u32 %v4187, 16
        %v4393 = vrot.slane %v4391, 5
        %v4394 = vsel %vm2157, %v4389, %v4393
        %v4395 = vshrl.u32 %v4187, 16
        %v4397 = vrot.slane %v4395, 4
        %v4398 = vor.u32 %v4397, %v4393
        %v4399 = vrot.slane %v4398, 4
        %v4401 = vshll.u32 %v4188, 16
        %v4403 = vrot.slane %v4401, 5
        %v4404 = vsel %vm2157, %v4399, %v4403
        %v4406 = vshrl.u32 %v4189, 16
        %v4408 = vrot.slane %v4406, 4
        %v4409 = vshll.u32 %v4189, 16
        %v4411 = vrot.slane %v4409, 5
        %v4412 = vor.u32 %v4408, %v4411
        %v4413 = vrot.slane %v4412, 4
        %v4415 = vshll.u32 %v4190, 16
        %v4417 = vrot.slane %v4415, 5
        %v4418 = vsel %vm2157, %v4413, %v4417
        %v4419 = vshrl.u32 %v4190, 16
        %v4421 = vrot.slane %v4419, 4
        %v4422 = vor.u32 %v4421, %v4417
        %v4423 = vrot.slane %v4422, 4
        %v4425 = vshll.u32 %v4191, 16
        %v4427 = vrot.slane %v4425, 5
        %v4428 = vsel %vm2157, %v4423, %v4427
        %v4430 = vshrl.u32 %v4192, 16
        %v4432 = vrot.slane %v4430, 4
        %v4433 = vshll.u32 %v4192, 16
        %v4435 = vrot.slane %v4433, 5
        %v4436 = vor.u32 %v4432, %v4435
        %v4437 = vrot.slane %v4436, 4
        %v4439 = vshll.u32 %v4193, 16
        %v4441 = vrot.slane %v4439, 5
        %v4442 = vsel %vm2157, %v4437, %v4441
        %v4443 = vshrl.u32 %v4193, 16
        %v4445 = vrot.slane %v4443, 4
        %v4446 = vor.u32 %v4445, %v4441
        %v4447 = vrot.slane %v4446, 4
        %v4449 = vshll.u32 %v4194, 16
        %v4451 = vrot.slane %v4449, 5
        %v4452 = vsel %vm2157, %v4447, %v4451
        %v4454 = vshrl.u32 %v4195, 16
        %v4456 = vrot.slane %v4454, 4
        %v4457 = vshll.u32 %v4195, 16
        %v4459 = vrot.slane %v4457, 5
        %v4460 = vor.u32 %v4456, %v4459
        %v4461 = vrot.slane %v4460, 4
        %v4463 = vshll.u32 %v4196, 16
        %v4465 = vrot.slane %v4463, 5
        %v4466 = vsel %vm2157, %v4461, %v4465
        %v4467 = vshrl.u32 %v4196, 16
        %v4469 = vrot.slane %v4467, 4
        %v4470 = vor.u32 %v4469, %v4465
        %v4471 = vrot.slane %v4470, 4
        %v4473 = vshll.u32 %v4197, 16
        %v4475 = vrot.slane %v4473, 5
        %v4476 = vsel %vm2157, %v4471, %v4475
        %v4478 = vshrl.u32 %v4198, 16
        %v4480 = vrot.slane %v4478, 4
        %v4481 = vshll.u32 %v4198, 16
        %v4483 = vrot.slane %v4481, 5
        %v4484 = vor.u32 %v4480, %v4483
        %v4485 = vrot.slane %v4484, 4
        %v4487 = vshll.u32 %v4199, 16
        %v4489 = vrot.slane %v4487, 5
        %v4490 = vsel %vm2157, %v4485, %v4489
        %v4491 = vshrl.u32 %v4199, 16
        %v4493 = vrot.slane %v4491, 4
        %v4494 = vor.u32 %v4493, %v4489
        %v4495 = vrot.slane %v4494, 4
        %v4497 = vshll.u32 %v4200, 16
        %v4499 = vrot.slane %v4497, 5
        %v4500 = vsel %vm2157, %v4495, %v4499
        %v4502 = vshrl.u32 %v4201, 16
        %v4504 = vrot.slane %v4502, 4
        %v4505 = vshll.u32 %v4201, 16
        %v4507 = vrot.slane %v4505, 5
        %v4508 = vor.u32 %v4504, %v4507
        %v4509 = vrot.slane %v4508, 4
        %v4511 = vshll.u32 %v4202, 16
        %v4513 = vrot.slane %v4511, 5
        %v4514 = vsel %vm2157, %v4509, %v4513
        %v4515 = vshrl.u32 %v4202, 16
        %v4517 = vrot.slane %v4515, 4
        %v4518 = vor.u32 %v4517, %v4513
        %v4519 = vrot.slane %v4518, 4
        %v4521 = vshll.u32 %v4203, 16
        %v4523 = vrot.slane %v4521, 5
        %v4524 = vsel %vm2157, %v4519, %v4523
        %v4526 = vshrl.u32 %v4204, 16
        %v4528 = vrot.slane %v4526, 4
        %v4529 = vshll.u32 %v4204, 16
        %v4531 = vrot.slane %v4529, 5
        %v4532 = vor.u32 %v4528, %v4531
        %v4533 = vrot.slane %v4532, 4
        %v4535 = vshll.u32 %v4205, 16
        %v4537 = vrot.slane %v4535, 5
        %v4538 = vsel %vm2157, %v4533, %v4537
        %v4539 = vshrl.u32 %v4205, 16
        %v4541 = vrot.slane %v4539, 4
        %v4542 = vor.u32 %v4541, %v4537
        %v4543 = vrot.slane %v4542, 4
        %v4545 = vshll.u32 %v4206, 16
        %v4547 = vrot.slane %v4545, 5
        %v4548 = vsel %vm2157, %v4543, %v4547
        %v4550 = vshrl.u32 %v4207, 16
        %v4552 = vrot.slane %v4550, 4
        %v4553 = vshll.u32 %v4207, 16
        %v4555 = vrot.slane %v4553, 5
        %v4556 = vor.u32 %v4552, %v4555
        %v4557 = vrot.slane %v4556, 4
        %v4559 = vshll.u32 %v4208, 16
        %v4561 = vrot.slane %v4559, 5
        %v4562 = vsel %vm2157, %v4557, %v4561
        %v4563 = vshrl.u32 %v4208, 16
        %v4565 = vrot.slane %v4563, 4
        %v4566 = vor.u32 %v4565, %v4561
        %v4567 = vrot.slane %v4566, 4
        %v4569 = vshll.u32 %v4209, 16
        %v4571 = vrot.slane %v4569, 5
        %v4572 = vsel %vm2157, %v4567, %v4571
        %v4574 = vshrl.u32 %v4210, 16
        %v4576 = vrot.slane %v4574, 4
        %v4577 = vshll.u32 %v4210, 16
        %v4579 = vrot.slane %v4577, 5
        %v4580 = vor.u32 %v4576, %v4579
        %v4581 = vrot.slane %v4580, 4
        %v4583 = vshll.u32 %v4211, 16
        %v4585 = vrot.slane %v4583, 5
        %v4586 = vsel %vm2157, %v4581, %v4585
        %v4587 = vshrl.u32 %v4211, 16
        %v4589 = vrot.slane %v4587, 4
        %v4590 = vor.u32 %v4589, %v4585
        %v4591 = vrot.slane %v4590, 4
        %v4593 = vshll.u32 %v4212, 16
        %v4595 = vrot.slane %v4593, 5
        %v4596 = vsel %vm2157, %v4591, %v4595
        %v4597 = vunpack.c.l.b16 %v4226
        %v4598 = vunpack.c.l.b16 %v4236
        %v4599 = vunpack.c.l.b16 %v4250
        %v4600 = vunpack.c.l.b16 %v4260
        %v4601 = vunpack.c.l.b16 %v4274
        %v4602 = vunpack.c.l.b16 %v4284
        %v4603 = vunpack.c.l.b16 %v4298
        %v4604 = vunpack.c.l.b16 %v4308
        %v4605 = vunpack.c.l.b16 %v4322
        %v4606 = vunpack.c.l.b16 %v4332
        %v4607 = vunpack.c.l.b16 %v4346
        %v4608 = vunpack.c.l.b16 %v4356
        %v4609 = vunpack.c.l.b16 %v4370
        %v4610 = vunpack.c.l.b16 %v4380
        %v4611 = vunpack.c.l.b16 %v4394
        %v4612 = vunpack.c.l.b16 %v4404
        %v4613 = vunpack.c.l.b16 %v4418
        %v4614 = vunpack.c.l.b16 %v4428
        %v4615 = vunpack.c.l.b16 %v4442
        %v4616 = vunpack.c.l.b16 %v4452
        %v4617 = vunpack.c.l.b16 %v4466
        %v4618 = vunpack.c.l.b16 %v4476
        %v4619 = vunpack.c.l.b16 %v4490
        %v4620 = vunpack.c.l.b16 %v4500
        %v4621 = vunpack.c.l.b16 %v4514
        %v4622 = vunpack.c.l.b16 %v4524
        %v4623 = vunpack.c.l.b16 %v4538
        %v4624 = vunpack.c.l.b16 %v4548
        %v4625 = vunpack.c.l.b16 %v4562
        %v4626 = vunpack.c.l.b16 %v4572
        %v4627 = vunpack.c.l.b16 %v4586
        %v4628 = vunpack.c.l.b16 %v4596
        %v4629 = vpack.c.b16 %v4598, %v4597
        %v4630 = vpack.c.b16 %v4600, %v4599
        %v4631 = vpack.c.b16 %v4602, %v4601
        %v4632 = vpack.c.b16 %v4604, %v4603
        %v4633 = vpack.c.b16 %v4606, %v4605
        %v4634 = vpack.c.b16 %v4608, %v4607
        %v4635 = vpack.c.b16 %v4610, %v4609
        %v4636 = vpack.c.b16 %v4612, %v4611
        %v4637 = vpack.c.b16 %v4614, %v4613
        %v4638 = vpack.c.b16 %v4616, %v4615
        %v4639 = vpack.c.b16 %v4618, %v4617
        %v4640 = vpack.c.b16 %v4620, %v4619
        %v4641 = vpack.c.b16 %v4622, %v4621
        %v4642 = vpack.c.b16 %v4624, %v4623
        %v4643 = vpack.c.b16 %v4626, %v4625
        %v4644 = vpack.c.b16 %v4628, %v4627
        %4645 = vrot.lane.b32.xlu0 %v4629, 96
        %v4646 = vpop.permute.xlu0 %4645
        %4647 = vrot.lane.b32.xlu0 %v4630, 96
        %v4648 = vpop.permute.xlu0 %4647
        %4649 = vrot.lane.b32.xlu0 %v4631, 96
        %v4650 = vpop.permute.xlu0 %4649
        %4651 = vrot.lane.b32.xlu0 %v4632, 96
        %v4652 = vpop.permute.xlu0 %4651
        %4653 = vrot.lane.b32.xlu0 %v4633, 96
        %v4654 = vpop.permute.xlu0 %4653
        %4655 = vrot.lane.b32.xlu0 %v4634, 96
        %v4656 = vpop.permute.xlu0 %4655
        %4657 = vrot.lane.b32.xlu0 %v4635, 96
        %v4658 = vpop.permute.xlu0 %4657
        %4659 = vrot.lane.b32.xlu0 %v4636, 96
        %v4660 = vpop.permute.xlu0 %4659
        %4661 = vrot.lane.b32.xlu0 %v4637, 96
        %v4662 = vpop.permute.xlu0 %4661
        %4663 = vrot.lane.b32.xlu0 %v4638, 96
        %v4664 = vpop.permute.xlu0 %4663
        %4665 = vrot.lane.b32.xlu0 %v4639, 96
        %v4666 = vpop.permute.xlu0 %4665
        %4667 = vrot.lane.b32.xlu0 %v4640, 96
        %v4668 = vpop.permute.xlu0 %4667
        %4669 = vrot.lane.b32.xlu0 %v4641, 96
        %v4670 = vpop.permute.xlu0 %4669
        %4671 = vrot.lane.b32.xlu0 %v4642, 96
        %v4672 = vpop.permute.xlu0 %4671
        %4673 = vrot.lane.b32.xlu0 %v4643, 96
        %v4674 = vpop.permute.xlu0 %4673
        %4675 = vrot.lane.b32.xlu0 %v4644, 96
        %v4676 = vpop.permute.xlu0 %4675
        %4693 = vst.msk [vmem:[#allocation3 + $0x8] sm:$0xff] %vm3139, %v4646
        %4694 = vst.msk [vmem:[#allocation3 + $0x20] sm:$0xff] %vm3139, %v4648
        %4695 = vst.msk [vmem:[#allocation3 + $0x38] sm:$0xff] %vm3139, %v4650
        %4696 = vst.msk [vmem:[#allocation3 + $0x50] sm:$0xff] %vm3139, %v4652
        %4697 = vst.msk [vmem:[#allocation3 + $0x68] sm:$0xff] %vm3139, %v4654
        %4698 = vst.msk [vmem:[#allocation3 + $0x80] sm:$0xff] %vm3139, %v4656
        %4699 = vst.msk [vmem:[#allocation3 + $0x98] sm:$0xff] %vm3139, %v4658
        %4700 = vst.msk [vmem:[#allocation3 + $0xb0] sm:$0xff] %vm3139, %v4660
        %4701 = vst.msk [vmem:[#allocation3 + $0xc8] sm:$0xff] %vm3139, %v4662
        %4702 = vst.msk [vmem:[#allocation3 + $0xe0] sm:$0xff] %vm3139, %v4664
        %4703 = vst.msk [vmem:[#allocation3 + $0xf8] sm:$0xff] %vm3139, %v4666
        %4704 = vst.msk [vmem:[#allocation3 + $0x110] sm:$0xff] %vm3139, %v4668
        %4705 = vst.msk [vmem:[#allocation3 + $0x128] sm:$0xff] %vm3139, %v4670
        %4706 = vst.msk [vmem:[#allocation3 + $0x140] sm:$0xff] %vm3139, %v4672
        %4707 = vst.msk [vmem:[#allocation3 + $0x158] sm:$0xff] %vm3139, %v4674
        %4708 = vst.msk [vmem:[#allocation3 + $0x170] sm:$0xff] %vm3139, %v4676
        %v4709 = vld [vmem:[%s3988] sm:$0xe]
        %v4710 = vld [vmem:[%s3988 + $0x4] sm:$0xf]
        %v4711 = vld [vmem:[%s3988 + $0x8] sm:$0x1]
        %v4712 = vld [vmem:[%s3988 + $0xc] sm:$0xe]
        %v4713 = vld [vmem:[%s3988 + $0x10] sm:$0xf]
        %v4714 = vld [vmem:[%s3988 + $0x14] sm:$0x1]
        %v4715 = vld [vmem:[%s3988 + $0x18] sm:$0xe]
        %v4716 = vld [vmem:[%s3988 + $0x1c] sm:$0xf]
        %v4717 = vld [vmem:[%s3988 + $0x20] sm:$0x1]
        %v4718 = vld [vmem:[%s3988 + $0x24] sm:$0xe]
        %v4719 = vld [vmem:[%s3988 + $0x28] sm:$0xf]
        %v4720 = vld [vmem:[%s3988 + $0x2c] sm:$0x1]
        %v4721 = vld [vmem:[%s3988 + $0x30] sm:$0xe]
        %v4722 = vld [vmem:[%s3988 + $0x34] sm:$0xf]
        %v4723 = vld [vmem:[%s3988 + $0x38] sm:$0x1]
        %v4724 = vld [vmem:[%s3988 + $0x3c] sm:$0xe]
        %v4725 = vld [vmem:[%s3988 + $0x40] sm:$0xf]
        %v4726 = vld [vmem:[%s3988 + $0x44] sm:$0x1]
        %v4727 = vld [vmem:[%s3988 + $0x48] sm:$0xe]
        %v4728 = vld [vmem:[%s3988 + $0x4c] sm:$0xf]
        %v4729 = vld [vmem:[%s3988 + $0x50] sm:$0x1]
        %v4730 = vld [vmem:[%s3988 + $0x54] sm:$0xe]
        %v4731 = vld [vmem:[%s3988 + $0x58] sm:$0xf]
        %v4732 = vld [vmem:[%s3988 + $0x5c] sm:$0x1]
        %v4733 = vld [vmem:[%s3988 + $0x60] sm:$0xe]
        %v4734 = vld [vmem:[%s3988 + $0x64] sm:$0xf]
        %v4735 = vld [vmem:[%s3988 + $0x68] sm:$0x1]
        %v4736 = vld [vmem:[%s3988 + $0x6c] sm:$0xe]
        %v4737 = vld [vmem:[%s3988 + $0x70] sm:$0xf]
        %v4738 = vld [vmem:[%s3988 + $0x74] sm:$0x1]
        %v4739 = vld [vmem:[%s3988 + $0x78] sm:$0xe]
        %v4740 = vld [vmem:[%s3988 + $0x7c] sm:$0xf]
        %v4741 = vld [vmem:[%s3988 + $0x80] sm:$0x1]
        %v4742 = vld [vmem:[%s3988 + $0x84] sm:$0xe]
        %v4743 = vld [vmem:[%s3988 + $0x88] sm:$0xf]
        %v4744 = vld [vmem:[%s3988 + $0x8c] sm:$0x1]
        %v4745 = vld [vmem:[%s3988 + $0x90] sm:$0xe]
        %v4746 = vld [vmem:[%s3988 + $0x94] sm:$0xf]
        %v4747 = vld [vmem:[%s3988 + $0x98] sm:$0x1]
        %v4748 = vld [vmem:[%s3988 + $0x9c] sm:$0xe]
        %v4749 = vld [vmem:[%s3988 + $0xa0] sm:$0xf]
        %v4750 = vld [vmem:[%s3988 + $0xa4] sm:$0x1]
        %v4751 = vld [vmem:[%s3988 + $0xa8] sm:$0xe]
        %v4752 = vld [vmem:[%s3988 + $0xac] sm:$0xf]
        %v4753 = vld [vmem:[%s3988 + $0xb0] sm:$0x1]
        %v4754 = vld [vmem:[%s3988 + $0xb4] sm:$0xe]
        %v4755 = vld [vmem:[%s3988 + $0xb8] sm:$0xf]
        %v4756 = vld [vmem:[%s3988 + $0xbc] sm:$0x1]
        %v4805 = vrot.slane %v4709, 5
        %v4806 = vrot.slane %v4805, 4
        %v4807 = vrot.slane %v4710, 5
        %v4808 = vsel %vm2753, %v4806, %v4807
        %v4809 = vrot.slane %v4807, 4
        %v4810 = vrot.slane %v4711, 5
        %v4811 = vsel %vm2753, %v4809, %v4810
        %v4812 = vrot.slane %v4712, 5
        %v4813 = vrot.slane %v4812, 4
        %v4814 = vrot.slane %v4713, 5
        %v4815 = vsel %vm2753, %v4813, %v4814
        %v4816 = vrot.slane %v4814, 4
        %v4817 = vrot.slane %v4714, 5
        %v4818 = vsel %vm2753, %v4816, %v4817
        %v4819 = vrot.slane %v4715, 5
        %v4820 = vrot.slane %v4819, 4
        %v4821 = vrot.slane %v4716, 5
        %v4822 = vsel %vm2753, %v4820, %v4821
        %v4823 = vrot.slane %v4821, 4
        %v4824 = vrot.slane %v4717, 5
        %v4825 = vsel %vm2753, %v4823, %v4824
        %v4826 = vrot.slane %v4718, 5
        %v4827 = vrot.slane %v4826, 4
        %v4828 = vrot.slane %v4719, 5
        %v4829 = vsel %vm2753, %v4827, %v4828
        %v4830 = vrot.slane %v4828, 4
        %v4831 = vrot.slane %v4720, 5
        %v4832 = vsel %vm2753, %v4830, %v4831
        %v4833 = vrot.slane %v4721, 5
        %v4834 = vrot.slane %v4833, 4
        %v4835 = vrot.slane %v4722, 5
        %v4836 = vsel %vm2753, %v4834, %v4835
        %v4837 = vrot.slane %v4835, 4
        %v4838 = vrot.slane %v4723, 5
        %v4839 = vsel %vm2753, %v4837, %v4838
        %v4840 = vrot.slane %v4724, 5
        %v4841 = vrot.slane %v4840, 4
        %v4842 = vrot.slane %v4725, 5
        %v4843 = vsel %vm2753, %v4841, %v4842
        %v4844 = vrot.slane %v4842, 4
        %v4845 = vrot.slane %v4726, 5
        %v4846 = vsel %vm2753, %v4844, %v4845
        %v4847 = vrot.slane %v4727, 5
        %v4848 = vrot.slane %v4847, 4
        %v4849 = vrot.slane %v4728, 5
        %v4850 = vsel %vm2753, %v4848, %v4849
        %v4851 = vrot.slane %v4849, 4
        %v4852 = vrot.slane %v4729, 5
        %v4853 = vsel %vm2753, %v4851, %v4852
        %v4854 = vrot.slane %v4730, 5
        %v4855 = vrot.slane %v4854, 4
        %v4856 = vrot.slane %v4731, 5
        %v4857 = vsel %vm2753, %v4855, %v4856
        %v4858 = vrot.slane %v4856, 4
        %v4859 = vrot.slane %v4732, 5
        %v4860 = vsel %vm2753, %v4858, %v4859
        %v4861 = vrot.slane %v4733, 5
        %v4862 = vrot.slane %v4861, 4
        %v4863 = vrot.slane %v4734, 5
        %v4864 = vsel %vm2753, %v4862, %v4863
        %v4865 = vrot.slane %v4863, 4
        %v4866 = vrot.slane %v4735, 5
        %v4867 = vsel %vm2753, %v4865, %v4866
        %v4868 = vrot.slane %v4736, 5
        %v4869 = vrot.slane %v4868, 4
        %v4870 = vrot.slane %v4737, 5
        %v4871 = vsel %vm2753, %v4869, %v4870
        %v4872 = vrot.slane %v4870, 4
        %v4873 = vrot.slane %v4738, 5
        %v4874 = vsel %vm2753, %v4872, %v4873
        %v4875 = vrot.slane %v4739, 5
        %v4876 = vrot.slane %v4875, 4
        %v4877 = vrot.slane %v4740, 5
        %v4878 = vsel %vm2753, %v4876, %v4877
        %v4879 = vrot.slane %v4877, 4
        %v4880 = vrot.slane %v4741, 5
        %v4881 = vsel %vm2753, %v4879, %v4880
        %v4882 = vrot.slane %v4742, 5
        %v4883 = vrot.slane %v4882, 4
        %v4884 = vrot.slane %v4743, 5
        %v4885 = vsel %vm2753, %v4883, %v4884
        %v4886 = vrot.slane %v4884, 4
        %v4887 = vrot.slane %v4744, 5
        %v4888 = vsel %vm2753, %v4886, %v4887
        %v4889 = vrot.slane %v4745, 5
        %v4890 = vrot.slane %v4889, 4
        %v4891 = vrot.slane %v4746, 5
        %v4892 = vsel %vm2753, %v4890, %v4891
        %v4893 = vrot.slane %v4891, 4
        %v4894 = vrot.slane %v4747, 5
        %v4895 = vsel %vm2753, %v4893, %v4894
        %v4896 = vrot.slane %v4748, 5
        %v4897 = vrot.slane %v4896, 4
        %v4898 = vrot.slane %v4749, 5
        %v4899 = vsel %vm2753, %v4897, %v4898
        %v4900 = vrot.slane %v4898, 4
        %v4901 = vrot.slane %v4750, 5
        %v4902 = vsel %vm2753, %v4900, %v4901
        %v4903 = vrot.slane %v4751, 5
        %v4904 = vrot.slane %v4903, 4
        %v4905 = vrot.slane %v4752, 5
        %v4906 = vsel %vm2753, %v4904, %v4905
        %v4907 = vrot.slane %v4905, 4
        %v4908 = vrot.slane %v4753, 5
        %v4909 = vsel %vm2753, %v4907, %v4908
        %v4910 = vrot.slane %v4754, 5
        %v4911 = vrot.slane %v4910, 4
        %v4912 = vrot.slane %v4755, 5
        %v4913 = vsel %vm2753, %v4911, %v4912
        %v4914 = vrot.slane %v4912, 4
        %v4915 = vrot.slane %v4756, 5
        %v4916 = vsel %vm2753, %v4914, %v4915
        %v4917 = vunpack.c.l.b16 %v4808
        %v4918 = vunpack.c.l.b16 %v4811
        %v4919 = vunpack.c.l.b16 %v4815
        %v4920 = vunpack.c.l.b16 %v4818
        %v4921 = vunpack.c.l.b16 %v4822
        %v4922 = vunpack.c.l.b16 %v4825
        %v4923 = vunpack.c.l.b16 %v4829
        %v4924 = vunpack.c.l.b16 %v4832
        %v4925 = vunpack.c.l.b16 %v4836
        %v4926 = vunpack.c.l.b16 %v4839
        %v4927 = vunpack.c.l.b16 %v4843
        %v4928 = vunpack.c.l.b16 %v4846
        %v4929 = vunpack.c.l.b16 %v4850
        %v4930 = vunpack.c.l.b16 %v4853
        %v4931 = vunpack.c.l.b16 %v4857
        %v4932 = vunpack.c.l.b16 %v4860
        %v4933 = vunpack.c.l.b16 %v4864
        %v4934 = vunpack.c.l.b16 %v4867
        %v4935 = vunpack.c.l.b16 %v4871
        %v4936 = vunpack.c.l.b16 %v4874
        %v4937 = vunpack.c.l.b16 %v4878
        %v4938 = vunpack.c.l.b16 %v4881
        %v4939 = vunpack.c.l.b16 %v4885
        %v4940 = vunpack.c.l.b16 %v4888
        %v4941 = vunpack.c.l.b16 %v4892
        %v4942 = vunpack.c.l.b16 %v4895
        %v4943 = vunpack.c.l.b16 %v4899
        %v4944 = vunpack.c.l.b16 %v4902
        %v4945 = vunpack.c.l.b16 %v4906
        %v4946 = vunpack.c.l.b16 %v4909
        %v4947 = vunpack.c.l.b16 %v4913
        %v4948 = vunpack.c.l.b16 %v4916
        %v4949 = vpack.c.b16 %v4918, %v4917
        %v4950 = vpack.c.b16 %v4920, %v4919
        %v4951 = vpack.c.b16 %v4922, %v4921
        %v4952 = vpack.c.b16 %v4924, %v4923
        %v4953 = vpack.c.b16 %v4926, %v4925
        %v4954 = vpack.c.b16 %v4928, %v4927
        %v4955 = vpack.c.b16 %v4930, %v4929
        %v4956 = vpack.c.b16 %v4932, %v4931
        %v4957 = vpack.c.b16 %v4934, %v4933
        %v4958 = vpack.c.b16 %v4936, %v4935
        %v4959 = vpack.c.b16 %v4938, %v4937
        %v4960 = vpack.c.b16 %v4940, %v4939
        %v4961 = vpack.c.b16 %v4942, %v4941
        %v4962 = vpack.c.b16 %v4944, %v4943
        %v4963 = vpack.c.b16 %v4946, %v4945
        %v4964 = vpack.c.b16 %v4948, %v4947
        %4981 = vst.msk [vmem:[#allocation3 + $0x10] sm:$0xff] %vm685, %v4949
        %4982 = vst.msk [vmem:[#allocation3 + $0x28] sm:$0xff] %vm685, %v4950
        %4983 = vst.msk [vmem:[#allocation3 + $0x40] sm:$0xff] %vm685, %v4951
        %4984 = vst.msk [vmem:[#allocation3 + $0x58] sm:$0xff] %vm685, %v4952
        %4985 = vst.msk [vmem:[#allocation3 + $0x70] sm:$0xff] %vm685, %v4953
        %4986 = vst.msk [vmem:[#allocation3 + $0x88] sm:$0xff] %vm685, %v4954
        %4987 = vst.msk [vmem:[#allocation3 + $0xa0] sm:$0xff] %vm685, %v4955
        %4988 = vst.msk [vmem:[#allocation3 + $0xb8] sm:$0xff] %vm685, %v4956
        %4989 = vst.msk [vmem:[#allocation3 + $0xd0] sm:$0xff] %vm685, %v4957
        %4990 = vst.msk [vmem:[#allocation3 + $0xe8] sm:$0xff] %vm685, %v4958
        %4991 = vst.msk [vmem:[#allocation3 + $0x100] sm:$0xff] %vm685, %v4959
        %4992 = vst.msk [vmem:[#allocation3 + $0x118] sm:$0xff] %vm685, %v4960
        %4993 = vst.msk [vmem:[#allocation3 + $0x130] sm:$0xff] %vm685, %v4961
        %4994 = vst.msk [vmem:[#allocation3 + $0x148] sm:$0xff] %vm685, %v4962
        %4995 = vst.msk [vmem:[#allocation3 + $0x160] sm:$0xff] %vm685, %v4963
        %4996 = vst.msk [vmem:[#allocation3 + $0x178] sm:$0xff] %vm685, %v4964
        %v4997 = vld [vmem:[#allocation3] sm:$0xff]
        %v4998 = vld [vmem:[#allocation3 + $0x8] sm:$0xff]
        %v4999 = vld [vmem:[#allocation3 + $0x10] sm:$0xff]
        %v5000 = vld [vmem:[#allocation3 + $0x18] sm:$0xff]
        %v5001 = vld [vmem:[#allocation3 + $0x20] sm:$0xff]
        %v5002 = vld [vmem:[#allocation3 + $0x28] sm:$0xff]
        %v5003 = vld [vmem:[#allocation3 + $0x30] sm:$0xff]
        %v5004 = vld [vmem:[#allocation3 + $0x38] sm:$0xff]
        %v5005 = vld [vmem:[#allocation3 + $0x40] sm:$0xff]
        %v5006 = vld [vmem:[#allocation3 + $0x48] sm:$0xff]
        %v5007 = vld [vmem:[#allocation3 + $0x50] sm:$0xff]
        %v5008 = vld [vmem:[#allocation3 + $0x58] sm:$0xff]
        %v5009 = vld [vmem:[#allocation3 + $0x60] sm:$0xff]
        %v5010 = vld [vmem:[#allocation3 + $0x68] sm:$0xff]
        %v5011 = vld [vmem:[#allocation3 + $0x70] sm:$0xff]
        %v5012 = vld [vmem:[#allocation3 + $0x78] sm:$0xff]
        %v5013 = vld [vmem:[#allocation3 + $0x80] sm:$0xff]
        %v5014 = vld [vmem:[#allocation3 + $0x88] sm:$0xff]
        %v5015 = vld [vmem:[#allocation3 + $0x90] sm:$0xff]
        %v5016 = vld [vmem:[#allocation3 + $0x98] sm:$0xff]
        %v5017 = vld [vmem:[#allocation3 + $0xa0] sm:$0xff]
        %v5018 = vld [vmem:[#allocation3 + $0xa8] sm:$0xff]
        %v5019 = vld [vmem:[#allocation3 + $0xb0] sm:$0xff]
        %v5020 = vld [vmem:[#allocation3 + $0xb8] sm:$0xff]
        %v5021 = vld [vmem:[#allocation3 + $0xc0] sm:$0xff]
        %v5022 = vld [vmem:[#allocation3 + $0xc8] sm:$0xff]
        %v5023 = vld [vmem:[#allocation3 + $0xd0] sm:$0xff]
        %v5024 = vld [vmem:[#allocation3 + $0xd8] sm:$0xff]
        %v5025 = vld [vmem:[#allocation3 + $0xe0] sm:$0xff]
        %v5026 = vld [vmem:[#allocation3 + $0xe8] sm:$0xff]
        %v5027 = vld [vmem:[#allocation3 + $0xf0] sm:$0xff]
        %v5028 = vld [vmem:[#allocation3 + $0xf8] sm:$0xff]
        %v5029 = vld [vmem:[#allocation3 + $0x100] sm:$0xff]
        %v5030 = vld [vmem:[#allocation3 + $0x108] sm:$0xff]
        %v5031 = vld [vmem:[#allocation3 + $0x110] sm:$0xff]
        %v5032 = vld [vmem:[#allocation3 + $0x118] sm:$0xff]
        %v5033 = vld [vmem:[#allocation3 + $0x120] sm:$0xff]
        %v5034 = vld [vmem:[#allocation3 + $0x128] sm:$0xff]
        %v5035 = vld [vmem:[#allocation3 + $0x130] sm:$0xff]
        %v5036 = vld [vmem:[#allocation3 + $0x138] sm:$0xff]
        %v5037 = vld [vmem:[#allocation3 + $0x140] sm:$0xff]
        %v5038 = vld [vmem:[#allocation3 + $0x148] sm:$0xff]
        %v5039 = vld [vmem:[#allocation3 + $0x150] sm:$0xff]
        %v5040 = vld [vmem:[#allocation3 + $0x158] sm:$0xff]
        %v5041 = vld [vmem:[#allocation3 + $0x160] sm:$0xff]
        %v5042 = vld [vmem:[#allocation3 + $0x168] sm:$0xff]
        %v5043 = vld [vmem:[#allocation3 + $0x170] sm:$0xff]
        %v5044 = vld [vmem:[#allocation3 + $0x178] sm:$0xff]
        %v5045 = vld [vmem:[#allocation9] sm:$0xf]
        %v5046 = vld [vmem:[#allocation9 + $0x4] sm:$0xf]
        %v5047 = vld [vmem:[#allocation9 + $0x8] sm:$0xf]
        %v5048 = vld [vmem:[#allocation9 + $0xc] sm:$0xf]
        %v5049 = vld [vmem:[#allocation9 + $0x10] sm:$0xf]
        %v5050 = vld [vmem:[#allocation9 + $0x14] sm:$0xf]
        %v5051 = vld [vmem:[#allocation9 + $0x18] sm:$0xf]
        %v5052 = vld [vmem:[#allocation9 + $0x1c] sm:$0xf]
        %v5053 = vld [vmem:[#allocation9 + $0x20] sm:$0xf]
        %v5054 = vld [vmem:[#allocation9 + $0x24] sm:$0xf]
        %v5055 = vld [vmem:[#allocation9 + $0x28] sm:$0xf]
        %v5056 = vld [vmem:[#allocation9 + $0x2c] sm:$0xf]
        %v5057 = vld [vmem:[#allocation9 + $0x30] sm:$0xf]
        %v5058 = vld [vmem:[#allocation9 + $0x34] sm:$0xf]
        %v5059 = vld [vmem:[#allocation9 + $0x38] sm:$0xf]
        %v5060 = vld [vmem:[#allocation9 + $0x3c] sm:$0xf]
        %v5061 = vld [vmem:[#allocation9 + $0x40] sm:$0xf]
        %v5062 = vld [vmem:[#allocation9 + $0x44] sm:$0xf]
        %v5063 = vld [vmem:[#allocation9 + $0x48] sm:$0xf]
        %v5064 = vld [vmem:[#allocation9 + $0x4c] sm:$0xf]
        %v5065 = vld [vmem:[#allocation9 + $0x50] sm:$0xf]
        %v5066 = vld [vmem:[#allocation9 + $0x54] sm:$0xf]
        %v5067 = vld [vmem:[#allocation9 + $0x58] sm:$0xf]
        %v5068 = vld [vmem:[#allocation9 + $0x5c] sm:$0xf]
        %v5069 = vld [vmem:[#allocation9 + $0x60] sm:$0xf]
        %v5070 = vld [vmem:[#allocation9 + $0x64] sm:$0xf]
        %v5071 = vld [vmem:[#allocation9 + $0x68] sm:$0xf]
        %v5072 = vld [vmem:[#allocation9 + $0x6c] sm:$0xf]
        %v5073 = vld [vmem:[#allocation9 + $0x70] sm:$0xf]
        %v5074 = vld [vmem:[#allocation9 + $0x74] sm:$0xf]
        %v5075 = vld [vmem:[#allocation9 + $0x78] sm:$0xf]
        %v5076 = vld [vmem:[#allocation9 + $0x7c] sm:$0xf]
        %v5077 = vld [vmem:[#allocation9 + $0x80] sm:$0xf]
        %v5078 = vld [vmem:[#allocation9 + $0x84] sm:$0xf]
        %v5079 = vld [vmem:[#allocation9 + $0x88] sm:$0xf]
        %v5080 = vld [vmem:[#allocation9 + $0x8c] sm:$0xf]
        %v5117 = vunpack.c.l.b16 %v5045
        %v5118 = vunpack.c.l.b16 %v5046
        %v5119 = vunpack.c.l.b16 %v5047
        %v5120 = vunpack.c.l.b16 %v5048
        %v5121 = vunpack.c.l.b16 %v5049
        %v5122 = vunpack.c.l.b16 %v5050
        %v5123 = vunpack.c.l.b16 %v5051
        %v5124 = vunpack.c.l.b16 %v5052
        %v5125 = vunpack.c.l.b16 %v5053
        %v5126 = vunpack.c.l.b16 %v5054
        %v5127 = vunpack.c.l.b16 %v5055
        %v5128 = vunpack.c.l.b16 %v5056
        %v5129 = vunpack.c.l.b16 %v5057
        %v5130 = vunpack.c.l.b16 %v5058
        %v5131 = vunpack.c.l.b16 %v5059
        %v5132 = vunpack.c.l.b16 %v5060
        %v5133 = vunpack.c.l.b16 %v5061
        %v5134 = vunpack.c.l.b16 %v5062
        %v5135 = vunpack.c.l.b16 %v5063
        %v5136 = vunpack.c.l.b16 %v5064
        %v5137 = vunpack.c.l.b16 %v5065
        %v5138 = vunpack.c.l.b16 %v5066
        %v5139 = vunpack.c.l.b16 %v5067
        %v5140 = vunpack.c.l.b16 %v5068
        %v5141 = vunpack.c.l.b16 %v5069
        %v5142 = vunpack.c.l.b16 %v5070
        %v5143 = vunpack.c.l.b16 %v5071
        %v5144 = vunpack.c.l.b16 %v5072
        %v5145 = vunpack.c.l.b16 %v5073
        %v5146 = vunpack.c.l.b16 %v5074
        %v5147 = vunpack.c.l.b16 %v5075
        %v5148 = vunpack.c.l.b16 %v5076
        %v5149 = vunpack.c.l.b16 %v5077
        %v5150 = vunpack.c.l.b16 %v5078
        %v5151 = vunpack.c.l.b16 %v5079
        %v5152 = vunpack.c.l.b16 %v5080
        %v5153 = vpack.c.b16 %v5118, %v5117
        %v5154 = vpack.c.b16 %v5120, %v5119
        %v5155 = vpack.c.b16 %v5122, %v5121
        %v5156 = vpack.c.b16 %v5124, %v5123
        %v5157 = vpack.c.b16 %v5126, %v5125
        %v5158 = vpack.c.b16 %v5128, %v5127
        %v5159 = vpack.c.b16 %v5130, %v5129
        %v5160 = vpack.c.b16 %v5132, %v5131
        %v5161 = vpack.c.b16 %v5134, %v5133
        %v5162 = vpack.c.b16 %v5136, %v5135
        %v5163 = vpack.c.b16 %v5138, %v5137
        %v5164 = vpack.c.b16 %v5140, %v5139
        %v5165 = vpack.c.b16 %v5142, %v5141
        %v5166 = vpack.c.b16 %v5144, %v5143
        %v5167 = vpack.c.b16 %v5146, %v5145
        %v5168 = vpack.c.b16 %v5148, %v5147
        %v5169 = vpack.c.b16 %v5150, %v5149
        %v5170 = vpack.c.b16 %v5152, %v5151
        %v5190 = vsel %vm685, %v4999, 0
        %v5193 = vsel %vm685, %v5002, 0
        %v5196 = vsel %vm685, %v5005, 0
        %v5199 = vsel %vm685, %v5008, 0
        %v5202 = vsel %vm685, %v5011, 0
        %v5205 = vsel %vm685, %v5014, 0
        %v5208 = vsel %vm685, %v5017, 0
        %v5211 = vsel %vm685, %v5020, 0
        %v5214 = vsel %vm685, %v5023, 0
        %v5217 = vsel %vm685, %v5026, 0
        %v5220 = vsel %vm685, %v5029, 0
        %v5223 = vsel %vm685, %v5032, 0
        %v5226 = vsel %vm685, %v5035, 0
        %v5229 = vsel %vm685, %v5038, 0
        %v5232 = vsel %vm685, %v5041, 0
        %v5235 = vsel %vm685, %v5044, 0
        %5237 = vmatprep.subr.bf16.mxu0 0
        %5238 = vmatpush1.bf16.msra.mxu0 %v5153
        %5239 = vmatprep.subr.bf16.mxu0 0
        %5240 = vmatpush1.bf16.msra.mxu0 %v5154
        %5241 = vmatprep.subr.bf16.mxu0 0
        %5242 = vmatpush1.bf16.msra.mxu0 %v5155
        %5243 = vmatprep.subr.bf16.mxu0 0
        %5244 = vmatpush1.bf16.msra.mxu0 %v5156
        %5245 = vmatprep.subr.bf16.mxu0 0
        %5246 = vmatpush1.bf16.msra.mxu0 %v5157
        %5247 = vmatprep.subr.bf16.mxu0 0
        %5248 = vmatpush1.bf16.msra.mxu0 %v5158
        %5249 = vmatprep.subr.bf16.mxu0 0
        %5250 = vmatpush1.bf16.msra.mxu0 %v5159
        %5251 = vmatprep.subr.bf16.mxu0 0
        %5252 = vmatpush1.bf16.msra.mxu0 %v5160
        %5253 = vmatprep.subr.bf16.mxu0 0
        %5254 = vmatpush1.bf16.msra.mxu0 %v5161
        %5255 = vmatprep.subr.bf16.mxu0 0
        %5256 = vmatpush1.bf16.msra.mxu0 %v5162
        %5257 = vmatprep.subr.bf16.mxu0 0
        %5258 = vmatpush1.bf16.msra.mxu0 %v5163
        %5259 = vmatprep.subr.bf16.mxu0 0
        %5260 = vmatpush1.bf16.msra.mxu0 %v5164
        %5261 = vmatprep.subr.bf16.mxu0 0
        %5262 = vmatpush1.bf16.msra.mxu0 %v5165
        %5263 = vmatprep.subr.bf16.mxu0 0
        %5264 = vmatpush1.bf16.msra.mxu0 %v5166
        %5265 = vmatprep.subr.bf16.mxu0 0
        %5266 = vmatpush1.bf16.msra.mxu0 %v5167
        %5267 = vmatprep.subr.bf16.mxu0 0
        %5268 = vmatpush1.bf16.msra.mxu0 %v5168
        %5269 = vmatprep.mubr.bf16.mxu0 %v4998
        %5270 = vmatmul.mubr.bf16.gmra.mrb[0].mxu0 %v4997
        %v5271 = vpop.f32.mrb[0].mxu0
        %v5272 = vadd.f32 0.0, %v5271
        %v5273 = vpop.f32.mrb[0].mxu0
        %v5274 = vpop.f32.mrb[0].mxu0
        %v5275 = vadd.f32 0.0, %v5274
        %v5276 = vpop.f32.mrb[0].mxu0
        %5277 = vmatprep.mubr.bf16.mxu0 %v5001
        %5278 = vmatmul.mubr.bf16.gmra.mrb[0].mxu0 %v5000
        %v5279 = vpop.f32.mrb[0].mxu0
        %v5280 = vadd.f32 0.0, %v5279
        %v5281 = vpop.f32.mrb[0].mxu0
        %v5282 = vpop.f32.mrb[0].mxu0
        %v5283 = vadd.f32 0.0, %v5282
        %v5284 = vpop.f32.mrb[0].mxu0
        %5285 = vmatprep.mubr.bf16.mxu0 %v5004
        %5286 = vmatmul.mubr.bf16.gmra.mrb[0].mxu0 %v5003
        %v5287 = vpop.f32.mrb[0].mxu0
        %v5288 = vadd.f32 0.0, %v5287
        %v5289 = vpop.f32.mrb[0].mxu0
        %v5290 = vpop.f32.mrb[0].mxu0
        %v5291 = vadd.f32 0.0, %v5290
        %v5292 = vpop.f32.mrb[0].mxu0
        %5293 = vmatprep.mubr.bf16.mxu0 %v5007
        %5294 = vmatmul.mubr.bf16.gmra.mrb[0].mxu0 %v5006
        %v5295 = vpop.f32.mrb[0].mxu0
        %v5296 = vadd.f32 0.0, %v5295
        %v5297 = vpop.f32.mrb[0].mxu0
        %v5298 = vpop.f32.mrb[0].mxu0
        %v5299 = vadd.f32 0.0, %v5298
        %v5300 = vpop.f32.mrb[0].mxu0
        %5301 = vmatprep.mubr.bf16.mxu0 %v5010
        %5302 = vmatmul.mubr.bf16.gmra.mrb[0].mxu0 %v5009
        %v5303 = vpop.f32.mrb[0].mxu0
        %v5304 = vadd.f32 0.0, %v5303
        %v5305 = vpop.f32.mrb[0].mxu0
        %v5306 = vpop.f32.mrb[0].mxu0
        %v5307 = vadd.f32 0.0, %v5306
        %v5308 = vpop.f32.mrb[0].mxu0
        %5309 = vmatprep.mubr.bf16.mxu0 %v5013
        %5310 = vmatmul.mubr.bf16.gmra.mrb[0].mxu0 %v5012
        %v5311 = vpop.f32.mrb[0].mxu0
        %v5312 = vadd.f32 0.0, %v5311
        %v5313 = vpop.f32.mrb[0].mxu0
        %v5314 = vpop.f32.mrb[0].mxu0
        %v5315 = vadd.f32 0.0, %v5314
        %v5316 = vpop.f32.mrb[0].mxu0
        %5317 = vmatprep.mubr.bf16.mxu0 %v5016
        %5318 = vmatmul.mubr.bf16.gmra.mrb[0].mxu0 %v5015
        %v5319 = vpop.f32.mrb[0].mxu0
        %v5320 = vadd.f32 0.0, %v5319
        %v5321 = vpop.f32.mrb[0].mxu0
        %v5322 = vpop.f32.mrb[0].mxu0
        %v5323 = vadd.f32 0.0, %v5322
        %v5324 = vpop.f32.mrb[0].mxu0
        %5325 = vmatprep.mubr.bf16.mxu0 %v5019
        %5326 = vmatmul.mubr.bf16.gmra.mrb[0].mxu0 %v5018
        %v5327 = vpop.f32.mrb[0].mxu0
        %v5328 = vadd.f32 0.0, %v5327
        %v5329 = vpop.f32.mrb[0].mxu0
        %v5330 = vpop.f32.mrb[0].mxu0
        %v5331 = vadd.f32 0.0, %v5330
        %v5332 = vpop.f32.mrb[0].mxu0
        %5333 = vmatprep.mubr.bf16.mxu0 %v5022
        %5334 = vmatmul.mubr.bf16.gmra.mrb[0].mxu0 %v5021
        %v5335 = vpop.f32.mrb[0].mxu0
        %v5336 = vadd.f32 0.0, %v5335
        %v5337 = vpop.f32.mrb[0].mxu0
        %v5338 = vpop.f32.mrb[0].mxu0
        %v5339 = vadd.f32 0.0, %v5338
        %v5340 = vpop.f32.mrb[0].mxu0
        %5341 = vmatprep.mubr.bf16.mxu0 %v5025
        %5342 = vmatmul.mubr.bf16.gmra.mrb[0].mxu0 %v5024
        %v5343 = vpop.f32.mrb[0].mxu0
        %v5344 = vadd.f32 0.0, %v5343
        %v5345 = vpop.f32.mrb[0].mxu0
        %v5346 = vpop.f32.mrb[0].mxu0
        %v5347 = vadd.f32 0.0, %v5346
        %v5348 = vpop.f32.mrb[0].mxu0
        %5349 = vmatprep.mubr.bf16.mxu0 %v5028
        %5350 = vmatmul.mubr.bf16.gmra.mrb[0].mxu0 %v5027
        %v5351 = vpop.f32.mrb[0].mxu0
        %v5352 = vadd.f32 0.0, %v5351
        %v5353 = vpop.f32.mrb[0].mxu0
        %v5354 = vpop.f32.mrb[0].mxu0
        %v5355 = vadd.f32 0.0, %v5354
        %v5356 = vpop.f32.mrb[0].mxu0
        %5357 = vmatprep.mubr.bf16.mxu0 %v5031
        %5358 = vmatmul.mubr.bf16.gmra.mrb[0].mxu0 %v5030
        %v5359 = vpop.f32.mrb[0].mxu0
        %v5360 = vadd.f32 0.0, %v5359
        %v5361 = vpop.f32.mrb[0].mxu0
        %v5362 = vpop.f32.mrb[0].mxu0
        %v5363 = vadd.f32 0.0, %v5362
        %v5364 = vpop.f32.mrb[0].mxu0
        %5365 = vmatprep.mubr.bf16.mxu0 %v5034
        %5366 = vmatmul.mubr.bf16.gmra.mrb[0].mxu0 %v5033
        %v5367 = vpop.f32.mrb[0].mxu0
        %v5368 = vadd.f32 0.0, %v5367
        %v5369 = vpop.f32.mrb[0].mxu0
        %v5370 = vpop.f32.mrb[0].mxu0
        %v5371 = vadd.f32 0.0, %v5370
        %v5372 = vpop.f32.mrb[0].mxu0
        %5373 = vmatprep.mubr.bf16.mxu0 %v5037
        %5374 = vmatmul.mubr.bf16.gmra.mrb[0].mxu0 %v5036
        %v5375 = vpop.f32.mrb[0].mxu0
        %v5376 = vadd.f32 0.0, %v5375
        %v5377 = vpop.f32.mrb[0].mxu0
        %v5378 = vpop.f32.mrb[0].mxu0
        %v5379 = vadd.f32 0.0, %v5378
        %v5380 = vpop.f32.mrb[0].mxu0
        %5381 = vmatprep.mubr.bf16.mxu0 %v5040
        %5382 = vmatmul.mubr.bf16.gmra.mrb[0].mxu0 %v5039
        %v5383 = vpop.f32.mrb[0].mxu0
        %v5384 = vadd.f32 0.0, %v5383
        %v5385 = vpop.f32.mrb[0].mxu0
        %v5386 = vpop.f32.mrb[0].mxu0
        %v5387 = vadd.f32 0.0, %v5386
        %v5388 = vpop.f32.mrb[0].mxu0
        %5389 = vmatprep.mubr.bf16.mxu0 %v5043
        %5390 = vmatmul.mubr.bf16.gmra.mrb[0].mxu0 %v5042
        %v5391 = vpop.f32.mrb[0].mxu0
        %v5392 = vadd.f32 0.0, %v5391
        %v5393 = vpop.f32.mrb[0].mxu0
        %v5394 = vpop.f32.mrb[0].mxu0
        %v5395 = vadd.f32 0.0, %v5394
        %v5396 = vpop.f32.mrb[0].mxu0
        %5397 = vdwg.mxu0
        %5398 = vmatprep.subr.bf16.mxu0 0
        %5399 = vmatpush1.bf16.msra.mxu0 %v5169
        %5400 = vmatprep.subr.bf16.mxu0 0
        %5401 = vmatpush1.bf16.msra.mxu0 %v5170
        %5402 = vmatprep.subr.bf16.mxu0 0
        %5403 = vmatpush1.bf16.msra.mxu0 0
        %5404 = vmatprep.subr.bf16.mxu0 0
        %5405 = vmatpush1.bf16.msra.mxu0 0
        %5406 = vmatprep.subr.bf16.mxu0 0
        %5407 = vmatpush1.bf16.msra.mxu0 0
        %5408 = vmatprep.subr.bf16.mxu0 0
        %5409 = vmatpush1.bf16.msra.mxu0 0
        %5410 = vmatprep.subr.bf16.mxu0 0
        %5411 = vmatpush1.bf16.msra.mxu0 0
        %5412 = vmatprep.subr.bf16.mxu0 0
        %5413 = vmatpush1.bf16.msra.mxu0 0
        %5414 = vmatprep.subr.bf16.mxu0 0
        %5415 = vmatpush1.bf16.msra.mxu0 0
        %5416 = vmatprep.subr.bf16.mxu0 0
        %5417 = vmatpush1.bf16.msra.mxu0 0
        %5418 = vmatprep.subr.bf16.mxu0 0
        %5419 = vmatpush1.bf16.msra.mxu0 0
        %5420 = vmatprep.subr.bf16.mxu0 0
        %5421 = vmatpush1.bf16.msra.mxu0 0
        %5422 = vmatprep.subr.bf16.mxu0 0
        %5423 = vmatpush1.bf16.msra.mxu0 0
        %5424 = vmatprep.subr.bf16.mxu0 0
        %5425 = vmatpush1.bf16.msra.mxu0 0
        %5426 = vmatprep.subr.bf16.mxu0 0
        %5427 = vmatpush1.bf16.msra.mxu0 0
        %5428 = vmatprep.subr.bf16.mxu0 0
        %5429 = vmatpush1.bf16.msra.mxu0 0
        %5430 = vmatprep.mubr.bf16.mxu0 0
        %5431 = vmatmul.mubr.bf16.gmra.mrb[0].mxu0 %v5190
        %v5432 = vpop.f32.mrb[0].mxu0
        %v5433 = vadd.f32 %v5272, %v5432
        %v5434 = vpop.f32.mrb[0].mxu0
        %v5435 = vpop.f32.mrb[0].mxu0
        %v5436 = vadd.f32 %v5275, %v5435
        %v5437 = vpop.f32.mrb[0].mxu0
        %5438 = vmatprep.mubr.bf16.mxu0 0
        %5439 = vmatmul.mubr.bf16.gmra.mrb[0].mxu0 %v5193
        %v5440 = vpop.f32.mrb[0].mxu0
        %v5441 = vadd.f32 %v5280, %v5440
        %v5442 = vpop.f32.mrb[0].mxu0
        %v5443 = vpop.f32.mrb[0].mxu0
        %v5444 = vadd.f32 %v5283, %v5443
        %v5445 = vpop.f32.mrb[0].mxu0
        %5446 = vmatprep.mubr.bf16.mxu0 0
        %5447 = vmatmul.mubr.bf16.gmra.mrb[0].mxu0 %v5196
        %v5448 = vpop.f32.mrb[0].mxu0
        %v5449 = vadd.f32 %v5288, %v5448
        %v5450 = vpop.f32.mrb[0].mxu0
        %v5451 = vpop.f32.mrb[0].mxu0
        %v5452 = vadd.f32 %v5291, %v5451
        %v5453 = vpop.f32.mrb[0].mxu0
        %5454 = vmatprep.mubr.bf16.mxu0 0
        %5455 = vmatmul.mubr.bf16.gmra.mrb[0].mxu0 %v5199
        %v5456 = vpop.f32.mrb[0].mxu0
        %v5457 = vadd.f32 %v5296, %v5456
        %v5458 = vpop.f32.mrb[0].mxu0
        %v5459 = vpop.f32.mrb[0].mxu0
        %v5460 = vadd.f32 %v5299, %v5459
        %v5461 = vpop.f32.mrb[0].mxu0
        %5462 = vmatprep.mubr.bf16.mxu0 0
        %5463 = vmatmul.mubr.bf16.gmra.mrb[0].mxu0 %v5202
        %v5464 = vpop.f32.mrb[0].mxu0
        %v5465 = vadd.f32 %v5304, %v5464
        %v5466 = vpop.f32.mrb[0].mxu0
        %v5467 = vpop.f32.mrb[0].mxu0
        %v5468 = vadd.f32 %v5307, %v5467
        %v5469 = vpop.f32.mrb[0].mxu0
        %5470 = vmatprep.mubr.bf16.mxu0 0
        %5471 = vmatmul.mubr.bf16.gmra.mrb[0].mxu0 %v5205
        %v5472 = vpop.f32.mrb[0].mxu0
        %v5473 = vadd.f32 %v5312, %v5472
        %v5474 = vpop.f32.mrb[0].mxu0
        %v5475 = vpop.f32.mrb[0].mxu0
        %v5476 = vadd.f32 %v5315, %v5475
        %v5477 = vpop.f32.mrb[0].mxu0
        %5478 = vmatprep.mubr.bf16.mxu0 0
        %5479 = vmatmul.mubr.bf16.gmra.mrb[0].mxu0 %v5208
        %v5480 = vpop.f32.mrb[0].mxu0
        %v5481 = vadd.f32 %v5320, %v5480
        %v5482 = vpop.f32.mrb[0].mxu0
        %v5483 = vpop.f32.mrb[0].mxu0
        %v5484 = vadd.f32 %v5323, %v5483
        %v5485 = vpop.f32.mrb[0].mxu0
        %5486 = vmatprep.mubr.bf16.mxu0 0
        %5487 = vmatmul.mubr.bf16.gmra.mrb[0].mxu0 %v5211
        %v5488 = vpop.f32.mrb[0].mxu0
        %v5489 = vadd.f32 %v5328, %v5488
        %v5490 = vpop.f32.mrb[0].mxu0
        %v5491 = vpop.f32.mrb[0].mxu0
        %v5492 = vadd.f32 %v5331, %v5491
        %v5493 = vpop.f32.mrb[0].mxu0
        %5494 = vmatprep.mubr.bf16.mxu0 0
        %5495 = vmatmul.mubr.bf16.gmra.mrb[0].mxu0 %v5214
        %v5496 = vpop.f32.mrb[0].mxu0
        %v5497 = vadd.f32 %v5336, %v5496
        %v5498 = vpop.f32.mrb[0].mxu0
        %v5499 = vpop.f32.mrb[0].mxu0
        %v5500 = vadd.f32 %v5339, %v5499
        %v5501 = vpop.f32.mrb[0].mxu0
        %5502 = vmatprep.mubr.bf16.mxu0 0
        %5503 = vmatmul.mubr.bf16.gmra.mrb[0].mxu0 %v5217
        %v5504 = vpop.f32.mrb[0].mxu0
        %v5505 = vadd.f32 %v5344, %v5504
        %v5506 = vpop.f32.mrb[0].mxu0
        %v5507 = vpop.f32.mrb[0].mxu0
        %v5508 = vadd.f32 %v5347, %v5507
        %v5509 = vpop.f32.mrb[0].mxu0
        %5510 = vmatprep.mubr.bf16.mxu0 0
        %5511 = vmatmul.mubr.bf16.gmra.mrb[0].mxu0 %v5220
        %v5512 = vpop.f32.mrb[0].mxu0
        %v5513 = vadd.f32 %v5352, %v5512
        %v5514 = vpop.f32.mrb[0].mxu0
        %v5515 = vpop.f32.mrb[0].mxu0
        %v5516 = vadd.f32 %v5355, %v5515
        %v5517 = vpop.f32.mrb[0].mxu0
        %5518 = vmatprep.mubr.bf16.mxu0 0
        %5519 = vmatmul.mubr.bf16.gmra.mrb[0].mxu0 %v5223
        %v5520 = vpop.f32.mrb[0].mxu0
        %v5521 = vadd.f32 %v5360, %v5520
        %v5522 = vpop.f32.mrb[0].mxu0
        %v5523 = vpop.f32.mrb[0].mxu0
        %v5524 = vadd.f32 %v5363, %v5523
        %v5525 = vpop.f32.mrb[0].mxu0
        %5526 = vmatprep.mubr.bf16.mxu0 0
        %5527 = vmatmul.mubr.bf16.gmra.mrb[0].mxu0 %v5226
        %v5528 = vpop.f32.mrb[0].mxu0
        %v5529 = vadd.f32 %v5368, %v5528
        %v5530 = vpop.f32.mrb[0].mxu0
        %v5531 = vpop.f32.mrb[0].mxu0
        %v5532 = vadd.f32 %v5371, %v5531
        %v5533 = vpop.f32.mrb[0].mxu0
        %5534 = vmatprep.mubr.bf16.mxu0 0
        %5535 = vmatmul.mubr.bf16.gmra.mrb[0].mxu0 %v5229
        %v5536 = vpop.f32.mrb[0].mxu0
        %v5537 = vadd.f32 %v5376, %v5536
        %v5538 = vpop.f32.mrb[0].mxu0
        %v5539 = vpop.f32.mrb[0].mxu0
        %v5540 = vadd.f32 %v5379, %v5539
        %v5541 = vpop.f32.mrb[0].mxu0
        %5542 = vmatprep.mubr.bf16.mxu0 0
        %5543 = vmatmul.mubr.bf16.gmra.mrb[0].mxu0 %v5232
        %v5544 = vpop.f32.mrb[0].mxu0
        %v5545 = vadd.f32 %v5384, %v5544
        %v5546 = vpop.f32.mrb[0].mxu0
        %v5547 = vpop.f32.mrb[0].mxu0
        %v5548 = vadd.f32 %v5387, %v5547
        %v5549 = vpop.f32.mrb[0].mxu0
        %5550 = vmatprep.mubr.bf16.mxu0 0
        %5551 = vmatmul.mubr.bf16.gmra.mrb[0].mxu0 %v5235
        %v5552 = vpop.f32.mrb[0].mxu0
        %v5553 = vadd.f32 %v5392, %v5552
        %v5554 = vpop.f32.mrb[0].mxu0
        %v5555 = vpop.f32.mrb[0].mxu0
        %v5556 = vadd.f32 %v5395, %v5555
        %v5557 = vpop.f32.mrb[0].mxu0
        %5558 = vdwg.mxu0
        %v5559 = vld [vmem:[%s5] sm:$0x1]
        %v5560 = vld [vmem:[%s6] sm:$0x1]
        %v5561 = vsel %vm685, %v5433, 0.0
        %v5562 = vsel %vm685, %v5436, 0.0
        %v5563 = vadd.f32 %v5561, %v5562
        %v5564 = vsel %vm685, %v5441, 0.0
        %v5565 = vadd.f32 %v5563, %v5564
        %v5566 = vsel %vm685, %v5444, 0.0
        %v5567 = vadd.f32 %v5565, %v5566
        %v5568 = vsel %vm685, %v5449, 0.0
        %v5569 = vadd.f32 %v5567, %v5568
        %v5570 = vsel %vm685, %v5452, 0.0
        %v5571 = vadd.f32 %v5569, %v5570
        %v5572 = vsel %vm685, %v5457, 0.0
        %v5573 = vadd.f32 %v5571, %v5572
        %v5574 = vsel %vm685, %v5460, 0.0
        %v5575 = vadd.f32 %v5573, %v5574
        %v5576 = vsel %vm685, %v5465, 0.0
        %v5577 = vadd.f32 %v5575, %v5576
        %v5578 = vsel %vm685, %v5468, 0.0
        %v5579 = vadd.f32 %v5577, %v5578
        %v5580 = vsel %vm685, %v5473, 0.0
        %v5581 = vadd.f32 %v5579, %v5580
        %v5582 = vsel %vm685, %v5476, 0.0
        %v5583 = vadd.f32 %v5581, %v5582
        %v5584 = vsel %vm685, %v5481, 0.0
        %v5585 = vadd.f32 %v5583, %v5584
        %v5586 = vsel %vm685, %v5484, 0.0
        %v5587 = vadd.f32 %v5585, %v5586
        %v5588 = vsel %vm685, %v5489, 0.0
        %v5589 = vadd.f32 %v5587, %v5588
        %v5590 = vsel %vm685, %v5492, 0.0
        %v5591 = vadd.f32 %v5589, %v5590
        %v5592 = vsel %vm685, %v5497, 0.0
        %v5593 = vadd.f32 %v5591, %v5592
        %v5594 = vsel %vm685, %v5500, 0.0
        %v5595 = vadd.f32 %v5593, %v5594
        %v5596 = vsel %vm685, %v5505, 0.0
        %v5597 = vadd.f32 %v5595, %v5596
        %v5598 = vsel %vm685, %v5508, 0.0
        %v5599 = vadd.f32 %v5597, %v5598
        %v5600 = vsel %vm685, %v5513, 0.0
        %v5601 = vadd.f32 %v5599, %v5600
        %v5602 = vsel %vm685, %v5516, 0.0
        %v5603 = vadd.f32 %v5601, %v5602
        %v5604 = vsel %vm685, %v5521, 0.0
        %v5605 = vadd.f32 %v5603, %v5604
        %v5606 = vsel %vm685, %v5524, 0.0
        %v5607 = vadd.f32 %v5605, %v5606
        %v5608 = vsel %vm685, %v5529, 0.0
        %v5609 = vadd.f32 %v5607, %v5608
        %v5610 = vsel %vm685, %v5532, 0.0
        %v5611 = vadd.f32 %v5609, %v5610
        %v5612 = vsel %vm685, %v5537, 0.0
        %v5613 = vadd.f32 %v5611, %v5612
        %v5614 = vsel %vm685, %v5540, 0.0
        %v5615 = vadd.f32 %v5613, %v5614
        %v5616 = vsel %vm685, %v5545, 0.0
        %v5617 = vadd.f32 %v5615, %v5616
        %v5618 = vsel %vm685, %v5548, 0.0
        %v5619 = vadd.f32 %v5617, %v5618
        %v5620 = vsel %vm685, %v5553, 0.0
        %v5621 = vadd.f32 %v5619, %v5620
        %v5622 = vsel %vm685, %v5556, 0.0
        %v5623 = vadd.f32 %v5621, %v5622
        %v5624 = vrot.slane %v5623, 4
        %v5625 = vadd.f32 %v5623, %v5624
        %v5626 = vrot.slane %v5625, 2
        %v5627 = vadd.f32 %v5625, %v5626
        %v5628 = vrot.slane %v5627, 1
        %v5629 = vadd.f32 %v5627, %v5628
        %v5630 = vmul.f32 %v5433, %v5433
        %v5631 = vmul.f32 %v5436, %v5436
        %v5632 = vmul.f32 %v5441, %v5441
        %v5633 = vmul.f32 %v5444, %v5444
        %v5634 = vmul.f32 %v5449, %v5449
        %v5635 = vmul.f32 %v5452, %v5452
        %v5636 = vmul.f32 %v5457, %v5457
        %v5637 = vmul.f32 %v5460, %v5460
        %v5638 = vmul.f32 %v5465, %v5465
        %v5639 = vmul.f32 %v5468, %v5468
        %v5640 = vmul.f32 %v5473, %v5473
        %v5641 = vmul.f32 %v5476, %v5476
        %v5642 = vmul.f32 %v5481, %v5481
        %v5643 = vmul.f32 %v5484, %v5484
        %v5644 = vmul.f32 %v5489, %v5489
        %v5645 = vmul.f32 %v5492, %v5492
        %v5646 = vmul.f32 %v5497, %v5497
        %v5647 = vmul.f32 %v5500, %v5500
        %v5648 = vmul.f32 %v5505, %v5505
        %v5649 = vmul.f32 %v5508, %v5508
        %v5650 = vmul.f32 %v5513, %v5513
        %v5651 = vmul.f32 %v5516, %v5516
        %v5652 = vmul.f32 %v5521, %v5521
        %v5653 = vmul.f32 %v5524, %v5524
        %v5654 = vmul.f32 %v5529, %v5529
        %v5655 = vmul.f32 %v5532, %v5532
        %v5656 = vmul.f32 %v5537, %v5537
        %v5657 = vmul.f32 %v5540, %v5540
        %v5658 = vmul.f32 %v5545, %v5545
        %v5659 = vmul.f32 %v5548, %v5548
        %v5660 = vmul.f32 %v5553, %v5553
        %v5661 = vmul.f32 %v5556, %v5556
        %v5662 = vsel %vm685, %v5630, 0.0
        %v5663 = vsel %vm685, %v5631, 0.0
        %v5664 = vadd.f32 %v5662, %v5663
        %v5665 = vsel %vm685, %v5632, 0.0
        %v5666 = vadd.f32 %v5664, %v5665
        %v5667 = vsel %vm685, %v5633, 0.0
        %v5668 = vadd.f32 %v5666, %v5667
        %v5669 = vsel %vm685, %v5634, 0.0
        %v5670 = vadd.f32 %v5668, %v5669
        %v5671 = vsel %vm685, %v5635, 0.0
        %v5672 = vadd.f32 %v5670, %v5671
        %v5673 = vsel %vm685, %v5636, 0.0
        %v5674 = vadd.f32 %v5672, %v5673
        %v5675 = vsel %vm685, %v5637, 0.0
        %v5676 = vadd.f32 %v5674, %v5675
        %v5677 = vsel %vm685, %v5638, 0.0
        %v5678 = vadd.f32 %v5676, %v5677
        %v5679 = vsel %vm685, %v5639, 0.0
        %v5680 = vadd.f32 %v5678, %v5679
        %v5681 = vsel %vm685, %v5640, 0.0
        %v5682 = vadd.f32 %v5680, %v5681
        %v5683 = vsel %vm685, %v5641, 0.0
        %v5684 = vadd.f32 %v5682, %v5683
        %v5685 = vsel %vm685, %v5642, 0.0
        %v5686 = vadd.f32 %v5684, %v5685
        %v5687 = vsel %vm685, %v5643, 0.0
        %v5688 = vadd.f32 %v5686, %v5687
        %v5689 = vsel %vm685, %v5644, 0.0
        %v5690 = vadd.f32 %v5688, %v5689
        %v5691 = vsel %vm685, %v5645, 0.0
        %v5692 = vadd.f32 %v5690, %v5691
        %v5693 = vsel %vm685, %v5646, 0.0
        %v5694 = vadd.f32 %v5692, %v5693
        %v5695 = vsel %vm685, %v5647, 0.0
        %v5696 = vadd.f32 %v5694, %v5695
        %v5697 = vsel %vm685, %v5648, 0.0
        %v5698 = vadd.f32 %v5696, %v5697
        %v5699 = vsel %vm685, %v5649, 0.0
        %v5700 = vadd.f32 %v5698, %v5699
        %v5701 = vsel %vm685, %v5650, 0.0
        %v5702 = vadd.f32 %v5700, %v5701
        %v5703 = vsel %vm685, %v5651, 0.0
        %v5704 = vadd.f32 %v5702, %v5703
        %v5705 = vsel %vm685, %v5652, 0.0
        %v5706 = vadd.f32 %v5704, %v5705
        %v5707 = vsel %vm685, %v5653, 0.0
        %v5708 = vadd.f32 %v5706, %v5707
        %v5709 = vsel %vm685, %v5654, 0.0
        %v5710 = vadd.f32 %v5708, %v5709
        %v5711 = vsel %vm685, %v5655, 0.0
        %v5712 = vadd.f32 %v5710, %v5711
        %v5713 = vsel %vm685, %v5656, 0.0
        %v5714 = vadd.f32 %v5712, %v5713
        %v5715 = vsel %vm685, %v5657, 0.0
        %v5716 = vadd.f32 %v5714, %v5715
        %v5717 = vsel %vm685, %v5658, 0.0
        %v5718 = vadd.f32 %v5716, %v5717
        %v5719 = vsel %vm685, %v5659, 0.0
        %v5720 = vadd.f32 %v5718, %v5719
        %v5721 = vsel %vm685, %v5660, 0.0
        %v5722 = vadd.f32 %v5720, %v5721
        %v5723 = vsel %vm685, %v5661, 0.0
        %v5724 = vadd.f32 %v5722, %v5723
        %v5725 = vrot.slane %v5724, 4
        %v5726 = vadd.f32 %v5724, %v5725
        %v5727 = vrot.slane %v5726, 2
        %v5728 = vadd.f32 %v5726, %v5727
        %v5729 = vrot.slane %v5728, 1
        %v5730 = vadd.f32 %v5728, %v5729
        %v5731 = vsel %vm858, %v5629, 0.0
        %5732 = vadd.xlane.f32.xlu0 %v5731
        %v5733 = vpop.xlane.xlu0 %5732
        %v5734 = vmul.f32 %v5733, 0.0009765625
        %v5735 = vsel %vm858, %v5730, 0.0
        %5736 = vadd.xlane.f32.xlu0 %v5735
        %v5737 = vpop.xlane.xlu0 %5736
        %v5738 = vmul.f32 %v5737, 0.0009765625
        %v5739 = vsel %vm869, %v5734, 0.0
        %v5740 = vsel %vm869, %v5738, 0.0
        %5742 = vrot.lane.b32.xlu0 %v5629, 124
        %v5743 = vpop.permute.xlu0 %5742
        %v5745 = vsel %vm858, %v5743, 0.0
        %5746 = vadd.xlane.f32.xlu0 %v5745
        %v5747 = vpop.xlane.xlu0 %5746
        %v5748 = vmul.f32 %v5747, 0.0009765625
        %5750 = vrot.lane.b32.xlu0 %v5730, 124
        %v5751 = vpop.permute.xlu0 %5750
        %v5753 = vsel %vm858, %v5751, 0.0
        %5754 = vadd.xlane.f32.xlu0 %v5753
        %v5755 = vpop.xlane.xlu0 %5754
        %v5756 = vmul.f32 %v5755, 0.0009765625
        %v5757 = vsel %vm890, %v5748, %v5739
        %v5758 = vsel %vm890, %v5756, %v5740
        %5759 = vrot.lane.b32.xlu0 %v5629, 120
        %v5760 = vpop.permute.xlu0 %5759
        %v5762 = vsel %vm858, %v5760, 0.0
        %5763 = vadd.xlane.f32.xlu0 %v5762
        %v5764 = vpop.xlane.xlu0 %5763
        %v5765 = vmul.f32 %v5764, 0.0009765625
        %5766 = vrot.lane.b32.xlu0 %v5730, 120
        %v5767 = vpop.permute.xlu0 %5766
        %v5769 = vsel %vm858, %v5767, 0.0
        %5770 = vadd.xlane.f32.xlu0 %v5769
        %v5771 = vpop.xlane.xlu0 %5770
        %v5772 = vmul.f32 %v5771, 0.0009765625
        %v5773 = vsel %vm909, %v5765, %v5757
        %v5774 = vsel %vm909, %v5772, %v5758
        %5775 = vrot.lane.b32.xlu0 %v5629, 116
        %v5776 = vpop.permute.xlu0 %5775
        %v5778 = vsel %vm858, %v5776, 0.0
        %5779 = vadd.xlane.f32.xlu0 %v5778
        %v5780 = vpop.xlane.xlu0 %5779
        %v5781 = vmul.f32 %v5780, 0.0009765625
        %5782 = vrot.lane.b32.xlu0 %v5730, 116
        %v5783 = vpop.permute.xlu0 %5782
        %v5785 = vsel %vm858, %v5783, 0.0
        %5786 = vadd.xlane.f32.xlu0 %v5785
        %v5787 = vpop.xlane.xlu0 %5786
        %v5788 = vmul.f32 %v5787, 0.0009765625
        %v5789 = vsel %vm928, %v5781, %v5773
        %v5790 = vsel %vm928, %v5788, %v5774
        %5791 = vrot.lane.b32.xlu0 %v5629, 112
        %v5792 = vpop.permute.xlu0 %5791
        %v5794 = vsel %vm858, %v5792, 0.0
        %5795 = vadd.xlane.f32.xlu0 %v5794
        %v5796 = vpop.xlane.xlu0 %5795
        %v5797 = vmul.f32 %v5796, 0.0009765625
        %5798 = vrot.lane.b32.xlu0 %v5730, 112
        %v5799 = vpop.permute.xlu0 %5798
        %v5801 = vsel %vm858, %v5799, 0.0
        %5802 = vadd.xlane.f32.xlu0 %v5801
        %v5803 = vpop.xlane.xlu0 %5802
        %v5804 = vmul.f32 %v5803, 0.0009765625
        %v5805 = vsel %vm947, %v5797, %v5789
        %v5806 = vsel %vm947, %v5804, %v5790
        %5807 = vrot.lane.b32.xlu0 %v5629, 108
        %v5808 = vpop.permute.xlu0 %5807
        %v5810 = vsel %vm858, %v5808, 0.0
        %5811 = vadd.xlane.f32.xlu0 %v5810
        %v5812 = vpop.xlane.xlu0 %5811
        %v5813 = vmul.f32 %v5812, 0.0009765625
        %5814 = vrot.lane.b32.xlu0 %v5730, 108
        %v5815 = vpop.permute.xlu0 %5814
        %v5817 = vsel %vm858, %v5815, 0.0
        %5818 = vadd.xlane.f32.xlu0 %v5817
        %v5819 = vpop.xlane.xlu0 %5818
        %v5820 = vmul.f32 %v5819, 0.0009765625
        %v5821 = vsel %vm966, %v5813, %v5805
        %v5822 = vsel %vm966, %v5820, %v5806
        %5823 = vrot.lane.b32.xlu0 %v5629, 104
        %v5824 = vpop.permute.xlu0 %5823
        %v5826 = vsel %vm858, %v5824, 0.0
        %5827 = vadd.xlane.f32.xlu0 %v5826
        %v5828 = vpop.xlane.xlu0 %5827
        %v5829 = vmul.f32 %v5828, 0.0009765625
        %5830 = vrot.lane.b32.xlu0 %v5730, 104
        %v5831 = vpop.permute.xlu0 %5830
        %v5833 = vsel %vm858, %v5831, 0.0
        %5834 = vadd.xlane.f32.xlu0 %v5833
        %v5835 = vpop.xlane.xlu0 %5834
        %v5836 = vmul.f32 %v5835, 0.0009765625
        %v5837 = vsel %vm985, %v5829, %v5821
        %v5838 = vsel %vm985, %v5836, %v5822
        %5839 = vrot.lane.b32.xlu0 %v5629, 100
        %v5840 = vpop.permute.xlu0 %5839
        %v5842 = vsel %vm858, %v5840, 0.0
        %5843 = vadd.xlane.f32.xlu0 %v5842
        %v5844 = vpop.xlane.xlu0 %5843
        %v5845 = vmul.f32 %v5844, 0.0009765625
        %5846 = vrot.lane.b32.xlu0 %v5730, 100
        %v5847 = vpop.permute.xlu0 %5846
        %v5849 = vsel %vm858, %v5847, 0.0
        %5850 = vadd.xlane.f32.xlu0 %v5849
        %v5851 = vpop.xlane.xlu0 %5850
        %v5852 = vmul.f32 %v5851, 0.0009765625
        %v5853 = vsel %vm1004, %v5845, %v5837
        %v5854 = vsel %vm1004, %v5852, %v5838
        %v5855 = vmul.f32 %v5853, %v5853
        %v5856 = vsub.f32 %v5854, %v5855
        %v5857 = vmax.f32 %v5856, 0.0
        %v5858 = vadd.f32 %v5857, 1e-05
        %v5859 = vrsqrt.pop %v5858
        %v5860 = vmul.f32 %v5859, %v5559
        %v5861 = vmul.f32 %v5853, %v5860
        %v5862 = vsub.f32 %v5560, %v5861
        %v5863 = vlaneseq
        %v5864 = vshrl.u32 %v5863, 7
        %v5865 = vsub.s32 0, %v5864
        %v5866 = vrot.slane %v5860, %v5865
        %v5867 = vmul.f32 %v5433, %v5866
        %v5868 = vmul.f32 %v5436, %v5866
        %v5869 = vmul.f32 %v5441, %v5866
        %v5870 = vmul.f32 %v5444, %v5866
        %v5871 = vmul.f32 %v5449, %v5866
        %v5872 = vmul.f32 %v5452, %v5866
        %v5873 = vmul.f32 %v5457, %v5866
        %v5874 = vmul.f32 %v5460, %v5866
        %v5875 = vmul.f32 %v5465, %v5866
        %v5876 = vmul.f32 %v5468, %v5866
        %v5877 = vmul.f32 %v5473, %v5866
        %v5878 = vmul.f32 %v5476, %v5866
        %v5879 = vmul.f32 %v5481, %v5866
        %v5880 = vmul.f32 %v5484, %v5866
        %v5881 = vmul.f32 %v5489, %v5866
        %v5882 = vmul.f32 %v5492, %v5866
        %v5883 = vmul.f32 %v5497, %v5866
        %v5884 = vmul.f32 %v5500, %v5866
        %v5885 = vmul.f32 %v5505, %v5866
        %v5886 = vmul.f32 %v5508, %v5866
        %v5887 = vmul.f32 %v5513, %v5866
        %v5888 = vmul.f32 %v5516, %v5866
        %v5889 = vmul.f32 %v5521, %v5866
        %v5890 = vmul.f32 %v5524, %v5866
        %v5891 = vmul.f32 %v5529, %v5866
        %v5892 = vmul.f32 %v5532, %v5866
        %v5893 = vmul.f32 %v5537, %v5866
        %v5894 = vmul.f32 %v5540, %v5866
        %v5895 = vmul.f32 %v5545, %v5866
        %v5896 = vmul.f32 %v5548, %v5866
        %v5897 = vmul.f32 %v5553, %v5866
        %v5898 = vmul.f32 %v5556, %v5866
        %v5900 = vlaneseq
        %v5901 = vshrl.u32 %v5900, 7
        %v5902 = vsub.s32 0, %v5901
        %v5903 = vrot.slane %v5862, %v5902
        %v5905 = vadd.f32 %v5867, %v5903
        %v5906 = vadd.f32 %v5868, %v5903
        %v5907 = vadd.f32 %v5869, %v5903
        %v5908 = vadd.f32 %v5870, %v5903
        %v5909 = vadd.f32 %v5871, %v5903
        %v5910 = vadd.f32 %v5872, %v5903
        %v5911 = vadd.f32 %v5873, %v5903
        %v5912 = vadd.f32 %v5874, %v5903
        %v5913 = vadd.f32 %v5875, %v5903
        %v5914 = vadd.f32 %v5876, %v5903
        %v5915 = vadd.f32 %v5877, %v5903
        %v5916 = vadd.f32 %v5878, %v5903
        %v5917 = vadd.f32 %v5879, %v5903
        %v5918 = vadd.f32 %v5880, %v5903
        %v5919 = vadd.f32 %v5881, %v5903
        %v5920 = vadd.f32 %v5882, %v5903
        %v5921 = vadd.f32 %v5883, %v5903
        %v5922 = vadd.f32 %v5884, %v5903
        %v5923 = vadd.f32 %v5885, %v5903
        %v5924 = vadd.f32 %v5886, %v5903
        %v5925 = vadd.f32 %v5887, %v5903
        %v5926 = vadd.f32 %v5888, %v5903
        %v5927 = vadd.f32 %v5889, %v5903
        %v5928 = vadd.f32 %v5890, %v5903
        %v5929 = vadd.f32 %v5891, %v5903
        %v5930 = vadd.f32 %v5892, %v5903
        %v5931 = vadd.f32 %v5893, %v5903
        %v5932 = vadd.f32 %v5894, %v5903
        %v5933 = vadd.f32 %v5895, %v5903
        %v5934 = vadd.f32 %v5896, %v5903
        %v5935 = vadd.f32 %v5897, %v5903
        %v5936 = vadd.f32 %v5898, %v5903
        %v5937 = vmax.f32 %v5905, 0.0
        %v5938 = vmax.f32 %v5906, 0.0
        %v5939 = vmax.f32 %v5907, 0.0
        %v5940 = vmax.f32 %v5908, 0.0
        %v5941 = vmax.f32 %v5909, 0.0
        %v5942 = vmax.f32 %v5910, 0.0
        %v5943 = vmax.f32 %v5911, 0.0
        %v5944 = vmax.f32 %v5912, 0.0
        %v5945 = vmax.f32 %v5913, 0.0
        %v5946 = vmax.f32 %v5914, 0.0
        %v5947 = vmax.f32 %v5915, 0.0
        %v5948 = vmax.f32 %v5916, 0.0
        %v5949 = vmax.f32 %v5917, 0.0
        %v5950 = vmax.f32 %v5918, 0.0
        %v5951 = vmax.f32 %v5919, 0.0
        %v5952 = vmax.f32 %v5920, 0.0
        %v5953 = vmax.f32 %v5921, 0.0
        %v5954 = vmax.f32 %v5922, 0.0
        %v5955 = vmax.f32 %v5923, 0.0
        %v5956 = vmax.f32 %v5924, 0.0
        %v5957 = vmax.f32 %v5925, 0.0
        %v5958 = vmax.f32 %v5926, 0.0
        %v5959 = vmax.f32 %v5927, 0.0
        %v5960 = vmax.f32 %v5928, 0.0
        %v5961 = vmax.f32 %v5929, 0.0
        %v5962 = vmax.f32 %v5930, 0.0
        %v5963 = vmax.f32 %v5931, 0.0
        %v5964 = vmax.f32 %v5932, 0.0
        %v5965 = vmax.f32 %v5933, 0.0
        %v5966 = vmax.f32 %v5934, 0.0
        %v5967 = vmax.f32 %v5935, 0.0
        %v5968 = vmax.f32 %v5936, 0.0
        %v5969 = vpack.c.bf16 %v5938, %v5937
        %v5970 = vpack.c.bf16 %v5940, %v5939
        %v5971 = vpack.c.bf16 %v5942, %v5941
        %v5972 = vpack.c.bf16 %v5944, %v5943
        %v5973 = vpack.c.bf16 %v5946, %v5945
        %v5974 = vpack.c.bf16 %v5948, %v5947
        %v5975 = vpack.c.bf16 %v5950, %v5949
        %v5976 = vpack.c.bf16 %v5952, %v5951
        %v5977 = vpack.c.bf16 %v5954, %v5953
        %v5978 = vpack.c.bf16 %v5956, %v5955
        %v5979 = vpack.c.bf16 %v5958, %v5957
        %v5980 = vpack.c.bf16 %v5960, %v5959
        %v5981 = vpack.c.bf16 %v5962, %v5961
        %v5982 = vpack.c.bf16 %v5964, %v5963
        %v5983 = vpack.c.bf16 %v5966, %v5965
        %v5984 = vpack.c.bf16 %v5968, %v5967
        %v5985 = vld [vmem:[%s7] sm:$0xf]
        %v5986 = vld [vmem:[%s7 + $0x4] sm:$0xf]
        %v5987 = vld [vmem:[%s7 + $0x8] sm:$0xf]
        %v5988 = vld [vmem:[%s7 + $0xc] sm:$0xf]
        %v5993 = vunpack.c.l.b16 %v5985
        %v5994 = vunpack.c.l.b16 %v5986
        %v5995 = vunpack.c.l.b16 %v5987
        %v5996 = vunpack.c.l.b16 %v5988
        %v5997 = vpack.c.b16 %v5994, %v5993
        %v5998 = vpack.c.b16 %v5996, %v5995
        %v6002 = vsel %vm685, %v5969, 0
        %v6005 = vsel %vm685, %v5970, 0
        %v6008 = vsel %vm685, %v5971, 0
        %v6011 = vsel %vm685, %v5972, 0
        %v6014 = vsel %vm685, %v5973, 0
        %v6017 = vsel %vm685, %v5974, 0
        %v6020 = vsel %vm685, %v5975, 0
        %v6023 = vsel %vm685, %v5976, 0
        %v6026 = vsel %vm685, %v5977, 0
        %v6029 = vsel %vm685, %v5978, 0
        %v6032 = vsel %vm685, %v5979, 0
        %v6035 = vsel %vm685, %v5980, 0
        %v6038 = vsel %vm685, %v5981, 0
        %v6041 = vsel %vm685, %v5982, 0
        %v6044 = vsel %vm685, %v5983, 0
        %v6047 = vsel %vm685, %v5984, 0
        %6049 = vmatprep.subr.bf16.mxu0 0
        %6050 = vmatpush1.bf16.msra.mxu0 %v5997
        %6051 = vmatprep.subr.bf16.mxu0 0
        %6052 = vmatpush1.bf16.msra.mxu0 %v5998
        %6053 = vmatprep.subr.bf16.mxu0 0
        %6054 = vmatpush1.bf16.msra.mxu0 0
        %6055 = vmatprep.subr.bf16.mxu0 0
        %6056 = vmatpush1.bf16.msra.mxu0 0
        %6057 = vmatprep.subr.bf16.mxu0 0
        %6058 = vmatpush1.bf16.msra.mxu0 0
        %6059 = vmatprep.subr.bf16.mxu0 0
        %6060 = vmatpush1.bf16.msra.mxu0 0
        %6061 = vmatprep.subr.bf16.mxu0 0
        %6062 = vmatpush1.bf16.msra.mxu0 0
        %6063 = vmatprep.subr.bf16.mxu0 0
        %6064 = vmatpush1.bf16.msra.mxu0 0
        %6065 = vmatprep.subr.bf16.mxu0 0
        %6066 = vmatpush1.bf16.msra.mxu0 0
        %6067 = vmatprep.subr.bf16.mxu0 0
        %6068 = vmatpush1.bf16.msra.mxu0 0
        %6069 = vmatprep.subr.bf16.mxu0 0
        %6070 = vmatpush1.bf16.msra.mxu0 0
        %6071 = vmatprep.subr.bf16.mxu0 0
        %6072 = vmatpush1.bf16.msra.mxu0 0
        %6073 = vmatprep.subr.bf16.mxu0 0
        %6074 = vmatpush1.bf16.msra.mxu0 0
        %6075 = vmatprep.subr.bf16.mxu0 0
        %6076 = vmatpush1.bf16.msra.mxu0 0
        %6077 = vmatprep.subr.bf16.mxu0 0
        %6078 = vmatpush1.bf16.msra.mxu0 0
        %6079 = vmatprep.subr.bf16.mxu0 0
        %6080 = vmatpush1.bf16.msra.mxu0 0
        %6081 = vmatprep.mubr.bf16.mxu0 0
        %6082 = vmatmul.mubr.bf16.gmra.mrb[0].mxu0 %v6002
        %v6083 = vpop.f32.mrb[0].mxu0
        %v6084 = vadd.f32 0.0, %v6083
        %v6085 = vpop.f32.mrb[0].mxu0
        %v6086 = vpop.f32.mrb[0].mxu0
        %v6087 = vadd.f32 0.0, %v6086
        %v6088 = vpop.f32.mrb[0].mxu0
        %6089 = vmatprep.mubr.bf16.mxu0 0
        %6090 = vmatmul.mubr.bf16.gmra.mrb[0].mxu0 %v6005
        %v6091 = vpop.f32.mrb[0].mxu0
        %v6092 = vadd.f32 0.0, %v6091
        %v6093 = vpop.f32.mrb[0].mxu0
        %v6094 = vpop.f32.mrb[0].mxu0
        %v6095 = vadd.f32 0.0, %v6094
        %v6096 = vpop.f32.mrb[0].mxu0
        %6097 = vmatprep.mubr.bf16.mxu0 0
        %6098 = vmatmul.mubr.bf16.gmra.mrb[0].mxu0 %v6008
        %v6099 = vpop.f32.mrb[0].mxu0
        %v6100 = vadd.f32 0.0, %v6099
        %v6101 = vpop.f32.mrb[0].mxu0
        %v6102 = vpop.f32.mrb[0].mxu0
        %v6103 = vadd.f32 0.0, %v6102
        %v6104 = vpop.f32.mrb[0].mxu0
        %6105 = vmatprep.mubr.bf16.mxu0 0
        %6106 = vmatmul.mubr.bf16.gmra.mrb[0].mxu0 %v6011
        %v6107 = vpop.f32.mrb[0].mxu0
        %v6108 = vadd.f32 0.0, %v6107
        %v6109 = vpop.f32.mrb[0].mxu0
        %v6110 = vpop.f32.mrb[0].mxu0
        %v6111 = vadd.f32 0.0, %v6110
        %v6112 = vpop.f32.mrb[0].mxu0
        %6113 = vmatprep.mubr.bf16.mxu0 0
        %6114 = vmatmul.mubr.bf16.gmra.mrb[0].mxu0 %v6014
        %v6115 = vpop.f32.mrb[0].mxu0
        %v6116 = vadd.f32 0.0, %v6115
        %v6117 = vpop.f32.mrb[0].mxu0
        %v6118 = vpop.f32.mrb[0].mxu0
        %v6119 = vadd.f32 0.0, %v6118
        %v6120 = vpop.f32.mrb[0].mxu0
        %6121 = vmatprep.mubr.bf16.mxu0 0
        %6122 = vmatmul.mubr.bf16.gmra.mrb[0].mxu0 %v6017
        %v6123 = vpop.f32.mrb[0].mxu0
        %v6124 = vadd.f32 0.0, %v6123
        %v6125 = vpop.f32.mrb[0].mxu0
        %v6126 = vpop.f32.mrb[0].mxu0
        %v6127 = vadd.f32 0.0, %v6126
        %v6128 = vpop.f32.mrb[0].mxu0
        %6129 = vmatprep.mubr.bf16.mxu0 0
        %6130 = vmatmul.mubr.bf16.gmra.mrb[0].mxu0 %v6020
        %v6131 = vpop.f32.mrb[0].mxu0
        %v6132 = vadd.f32 0.0, %v6131
        %v6133 = vpop.f32.mrb[0].mxu0
        %v6134 = vpop.f32.mrb[0].mxu0
        %v6135 = vadd.f32 0.0, %v6134
        %v6136 = vpop.f32.mrb[0].mxu0
        %6137 = vmatprep.mubr.bf16.mxu0 0
        %6138 = vmatmul.mubr.bf16.gmra.mrb[0].mxu0 %v6023
        %v6139 = vpop.f32.mrb[0].mxu0
        %v6140 = vadd.f32 0.0, %v6139
        %v6141 = vpop.f32.mrb[0].mxu0
        %v6142 = vpop.f32.mrb[0].mxu0
        %v6143 = vadd.f32 0.0, %v6142
        %v6144 = vpop.f32.mrb[0].mxu0
        %6145 = vmatprep.mubr.bf16.mxu0 0
        %6146 = vmatmul.mubr.bf16.gmra.mrb[0].mxu0 %v6026
        %v6147 = vpop.f32.mrb[0].mxu0
        %v6148 = vadd.f32 0.0, %v6147
        %v6149 = vpop.f32.mrb[0].mxu0
        %v6150 = vpop.f32.mrb[0].mxu0
        %v6151 = vadd.f32 0.0, %v6150
        %v6152 = vpop.f32.mrb[0].mxu0
        %6153 = vmatprep.mubr.bf16.mxu0 0
        %6154 = vmatmul.mubr.bf16.gmra.mrb[0].mxu0 %v6029
        %v6155 = vpop.f32.mrb[0].mxu0
        %v6156 = vadd.f32 0.0, %v6155
        %v6157 = vpop.f32.mrb[0].mxu0
        %v6158 = vpop.f32.mrb[0].mxu0
        %v6159 = vadd.f32 0.0, %v6158
        %v6160 = vpop.f32.mrb[0].mxu0
        %6161 = vmatprep.mubr.bf16.mxu0 0
        %6162 = vmatmul.mubr.bf16.gmra.mrb[0].mxu0 %v6032
        %v6163 = vpop.f32.mrb[0].mxu0
        %v6164 = vadd.f32 0.0, %v6163
        %v6165 = vpop.f32.mrb[0].mxu0
        %v6166 = vpop.f32.mrb[0].mxu0
        %v6167 = vadd.f32 0.0, %v6166
        %v6168 = vpop.f32.mrb[0].mxu0
        %6169 = vmatprep.mubr.bf16.mxu0 0
        %6170 = vmatmul.mubr.bf16.gmra.mrb[0].mxu0 %v6035
        %v6171 = vpop.f32.mrb[0].mxu0
        %v6172 = vadd.f32 0.0, %v6171
        %v6173 = vpop.f32.mrb[0].mxu0
        %v6174 = vpop.f32.mrb[0].mxu0
        %v6175 = vadd.f32 0.0, %v6174
        %v6176 = vpop.f32.mrb[0].mxu0
        %6177 = vmatprep.mubr.bf16.mxu0 0
        %6178 = vmatmul.mubr.bf16.gmra.mrb[0].mxu0 %v6038
        %v6179 = vpop.f32.mrb[0].mxu0
        %v6180 = vadd.f32 0.0, %v6179
        %v6181 = vpop.f32.mrb[0].mxu0
        %v6182 = vpop.f32.mrb[0].mxu0
        %v6183 = vadd.f32 0.0, %v6182
        %v6184 = vpop.f32.mrb[0].mxu0
        %6185 = vmatprep.mubr.bf16.mxu0 0
        %6186 = vmatmul.mubr.bf16.gmra.mrb[0].mxu0 %v6041
        %v6187 = vpop.f32.mrb[0].mxu0
        %v6188 = vadd.f32 0.0, %v6187
        %v6189 = vpop.f32.mrb[0].mxu0
        %v6190 = vpop.f32.mrb[0].mxu0
        %v6191 = vadd.f32 0.0, %v6190
        %v6192 = vpop.f32.mrb[0].mxu0
        %6193 = vmatprep.mubr.bf16.mxu0 0
        %6194 = vmatmul.mubr.bf16.gmra.mrb[0].mxu0 %v6044
        %v6195 = vpop.f32.mrb[0].mxu0
        %v6196 = vadd.f32 0.0, %v6195
        %v6197 = vpop.f32.mrb[0].mxu0
        %v6198 = vpop.f32.mrb[0].mxu0
        %v6199 = vadd.f32 0.0, %v6198
        %v6200 = vpop.f32.mrb[0].mxu0
        %6201 = vmatprep.mubr.bf16.mxu0 0
        %6202 = vmatmul.mubr.bf16.gmra.mrb[0].mxu0 %v6047
        %v6203 = vpop.f32.mrb[0].mxu0
        %v6204 = vadd.f32 0.0, %v6203
        %v6205 = vpop.f32.mrb[0].mxu0
        %v6206 = vpop.f32.mrb[0].mxu0
        %v6207 = vadd.f32 0.0, %v6206
        %v6208 = vpop.f32.mrb[0].mxu0
        %6209 = vdwg.mxu0
        %v6210 = vld [vmem:[%s8] sm:$0x1]
        %v6211 = vld [vmem:[%s9] sm:$0x1]
        %v6212 = vadd.f32 %v6084, %v6087
        %v6213 = vadd.f32 %v6212, %v6092
        %v6214 = vadd.f32 %v6213, %v6095
        %v6215 = vadd.f32 %v6214, %v6100
        %v6216 = vadd.f32 %v6215, %v6103
        %v6217 = vadd.f32 %v6216, %v6108
        %v6218 = vadd.f32 %v6217, %v6111
        %v6219 = vadd.f32 %v6218, %v6116
        %v6220 = vadd.f32 %v6219, %v6119
        %v6221 = vadd.f32 %v6220, %v6124
        %v6222 = vadd.f32 %v6221, %v6127
        %v6223 = vadd.f32 %v6222, %v6132
        %v6224 = vadd.f32 %v6223, %v6135
        %v6225 = vadd.f32 %v6224, %v6140
        %v6226 = vadd.f32 %v6225, %v6143
        %v6227 = vadd.f32 %v6226, %v6148
        %v6228 = vadd.f32 %v6227, %v6151
        %v6229 = vadd.f32 %v6228, %v6156
        %v6230 = vadd.f32 %v6229, %v6159
        %v6231 = vadd.f32 %v6230, %v6164
        %v6232 = vadd.f32 %v6231, %v6167
        %v6233 = vadd.f32 %v6232, %v6172
        %v6234 = vadd.f32 %v6233, %v6175
        %v6235 = vadd.f32 %v6234, %v6180
        %v6236 = vadd.f32 %v6235, %v6183
        %v6237 = vadd.f32 %v6236, %v6188
        %v6238 = vadd.f32 %v6237, %v6191
        %v6239 = vadd.f32 %v6238, %v6196
        %v6240 = vadd.f32 %v6239, %v6199
        %v6241 = vadd.f32 %v6240, %v6204
        %v6242 = vadd.f32 %v6241, %v6207
        %v6243 = vrot.slane %v6242, 4
        %v6244 = vadd.f32 %v6242, %v6243
        %v6245 = vrot.slane %v6244, 2
        %v6246 = vadd.f32 %v6244, %v6245
        %v6247 = vrot.slane %v6246, 1
        %v6248 = vadd.f32 %v6246, %v6247
        %v6249 = vmul.f32 %v6084, %v6084
        %v6250 = vmul.f32 %v6087, %v6087
        %v6251 = vmul.f32 %v6092, %v6092
        %v6252 = vmul.f32 %v6095, %v6095
        %v6253 = vmul.f32 %v6100, %v6100
        %v6254 = vmul.f32 %v6103, %v6103
        %v6255 = vmul.f32 %v6108, %v6108
        %v6256 = vmul.f32 %v6111, %v6111
        %v6257 = vmul.f32 %v6116, %v6116
        %v6258 = vmul.f32 %v6119, %v6119
        %v6259 = vmul.f32 %v6124, %v6124
        %v6260 = vmul.f32 %v6127, %v6127
        %v6261 = vmul.f32 %v6132, %v6132
        %v6262 = vmul.f32 %v6135, %v6135
        %v6263 = vmul.f32 %v6140, %v6140
        %v6264 = vmul.f32 %v6143, %v6143
        %v6265 = vmul.f32 %v6148, %v6148
        %v6266 = vmul.f32 %v6151, %v6151
        %v6267 = vmul.f32 %v6156, %v6156
        %v6268 = vmul.f32 %v6159, %v6159
        %v6269 = vmul.f32 %v6164, %v6164
        %v6270 = vmul.f32 %v6167, %v6167
        %v6271 = vmul.f32 %v6172, %v6172
        %v6272 = vmul.f32 %v6175, %v6175
        %v6273 = vmul.f32 %v6180, %v6180
        %v6274 = vmul.f32 %v6183, %v6183
        %v6275 = vmul.f32 %v6188, %v6188
        %v6276 = vmul.f32 %v6191, %v6191
        %v6277 = vmul.f32 %v6196, %v6196
        %v6278 = vmul.f32 %v6199, %v6199
        %v6279 = vmul.f32 %v6204, %v6204
        %v6280 = vmul.f32 %v6207, %v6207
        %v6281 = vadd.f32 %v6249, %v6250
        %v6282 = vadd.f32 %v6281, %v6251
        %v6283 = vadd.f32 %v6282, %v6252
        %v6284 = vadd.f32 %v6283, %v6253
        %v6285 = vadd.f32 %v6284, %v6254
        %v6286 = vadd.f32 %v6285, %v6255
        %v6287 = vadd.f32 %v6286, %v6256
        %v6288 = vadd.f32 %v6287, %v6257
        %v6289 = vadd.f32 %v6288, %v6258
        %v6290 = vadd.f32 %v6289, %v6259
        %v6291 = vadd.f32 %v6290, %v6260
        %v6292 = vadd.f32 %v6291, %v6261
        %v6293 = vadd.f32 %v6292, %v6262
        %v6294 = vadd.f32 %v6293, %v6263
        %v6295 = vadd.f32 %v6294, %v6264
        %v6296 = vadd.f32 %v6295, %v6265
        %v6297 = vadd.f32 %v6296, %v6266
        %v6298 = vadd.f32 %v6297, %v6267
        %v6299 = vadd.f32 %v6298, %v6268
        %v6300 = vadd.f32 %v6299, %v6269
        %v6301 = vadd.f32 %v6300, %v6270
        %v6302 = vadd.f32 %v6301, %v6271
        %v6303 = vadd.f32 %v6302, %v6272
        %v6304 = vadd.f32 %v6303, %v6273
        %v6305 = vadd.f32 %v6304, %v6274
        %v6306 = vadd.f32 %v6305, %v6275
        %v6307 = vadd.f32 %v6306, %v6276
        %v6308 = vadd.f32 %v6307, %v6277
        %v6309 = vadd.f32 %v6308, %v6278
        %v6310 = vadd.f32 %v6309, %v6279
        %v6311 = vadd.f32 %v6310, %v6280
        %v6312 = vrot.slane %v6311, 4
        %v6313 = vadd.f32 %v6311, %v6312
        %v6314 = vrot.slane %v6313, 2
        %v6315 = vadd.f32 %v6313, %v6314
        %v6316 = vrot.slane %v6315, 1
        %v6317 = vadd.f32 %v6315, %v6316
        %vm6318 = vcmask 130048
        %v6319 = vsel %vm6318, %v6248, 0.0
        %6320 = vadd.xlane.f32.xlu0 %v6319
        %v6321 = vpop.xlane.xlu0 %6320
        %v6322 = vmul.f32 %v6321, 0.00024414063
        %v6323 = vsel %vm6318, %v6317, 0.0
        %6324 = vadd.xlane.f32.xlu0 %v6323
        %v6325 = vpop.xlane.xlu0 %6324
        %v6326 = vmul.f32 %v6325, 0.00024414063
        %vm6327 = vmand %vm867, %vm927
        %v6328 = vsel %vm6327, %v6322, 0.0
        %v6329 = vsel %vm6327, %v6326, 0.0
        %6331 = vrot.lane.b32.xlu0 %v6248, 112
        %v6332 = vpop.permute.xlu0 %6331
        %v6334 = vsel %vm6318, %v6332, 0.0
        %6335 = vadd.xlane.f32.xlu0 %v6334
        %v6336 = vpop.xlane.xlu0 %6335
        %v6337 = vmul.f32 %v6336, 0.00024414063
        %6339 = vrot.lane.b32.xlu0 %v6317, 112
        %v6340 = vpop.permute.xlu0 %6339
        %v6342 = vsel %vm6318, %v6340, 0.0
        %6343 = vadd.xlane.f32.xlu0 %v6342
        %v6344 = vpop.xlane.xlu0 %6343
        %v6345 = vmul.f32 %v6344, 0.00024414063
        %vm6346 = vmand %vm945, %vm1003
        %v6347 = vsel %vm6346, %v6337, %v6328
        %v6348 = vsel %vm6346, %v6345, %v6329
        %6349 = vrot.lane.b32.xlu0 %v6248, 96
        %v6350 = vpop.permute.xlu0 %6349
        %v6352 = vsel %vm6318, %v6350, 0.0
        %6353 = vadd.xlane.f32.xlu0 %v6352
        %v6354 = vpop.xlane.xlu0 %6353
        %v6355 = vmul.f32 %v6354, 0.00024414063
        %6356 = vrot.lane.b32.xlu0 %v6317, 96
        %v6357 = vpop.permute.xlu0 %6356
        %v6359 = vsel %vm6318, %v6357, 0.0
        %6360 = vadd.xlane.f32.xlu0 %v6359
        %v6361 = vpop.xlane.xlu0 %6360
        %v6362 = vmul.f32 %v6361, 0.00024414063
        %vm6363 = vcmp.ge.s32.totalorder %v857, 32
        %vm6364 = vcmp.lt.s32.totalorder %v857, 48
        %vm6365 = vmand %vm6363, %vm6364
        %v6366 = vsel %vm6365, %v6355, %v6347
        %v6367 = vsel %vm6365, %v6362, %v6348
        %6368 = vrot.lane.b32.xlu0 %v6248, 80
        %v6369 = vpop.permute.xlu0 %6368
        %v6371 = vsel %vm6318, %v6369, 0.0
        %6372 = vadd.xlane.f32.xlu0 %v6371
        %v6373 = vpop.xlane.xlu0 %6372
        %v6374 = vmul.f32 %v6373, 0.00024414063
        %6375 = vrot.lane.b32.xlu0 %v6317, 80
        %v6376 = vpop.permute.xlu0 %6375
        %v6378 = vsel %vm6318, %v6376, 0.0
        %6379 = vadd.xlane.f32.xlu0 %v6378
        %v6380 = vpop.xlane.xlu0 %6379
        %v6381 = vmul.f32 %v6380, 0.00024414063
        %vm6382 = vcmp.ge.s32.totalorder %v857, 48
        %vm6383 = vcmp.lt.s32.totalorder %v857, 64
        %vm6384 = vmand %vm6382, %vm6383
        %v6385 = vsel %vm6384, %v6374, %v6366
        %v6386 = vsel %vm6384, %v6381, %v6367
        %6387 = vrot.lane.b32.xlu0 %v6248, 64
        %v6388 = vpop.permute.xlu0 %6387
        %v6390 = vsel %vm6318, %v6388, 0.0
        %6391 = vadd.xlane.f32.xlu0 %v6390
        %v6392 = vpop.xlane.xlu0 %6391
        %v6393 = vmul.f32 %v6392, 0.00024414063
        %6394 = vrot.lane.b32.xlu0 %v6317, 64
        %v6395 = vpop.permute.xlu0 %6394
        %v6397 = vsel %vm6318, %v6395, 0.0
        %6398 = vadd.xlane.f32.xlu0 %v6397
        %v6399 = vpop.xlane.xlu0 %6398
        %v6400 = vmul.f32 %v6399, 0.00024414063
        %vm6401 = vcmp.ge.s32.totalorder %v857, 64
        %vm6402 = vcmp.lt.s32.totalorder %v857, 80
        %vm6403 = vmand %vm6401, %vm6402
        %v6404 = vsel %vm6403, %v6393, %v6385
        %v6405 = vsel %vm6403, %v6400, %v6386
        %6406 = vrot.lane.b32.xlu0 %v6248, 48
        %v6407 = vpop.permute.xlu0 %6406
        %v6409 = vsel %vm6318, %v6407, 0.0
        %6410 = vadd.xlane.f32.xlu0 %v6409
        %v6411 = vpop.xlane.xlu0 %6410
        %v6412 = vmul.f32 %v6411, 0.00024414063
        %6413 = vrot.lane.b32.xlu0 %v6317, 48
        %v6414 = vpop.permute.xlu0 %6413
        %v6416 = vsel %vm6318, %v6414, 0.0
        %6417 = vadd.xlane.f32.xlu0 %v6416
        %v6418 = vpop.xlane.xlu0 %6417
        %v6419 = vmul.f32 %v6418, 0.00024414063
        %vm6420 = vcmp.ge.s32.totalorder %v857, 80
        %vm6421 = vcmp.lt.s32.totalorder %v857, 96
        %vm6422 = vmand %vm6420, %vm6421
        %v6423 = vsel %vm6422, %v6412, %v6404
        %v6424 = vsel %vm6422, %v6419, %v6405
        %6425 = vrot.lane.b32.xlu0 %v6248, 32
        %v6426 = vpop.permute.xlu0 %6425
        %v6428 = vsel %vm6318, %v6426, 0.0
        %6429 = vadd.xlane.f32.xlu0 %v6428
        %v6430 = vpop.xlane.xlu0 %6429
        %v6431 = vmul.f32 %v6430, 0.00024414063
        %6432 = vrot.lane.b32.xlu0 %v6317, 32
        %v6433 = vpop.permute.xlu0 %6432
        %v6435 = vsel %vm6318, %v6433, 0.0
        %6436 = vadd.xlane.f32.xlu0 %v6435
        %v6437 = vpop.xlane.xlu0 %6436
        %v6438 = vmul.f32 %v6437, 0.00024414063
        %vm6439 = vcmp.ge.s32.totalorder %v857, 96
        %vm6440 = vcmp.lt.s32.totalorder %v857, 112
        %vm6441 = vmand %vm6439, %vm6440
        %v6442 = vsel %vm6441, %v6431, %v6423
        %v6443 = vsel %vm6441, %v6438, %v6424
        %6444 = vrot.lane.b32.xlu0 %v6248, 16
        %v6445 = vpop.permute.xlu0 %6444
        %v6447 = vsel %vm6318, %v6445, 0.0
        %6448 = vadd.xlane.f32.xlu0 %v6447
        %v6449 = vpop.xlane.xlu0 %6448
        %v6450 = vmul.f32 %v6449, 0.00024414063
        %6451 = vrot.lane.b32.xlu0 %v6317, 16
        %v6452 = vpop.permute.xlu0 %6451
        %v6454 = vsel %vm6318, %v6452, 0.0
        %6455 = vadd.xlane.f32.xlu0 %v6454
        %v6456 = vpop.xlane.xlu0 %6455
        %v6457 = vmul.f32 %v6456, 0.00024414063
        %vm6458 = vcmp.ge.s32.totalorder %v857, 112
        %vm6459 = vcmp.lt.s32.totalorder %v857, 128
        %vm6460 = vmand %vm6458, %vm6459
        %v6461 = vsel %vm6460, %v6450, %v6442
        %v6462 = vsel %vm6460, %v6457, %v6443
        %v6463 = vmul.f32 %v6461, %v6461
        %v6464 = vsub.f32 %v6462, %v6463
        %v6465 = vmax.f32 %v6464, 0.0
        %v6466 = vadd.f32 %v6465, 1e-05
        %v6467 = vrsqrt.pop %v6466
        %v6468 = vmul.f32 %v6467, %v6210
        %v6469 = vmul.f32 %v6461, %v6468
        %v6470 = vsub.f32 %v6211, %v6469
        %v6471 = vlaneseq
        %v6472 = vshrl.u32 %v6471, 7
        %v6473 = vsub.s32 0, %v6472
        %v6474 = vrot.slane %v6468, %v6473
        %v6475 = vmul.f32 %v6084, %v6474
        %v6476 = vmul.f32 %v6087, %v6474
        %v6477 = vmul.f32 %v6092, %v6474
        %v6478 = vmul.f32 %v6095, %v6474
        %v6479 = vmul.f32 %v6100, %v6474
        %v6480 = vmul.f32 %v6103, %v6474
        %v6481 = vmul.f32 %v6108, %v6474
        %v6482 = vmul.f32 %v6111, %v6474
        %v6483 = vmul.f32 %v6116, %v6474
        %v6484 = vmul.f32 %v6119, %v6474
        %v6485 = vmul.f32 %v6124, %v6474
        %v6486 = vmul.f32 %v6127, %v6474
        %v6487 = vmul.f32 %v6132, %v6474
        %v6488 = vmul.f32 %v6135, %v6474
        %v6489 = vmul.f32 %v6140, %v6474
        %v6490 = vmul.f32 %v6143, %v6474
        %v6491 = vmul.f32 %v6148, %v6474
        %v6492 = vmul.f32 %v6151, %v6474
        %v6493 = vmul.f32 %v6156, %v6474
        %v6494 = vmul.f32 %v6159, %v6474
        %v6495 = vmul.f32 %v6164, %v6474
        %v6496 = vmul.f32 %v6167, %v6474
        %v6497 = vmul.f32 %v6172, %v6474
        %v6498 = vmul.f32 %v6175, %v6474
        %v6499 = vmul.f32 %v6180, %v6474
        %v6500 = vmul.f32 %v6183, %v6474
        %v6501 = vmul.f32 %v6188, %v6474
        %v6502 = vmul.f32 %v6191, %v6474
        %v6503 = vmul.f32 %v6196, %v6474
        %v6504 = vmul.f32 %v6199, %v6474
        %v6505 = vmul.f32 %v6204, %v6474
        %v6506 = vmul.f32 %v6207, %v6474
        %v6508 = vlaneseq
        %v6509 = vshrl.u32 %v6508, 7
        %v6510 = vsub.s32 0, %v6509
        %v6511 = vrot.slane %v6470, %v6510
        %v6513 = vadd.f32 %v6475, %v6511
        %v6514 = vadd.f32 %v6476, %v6511
        %v6515 = vadd.f32 %v6477, %v6511
        %v6516 = vadd.f32 %v6478, %v6511
        %v6517 = vadd.f32 %v6479, %v6511
        %v6518 = vadd.f32 %v6480, %v6511
        %v6519 = vadd.f32 %v6481, %v6511
        %v6520 = vadd.f32 %v6482, %v6511
        %v6521 = vadd.f32 %v6483, %v6511
        %v6522 = vadd.f32 %v6484, %v6511
        %v6523 = vadd.f32 %v6485, %v6511
        %v6524 = vadd.f32 %v6486, %v6511
        %v6525 = vadd.f32 %v6487, %v6511
        %v6526 = vadd.f32 %v6488, %v6511
        %v6527 = vadd.f32 %v6489, %v6511
        %v6528 = vadd.f32 %v6490, %v6511
        %v6529 = vadd.f32 %v6491, %v6511
        %v6530 = vadd.f32 %v6492, %v6511
        %v6531 = vadd.f32 %v6493, %v6511
        %v6532 = vadd.f32 %v6494, %v6511
        %v6533 = vadd.f32 %v6495, %v6511
        %v6534 = vadd.f32 %v6496, %v6511
        %v6535 = vadd.f32 %v6497, %v6511
        %v6536 = vadd.f32 %v6498, %v6511
        %v6537 = vadd.f32 %v6499, %v6511
        %v6538 = vadd.f32 %v6500, %v6511
        %v6539 = vadd.f32 %v6501, %v6511
        %v6540 = vadd.f32 %v6502, %v6511
        %v6541 = vadd.f32 %v6503, %v6511
        %v6542 = vadd.f32 %v6504, %v6511
        %v6543 = vadd.f32 %v6505, %v6511
        %v6544 = vadd.f32 %v6506, %v6511
        %v6545 = vadd.f32 %v6513, %v410
        %v6546 = vadd.f32 %v6514, %v411
        %v6547 = vadd.f32 %v6515, %v412
        %v6548 = vadd.f32 %v6516, %v413
        %v6549 = vadd.f32 %v6517, %v414
        %v6550 = vadd.f32 %v6518, %v415
        %v6551 = vadd.f32 %v6519, %v416
        %v6552 = vadd.f32 %v6520, %v417
        %v6553 = vadd.f32 %v6521, %v418
        %v6554 = vadd.f32 %v6522, %v419
        %v6555 = vadd.f32 %v6523, %v420
        %v6556 = vadd.f32 %v6524, %v421
        %v6557 = vadd.f32 %v6525, %v422
        %v6558 = vadd.f32 %v6526, %v423
        %v6559 = vadd.f32 %v6527, %v424
        %v6560 = vadd.f32 %v6528, %v425
        %v6561 = vadd.f32 %v6529, %v426
        %v6562 = vadd.f32 %v6530, %v427
        %v6563 = vadd.f32 %v6531, %v428
        %v6564 = vadd.f32 %v6532, %v429
        %v6565 = vadd.f32 %v6533, %v430
        %v6566 = vadd.f32 %v6534, %v431
        %v6567 = vadd.f32 %v6535, %v432
        %v6568 = vadd.f32 %v6536, %v433
        %v6569 = vadd.f32 %v6537, %v434
        %v6570 = vadd.f32 %v6538, %v435
        %v6571 = vadd.f32 %v6539, %v436
        %v6572 = vadd.f32 %v6540, %v437
        %v6573 = vadd.f32 %v6541, %v438
        %v6574 = vadd.f32 %v6542, %v439
        %v6575 = vadd.f32 %v6543, %v440
        %v6576 = vadd.f32 %v6544, %v441
        %v6577 = vmax.f32 %v6545, 0.0
        %v6578 = vmax.f32 %v6546, 0.0
        %v6579 = vmax.f32 %v6547, 0.0
        %v6580 = vmax.f32 %v6548, 0.0
        %v6581 = vmax.f32 %v6549, 0.0
        %v6582 = vmax.f32 %v6550, 0.0
        %v6583 = vmax.f32 %v6551, 0.0
        %v6584 = vmax.f32 %v6552, 0.0
        %v6585 = vmax.f32 %v6553, 0.0
        %v6586 = vmax.f32 %v6554, 0.0
        %v6587 = vmax.f32 %v6555, 0.0
        %v6588 = vmax.f32 %v6556, 0.0
        %v6589 = vmax.f32 %v6557, 0.0
        %v6590 = vmax.f32 %v6558, 0.0
        %v6591 = vmax.f32 %v6559, 0.0
        %v6592 = vmax.f32 %v6560, 0.0
        %v6593 = vmax.f32 %v6561, 0.0
        %v6594 = vmax.f32 %v6562, 0.0
        %v6595 = vmax.f32 %v6563, 0.0
        %v6596 = vmax.f32 %v6564, 0.0
        %v6597 = vmax.f32 %v6565, 0.0
        %v6598 = vmax.f32 %v6566, 0.0
        %v6599 = vmax.f32 %v6567, 0.0
        %v6600 = vmax.f32 %v6568, 0.0
        %v6601 = vmax.f32 %v6569, 0.0
        %v6602 = vmax.f32 %v6570, 0.0
        %v6603 = vmax.f32 %v6571, 0.0
        %v6604 = vmax.f32 %v6572, 0.0
        %v6605 = vmax.f32 %v6573, 0.0
        %v6606 = vmax.f32 %v6574, 0.0
        %v6607 = vmax.f32 %v6575, 0.0
        %v6608 = vmax.f32 %v6576, 0.0
        %6609 = vst [vmem:[%s406] sm:$0xff] %v6577
        %6610 = vst [vmem:[%s406 + $0x8] sm:$0xff] %v6578
        %6611 = vst [vmem:[%s406 + $0x10] sm:$0xff] %v6579
        %6612 = vst [vmem:[%s406 + $0x18] sm:$0xff] %v6580
        %6613 = vst [vmem:[%s406 + $0x20] sm:$0xff] %v6581
        %6614 = vst [vmem:[%s406 + $0x28] sm:$0xff] %v6582
        %6615 = vst [vmem:[%s406 + $0x30] sm:$0xff] %v6583
        %6616 = vst [vmem:[%s406 + $0x38] sm:$0xff] %v6584
        %6617 = vst [vmem:[%s406 + $0x40] sm:$0xff] %v6585
        %6618 = vst [vmem:[%s406 + $0x48] sm:$0xff] %v6586
        %6619 = vst [vmem:[%s406 + $0x50] sm:$0xff] %v6587
        %6620 = vst [vmem:[%s406 + $0x58] sm:$0xff] %v6588
        %6621 = vst [vmem:[%s406 + $0x60] sm:$0xff] %v6589
        %6622 = vst [vmem:[%s406 + $0x68] sm:$0xff] %v6590
        %6623 = vst [vmem:[%s406 + $0x70] sm:$0xff] %v6591
        %6624 = vst [vmem:[%s406 + $0x78] sm:$0xff] %v6592
        %6625 = vst [vmem:[%s406 + $0x80] sm:$0xff] %v6593
        %6626 = vst [vmem:[%s406 + $0x88] sm:$0xff] %v6594
        %6627 = vst [vmem:[%s406 + $0x90] sm:$0xff] %v6595
        %6628 = vst [vmem:[%s406 + $0x98] sm:$0xff] %v6596
        %6629 = vst [vmem:[%s406 + $0xa0] sm:$0xff] %v6597
        %6630 = vst [vmem:[%s406 + $0xa8] sm:$0xff] %v6598
        %6631 = vst [vmem:[%s406 + $0xb0] sm:$0xff] %v6599
        %6632 = vst [vmem:[%s406 + $0xb8] sm:$0xff] %v6600
        %6633 = vst [vmem:[%s406 + $0xc0] sm:$0xff] %v6601
        %6634 = vst [vmem:[%s406 + $0xc8] sm:$0xff] %v6602
        %6635 = vst [vmem:[%s406 + $0xd0] sm:$0xff] %v6603
        %6636 = vst [vmem:[%s406 + $0xd8] sm:$0xff] %v6604
        %6637 = vst [vmem:[%s406 + $0xe0] sm:$0xff] %v6605
        %6638 = vst [vmem:[%s406 + $0xe8] sm:$0xff] %v6606
        %6639 = vst [vmem:[%s406 + $0xf0] sm:$0xff] %v6607
        %6640 = vst [vmem:[%s406 + $0xf8] sm:$0xff] %v6608
        %s6641 = sand.u32 %s251, 1
        %s6642 = scalar_lea.sflag [#allocation6], %s6641
        %s6643 = sand.u32 %s251, 1
        %s6644 = smul.addr %s6643, 256
        %s6645 = scalar_lea.vmem [#allocation10], %s6644
        // Predicated region
        $region73: #{_lambda_.1} parent=59 // pred_check
          %p6646 = pneg %p261
        $region74: #{_lambda_.1} parent=59 // pred_check_branch
          %6648 = sbr.rel (%p6646) target = $region76
        $region75: #{_lambda_.1} parent=59 // pred_region
          %s6649 = smul.u32 32, %s28
          %s6651 = ssub.s32 4096, 4096
          %6652 = vsyncadd %s6642, %s6651
          %s6653 = smul.addr %s6649, 128
          %s6654 = scalar_lea.hbm %s10, %s6653
          %s6655 = sshll.u32 %s6645, 4
          %s6656 = int_to_ptr.vmem [resolvable:$true] %s6655
          %6661 = dma.vmem_to_hbm [thread:$0]  %s6656, 4096, %s6654, %s6642, 128, 128, 8
        $region76: #{_lambda_.1} parent=59 // pred_fallthru
          _
      $region60: #{_lambda_.1} parent=5 // pred_fallthru
        _
      %p6662 = scmp.le.s32.totalorder 2, %s23
      // Predicated region
      $region77: #{_lambda_.1} parent=5 // pred_check
        %p6663 = pneg %p6662
      $region78: #{_lambda_.1} parent=5 // pred_check_branch
        %6665 = sbr.rel (%p6663) target = $region80
      $region79: #{_lambda_.1} parent=5 // pred_region
        %s6666 = ssub.s32 %s23, 2
        // Predicated region
        $region81: #{_lambda_.1} parent=79 // pred_check
          %p6667 = pneg %p267
        $region82: #{_lambda_.1} parent=79 // pred_check_branch
          %6669 = sbr.rel (%p6667) target = $region84
        $region83: #{_lambda_.1} parent=79 // pred_region
          %s6670 = sand.u32 %s252, 1
          %s6671 = scalar_lea.sflag [#allocation6], %s6670
          %s6672 = sand.u32 %s252, 1
          %s6673 = smul.addr %s6672, 256
          %s6674 = scalar_lea.vmem [#allocation10], %s6673
          %6675 = dma.done %s6671, 4096
        $region84: #{_lambda_.1} parent=79 // pred_fallthru
          _
      $region80: #{_lambda_.1} parent=5 // pred_fallthru
        _
    $region6: #{_lambda_.1} parent=1 // loop_footer
      %s27 = sadd.s32 1, %s23
    $region7: #{_lambda_.1} parent=1 // loop_footer_branch
      %22 = sbr.rel target = $region3
    $region8: #{_lambda_.1} parent=1 // loop_exit
      _
    %6676 = vsyncpa [#allocation5], 1
    %s6677 = scalar_lea.sflag [#allocation5], 1
    %6678 = vsyncpa %s6677, 1
    %6679 = vsyncpa [#allocation8], 1
    %6680 = vsyncpa [#allocation6], 1
    %s6681 = scalar_lea.sflag [#allocation6], 1
    %6682 = vsyncpa %s6681, 1

</llo_original>
